<compile_context>
chip_gen: v7x
topology: tpu7x:2x2x1
jax: 0.10.0
libtpu: 0.0.40
codegen_flags: <defaults>
</compile_context>

<pallas_src>
import functools

import jax
import jax.numpy as jnp
from jax.experimental import pallas as pl
from jax.experimental.pallas import tpu as pltpu

_EPS = 1e-5
_LANE = 128             # channel padding target (lane width)
_SUB = 16               # W-padding alignment (bf16 packs 16 rows per vreg)
_GUARD = 16             # guard rows around the padded input slab
_ACT = jnp.bfloat16     # HBM activation / MXU operand dtype


def _round_up(x, m):
    return (x + m - 1) // m * m


# --------------------------------------------------------------------------- #
# Kernels
# --------------------------------------------------------------------------- #
def _conv3x3_kernel(scale_ref, shift_ref, w_ref, xm_ref, xt_ref, xb_ref,
                    y_ref, st_ref, xs_ref, xc_ref,
                    *, W, Wp, TH, n_tiles, cin_p, cout_p, fused):
    """3x3 conv (padding=1) on one (TH, Wp) row-tile of one image.

    Optionally fuses relu(x*scale + shift) (the previous BatchNorm+ReLU) into
    the input read, and emits per-tile partial BN stats (sum, sum-of-squares
    over valid pixels) of its own pre-BN output.
    """
    i = pl.program_id(1)
    rows_out = TH * Wp
    rows_pad = (TH + 2) * Wp
    G = _GUARD

    # Hoisted column-validity masks (w == 0 and w > W are zero-padding cols).
    wp_main = jax.lax.broadcasted_iota(jnp.int32, (rows_out, 1), 0) % Wp
    col_ok_main = jnp.logical_and(wp_main >= 1, wp_main <= W)
    if fused:
        scale = scale_ref[...]
        shift = shift_ref[...]
        wp_halo = jax.lax.broadcasted_iota(jnp.int32, (Wp, 1), 0)
        col_ok_halo = jnp.logical_and(wp_halo >= 1, wp_halo <= W)

    def prep(v, keep):
        # v: (L, cin_p) bf16 chunk straight from HBM (already W-zero-padded).
        if fused:
            v = jnp.maximum(v.astype(jnp.float32) * scale + shift, 0.0)
        if keep is not None:
            v = jnp.where(keep, v, jnp.zeros_like(v))
        return v.astype(_ACT)

    main_keep = col_ok_main if fused else None
    top_keep = (jnp.logical_and(col_ok_halo, i > 0) if fused else (i > 0))
    bot_keep = (jnp.logical_and(col_ok_halo, i < n_tiles - 1) if fused
                else (i < n_tiles - 1))

    # Assemble the zero-padded (TH+2, Wp) input slab (flattened) in VMEM.
    xs_ref[pl.ds(G + Wp, rows_out), :] = prep(xm_ref[0], main_keep)
    xs_ref[pl.ds(G, Wp), :] = prep(xt_ref[0], top_keep)
    xs_ref[pl.ds(G + (TH + 1) * Wp, Wp), :] = prep(xb_ref[0], bot_keep)
    # Zero the two guard rows touched by the kx=0 / kx=2 taps (no stale VMEM).
    zrow = jnp.zeros((1, cin_p), _ACT)
    xs_ref[pl.ds(G - 1, 1), :] = zrow
    xs_ref[pl.ds(G + rows_pad, 1), :] = zrow

    # Fold the three kx taps into the contraction dim: xc[r] = concat_k xs[r+k-1].
    for k in range(3):
        xc_ref[:, pl.ds(k * cin_p, cin_p)] = xs_ref[pl.ds(G + k - 1, rows_pad), :]

    # Three bf16 MXU matmuls (one per ky), K = 3*cin_p, f32 accumulation,
    # no output masking.
    acc = jnp.dot(xc_ref[pl.ds(0, rows_out), :], w_ref[0],
                  preferred_element_type=jnp.float32)
    for ky in (1, 2):
        acc = acc + jnp.dot(xc_ref[pl.ds(ky * Wp, rows_out), :], w_ref[ky],
                            preferred_element_type=jnp.float32)

    y_ref[...] = acc.reshape(1, rows_out, cout_p).astype(y_ref.dtype)

    # One-pass partial BN statistics over this tile's valid pixels (f32).
    # TODO(synk): E[x^2]-E[x]^2 can cancel for very large/biased activations;
    # switch to a shifted accumulation if this ever feeds training.
    yz = jnp.where(col_ok_main, acc, 0.0)
    st = jnp.concatenate([jnp.sum(yz, axis=0, keepdims=True),
                          jnp.sum(yz * yz, axis=0, keepdims=True)], axis=0)
    st_ref[...] = st.reshape(1, 1, 2, cout_p)


def _bn_relu_crop_kernel(scale_ref, shift_ref, y_ref, o_ref,
                         *, TH, Wp, W, cout_p, cout):
    """BN2 + ReLU with the W-padding crop and channel crop fused into the store."""
    v = y_ref[...].astype(jnp.float32).reshape(TH, Wp, cout_p)
    v = jnp.maximum(v * scale_ref[...].reshape(1, 1, cout_p)
                    + shift_ref[...].reshape(1, 1, cout_p), 0.0)
    o_ref[...] = v[:, 1:W + 1, :cout].reshape(1, TH, W, cout)


# --------------------------------------------------------------------------- #
# pallas_call wrappers
# --------------------------------------------------------------------------- #
def _conv_call(x_flat, w_fold, scale, shift, *, fused, N, H, W, Wp, TH,
               cin_p, cout_p, vmem_limit):
    n_tiles = H // TH
    rows = TH * Wp
    kernel = functools.partial(_conv3x3_kernel, W=W, Wp=Wp, TH=TH,
                               n_tiles=n_tiles, cin_p=cin_p, cout_p=cout_p,
                               fused=fused)

    def const(shape):
        return pl.BlockSpec(shape, lambda n, i: (0,) * len(shape))

    cost = pl.CostEstimate(
        flops=int(2 * N * H * Wp * 3 * (3 * cin_p) * cout_p),
        transcendentals=0,
        bytes_accessed=int(2 * N * H * Wp * (cin_p + cout_p)       # bf16 acts
                           + 2 * N * n_tiles * 2 * Wp * cin_p      # halo rows
                           + 2 * 9 * cin_p * cout_p                # weights
                           + 4 * N * n_tiles * 2 * cout_p))        # stats

    y, st = pl.pallas_call(
        kernel,
        grid=(N, n_tiles),
        in_specs=[
            const((1, cin_p)),                                     # input BN scale
            const((1, cin_p)),                                     # input BN shift
            const((3, 3 * cin_p, cout_p)),                         # folded weights
            pl.BlockSpec((1, rows, cin_p), lambda n, i: (n, i, 0)),            # main
            pl.BlockSpec((1, Wp, cin_p),
                         lambda n, i: (n, jnp.maximum(i * TH - 1, 0), 0)),     # top halo
            pl.BlockSpec((1, Wp, cin_p),
                         lambda n, i: (n, jnp.minimum((i + 1) * TH, H - 1), 0)),  # bottom
        ],
        out_specs=[
            pl.BlockSpec((1, rows, cout_p), lambda n, i: (n, i, 0)),
            pl.BlockSpec((1, 1, 2, cout_p), lambda n, i: (n, i, 0, 0)),
        ],
        out_shape=[
            jax.ShapeDtypeStruct((N, H * Wp, cout_p), _ACT),
            jax.ShapeDtypeStruct((N, n_tiles, 2, cout_p), jnp.float32),
        ],
        scratch_shapes=[
            pltpu.VMEM(((TH + 2) * Wp + 2 * _GUARD, cin_p), _ACT),   # padded slab
            pltpu.VMEM(((TH + 2) * Wp, 3 * cin_p), _ACT),            # kx-folded slab
        ],
        compiler_params=pltpu.CompilerParams(
            dimension_semantics=("parallel", "parallel"),
            vmem_limit_bytes=vmem_limit),
        cost_estimate=cost,
    )(scale, shift, w_fold, x_flat, x_flat, x_flat)
    return y, st


def _bn_relu_crop_call(y_flat, scale, shift, *, N, H, W, Wp, TH, cout_p, cout,
                       vmem_limit):
    n_tiles = H // TH
    kernel = functools.partial(_bn_relu_crop_kernel, TH=TH, Wp=Wp, W=W,
                               cout_p=cout_p, cout=cout)
    return pl.pallas_call(
        kernel,
        grid=(N, n_tiles),
        in_specs=[pl.BlockSpec((1, cout_p), lambda n, i: (0, 0)),
                  pl.BlockSpec((1, cout_p), lambda n, i: (0, 0)),
                  pl.BlockSpec((1, TH * Wp, cout_p), lambda n, i: (n, i, 0))],
        out_specs=pl.BlockSpec((1, TH, W, cout), lambda n, i: (n, i, 0, 0)),
        out_shape=jax.ShapeDtypeStruct((N, H, W, cout), jnp.float32),
        compiler_params=pltpu.CompilerParams(
            dimension_semantics=("parallel", "parallel"),
            vmem_limit_bytes=vmem_limit),
    )(scale, shift, y_flat)


# --------------------------------------------------------------------------- #
# Parameter prep / BN finalize / tiling (tiny plain-JAX & python glue)
# --------------------------------------------------------------------------- #
def _fold_weight(w, cin_p, cout_p):
    # (Cout, Cin, 3, 3) -> (3, 3*cin_p, cout_p) bf16; row index = kx*cin_p + cin.
    cout, cin = int(w.shape[0]), int(w.shape[1])
    wt = jnp.transpose(w.astype(jnp.float32), (2, 3, 1, 0))   # (ky, kx, cin, cout)
    wt = jnp.pad(wt, ((0, 0), (0, 0), (0, cin_p - cin), (0, cout_p - cout)))
    return wt.reshape(3, 3 * cin_p, cout_p).astype(_ACT)


def _finalize_bn(stats, gamma, beta, cp, count):
    s = jnp.sum(stats, axis=(0, 1))                     # (2, cp): [sum, sumsq]
    mean = s[0] / count
    var = jnp.maximum(s[1] / count - mean * mean, 0.0)  # biased batch variance
    g = jnp.pad(gamma.astype(jnp.float32), (0, cp - gamma.shape[0]))
    b = jnp.pad(beta.astype(jnp.float32), (0, cp - beta.shape[0]))
    scale = g * jax.lax.rsqrt(var + _EPS)
    shift = b - mean * scale
    return scale.reshape(1, cp), shift.reshape(1, cp)


def _vmem_capacity_bytes():
    try:
        return int(pltpu.get_tpu_info().vmem_capacity_bytes)
    except Exception:
        return 128 << 20            # v5e/v6e physical VMEM as a fallback


def _per_step_vmem_bytes(TH, Wp, cin_p, cout_p):
    a = 2                                       # bf16 bytes
    rows_out, rows_pad = TH * Wp, (TH + 2) * Wp
    dma = (2 * rows_out * cin_p * a             # main input tile (double buffered)
           + 2 * 2 * Wp * cin_p * a             # top/bottom halo rows
           + 2 * 9 * cin_p * cout_p * a         # folded weights
           + 2 * 2 * cin_p * 4                  # BN scale/shift
           + 2 * rows_out * cout_p * a          # conv output tile
           + 2 * 2 * cout_p * 4)                # BN partial stats
    scratch = (rows_pad + 2 * _GUARD) * cin_p * a + rows_pad * 3 * cin_p * a
    live = 2 * rows_out * cout_p * 4 + rows_out * cin_p * 4   # acc/yz + f32 prep
    return dma + scratch + live


def _pick_tile_h(H, Wp, chan_pairs, budget):
    best = 1
    for th in range(1, H + 1):
        if H % th:
            continue
        need = max(_per_step_vmem_bytes(th, Wp, ci, co) for ci, co in chan_pairs)
        if need <= budget:
            best = th
    return best


# --------------------------------------------------------------------------- #
# Public forward
# --------------------------------------------------------------------------- #
def double_conv_nhwc(x_nhwc, params, *, tile_h=None):
    """DoubleConv forward, NHWC in / NHWC out (the transpose-free fast path)."""
    N, H, W, Cin = (int(d) for d in x_nhwc.shape)
    Cmid = int(params["w1"].shape[0])
    Cout = int(params["w2"].shape[0])

    cin_p = _round_up(Cin, _LANE)
    cmid_p = _round_up(Cmid, _LANE)
    cout_p = _round_up(Cout, _LANE)
    Wp = _round_up(W + 2, _SUB)

    cap = _vmem_capacity_bytes()
    budget = min(cap * 3 // 8, 48 << 20)     # ~48 MiB on 128-MiB parts, ~24 MiB on v7x
    chan_pairs = ((cin_p, cmid_p), (cmid_p, cout_p))
    TH = tile_h if tile_h is not None else _pick_tile_h(H, Wp, chan_pairs, budget)
    assert H % TH == 0, f"tile_h={TH} must divide H={H}"
    need = max(_per_step_vmem_bytes(TH, Wp, ci, co) for ci, co in chan_pairs)
    vmem_limit = int(min(cap * 3 // 4, max(need + (8 << 20), budget + (16 << 20))))

    # Zero-pad W (1 col left, Wp-W-1 right) + channels to lane width, cast bf16.
    # TODO(synk): fuse this pad/cast into conv1's input read to drop one HBM pass.
    xt = jnp.pad(x_nhwc.astype(_ACT),
                 ((0, 0), (0, 0), (1, Wp - W - 1), (0, cin_p - Cin)))
    x_flat = xt.reshape(N, H * Wp, cin_p)

    w1 = _fold_weight(params["w1"], cin_p, cmid_p)
    w2 = _fold_weight(params["w2"], cmid_p, cout_p)

    # Conv biases (b1/b2) are intentionally unused: a per-channel constant
    # added before training-mode BatchNorm is exactly cancelled by the mean
    # subtraction. (They must be restored if eval-mode/running-stats BN is used.)
    zero_aff = jnp.zeros((1, cin_p), jnp.float32)
    count = N * H * W

    # conv1 (+ partial BN1 stats)
    y1, st1 = _conv_call(x_flat, w1, zero_aff, zero_aff, fused=False,
                         N=N, H=H, W=W, Wp=Wp, TH=TH,
                         cin_p=cin_p, cout_p=cmid_p, vmem_limit=vmem_limit)
    sc1, sh1 = _finalize_bn(st1, params["g1"], params["be1"], cmid_p, count)

    # BN1 + ReLU fused into conv2's input read; conv2 (+ partial BN2 stats)
    y2, st2 = _conv_call(y1, w2, sc1, sh1, fused=True,
                         N=N, H=H, W=W, Wp=Wp, TH=TH,
                         cin_p=cmid_p, cout_p=cout_p, vmem_limit=vmem_limit)
    sc2, sh2 = _finalize_bn(st2, params["g2"], params["be2"], cout_p, count)

    # Final BN2 + ReLU with the W-/channel-crop fused into the store.
    return _bn_relu_crop_call(y2, sc2, sh2, N=N, H=H, W=W, Wp=Wp, TH=TH,
                              cout_p=cout_p, cout=Cout, vmem_limit=vmem_limit)


def double_conv(x_nchw, params, *, tile_h=None):
    """PyTorch-layout adapter: NCHW in -> NCHW out.

    Prefer double_conv_nhwc inside an NHWC model: the two transposes here are
    full HBM passes outside the kernels and exist only for layout parity.
    """
    out = double_conv_nhwc(jnp.transpose(x_nchw, (0, 2, 3, 1)), params,
                           tile_h=tile_h)
    return jnp.transpose(out, (0, 3, 1, 2))


# --------------------------------------------------------------------------- #
# Pure-JAX reference (PyTorch DoubleConv, training-mode BN)
# --------------------------------------------------------------------------- #
def _reference(x, p):
    def block(x, w, b, g, be):
        y = jax.lax.conv_general_dilated(
            x, w, window_strides=(1, 1), padding="SAME",
            dimension_numbers=("NCHW", "OIHW", "NCHW"))
        y = y + b.reshape(1, -1, 1, 1)
        mean = jnp.mean(y, axis=(0, 2, 3), keepdims=True)
        var = jnp.mean((y - mean) ** 2, axis=(0, 2, 3), keepdims=True)
        y = (y - mean) * jax.lax.rsqrt(var + _EPS)
        y = y * g.reshape(1, -1, 1, 1) + be.reshape(1, -1, 1, 1)
        return jnp.maximum(y, 0.0)

    y = block(x, p["w1"], p["b1"], p["g1"], p["be1"])
    return block(y, p["w2"], p["b2"], p["g2"], p["be2"])


if __name__ == "__main__":
    key = jax.random.PRNGKey(0)
    k = jax.random.split(key, 9)
    N, Cin, Cout, H, W = 2, 4, 8, 16, 16

    x = jax.random.normal(k[0], (N, Cin, H, W), jnp.float32)
    params = {
        "w1": 0.2 * jax.random.normal(k[1], (Cout, Cin, 3, 3), jnp.float32),
        "b1": 0.1 * jax.random.normal(k[2], (Cout,), jnp.float32),
        "g1": 1.0 + 0.1 * jax.random.normal(k[3], (Cout,), jnp.float32),
        "be1": 0.1 * jax.random.normal(k[4], (Cout,), jnp.float32),
        "w2": 0.2 * jax.random.normal(k[5], (Cout, Cout, 3, 3), jnp.float32),
        "b2": 0.1 * jax.random.normal(k[6], (Cout,), jnp.float32),
        "g2": 1.0 + 0.1 * jax.random.normal(k[7], (Cout,), jnp.float32),
        "be2": 0.1 * jax.random.normal(k[8], (Cout,), jnp.float32),
    }

    # tile_h=8 -> two H-tiles per image, exercising the halo path.
    fwd = jax.jit(lambda xx, pp: double_conv(xx, pp, tile_h=8))
    out = jax.block_until_ready(fwd(x, params))
    ref = jax.block_until_ready(_reference(x, params))

    assert out.shape == (N, Cout, H, W), out.shape
    # bf16 MXU operands + bf16 HBM intermediates -> slightly looser tolerance.
    err = float(jnp.max(jnp.abs(out - ref)))
    assert err < 5e-2, f"max abs diff too large: {err}"
    print("KERNEL_OK")
</pallas_src>

<mosaic_0001>
module attributes {stable_mosaic.version = 11 : i64} {
  func.func @_conv3x3_kernel(%arg0: i32, %arg1: i32, %arg2: memref<1x128xf32, #tpu.memory_space<vmem>>, %arg3: memref<1x128xf32, #tpu.memory_space<vmem>>, %arg4: memref<3x384x128xbf16, #tpu.memory_space<vmem>>, %arg5: memref<1x256x128xbf16, #tpu.memory_space<vmem>>, %arg6: memref<1x32x128xbf16, #tpu.memory_space<vmem>>, %arg7: memref<1x32x128xbf16, #tpu.memory_space<vmem>>, %arg8: memref<1x256x128xbf16, #tpu.memory_space<vmem>>, %arg9: memref<1x1x2x128xf32, #tpu.memory_space<vmem>>, %arg10: memref<352x128xbf16, #tpu.memory_space<vmem>>, %arg11: memref<320x384xbf16, #tpu.memory_space<vmem>>) attributes {dimension_semantics = [#tpu.dimension_semantics<parallel>, #tpu.dimension_semantics<parallel>], iteration_bounds = array<i64: 2, 2>, scalar_prefetch = 0 : i64, scratch_operands = 2 : i64, tpu.core_type = #tpu.core_type<tc>, window_params = [{pipeline_mode = #tpu.pipeline_mode<synchronous>, transform_indices = @transform_0, window_bounds = array<i64: 1, 128>}, {pipeline_mode = #tpu.pipeline_mode<synchronous>, transform_indices = @transform_1, window_bounds = array<i64: 1, 128>}, {pipeline_mode = #tpu.pipeline_mode<synchronous>, transform_indices = @transform_2, window_bounds = array<i64: 3, 384, 128>}, {transform_indices = @transform_3, window_bounds = array<i64: 1, 256, 128>}, {transform_indices = @transform_4, window_bounds = array<i64: 1, 32, 128>}, {transform_indices = @transform_5, window_bounds = array<i64: 1, 32, 128>}, {transform_indices = @transform_6, window_bounds = array<i64: 1, 256, 128>}, {transform_indices = @transform_7, window_bounds = array<i64: 1, 1, 2, 128>}]} {
    %0 = tpu.iota {dimensions = array<i32: 0>} : vector<256x1xi32>
    %c32_i32 = arith.constant 32 : i32
    %c0_i32 = arith.constant 0 : i32
    %1 = arith.cmpi eq, %c32_i32, %c0_i32 : i32
    %c1_i32 = arith.constant 1 : i32
    %2 = arith.select %1, %c1_i32, %c32_i32 : i32
    %3 = vector.broadcast %2 : i32 to vector<256x1xi32>
    %4 = arith.remsi %0, %3 : vector<256x1xi32>
    %c0_i32_0 = arith.constant 0 : i32
    %5 = vector.broadcast %c0_i32_0 : i32 to vector<256x1xi32>
    %6 = arith.cmpi ne, %4, %5 : vector<256x1xi32>
    %c0_i32_1 = arith.constant 0 : i32
    %7 = vector.broadcast %c0_i32_1 : i32 to vector<256x1xi32>
    %8 = arith.cmpi slt, %4, %7 : vector<256x1xi32>
    %c0_i32_2 = arith.constant 0 : i32
    %9 = arith.cmpi slt, %2, %c0_i32_2 : i32
    %10 = vector.broadcast %9 : i1 to vector<256x1xi1>
    %11 = vector.broadcast %10 : vector<256x1xi1> to vector<256x1xi1>
    %12 = arith.xori %8, %11 : vector<256x1xi1>
    %13 = arith.andi %12, %6 : vector<256x1xi1>
    %14 = vector.broadcast %2 : i32 to vector<256x1xi32>
    %15 = arith.addi %4, %14 : vector<256x1xi32>
    %16 = arith.select %13, %15, %4 : vector<256x1xi1>, vector<256x1xi32>
    %c1_i32_3 = arith.constant 1 : i32
    %17 = vector.broadcast %c1_i32_3 : i32 to vector<256x1xi32>
    %18 = arith.cmpi sge, %16, %17 : vector<256x1xi32>
    %c16_i32 = arith.constant 16 : i32
    %19 = vector.broadcast %c16_i32 : i32 to vector<256x1xi32>
    %20 = arith.cmpi sle, %16, %19 : vector<256x1xi32>
    %21 = arith.andi %18, %20 : vector<256x1xi1>
    %c0_i32_4 = arith.constant 0 : i32
    %22 = arith.cmpi sgt, %arg1, %c0_i32_4 : i32
    %c1_i32_5 = arith.constant 1 : i32
    %23 = arith.cmpi slt, %arg1, %c1_i32_5 : i32
    %c0 = arith.constant 0 : index
    %c0_6 = arith.constant 0 : index
    %c0_7 = arith.constant 0 : index
    %24 = vector.load %arg5[%c0, %c0_6, %c0_7] : memref<1x256x128xbf16, #tpu.memory_space<vmem>>, vector<1x256x128xbf16>
    %25 = vector.shape_cast %24 : vector<1x256x128xbf16> to vector<256x128xbf16>
    %c48 = arith.constant 48 : index
    %c0_8 = arith.constant 0 : index
    %26 = vector.load %arg10[%c48, %c0_8] : memref<352x128xbf16, #tpu.memory_space<vmem>>, vector<256x128xbf16>
    tpu.vector_store %arg10[%c48, %c0_8], %25 {strides = array<i32>} : memref<352x128xbf16, #tpu.memory_space<vmem>>, vector<256x128xbf16>,
    %c0_9 = arith.constant 0 : index
    %c0_10 = arith.constant 0 : index
    %c0_11 = arith.constant 0 : index
    %27 = vector.load %arg6[%c0_9, %c0_10, %c0_11] : memref<1x32x128xbf16, #tpu.memory_space<vmem>>, vector<1x32x128xbf16>
    %28 = vector.shape_cast %27 : vector<1x32x128xbf16> to vector<32x128xbf16>
    %cst = arith.constant 0.000000e+00 : bf16
    %29 = vector.broadcast %cst : bf16 to vector<32x128xbf16>
    %30 = arith.select %22, %28, %29 : vector<32x128xbf16>
    %c16 = arith.constant 16 : index
    %c0_12 = arith.constant 0 : index
    %31 = vector.load %arg10[%c16, %c0_12] : memref<352x128xbf16, #tpu.memory_space<vmem>>, vector<32x128xbf16>
    tpu.vector_store %arg10[%c16, %c0_12], %30 {strides = array<i32>} : memref<352x128xbf16, #tpu.memory_space<vmem>>, vector<32x128xbf16>,
    %c0_13 = arith.constant 0 : index
    %c0_14 = arith.constant 0 : index
    %c0_15 = arith.constant 0 : index
    %32 = vector.load %arg7[%c0_13, %c0_14, %c0_15] : memref<1x32x128xbf16, #tpu.memory_space<vmem>>, vector<1x32x128xbf16>
    %33 = vector.shape_cast %32 : vector<1x32x128xbf16> to vector<32x128xbf16>
    %cst_16 = arith.constant 0.000000e+00 : bf16
    %34 = vector.broadcast %cst_16 : bf16 to vector<32x128xbf16>
    %35 = arith.select %23, %33, %34 : vector<32x128xbf16>
    %c304 = arith.constant 304 : index
    %c0_17 = arith.constant 0 : index
    %36 = vector.load %arg10[%c304, %c0_17] : memref<352x128xbf16, #tpu.memory_space<vmem>>, vector<32x128xbf16>
    tpu.vector_store %arg10[%c304, %c0_17], %35 {strides = array<i32>} : memref<352x128xbf16, #tpu.memory_space<vmem>>, vector<32x128xbf16>,
    %cst_18 = arith.constant 0.000000e+00 : bf16
    %37 = vector.broadcast %cst_18 : bf16 to vector<1x128xbf16>
    %c15 = arith.constant 15 : index
    %c0_19 = arith.constant 0 : index
    %38 = vector.load %arg10[%c15, %c0_19] : memref<352x128xbf16, #tpu.memory_space<vmem>>, vector<1x128xbf16>
    tpu.vector_store %arg10[%c15, %c0_19], %37 {strides = array<i32>} : memref<352x128xbf16, #tpu.memory_space<vmem>>, vector<1x128xbf16>,
    %c336 = arith.constant 336 : index
    %c0_20 = arith.constant 0 : index
    %39 = vector.load %arg10[%c336, %c0_20] : memref<352x128xbf16, #tpu.memory_space<vmem>>, vector<1x128xbf16>
    tpu.vector_store %arg10[%c336, %c0_20], %37 {strides = array<i32>} : memref<352x128xbf16, #tpu.memory_space<vmem>>, vector<1x128xbf16>,
    %c15_21 = arith.constant 15 : index
    %c0_22 = arith.constant 0 : index
    %40 = vector.load %arg10[%c15_21, %c0_22] : memref<352x128xbf16, #tpu.memory_space<vmem>>, vector<320x128xbf16>
    %c0_23 = arith.constant 0 : index
    %c0_24 = arith.constant 0 : index
    %41 = vector.load %arg11[%c0_23, %c0_24] : memref<320x384xbf16, #tpu.memory_space<vmem>>, vector<320x128xbf16>
    tpu.vector_store %arg11[%c0_23, %c0_24], %40 {strides = array<i32>} : memref<320x384xbf16, #tpu.memory_space<vmem>>, vector<320x128xbf16>,
    %c16_25 = arith.constant 16 : index
    %c0_26 = arith.constant 0 : index
    %42 = vector.load %arg10[%c16_25, %c0_26] : memref<352x128xbf16, #tpu.memory_space<vmem>>, vector<320x128xbf16>
    %c0_27 = arith.constant 0 : index
    %c128 = arith.constant 128 : index
    %43 = vector.load %arg11[%c0_27, %c128] : memref<320x384xbf16, #tpu.memory_space<vmem>>, vector<320x128xbf16>
    tpu.vector_store %arg11[%c0_27, %c128], %42 {strides = array<i32>} : memref<320x384xbf16, #tpu.memory_space<vmem>>, vector<320x128xbf16>,
    %c17 = arith.constant 17 : index
    %c0_28 = arith.constant 0 : index
    %44 = vector.load %arg10[%c17, %c0_28] : memref<352x128xbf16, #tpu.memory_space<vmem>>, vector<320x128xbf16>
    %c0_29 = arith.constant 0 : index
    %c256 = arith.constant 256 : index
    %45 = vector.load %arg11[%c0_29, %c256] : memref<320x384xbf16, #tpu.memory_space<vmem>>, vector<320x128xbf16>
    tpu.vector_store %arg11[%c0_29, %c256], %44 {strides = array<i32>} : memref<320x384xbf16, #tpu.memory_space<vmem>>, vector<320x128xbf16>,
    %c0_30 = arith.constant 0 : index
    %c0_31 = arith.constant 0 : index
    %46 = vector.load %arg11[%c0_30, %c0_31] : memref<320x384xbf16, #tpu.memory_space<vmem>>, vector<256x384xbf16>
    %c0_32 = arith.constant 0 : index
    %c0_33 = arith.constant 0 : index
    %c0_34 = arith.constant 0 : index
    %47 = vector.load %arg4[%c0_32, %c0_33, %c0_34] : memref<3x384x128xbf16, #tpu.memory_space<vmem>>, vector<1x384x128xbf16>
    %48 = vector.shape_cast %47 : vector<1x384x128xbf16> to vector<384x128xbf16>
    %cst_35 = arith.constant dense<0.000000e+00> : vector<256x128xf32>
    %49 = tpu.matmul %46, %48, %cst_35 {dimension_numbers = #tpu.dot_dimension_numbers<[1], [0], [0], [1], [0, 0, 1, 1], [], []>} : vector<256x384xbf16>, vector<384x128xbf16>, vector<256x128xf32> -> vector<256x128xf32>
    %c32 = arith.constant 32 : index
    %c0_36 = arith.constant 0 : index
    %50 = vector.load %arg11[%c32, %c0_36] : memref<320x384xbf16, #tpu.memory_space<vmem>>, vector<256x384xbf16>
    %c1 = arith.constant 1 : index
    %c0_37 = arith.constant 0 : index
    %c0_38 = arith.constant 0 : index
    %51 = vector.load %arg4[%c1, %c0_37, %c0_38] : memref<3x384x128xbf16, #tpu.memory_space<vmem>>, vector<1x384x128xbf16>
    %52 = vector.shape_cast %51 : vector<1x384x128xbf16> to vector<384x128xbf16>
    %cst_39 = arith.constant dense<0.000000e+00> : vector<256x128xf32>
    %53 = tpu.matmul %50, %52, %cst_39 {dimension_numbers = #tpu.dot_dimension_numbers<[1], [0], [0], [1], [0, 0, 1, 1], [], []>} : vector<256x384xbf16>, vector<384x128xbf16>, vector<256x128xf32> -> vector<256x128xf32>
    %54 = arith.addf %49, %53 : vector<256x128xf32>
    %c64 = arith.constant 64 : index
    %c0_40 = arith.constant 0 : index
    %55 = vector.load %arg11[%c64, %c0_40] : memref<320x384xbf16, #tpu.memory_space<vmem>>, vector<256x384xbf16>
    %c2 = arith.constant 2 : index
    %c0_41 = arith.constant 0 : index
    %c0_42 = arith.constant 0 : index
    %56 = vector.load %arg4[%c2, %c0_41, %c0_42] : memref<3x384x128xbf16, #tpu.memory_space<vmem>>, vector<1x384x128xbf16>
    %57 = vector.shape_cast %56 : vector<1x384x128xbf16> to vector<384x128xbf16>
    %cst_43 = arith.constant dense<0.000000e+00> : vector<256x128xf32>
    %58 = tpu.matmul %55, %57, %cst_43 {dimension_numbers = #tpu.dot_dimension_numbers<[1], [0], [0], [1], [0, 0, 1, 1], [], []>} : vector<256x384xbf16>, vector<384x128xbf16>, vector<256x128xf32> -> vector<256x128xf32>
    %59 = arith.addf %54, %58 : vector<256x128xf32>
    %60 = vector.shape_cast %59 : vector<256x128xf32> to vector<1x256x128xf32>
    %61 = arith.truncf %60 : vector<1x256x128xf32> to vector<1x256x128xbf16>
    %c0_44 = arith.constant 0 : index
    %c0_45 = arith.constant 0 : index
    %c0_46 = arith.constant 0 : index
    %62 = vector.load %arg8[%c0_44, %c0_45, %c0_46] : memref<1x256x128xbf16, #tpu.memory_space<vmem>>, vector<1x256x128xbf16>
    tpu.vector_store %arg8[%c0_44, %c0_45, %c0_46], %61 {strides = array<i32>} : memref<1x256x128xbf16, #tpu.memory_space<vmem>>, vector<1x256x128xbf16>,
    %cst_47 = arith.constant 0.000000e+00 : f32
    %63 = vector.shape_cast %21 : vector<256x1xi1> to vector<256x1xi1>
    %64 = vector.broadcast %63 : vector<256x1xi1> to vector<256x128xi1>
    %65 = vector.broadcast %cst_47 : f32 to vector<256x128xf32>
    %66 = arith.select %64, %59, %65 : vector<256x128xi1>, vector<256x128xf32>
    %cst_48 = arith.constant dense<0.000000e+00> : vector<128xf32>
    %67 = vector.multi_reduction <add>, %66, %cst_48 [0] : vector<256x128xf32> to vector<128xf32>
    %68 = vector.shape_cast %67 : vector<128xf32> to vector<1x128xf32>
    %69 = arith.mulf %66, %66 : vector<256x128xf32>
    %cst_49 = arith.constant dense<0.000000e+00> : vector<128xf32>
    %70 = vector.multi_reduction <add>, %69, %cst_49 [0] : vector<256x128xf32> to vector<128xf32>
    %71 = vector.shape_cast %70 : vector<128xf32> to vector<1x128xf32>
    %72 = tpu.concatenate %68, %71 in 0 : vector<1x128xf32>, vector<1x128xf32> -> vector<2x128xf32>
    %73 = vector.shape_cast %72 : vector<2x128xf32> to vector<1x1x2x128xf32>
    %c0_50 = arith.constant 0 : index
    %c0_51 = arith.constant 0 : index
    %c0_52 = arith.constant 0 : index
    %c0_53 = arith.constant 0 : index
    %74 = vector.load %arg9[%c0_50, %c0_51, %c0_52, %c0_53] : memref<1x1x2x128xf32, #tpu.memory_space<vmem>>, vector<1x1x2x128xf32>
    tpu.vector_store %arg9[%c0_50, %c0_51, %c0_52, %c0_53], %73 {strides = array<i32>} : memref<1x1x2x128xf32, #tpu.memory_space<vmem>>, vector<1x1x2x128xf32>,
    return
  }
  func.func @transform_0(%arg0: i32, %arg1: i32) -> (i32, i32) {
    %c0_i32 = arith.constant 0 : i32
    %c0_i32_0 = arith.constant 0 : i32
    %c0_i32_1 = arith.constant 0 : i32
    return %c0_i32, %c0_i32_0 : i32, i32
  }
  func.func @transform_1(%arg0: i32, %arg1: i32) -> (i32, i32) {
    %c0_i32 = arith.constant 0 : i32
    %c0_i32_0 = arith.constant 0 : i32
    %c0_i32_1 = arith.constant 0 : i32
    return %c0_i32, %c0_i32_0 : i32, i32
  }
  func.func @transform_2(%arg0: i32, %arg1: i32) -> (i32, i32, i32) {
    %c0_i32 = arith.constant 0 : i32
    %c0_i32_0 = arith.constant 0 : i32
    %c0_i32_1 = arith.constant 0 : i32
    %c0_i32_2 = arith.constant 0 : i32
    return %c0_i32, %c0_i32_0, %c0_i32_1 : i32, i32, i32
  }
  func.func @transform_3(%arg0: i32, %arg1: i32) -> (i32, i32, i32) {
    %c0_i32 = arith.constant 0 : i32
    %c0_i32_0 = arith.constant 0 : i32
    return %arg0, %arg1, %c0_i32 : i32, i32, i32
  }
  func.func @transform_4(%arg0: i32, %arg1: i32) -> (i32, i32, i32) {
    %c8_i32 = arith.constant 8 : i32
    %0 = arith.muli %arg1, %c8_i32 : i32
    %c1_i32 = arith.constant 1 : i32
    %1 = arith.subi %0, %c1_i32 : i32
    %c0_i32 = arith.constant 0 : i32
    %2 = arith.maxsi %1, %c0_i32 : i32
    %c0_i32_0 = arith.constant 0 : i32
    %c0_i32_1 = arith.constant 0 : i32
    return %arg0, %2, %c0_i32_0 : i32, i32, i32
  }
  func.func @transform_5(%arg0: i32, %arg1: i32) -> (i32, i32, i32) {
    %c1_i32 = arith.constant 1 : i32
    %0 = arith.addi %arg1, %c1_i32 : i32
    %c8_i32 = arith.constant 8 : i32
    %1 = arith.muli %0, %c8_i32 : i32
    %c15_i32 = arith.constant 15 : i32
    %2 = arith.minsi %1, %c15_i32 : i32
    %c0_i32 = arith.constant 0 : i32
    %c0_i32_0 = arith.constant 0 : i32
    return %arg0, %2, %c0_i32 : i32, i32, i32
  }
  func.func @transform_6(%arg0: i32, %arg1: i32) -> (i32, i32, i32) {
    %c0_i32 = arith.constant 0 : i32
    %c0_i32_0 = arith.constant 0 : i32
    return %arg0, %arg1, %c0_i32 : i32, i32, i32
  }
  func.func @transform_7(%arg0: i32, %arg1: i32) -> (i32, i32, i32, i32) {
    %c0_i32 = arith.constant 0 : i32
    %c0_i32_0 = arith.constant 0 : i32
    %c0_i32_1 = arith.constant 0 : i32
    return %arg0, %arg1, %c0_i32, %c0_i32_0 : i32, i32, i32, i32
  }
}

module attributes {stable_mosaic.version = 11 : i64} {
  func.func @_conv3x3_kernel(%arg0: i32, %arg1: i32, %arg2: memref<1x128xf32, #tpu.memory_space<vmem>>, %arg3: memref<1x128xf32, #tpu.memory_space<vmem>>, %arg4: memref<3x384x128xbf16, #tpu.memory_space<vmem>>, %arg5: memref<1x256x128xbf16, #tpu.memory_space<vmem>>, %arg6: memref<1x32x128xbf16, #tpu.memory_space<vmem>>, %arg7: memref<1x32x128xbf16, #tpu.memory_space<vmem>>, %arg8: memref<1x256x128xbf16, #tpu.memory_space<vmem>>, %arg9: memref<1x1x2x128xf32, #tpu.memory_space<vmem>>, %arg10: memref<352x128xbf16, #tpu.memory_space<vmem>>, %arg11: memref<320x384xbf16, #tpu.memory_space<vmem>>) attributes {dimension_semantics = [#tpu.dimension_semantics<parallel>, #tpu.dimension_semantics<parallel>], iteration_bounds = array<i64: 2, 2>, scalar_prefetch = 0 : i64, scratch_operands = 2 : i64, tpu.core_type = #tpu.core_type<tc>, window_params = [{pipeline_mode = #tpu.pipeline_mode<synchronous>, transform_indices = @transform_0, window_bounds = array<i64: 1, 128>}, {pipeline_mode = #tpu.pipeline_mode<synchronous>, transform_indices = @transform_1, window_bounds = array<i64: 1, 128>}, {pipeline_mode = #tpu.pipeline_mode<synchronous>, transform_indices = @transform_2, window_bounds = array<i64: 3, 384, 128>}, {transform_indices = @transform_3, window_bounds = array<i64: 1, 256, 128>}, {transform_indices = @transform_4, window_bounds = array<i64: 1, 32, 128>}, {transform_indices = @transform_5, window_bounds = array<i64: 1, 32, 128>}, {transform_indices = @transform_6, window_bounds = array<i64: 1, 256, 128>}, {transform_indices = @transform_7, window_bounds = array<i64: 1, 1, 2, 128>}]} {
    %0 = tpu.iota {dimensions = array<i32: 0>} : vector<256x1xi32>
    %c32_i32 = arith.constant 32 : i32
    %c0_i32 = arith.constant 0 : i32
    %1 = arith.cmpi eq, %c32_i32, %c0_i32 : i32
    %c1_i32 = arith.constant 1 : i32
    %2 = arith.select %1, %c1_i32, %c32_i32 : i32
    %3 = vector.broadcast %2 : i32 to vector<256x1xi32>
    %4 = arith.remsi %0, %3 : vector<256x1xi32>
    %c0_i32_0 = arith.constant 0 : i32
    %5 = vector.broadcast %c0_i32_0 : i32 to vector<256x1xi32>
    %6 = arith.cmpi ne, %4, %5 : vector<256x1xi32>
    %c0_i32_1 = arith.constant 0 : i32
    %7 = vector.broadcast %c0_i32_1 : i32 to vector<256x1xi32>
    %8 = arith.cmpi slt, %4, %7 : vector<256x1xi32>
    %c0_i32_2 = arith.constant 0 : i32
    %9 = arith.cmpi slt, %2, %c0_i32_2 : i32
    %10 = vector.broadcast %9 : i1 to vector<256x1xi1>
    %11 = vector.broadcast %10 : vector<256x1xi1> to vector<256x1xi1>
    %12 = arith.xori %8, %11 : vector<256x1xi1>
    %13 = arith.andi %12, %6 : vector<256x1xi1>
    %14 = vector.broadcast %2 : i32 to vector<256x1xi32>
    %15 = arith.addi %4, %14 : vector<256x1xi32>
    %16 = arith.select %13, %15, %4 : vector<256x1xi1>, vector<256x1xi32>
    %c1_i32_3 = arith.constant 1 : i32
    %17 = vector.broadcast %c1_i32_3 : i32 to vector<256x1xi32>
    %18 = arith.cmpi sge, %16, %17 : vector<256x1xi32>
    %c16_i32 = arith.constant 16 : i32
    %19 = vector.broadcast %c16_i32 : i32 to vector<256x1xi32>
    %20 = arith.cmpi sle, %16, %19 : vector<256x1xi32>
    %21 = arith.andi %18, %20 : vector<256x1xi1>
    %c0 = arith.constant 0 : index
    %c0_4 = arith.constant 0 : index
    %22 = vector.load %arg2[%c0, %c0_4] : memref<1x128xf32, #tpu.memory_space<vmem>>, vector<1x128xf32>
    %c0_5 = arith.constant 0 : index
    %c0_6 = arith.constant 0 : index
    %23 = vector.load %arg3[%c0_5, %c0_6] : memref<1x128xf32, #tpu.memory_space<vmem>>, vector<1x128xf32>
    %24 = tpu.iota {dimensions = array<i32: 0>} : vector<32x1xi32>
    %c1_i32_7 = arith.constant 1 : i32
    %25 = vector.broadcast %c1_i32_7 : i32 to vector<32x1xi32>
    %26 = arith.cmpi sge, %24, %25 : vector<32x1xi32>
    %c16_i32_8 = arith.constant 16 : i32
    %27 = vector.broadcast %c16_i32_8 : i32 to vector<32x1xi32>
    %28 = arith.cmpi sle, %24, %27 : vector<32x1xi32>
    %29 = arith.andi %26, %28 : vector<32x1xi1>
    %c0_i32_9 = arith.constant 0 : i32
    %30 = arith.cmpi sgt, %arg1, %c0_i32_9 : i32
    %31 = vector.broadcast %30 : i1 to vector<32x1xi1>
    %32 = arith.andi %29, %31 : vector<32x1xi1>
    %c1_i32_10 = arith.constant 1 : i32
    %33 = arith.cmpi slt, %arg1, %c1_i32_10 : i32
    %34 = vector.broadcast %33 : i1 to vector<32x1xi1>
    %35 = arith.andi %29, %34 : vector<32x1xi1>
    %c0_11 = arith.constant 0 : index
    %c0_12 = arith.constant 0 : index
    %c0_13 = arith.constant 0 : index
    %36 = vector.load %arg5[%c0_11, %c0_12, %c0_13] : memref<1x256x128xbf16, #tpu.memory_space<vmem>>, vector<1x256x128xbf16>
    %37 = vector.shape_cast %36 : vector<1x256x128xbf16> to vector<256x128xbf16>
    %38 = arith.extf %37 : vector<256x128xbf16> to vector<256x128xf32>
    %39 = vector.broadcast %22 : vector<1x128xf32> to vector<256x128xf32>
    %40 = arith.mulf %38, %39 : vector<256x128xf32>
    %41 = vector.broadcast %23 : vector<1x128xf32> to vector<256x128xf32>
    %42 = arith.addf %40, %41 : vector<256x128xf32>
    %cst = arith.constant 0.000000e+00 : f32
    %43 = vector.broadcast %cst : f32 to vector<256x128xf32>
    %44 = arith.maximumf %42, %43 : vector<256x128xf32>
    %cst_14 = arith.constant 0.000000e+00 : f32
    %45 = vector.broadcast %cst_14 : f32 to vector<256x128xf32>
    %46 = vector.shape_cast %21 : vector<256x1xi1> to vector<256x1xi1>
    %47 = vector.broadcast %46 : vector<256x1xi1> to vector<256x128xi1>
    %48 = arith.select %47, %44, %45 : vector<256x128xi1>, vector<256x128xf32>
    %49 = arith.truncf %48 : vector<256x128xf32> to vector<256x128xbf16>
    %c48 = arith.constant 48 : index
    %c0_15 = arith.constant 0 : index
    %50 = vector.load %arg10[%c48, %c0_15] : memref<352x128xbf16, #tpu.memory_space<vmem>>, vector<256x128xbf16>
    tpu.vector_store %arg10[%c48, %c0_15], %49 {strides = array<i32>} : memref<352x128xbf16, #tpu.memory_space<vmem>>, vector<256x128xbf16>,
    %c0_16 = arith.constant 0 : index
    %c0_17 = arith.constant 0 : index
    %c0_18 = arith.constant 0 : index
    %51 = vector.load %arg6[%c0_16, %c0_17, %c0_18] : memref<1x32x128xbf16, #tpu.memory_space<vmem>>, vector<1x32x128xbf16>
    %52 = vector.shape_cast %51 : vector<1x32x128xbf16> to vector<32x128xbf16>
    %53 = arith.extf %52 : vector<32x128xbf16> to vector<32x128xf32>
    %54 = vector.broadcast %22 : vector<1x128xf32> to vector<32x128xf32>
    %55 = arith.mulf %53, %54 : vector<32x128xf32>
    %56 = vector.broadcast %23 : vector<1x128xf32> to vector<32x128xf32>
    %57 = arith.addf %55, %56 : vector<32x128xf32>
    %cst_19 = arith.constant 0.000000e+00 : f32
    %58 = vector.broadcast %cst_19 : f32 to vector<32x128xf32>
    %59 = arith.maximumf %57, %58 : vector<32x128xf32>
    %cst_20 = arith.constant 0.000000e+00 : f32
    %60 = vector.broadcast %cst_20 : f32 to vector<32x128xf32>
    %61 = vector.shape_cast %32 : vector<32x1xi1> to vector<32x1xi1>
    %62 = vector.broadcast %61 : vector<32x1xi1> to vector<32x128xi1>
    %63 = arith.select %62, %59, %60 : vector<32x128xi1>, vector<32x128xf32>
    %64 = arith.truncf %63 : vector<32x128xf32> to vector<32x128xbf16>
    %c16 = arith.constant 16 : index
    %c0_21 = arith.constant 0 : index
    %65 = vector.load %arg10[%c16, %c0_21] : memref<352x128xbf16, #tpu.memory_space<vmem>>, vector<32x128xbf16>
    tpu.vector_store %arg10[%c16, %c0_21], %64 {strides = array<i32>} : memref<352x128xbf16, #tpu.memory_space<vmem>>, vector<32x128xbf16>,
    %c0_22 = arith.constant 0 : index
    %c0_23 = arith.constant 0 : index
    %c0_24 = arith.constant 0 : index
    %66 = vector.load %arg7[%c0_22, %c0_23, %c0_24] : memref<1x32x128xbf16, #tpu.memory_space<vmem>>, vector<1x32x128xbf16>
    %67 = vector.shape_cast %66 : vector<1x32x128xbf16> to vector<32x128xbf16>
    %68 = arith.extf %67 : vector<32x128xbf16> to vector<32x128xf32>
    %69 = vector.broadcast %22 : vector<1x128xf32> to vector<32x128xf32>
    %70 = arith.mulf %68, %69 : vector<32x128xf32>
    %71 = vector.broadcast %23 : vector<1x128xf32> to vector<32x128xf32>
    %72 = arith.addf %70, %71 : vector<32x128xf32>
    %cst_25 = arith.constant 0.000000e+00 : f32
    %73 = vector.broadcast %cst_25 : f32 to vector<32x128xf32>
    %74 = arith.maximumf %72, %73 : vector<32x128xf32>
    %cst_26 = arith.constant 0.000000e+00 : f32
    %75 = vector.broadcast %cst_26 : f32 to vector<32x128xf32>
    %76 = vector.shape_cast %35 : vector<32x1xi1> to vector<32x1xi1>
    %77 = vector.broadcast %76 : vector<32x1xi1> to vector<32x128xi1>
    %78 = arith.select %77, %74, %75 : vector<32x128xi1>, vector<32x128xf32>
    %79 = arith.truncf %78 : vector<32x128xf32> to vector<32x128xbf16>
    %c304 = arith.constant 304 : index
    %c0_27 = arith.constant 0 : index
    %80 = vector.load %arg10[%c304, %c0_27] : memref<352x128xbf16, #tpu.memory_space<vmem>>, vector<32x128xbf16>
    tpu.vector_store %arg10[%c304, %c0_27], %79 {strides = array<i32>} : memref<352x128xbf16, #tpu.memory_space<vmem>>, vector<32x128xbf16>,
    %cst_28 = arith.constant 0.000000e+00 : bf16
    %81 = vector.broadcast %cst_28 : bf16 to vector<1x128xbf16>
    %c15 = arith.constant 15 : index
    %c0_29 = arith.constant 0 : index
    %82 = vector.load %arg10[%c15, %c0_29] : memref<352x128xbf16, #tpu.memory_space<vmem>>, vector<1x128xbf16>
    tpu.vector_store %arg10[%c15, %c0_29], %81 {strides = array<i32>} : memref<352x128xbf16, #tpu.memory_space<vmem>>, vector<1x128xbf16>,
    %c336 = arith.constant 336 : index
    %c0_30 = arith.constant 0 : index
    %83 = vector.load %arg10[%c336, %c0_30] : memref<352x128xbf16, #tpu.memory_space<vmem>>, vector<1x128xbf16>
    tpu.vector_store %arg10[%c336, %c0_30], %81 {strides = array<i32>} : memref<352x128xbf16, #tpu.memory_space<vmem>>, vector<1x128xbf16>,
    %c15_31 = arith.constant 15 : index
    %c0_32 = arith.constant 0 : index
    %84 = vector.load %arg10[%c15_31, %c0_32] : memref<352x128xbf16, #tpu.memory_space<vmem>>, vector<320x128xbf16>
    %c0_33 = arith.constant 0 : index
    %c0_34 = arith.constant 0 : index
    %85 = vector.load %arg11[%c0_33, %c0_34] : memref<320x384xbf16, #tpu.memory_space<vmem>>, vector<320x128xbf16>
    tpu.vector_store %arg11[%c0_33, %c0_34], %84 {strides = array<i32>} : memref<320x384xbf16, #tpu.memory_space<vmem>>, vector<320x128xbf16>,
    %c16_35 = arith.constant 16 : index
    %c0_36 = arith.constant 0 : index
    %86 = vector.load %arg10[%c16_35, %c0_36] : memref<352x128xbf16, #tpu.memory_space<vmem>>, vector<320x128xbf16>
    %c0_37 = arith.constant 0 : index
    %c128 = arith.constant 128 : index
    %87 = vector.load %arg11[%c0_37, %c128] : memref<320x384xbf16, #tpu.memory_space<vmem>>, vector<320x128xbf16>
    tpu.vector_store %arg11[%c0_37, %c128], %86 {strides = array<i32>} : memref<320x384xbf16, #tpu.memory_space<vmem>>, vector<320x128xbf16>,
    %c17 = arith.constant 17 : index
    %c0_38 = arith.constant 0 : index
    %88 = vector.load %arg10[%c17, %c0_38] : memref<352x128xbf16, #tpu.memory_space<vmem>>, vector<320x128xbf16>
    %c0_39 = arith.constant 0 : index
    %c256 = arith.constant 256 : index
    %89 = vector.load %arg11[%c0_39, %c256] : memref<320x384xbf16, #tpu.memory_space<vmem>>, vector<320x128xbf16>
    tpu.vector_store %arg11[%c0_39, %c256], %88 {strides = array<i32>} : memref<320x384xbf16, #tpu.memory_space<vmem>>, vector<320x128xbf16>,
    %c0_40 = arith.constant 0 : index
    %c0_41 = arith.constant 0 : index
    %90 = vector.load %arg11[%c0_40, %c0_41] : memref<320x384xbf16, #tpu.memory_space<vmem>>, vector<256x384xbf16>
    %c0_42 = arith.constant 0 : index
    %c0_43 = arith.constant 0 : index
    %c0_44 = arith.constant 0 : index
    %91 = vector.load %arg4[%c0_42, %c0_43, %c0_44] : memref<3x384x128xbf16, #tpu.memory_space<vmem>>, vector<1x384x128xbf16>
    %92 = vector.shape_cast %91 : vector<1x384x128xbf16> to vector<384x128xbf16>
    %cst_45 = arith.constant dense<0.000000e+00> : vector<256x128xf32>
    %93 = tpu.matmul %90, %92, %cst_45 {dimension_numbers = #tpu.dot_dimension_numbers<[1], [0], [0], [1], [0, 0, 1, 1], [], []>} : vector<256x384xbf16>, vector<384x128xbf16>, vector<256x128xf32> -> vector<256x128xf32>
    %c32 = arith.constant 32 : index
    %c0_46 = arith.constant 0 : index
    %94 = vector.load %arg11[%c32, %c0_46] : memref<320x384xbf16, #tpu.memory_space<vmem>>, vector<256x384xbf16>
    %c1 = arith.constant 1 : index
    %c0_47 = arith.constant 0 : index
    %c0_48 = arith.constant 0 : index
    %95 = vector.load %arg4[%c1, %c0_47, %c0_48] : memref<3x384x128xbf16, #tpu.memory_space<vmem>>, vector<1x384x128xbf16>
    %96 = vector.shape_cast %95 : vector<1x384x128xbf16> to vector<384x128xbf16>
    %cst_49 = arith.constant dense<0.000000e+00> : vector<256x128xf32>
    %97 = tpu.matmul %94, %96, %cst_49 {dimension_numbers = #tpu.dot_dimension_numbers<[1], [0], [0], [1], [0, 0, 1, 1], [], []>} : vector<256x384xbf16>, vector<384x128xbf16>, vector<256x128xf32> -> vector<256x128xf32>
    %98 = arith.addf %93, %97 : vector<256x128xf32>
    %c64 = arith.constant 64 : index
    %c0_50 = arith.constant 0 : index
    %99 = vector.load %arg11[%c64, %c0_50] : memref<320x384xbf16, #tpu.memory_space<vmem>>, vector<256x384xbf16>
    %c2 = arith.constant 2 : index
    %c0_51 = arith.constant 0 : index
    %c0_52 = arith.constant 0 : index
    %100 = vector.load %arg4[%c2, %c0_51, %c0_52] : memref<3x384x128xbf16, #tpu.memory_space<vmem>>, vector<1x384x128xbf16>
    %101 = vector.shape_cast %100 : vector<1x384x128xbf16> to vector<384x128xbf16>
    %cst_53 = arith.constant dense<0.000000e+00> : vector<256x128xf32>
    %102 = tpu.matmul %99, %101, %cst_53 {dimension_numbers = #tpu.dot_dimension_numbers<[1], [0], [0], [1], [0, 0, 1, 1], [], []>} : vector<256x384xbf16>, vector<384x128xbf16>, vector<256x128xf32> -> vector<256x128xf32>
    %103 = arith.addf %98, %102 : vector<256x128xf32>
    %104 = vector.shape_cast %103 : vector<256x128xf32> to vector<1x256x128xf32>
    %105 = arith.truncf %104 : vector<1x256x128xf32> to vector<1x256x128xbf16>
    %c0_54 = arith.constant 0 : index
    %c0_55 = arith.constant 0 : index
    %c0_56 = arith.constant 0 : index
    %106 = vector.load %arg8[%c0_54, %c0_55, %c0_56] : memref<1x256x128xbf16, #tpu.memory_space<vmem>>, vector<1x256x128xbf16>
    tpu.vector_store %arg8[%c0_54, %c0_55, %c0_56], %105 {strides = array<i32>} : memref<1x256x128xbf16, #tpu.memory_space<vmem>>, vector<1x256x128xbf16>,
    %cst_57 = arith.constant 0.000000e+00 : f32
    %107 = vector.shape_cast %21 : vector<256x1xi1> to vector<256x1xi1>
    %108 = vector.broadcast %107 : vector<256x1xi1> to vector<256x128xi1>
    %109 = vector.broadcast %cst_57 : f32 to vector<256x128xf32>
    %110 = arith.select %108, %103, %109 : vector<256x128xi1>, vector<256x128xf32>
    %cst_58 = arith.constant dense<0.000000e+00> : vector<128xf32>
    %111 = vector.multi_reduction <add>, %110, %cst_58 [0] : vector<256x128xf32> to vector<128xf32>
    %112 = vector.shape_cast %111 : vector<128xf32> to vector<1x128xf32>
    %113 = arith.mulf %110, %110 : vector<256x128xf32>
    %cst_59 = arith.constant dense<0.000000e+00> : vector<128xf32>
    %114 = vector.multi_reduction <add>, %113, %cst_59 [0] : vector<256x128xf32> to vector<128xf32>
    %115 = vector.shape_cast %114 : vector<128xf32> to vector<1x128xf32>
    %116 = tpu.concatenate %112, %115 in 0 : vector<1x128xf32>, vector<1x128xf32> -> vector<2x128xf32>
    %117 = vector.shape_cast %116 : vector<2x128xf32> to vector<1x1x2x128xf32>
    %c0_60 = arith.constant 0 : index
    %c0_61 = arith.constant 0 : index
    %c0_62 = arith.constant 0 : index
    %c0_63 = arith.constant 0 : index
    %118 = vector.load %arg9[%c0_60, %c0_61, %c0_62, %c0_63] : memref<1x1x2x128xf32, #tpu.memory_space<vmem>>, vector<1x1x2x128xf32>
    tpu.vector_store %arg9[%c0_60, %c0_61, %c0_62, %c0_63], %117 {strides = array<i32>} : memref<1x1x2x128xf32, #tpu.memory_space<vmem>>, vector<1x1x2x128xf32>,
    return
  }
  func.func @transform_0(%arg0: i32, %arg1: i32) -> (i32, i32) {
    %c0_i32 = arith.constant 0 : i32
    %c0_i32_0 = arith.constant 0 : i32
    %c0_i32_1 = arith.constant 0 : i32
    return %c0_i32, %c0_i32_0 : i32, i32
  }
  func.func @transform_1(%arg0: i32, %arg1: i32) -> (i32, i32) {
    %c0_i32 = arith.constant 0 : i32
    %c0_i32_0 = arith.constant 0 : i32
    %c0_i32_1 = arith.constant 0 : i32
    return %c0_i32, %c0_i32_0 : i32, i32
  }
  func.func @transform_2(%arg0: i32, %arg1: i32) -> (i32, i32, i32) {
    %c0_i32 = arith.constant 0 : i32
    %c0_i32_0 = arith.constant 0 : i32
    %c0_i32_1 = arith.constant 0 : i32
    %c0_i32_2 = arith.constant 0 : i32
    return %c0_i32, %c0_i32_0, %c0_i32_1 : i32, i32, i32
  }
  func.func @transform_3(%arg0: i32, %arg1: i32) -> (i32, i32, i32) {
    %c0_i32 = arith.constant 0 : i32
    %c0_i32_0 = arith.constant 0 : i32
    return %arg0, %arg1, %c0_i32 : i32, i32, i32
  }
  func.func @transform_4(%arg0: i32, %arg1: i32) -> (i32, i32, i32) {
    %c8_i32 = arith.constant 8 : i32
    %0 = arith.muli %arg1, %c8_i32 : i32
    %c1_i32 = arith.constant 1 : i32
    %1 = arith.subi %0, %c1_i32 : i32
    %c0_i32 = arith.constant 0 : i32
    %2 = arith.maxsi %1, %c0_i32 : i32
    %c0_i32_0 = arith.constant 0 : i32
    %c0_i32_1 = arith.constant 0 : i32
    return %arg0, %2, %c0_i32_0 : i32, i32, i32
  }
  func.func @transform_5(%arg0: i32, %arg1: i32) -> (i32, i32, i32) {
    %c1_i32 = arith.constant 1 : i32
    %0 = arith.addi %arg1, %c1_i32 : i32
    %c8_i32 = arith.constant 8 : i32
    %1 = arith.muli %0, %c8_i32 : i32
    %c15_i32 = arith.constant 15 : i32
    %2 = arith.minsi %1, %c15_i32 : i32
    %c0_i32 = arith.constant 0 : i32
    %c0_i32_0 = arith.constant 0 : i32
    return %arg0, %2, %c0_i32 : i32, i32, i32
  }
  func.func @transform_6(%arg0: i32, %arg1: i32) -> (i32, i32, i32) {
    %c0_i32 = arith.constant 0 : i32
    %c0_i32_0 = arith.constant 0 : i32
    return %arg0, %arg1, %c0_i32 : i32, i32, i32
  }
  func.func @transform_7(%arg0: i32, %arg1: i32) -> (i32, i32, i32, i32) {
    %c0_i32 = arith.constant 0 : i32
    %c0_i32_0 = arith.constant 0 : i32
    %c0_i32_1 = arith.constant 0 : i32
    return %arg0, %arg1, %c0_i32, %c0_i32_0 : i32, i32, i32, i32
  }
}

module attributes {stable_mosaic.version = 11 : i64} {
  func.func @_bn_relu_crop_kernel(%arg0: i32, %arg1: i32, %arg2: memref<1x128xf32, #tpu.memory_space<vmem>>, %arg3: memref<1x128xf32, #tpu.memory_space<vmem>>, %arg4: memref<1x256x128xbf16, #tpu.memory_space<vmem>>, %arg5: memref<1x8x16x8xf32, #tpu.memory_space<vmem>>) attributes {dimension_semantics = [#tpu.dimension_semantics<parallel>, #tpu.dimension_semantics<parallel>], iteration_bounds = array<i64: 2, 2>, scalar_prefetch = 0 : i64, scratch_operands = 0 : i64, tpu.core_type = #tpu.core_type<tc>, window_params = [{pipeline_mode = #tpu.pipeline_mode<synchronous>, transform_indices = @transform_0, window_bounds = array<i64: 1, 128>}, {pipeline_mode = #tpu.pipeline_mode<synchronous>, transform_indices = @transform_1, window_bounds = array<i64: 1, 128>}, {transform_indices = @transform_2, window_bounds = array<i64: 1, 256, 128>}, {transform_indices = @transform_3, window_bounds = array<i64: 1, 8, 16, 8>}]} {
    %c0 = arith.constant 0 : index
    %c0_0 = arith.constant 0 : index
    %c0_1 = arith.constant 0 : index
    %0 = vector.load %arg4[%c0, %c0_0, %c0_1] : memref<1x256x128xbf16, #tpu.memory_space<vmem>>, vector<1x256x128xbf16>
    %1 = arith.extf %0 : vector<1x256x128xbf16> to vector<1x256x128xf32>
    %2 = vector.shape_cast %1 : vector<1x256x128xf32> to vector<8x32x128xf32>
    %c0_2 = arith.constant 0 : index
    %c0_3 = arith.constant 0 : index
    %3 = vector.load %arg2[%c0_2, %c0_3] : memref<1x128xf32, #tpu.memory_space<vmem>>, vector<1x128xf32>
    %4 = vector.shape_cast %3 : vector<1x128xf32> to vector<1x1x128xf32>
    %5 = vector.broadcast %4 : vector<1x1x128xf32> to vector<8x32x128xf32>
    %6 = arith.mulf %2, %5 : vector<8x32x128xf32>
    %c0_4 = arith.constant 0 : index
    %c0_5 = arith.constant 0 : index
    %7 = vector.load %arg3[%c0_4, %c0_5] : memref<1x128xf32, #tpu.memory_space<vmem>>, vector<1x128xf32>
    %8 = vector.shape_cast %7 : vector<1x128xf32> to vector<1x1x128xf32>
    %9 = vector.broadcast %8 : vector<1x1x128xf32> to vector<8x32x128xf32>
    %10 = arith.addf %6, %9 : vector<8x32x128xf32>
    %cst = arith.constant 0.000000e+00 : f32
    %11 = vector.broadcast %cst : f32 to vector<8x32x128xf32>
    %12 = arith.maximumf %10, %11 : vector<8x32x128xf32>
    %13 = vector.extract_strided_slice %12 {offsets = [0, 1, 0], sizes = [8, 16, 8], strides = [1, 1, 1]} : vector<8x32x128xf32> to vector<8x16x8xf32>
    %14 = vector.shape_cast %13 : vector<8x16x8xf32> to vector<1x8x16x8xf32>
    %c0_6 = arith.constant 0 : index
    %c0_7 = arith.constant 0 : index
    %c0_8 = arith.constant 0 : index
    %c0_9 = arith.constant 0 : index
    %15 = vector.load %arg5[%c0_6, %c0_7, %c0_8, %c0_9] : memref<1x8x16x8xf32, #tpu.memory_space<vmem>>, vector<1x8x16x8xf32>
    tpu.vector_store %arg5[%c0_6, %c0_7, %c0_8, %c0_9], %14 {strides = array<i32>} : memref<1x8x16x8xf32, #tpu.memory_space<vmem>>, vector<1x8x16x8xf32>,
    return
  }
  func.func @transform_0(%arg0: i32, %arg1: i32) -> (i32, i32) {
    %c0_i32 = arith.constant 0 : i32
    %c0_i32_0 = arith.constant 0 : i32
    %c0_i32_1 = arith.constant 0 : i32
    return %c0_i32, %c0_i32_0 : i32, i32
  }
  func.func @transform_1(%arg0: i32, %arg1: i32) -> (i32, i32) {
    %c0_i32 = arith.constant 0 : i32
    %c0_i32_0 = arith.constant 0 : i32
    %c0_i32_1 = arith.constant 0 : i32
    return %c0_i32, %c0_i32_0 : i32, i32
  }
  func.func @transform_2(%arg0: i32, %arg1: i32) -> (i32, i32, i32) {
    %c0_i32 = arith.constant 0 : i32
    %c0_i32_0 = arith.constant 0 : i32
    return %arg0, %arg1, %c0_i32 : i32, i32, i32
  }
  func.func @transform_3(%arg0: i32, %arg1: i32) -> (i32, i32, i32, i32) {
    %c0_i32 = arith.constant 0 : i32
    %c0_i32_0 = arith.constant 0 : i32
    %c0_i32_1 = arith.constant 0 : i32
    return %arg0, %arg1, %c0_i32, %c0_i32_0 : i32, i32, i32, i32
  }
}

</mosaic_0001>

<llo_original>
// kernel: _lambda_.5
$region0: #{_lambda_.5}
  #allocation0 [shape = 'u32[]', space=smem, size = 0x4, offset = 0x4, fixed_abs, tag = 'smem constant byte address 0x4 - core index']
  #allocation1 [shape = 'u32[144,128]{1,0:T(1,128)}', space=vmem, size = 0x12000, scoped, tag = 'internal scratch']
  %s0 = inlined_call_operand.hbm [shape: f32[1,128], index: 0, kind: input, shape index: {}]
  %s1 = inlined_call_operand.hbm [shape: f32[1,128], index: 1, kind: input, shape index: {}]
  %s2 = inlined_call_operand.hbm [shape: bf16[2,512,128], index: 2, kind: input, shape index: {}]
  %s3 = inlined_call_operand.hbm [shape: f32[2,16,16,8], index: 3, kind: output, shape index: {}]
  %s4 = sld [smem:[#allocation0]]
  $region57: #{_lambda_.5} parent=0
    _
  %s6 = ssub.s32 1, %s4
  %s7 = scalar_select 0, %s6, %s4
  $region1: #{_lambda_.5} parent=0
    #allocation2 [shape = 'u8[512]{0}', space=vmem, size = 0x400, scoped, tag = 'input window, operand 0, single buffered']
    #allocation3 [shape = 's32[2]{0}', space=sflag, size = 0x8, scoped, tag = 'scoped memory for _lambda_.5']
    #allocation4 [shape = 's32[2]{0}', space=sflag, size = 0x8, scoped, tag = 'scoped memory for _lambda_.5']
    #allocation5 [shape = 'u8[512]{0}', space=vmem, size = 0x400, scoped, tag = 'input window, operand 1, single buffered']
    #allocation6 [shape = 's32[1]{0}', space=sflag, size = 0x4, scoped, tag = 'scoped memory for _lambda_.5']
    #allocation7 [shape = 'u8[131072]{0}', space=vmem, size = 0x20000, scoped, tag = 'input window, operand 2']
    #allocation8 [shape = 'u8[131072]{0}', space=vmem, size = 0x20000, scoped, tag = 'output window, operand 0']
    %8 = vsyncpa [#allocation3], 0
    %9 = vsyncpa [#allocation6], 0
    %10 = vsyncpa [#allocation4], 0
    %s11 = scalar_lea.sflag [#allocation4], 1
    %12 = vsyncpa %s11, 0
    loop: start=0, step=1, limit=6
    $region2: #{_lambda_.5} parent=1 // loop_pre_header
      _
    $region3: #{_lambda_.5} parent=1 // loop_header
      %s14 = sphi 0, %s18
      %p15 = scmp.ge.s32.totalorder %s14, 6
      %s21 = sphi 0, %s33
      %s22 = sphi 0, %s29
      %s23 = sphi 0, %s21
      %s24 = sphi 0, %s22
      %s25 = sphi 0, %s23
      %s26 = sphi 0, %s24
      %s34 = sphi 0, %s34
      %s36 = sphi 0, %s34
      %s37 = sphi 0, %s36
      %s51 = sphi 0, %s37
      %s55 = sphi 0, %s55
      %s57 = sphi 0, %s55
      %s58 = sphi 0, %s57
      %s72 = sphi 0, %s58
      %s80 = sphi 0, %s82
      %s83 = sphi 0, %s80
      %s84 = sphi 0, %s83
      %s100 = sphi 0, %s84
      %s108 = sphi 0, %s110
      %s111 = sphi 0, %s108
      %s112 = sphi 0, %s111
      %s128 = sphi 0, %s112
    $region4: #{_lambda_.5} parent=1 // loop_header_branch
      %17 = sbr.rel (%p15) target = $region8
    $region5: #{_lambda_.5} parent=1 // loop_body
      %s19 = ssub.s32 %s14, 1
      %s20 = ssub.s32 %s14, 2
      %s27 = sadd.s32 1, %s22
      %p28 = scmp.ge.s32.totalorder %s27, 2
      %s29 = scalar_select %p28, 0, %s27
      %s30 = sadd.s32 1, %s21
      %s31 = scalar_select %p28, %s30, %s21
      %p32 = scmp.ge.s32.totalorder %s31, 2
      %s33 = scalar_select %p32, 0, %s31
      %s35 = sadd.s32 %s34, 1
      %p38 = scmp.eq.s32.totalorder %s14, 3
      %p39 = scmp.ne.s32.totalorder %s34, %s36
      %p40 = scmp.eq.s32.totalorder %s14, 0
      %p41 = por %p39, %p40
      %p42 = scmp.ne.s32.totalorder %s34, %s36
      %p43 = scmp.eq.s32.totalorder %s19, 3
      %p44 = por %p42, %p43
      %p45 = scmp.ne.s32.totalorder %s36, %s37
      %p46 = scmp.eq.s32.totalorder %s19, 0
      %p47 = por %p45, %p46
      %p48 = scmp.ne.s32.totalorder %s36, %s37
      %p49 = scmp.eq.s32.totalorder %s20, 3
      %p50 = por %p48, %p49
      %p52 = scmp.ne.s32.totalorder %s37, %s51
      %p53 = scmp.eq.s32.totalorder %s20, 0
      %p54 = por %p52, %p53
      %s56 = sadd.s32 %s55, 1
      %p59 = scmp.eq.s32.totalorder %s14, 3
      %p60 = scmp.ne.s32.totalorder %s55, %s57
      %p61 = scmp.eq.s32.totalorder %s14, 0
      %p62 = por %p60, %p61
      %p63 = scmp.ne.s32.totalorder %s55, %s57
      %p64 = scmp.eq.s32.totalorder %s19, 3
      %p65 = por %p63, %p64
      %p66 = scmp.ne.s32.totalorder %s57, %s58
      %p67 = scmp.eq.s32.totalorder %s19, 0
      %p68 = por %p66, %p67
      %p69 = scmp.ne.s32.totalorder %s57, %s58
      %p70 = scmp.eq.s32.totalorder %s20, 3
      %p71 = por %p69, %p70
      %p73 = scmp.ne.s32.totalorder %s58, %s72
      %p74 = scmp.eq.s32.totalorder %s20, 0
      %p75 = por %p73, %p74
      %s76 = ssub.s32 %s21, %s33
      %s77 = ssub.s32 %s22, %s29
      %s78 = sor.u32 %s76, %s77
      %p79 = scmp.eq.s32.totalorder %s78, 0
      %s81 = sadd.s32 %s80, 1
      %s82 = scalar_select %p79, %s80, %s81
      %p85 = pneg %p79
      %p86 = scmp.eq.s32.totalorder %s14, 3
      %p87 = por %p85, %p86
      %p88 = scmp.ne.s32.totalorder %s80, %s83
      %p89 = scmp.eq.s32.totalorder %s14, 0
      %p90 = por %p88, %p89
      %p91 = scmp.ne.s32.totalorder %s80, %s83
      %p92 = scmp.eq.s32.totalorder %s19, 3
      %p93 = por %p91, %p92
      %p94 = scmp.ne.s32.totalorder %s83, %s84
      %p95 = scmp.eq.s32.totalorder %s19, 0
      %p96 = por %p94, %p95
      %p97 = scmp.ne.s32.totalorder %s83, %s84
      %p98 = scmp.eq.s32.totalorder %s20, 3
      %p99 = por %p97, %p98
      %p101 = scmp.ne.s32.totalorder %s84, %s100
      %p102 = scmp.eq.s32.totalorder %s20, 0
      %p103 = por %p101, %p102
      %s104 = ssub.s32 %s21, %s33
      %s105 = ssub.s32 %s22, %s29
      %s106 = sor.u32 %s104, %s105
      %p107 = scmp.eq.s32.totalorder %s106, 0
      %s109 = sadd.s32 %s108, 1
      %s110 = scalar_select %p107, %s108, %s109
      %p113 = pneg %p107
      %p114 = scmp.eq.s32.totalorder %s14, 3
      %p115 = por %p113, %p114
      %p116 = scmp.ne.s32.totalorder %s108, %s111
      %p117 = scmp.eq.s32.totalorder %s14, 0
      %p118 = por %p116, %p117
      %p119 = scmp.ne.s32.totalorder %s108, %s111
      %p120 = scmp.eq.s32.totalorder %s19, 3
      %p121 = por %p119, %p120
      %p122 = scmp.ne.s32.totalorder %s111, %s112
      %p123 = scmp.eq.s32.totalorder %s19, 0
      %p124 = por %p122, %p123
      %p125 = scmp.ne.s32.totalorder %s111, %s112
      %p126 = scmp.eq.s32.totalorder %s20, 3
      %p127 = por %p125, %p126
      %p129 = scmp.ne.s32.totalorder %s112, %s128
      %p130 = scmp.eq.s32.totalorder %s20, 0
      %p131 = por %p129, %p130
      %p132 = scmp.le.s32.totalorder 1, %s14
      %p133 = scmp.lt.s32.totalorder %s14, 5
      %p134 = pnand %p132, %p133
      %p135 = pneg %p134
      // Predicated region
      $region9: #{_lambda_.5} parent=5 // pred_check
        _
      $region10: #{_lambda_.5} parent=5 // pred_check_branch
        %137 = sbr.rel (%p134) target = $region12
      $region11: #{_lambda_.5} parent=5 // pred_region
        %s138 = ssub.s32 %s14, 1
        // Predicated region
        $region13: #{_lambda_.5} parent=11 // pred_check
          %p139 = pneg %p47
        $region14: #{_lambda_.5} parent=11 // pred_check_branch
          %141 = sbr.rel (%p139) target = $region16
        $region15: #{_lambda_.5} parent=11 // pred_region
          %s143 = ssub.s32 16, 16
          %144 = vsyncadd [#allocation3], %s143
          %s146 = sshll.u32 [#allocation2], 4
          %s147 = int_to_ptr.vmem [resolvable:$true] %s146
          %149 = dma.hbm_to_vmem [thread:$0]  %s0, 16, %s147, [#allocation3]
        $region16: #{_lambda_.5} parent=11 // pred_fallthru
          _
        // Predicated region
        $region17: #{_lambda_.5} parent=11 // pred_check
          %p150 = pneg %p68
        $region18: #{_lambda_.5} parent=11 // pred_check_branch
          %152 = sbr.rel (%p150) target = $region20
        $region19: #{_lambda_.5} parent=11 // pred_region
          %s154 = ssub.s32 16, 16
          %155 = vsyncadd [#allocation6], %s154
          %s157 = sshll.u32 [#allocation5], 4
          %s158 = int_to_ptr.vmem [resolvable:$true] %s157
          %160 = dma.hbm_to_vmem [thread:$0]  %s1, 16, %s158, [#allocation6]
        $region20: #{_lambda_.5} parent=11 // pred_fallthru
          _
      $region12: #{_lambda_.5} parent=5 // pred_fallthru
        _
      %p161 = scmp.lt.s32.totalorder %s14, 4
      // Predicated region
      $region21: #{_lambda_.5} parent=5 // pred_check
        %p162 = pneg %p161
      $region22: #{_lambda_.5} parent=5 // pred_check_branch
        %164 = sbr.rel (%p162) target = $region24
      $region23: #{_lambda_.5} parent=5 // pred_region
        // Predicated region
        $region25: #{_lambda_.5} parent=23 // pred_check
          %p165 = pneg %p90
        $region26: #{_lambda_.5} parent=23 // pred_check_branch
          %167 = sbr.rel (%p165) target = $region28
        $region27: #{_lambda_.5} parent=23 // pred_region
          %s168 = sand.u32 %s14, 1
          %s169 = scalar_lea.sflag [#allocation3], %s168
          %s170 = sand.u32 %s80, 1
          %s171 = smul.addr %s170, 128
          %s172 = scalar_lea.vmem [#allocation7], %s171
          %s173 = smul.u32 32, %s22
          %s175 = ssub.s32 2048, 2048
          %176 = vsyncadd %s169, %s175
          %s177 = smul.addr %s21, 64
          %s178 = sadd.s32 %s173, %s177
          %s179 = smul.addr %s178, 64
          %s180 = scalar_lea.hbm %s2, %s179
          %s181 = sshll.u32 %s172, 4
          %s182 = int_to_ptr.vmem [resolvable:$true] %s181
          %187 = dma.hbm_to_vmem [thread:$0]  %s180, 2048, %s182, %s169, 64, 64, 4
        $region28: #{_lambda_.5} parent=23 // pred_fallthru
          _
      $region24: #{_lambda_.5} parent=5 // pred_fallthru
        _
      %p188 = scmp.le.s32.totalorder 1, %s14
      %p189 = scmp.lt.s32.totalorder %s14, 5
      %p190 = pnand %p188, %p189
      %p191 = pneg %p190
      // Predicated region
      $region29: #{_lambda_.5} parent=5 // pred_check
        _
      $region30: #{_lambda_.5} parent=5 // pred_check_branch
        %193 = sbr.rel (%p190) target = $region32
      $region31: #{_lambda_.5} parent=5 // pred_region
        %s194 = ssub.s32 %s14, 1
        // Predicated region
        $region33: #{_lambda_.5} parent=31 // pred_check
          %p195 = pneg %p47
        $region34: #{_lambda_.5} parent=31 // pred_check_branch
          %197 = sbr.rel (%p195) target = $region36
        $region35: #{_lambda_.5} parent=31 // pred_region
          %198 = dma.done [#allocation3], 16
        $region36: #{_lambda_.5} parent=31 // pred_fallthru
          _
        // Predicated region
        $region37: #{_lambda_.5} parent=31 // pred_check
          %p199 = pneg %p68
        $region38: #{_lambda_.5} parent=31 // pred_check_branch
          %201 = sbr.rel (%p199) target = $region40
        $region39: #{_lambda_.5} parent=31 // pred_region
          %202 = dma.done [#allocation6], 16
        $region40: #{_lambda_.5} parent=31 // pred_fallthru
          _
        %s203 = sand.u32 %s19, 1
        %s204 = scalar_lea.sflag [#allocation3], %s203
        %s205 = sand.u32 %s83, 1
        %s206 = smul.addr %s205, 128
        %s207 = scalar_lea.vmem [#allocation7], %s206
        // Predicated region
        $region41: #{_lambda_.5} parent=31 // pred_check
          %p208 = pneg %p96
        $region42: #{_lambda_.5} parent=31 // pred_check_branch
          %210 = sbr.rel (%p208) target = $region44
        $region43: #{_lambda_.5} parent=31 // pred_region
          %211 = dma.done %s204, 2048
        $region44: #{_lambda_.5} parent=31 // pred_fallthru
          _
        %p212 = pneg %p47
        %p213 = pneg %p44
        %p214 = pneg %p68
        %p215 = pneg %p65
        %s216 = sand.u32 %s19, 1
        %s217 = scalar_lea.sflag [#allocation3], %s216
        %s218 = sand.u32 %s83, 1
        %s219 = smul.addr %s218, 128
        %s220 = scalar_lea.vmem [#allocation7], %s219
        %p221 = pneg %p96
        %p222 = pneg %p93
        %p223 = pneg %p124
        %p224 = pneg %p121
        %s225 = sand.u32 %s111, 1
        %s226 = scalar_lea.sflag [#allocation4], %s225
        %s227 = sand.u32 %s111, 1
        %s228 = smul.addr %s227, 128
        %s229 = scalar_lea.vmem [#allocation8], %s228
        %s230 = smul.u32 32, %s24
        %s231 = smul.u32 8, %s24
        %v232 = vld [vmem:[%s207] sm:$0xf]
        %v233 = vld [vmem:[%s207 + $0x4] sm:$0xf]
        %v234 = vld [vmem:[%s207 + $0x8] sm:$0xf]
        %v235 = vld [vmem:[%s207 + $0x10] sm:$0xf]
        %v236 = vld [vmem:[%s207 + $0x14] sm:$0xf]
        %v237 = vld [vmem:[%s207 + $0x18] sm:$0xf]
        %v238 = vld [vmem:[%s207 + $0x20] sm:$0xf]
        %v239 = vld [vmem:[%s207 + $0x24] sm:$0xf]
        %v240 = vld [vmem:[%s207 + $0x28] sm:$0xf]
        %v241 = vld [vmem:[%s207 + $0x30] sm:$0xf]
        %v242 = vld [vmem:[%s207 + $0x34] sm:$0xf]
        %v243 = vld [vmem:[%s207 + $0x38] sm:$0xf]
        %v244 = vld [vmem:[%s207 + $0x40] sm:$0xf]
        %v245 = vld [vmem:[%s207 + $0x44] sm:$0xf]
        %v246 = vld [vmem:[%s207 + $0x48] sm:$0xf]
        %v247 = vld [vmem:[%s207 + $0x50] sm:$0xf]
        %v248 = vld [vmem:[%s207 + $0x54] sm:$0xf]
        %v249 = vld [vmem:[%s207 + $0x58] sm:$0xf]
        %v250 = vld [vmem:[%s207 + $0x60] sm:$0xf]
        %v251 = vld [vmem:[%s207 + $0x64] sm:$0xf]
        %v252 = vld [vmem:[%s207 + $0x68] sm:$0xf]
        %v253 = vld [vmem:[%s207 + $0x70] sm:$0xf]
        %v254 = vld [vmem:[%s207 + $0x74] sm:$0xf]
        %v255 = vld [vmem:[%s207 + $0x78] sm:$0xf]
        %v256 = vunpack.c.l.bf16 %v232
        %v257 = vunpack.c.l.bf16 %v233
        %v258 = vunpack.c.l.bf16 %v234
        %v259 = vunpack.c.l.bf16 %v235
        %v260 = vunpack.c.l.bf16 %v236
        %v261 = vunpack.c.l.bf16 %v237
        %v262 = vunpack.c.l.bf16 %v238
        %v263 = vunpack.c.l.bf16 %v239
        %v264 = vunpack.c.l.bf16 %v240
        %v265 = vunpack.c.l.bf16 %v241
        %v266 = vunpack.c.l.bf16 %v242
        %v267 = vunpack.c.l.bf16 %v243
        %v268 = vunpack.c.l.bf16 %v244
        %v269 = vunpack.c.l.bf16 %v245
        %v270 = vunpack.c.l.bf16 %v246
        %v271 = vunpack.c.l.bf16 %v247
        %v272 = vunpack.c.l.bf16 %v248
        %v273 = vunpack.c.l.bf16 %v249
        %v274 = vunpack.c.l.bf16 %v250
        %v275 = vunpack.c.l.bf16 %v251
        %v276 = vunpack.c.l.bf16 %v252
        %v277 = vunpack.c.l.bf16 %v253
        %v278 = vunpack.c.l.bf16 %v254
        %v279 = vunpack.c.l.bf16 %v255
        %v280 = vld [vmem:[#allocation2] sm:$0x1]
        %v282 = vlaneseq
        %v283 = vshrl.u32 %v282, 7
        %v284 = vsub.s32 0, %v283
        %v285 = vrot.slane %v280, %v284
        %v287 = vmul.f32 %v256, %v285
        %v288 = vmul.f32 %v257, %v285
        %v289 = vmul.f32 %v258, %v285
        %v290 = vmul.f32 %v259, %v285
        %v291 = vmul.f32 %v260, %v285
        %v292 = vmul.f32 %v261, %v285
        %v293 = vmul.f32 %v262, %v285
        %v294 = vmul.f32 %v263, %v285
        %v295 = vmul.f32 %v264, %v285
        %v296 = vmul.f32 %v265, %v285
        %v297 = vmul.f32 %v266, %v285
        %v298 = vmul.f32 %v267, %v285
        %v299 = vmul.f32 %v268, %v285
        %v300 = vmul.f32 %v269, %v285
        %v301 = vmul.f32 %v270, %v285
        %v302 = vmul.f32 %v271, %v285
        %v303 = vmul.f32 %v272, %v285
        %v304 = vmul.f32 %v273, %v285
        %v305 = vmul.f32 %v274, %v285
        %v306 = vmul.f32 %v275, %v285
        %v307 = vmul.f32 %v276, %v285
        %v308 = vmul.f32 %v277, %v285
        %v309 = vmul.f32 %v278, %v285
        %v310 = vmul.f32 %v279, %v285
        %v311 = vld [vmem:[#allocation5] sm:$0x1]
        %v313 = vlaneseq
        %v314 = vshrl.u32 %v313, 7
        %v315 = vsub.s32 0, %v314
        %v316 = vrot.slane %v311, %v315
        %v318 = vadd.f32 %v287, %v316
        %v319 = vadd.f32 %v288, %v316
        %v320 = vadd.f32 %v289, %v316
        %v321 = vadd.f32 %v290, %v316
        %v322 = vadd.f32 %v291, %v316
        %v323 = vadd.f32 %v292, %v316
        %v324 = vadd.f32 %v293, %v316
        %v325 = vadd.f32 %v294, %v316
        %v326 = vadd.f32 %v295, %v316
        %v327 = vadd.f32 %v296, %v316
        %v328 = vadd.f32 %v297, %v316
        %v329 = vadd.f32 %v298, %v316
        %v330 = vadd.f32 %v299, %v316
        %v331 = vadd.f32 %v300, %v316
        %v332 = vadd.f32 %v301, %v316
        %v333 = vadd.f32 %v302, %v316
        %v334 = vadd.f32 %v303, %v316
        %v335 = vadd.f32 %v304, %v316
        %v336 = vadd.f32 %v305, %v316
        %v337 = vadd.f32 %v306, %v316
        %v338 = vadd.f32 %v307, %v316
        %v339 = vadd.f32 %v308, %v316
        %v340 = vadd.f32 %v309, %v316
        %v341 = vadd.f32 %v310, %v316
        %v342 = vmax.f32 %v318, 0.0
        %v343 = vmax.f32 %v319, 0.0
        %v344 = vmax.f32 %v320, 0.0
        %v345 = vmax.f32 %v321, 0.0
        %v346 = vmax.f32 %v322, 0.0
        %v347 = vmax.f32 %v323, 0.0
        %v348 = vmax.f32 %v324, 0.0
        %v349 = vmax.f32 %v325, 0.0
        %v350 = vmax.f32 %v326, 0.0
        %v351 = vmax.f32 %v327, 0.0
        %v352 = vmax.f32 %v328, 0.0
        %v353 = vmax.f32 %v329, 0.0
        %v354 = vmax.f32 %v330, 0.0
        %v355 = vmax.f32 %v331, 0.0
        %v356 = vmax.f32 %v332, 0.0
        %v357 = vmax.f32 %v333, 0.0
        %v358 = vmax.f32 %v334, 0.0
        %v359 = vmax.f32 %v335, 0.0
        %v360 = vmax.f32 %v336, 0.0
        %v361 = vmax.f32 %v337, 0.0
        %v362 = vmax.f32 %v338, 0.0
        %v363 = vmax.f32 %v339, 0.0
        %v364 = vmax.f32 %v340, 0.0
        %v365 = vmax.f32 %v341, 0.0
        %vm366 = vcmask 64513
        %367 = vst.msk [vmem:[%s229 - $0x1] sm:$0xfe] %vm366, %v342
        %vm368 = vcmask 64512
        %369 = vst.msk [vmem:[%s229 + $0x7] sm:$0xff] %vm368, %v343
        %vm370 = vcmask 57344
        %371 = vst.msk [vmem:[%s229 + $0xf] sm:$0x1] %vm370, %v344
        %372 = vst.msk [vmem:[%s229 + $0xf] sm:$0xfe] %vm366, %v345
        %373 = vst.msk [vmem:[%s229 + $0x17] sm:$0xff] %vm368, %v346
        %374 = vst.msk [vmem:[%s229 + $0x1f] sm:$0x1] %vm370, %v347
        %375 = vst.msk [vmem:[%s229 + $0x1f] sm:$0xfe] %vm366, %v348
        %376 = vst.msk [vmem:[%s229 + $0x27] sm:$0xff] %vm368, %v349
        %377 = vst.msk [vmem:[%s229 + $0x2f] sm:$0x1] %vm370, %v350
        %378 = vst.msk [vmem:[%s229 + $0x2f] sm:$0xfe] %vm366, %v351
        %379 = vst.msk [vmem:[%s229 + $0x37] sm:$0xff] %vm368, %v352
        %380 = vst.msk [vmem:[%s229 + $0x3f] sm:$0x1] %vm370, %v353
        %381 = vst.msk [vmem:[%s229 + $0x3f] sm:$0xfe] %vm366, %v354
        %382 = vst.msk [vmem:[%s229 + $0x47] sm:$0xff] %vm368, %v355
        %383 = vst.msk [vmem:[%s229 + $0x4f] sm:$0x1] %vm370, %v356
        %384 = vst.msk [vmem:[%s229 + $0x4f] sm:$0xfe] %vm366, %v357
        %385 = vst.msk [vmem:[%s229 + $0x57] sm:$0xff] %vm368, %v358
        %386 = vst.msk [vmem:[%s229 + $0x5f] sm:$0x1] %vm370, %v359
        %387 = vst.msk [vmem:[%s229 + $0x5f] sm:$0xfe] %vm366, %v360
        %388 = vst.msk [vmem:[%s229 + $0x67] sm:$0xff] %vm368, %v361
        %389 = vst.msk [vmem:[%s229 + $0x6f] sm:$0x1] %vm370, %v362
        %390 = vst.msk [vmem:[%s229 + $0x6f] sm:$0xfe] %vm366, %v363
        %391 = vst.msk [vmem:[%s229 + $0x77] sm:$0xff] %vm368, %v364
        %392 = vst.msk [vmem:[%s229 + $0x7f] sm:$0x1] %vm370, %v365
        %s393 = sand.u32 %s111, 1
        %s394 = scalar_lea.sflag [#allocation4], %s393
        %s395 = sand.u32 %s111, 1
        %s396 = smul.addr %s395, 128
        %s397 = scalar_lea.vmem [#allocation8], %s396
        // Predicated region
        $region45: #{_lambda_.5} parent=31 // pred_check
          %p398 = pneg %p121
        $region46: #{_lambda_.5} parent=31 // pred_check_branch
          %400 = sbr.rel (%p398) target = $region48
        $region47: #{_lambda_.5} parent=31 // pred_region
          %s401 = smul.u32 8, %s24
          %s403 = ssub.s32 2048, 2048
          %404 = vsyncadd %s394, %s403
          %s405 = smul.addr %s401, 2
          %s406 = smul.addr %s23, 32
          %s407 = sadd.s32 %s405, %s406
          %s408 = smul.addr %s407, 128
          %s409 = scalar_lea.hbm %s3, %s408
          %s410 = sshll.u32 %s397, 4
          %s411 = int_to_ptr.vmem [resolvable:$true] %s410
          %416 = dma.vmem_to_hbm [thread:$0]  %s411, 2048, %s409, %s394, 128, 128, 8
        $region48: #{_lambda_.5} parent=31 // pred_fallthru
          _
      $region32: #{_lambda_.5} parent=5 // pred_fallthru
        _
      %p417 = scmp.le.s32.totalorder 2, %s14
      // Predicated region
      $region49: #{_lambda_.5} parent=5 // pred_check
        %p418 = pneg %p417
      $region50: #{_lambda_.5} parent=5 // pred_check_branch
        %420 = sbr.rel (%p418) target = $region52
      $region51: #{_lambda_.5} parent=5 // pred_region
        %s421 = ssub.s32 %s14, 2
        // Predicated region
        $region53: #{_lambda_.5} parent=51 // pred_check
          %p422 = pneg %p127
        $region54: #{_lambda_.5} parent=51 // pred_check_branch
          %424 = sbr.rel (%p422) target = $region56
        $region55: #{_lambda_.5} parent=51 // pred_region
          %s425 = sand.u32 %s112, 1
          %s426 = scalar_lea.sflag [#allocation4], %s425
          %s427 = sand.u32 %s112, 1
          %s428 = smul.addr %s427, 128
          %s429 = scalar_lea.vmem [#allocation8], %s428
          %430 = dma.done %s426, 2048
        $region56: #{_lambda_.5} parent=51 // pred_fallthru
          _
      $region52: #{_lambda_.5} parent=5 // pred_fallthru
        _
    $region6: #{_lambda_.5} parent=1 // loop_footer
      %s18 = sadd.s32 1, %s14
    $region7: #{_lambda_.5} parent=1 // loop_footer_branch
      %13 = sbr.rel target = $region3
    $region8: #{_lambda_.5} parent=1 // loop_exit
      _
    %431 = vsyncpa [#allocation3], 1
    %s432 = scalar_lea.sflag [#allocation3], 1
    %433 = vsyncpa %s432, 1
    %434 = vsyncpa [#allocation6], 1
    %435 = vsyncpa [#allocation4], 1
    %s436 = scalar_lea.sflag [#allocation4], 1
    %437 = vsyncpa %s436, 1

// kernel: _lambda_.3
$region0: #{_lambda_.3}
  #allocation0 [shape = 'u32[]', space=smem, size = 0x4, offset = 0x4, fixed_abs, tag = 'smem constant byte address 0x4 - core index']
  #allocation1 [shape = 'u32[144,128]{1,0:T(1,128)}', space=vmem, size = 0x12000, scoped, tag = 'internal scratch']
  #allocation2 [shape = 'bf16[352,128]{1,0:T(16,128)(2,1)}', space=vmem, size = 0x16000, scoped, tag = 'scratch operand']
  #allocation3 [shape = 'bf16[320,384]{1,0:T(16,128)(2,1)}', space=vmem, size = 0x3c000, scoped, tag = 'scratch operand']
  %s0 = inlined_call_operand.hbm [shape: f32[1,128], index: 0, kind: input, shape index: {}, may-alias: {0,1}]
  %s1 = inlined_call_operand.hbm [shape: f32[1,128], index: 1, kind: input, shape index: {}, may-alias: {0,1}]
  %s2 = inlined_call_operand.hbm [shape: bf16[3,384,128], index: 2, kind: input, shape index: {}]
  %s3 = inlined_call_operand.hbm [shape: bf16[2,512,128], index: 3, kind: input, shape index: {}, may-alias: {3,4,5}]
  %s4 = inlined_call_operand.hbm [shape: bf16[2,512,128], index: 4, kind: input, shape index: {}, may-alias: {3,4,5}]
  %s5 = inlined_call_operand.hbm [shape: bf16[2,512,128], index: 5, kind: input, shape index: {}, may-alias: {3,4,5}]
  %s6 = inlined_call_operand.hbm [shape: bf16[2,512,128], index: 6, kind: output, shape index: {0}]
  %s7 = inlined_call_operand.hbm [shape: f32[2,2,2,128], index: 7, kind: output, shape index: {1}]
  %8 = xla_tuple %s6, %s7
  %s9 = sld [smem:[#allocation0]]
  $region89: #{_lambda_.3} parent=0
    _
  %s11 = ssub.s32 1, %s9
  %s12 = scalar_select 0, %s11, %s9
  $region1: #{_lambda_.3} parent=0
    #allocation4 [shape = 'u8[512]{0}', space=vmem, size = 0x400, scoped, tag = 'input window, operand 0, single buffered']
    #allocation5 [shape = 's32[2]{0}', space=sflag, size = 0x8, scoped, tag = 'scoped memory for _lambda_.3']
    #allocation6 [shape = 's32[2]{0}', space=sflag, size = 0x8, scoped, tag = 'scoped memory for _lambda_.3']
    #allocation7 [shape = 'u8[512]{0}', space=vmem, size = 0x400, scoped, tag = 'input window, operand 1, single buffered']
    #allocation8 [shape = 's32[1]{0}', space=sflag, size = 0x4, scoped, tag = 'scoped memory for _lambda_.3']
    #allocation9 [shape = 'u8[294912]{0}', space=vmem, size = 0x48000, scoped, tag = 'input window, operand 2, single buffered']
    #allocation10 [shape = 'u8[131072]{0}', space=vmem, size = 0x20000, scoped, tag = 'input window, operand 3']
    #allocation11 [shape = 's32[2]{0}', space=sflag, size = 0x8, scoped, tag = 'scoped memory for _lambda_.3']
    #allocation12 [shape = 'u8[16384]{0}', space=vmem, size = 0x4000, scoped, tag = 'input window, operand 4']
    #allocation13 [shape = 'u8[16384]{0}', space=vmem, size = 0x4000, scoped, tag = 'input window, operand 5']
    #allocation14 [shape = 's32[2]{0}', space=sflag, size = 0x8, scoped, tag = 'scoped memory for _lambda_.3']
    #allocation15 [shape = 'u8[131072]{0}', space=vmem, size = 0x20000, scoped, tag = 'output window, operand 0']
    #allocation16 [shape = 'u8[2048]{0}', space=vmem, size = 0x800, scoped, tag = 'output window, operand 1']
    #allocation17 [shape = 's32[2]{0}', space=sflag, size = 0x8, scoped, tag = 'scoped memory for _lambda_.3']
    %13 = vsyncpa [#allocation5], 0
    %14 = vsyncpa [#allocation8], 0
    %15 = vsyncpa [#allocation11], 0
    %s16 = scalar_lea.sflag [#allocation11], 1
    %17 = vsyncpa %s16, 0
    %18 = vsyncpa [#allocation14], 0
    %s19 = scalar_lea.sflag [#allocation14], 1
    %20 = vsyncpa %s19, 0
    %21 = vsyncpa [#allocation6], 0
    %s22 = scalar_lea.sflag [#allocation6], 1
    %23 = vsyncpa %s22, 0
    %24 = vsyncpa [#allocation17], 0
    %s25 = scalar_lea.sflag [#allocation17], 1
    %26 = vsyncpa %s25, 0
    loop: start=0, step=1, limit=6
    $region2: #{_lambda_.3} parent=1 // loop_pre_header
      _
    $region3: #{_lambda_.3} parent=1 // loop_header
      %s28 = sphi 0, %s32
      %p29 = scmp.ge.s32.totalorder %s28, 6
      %s35 = sphi 0, %s47
      %s36 = sphi 0, %s43
      %s37 = sphi 0, %s35
      %s38 = sphi 0, %s36
      %s39 = sphi 0, %s37
      %s40 = sphi 0, %s38
      %s48 = sphi 0, %s48
      %s50 = sphi 0, %s48
      %s51 = sphi 0, %s50
      %s65 = sphi 0, %s51
      %s69 = sphi 0, %s69
      %s71 = sphi 0, %s69
      %s72 = sphi 0, %s71
      %s86 = sphi 0, %s72
      %s90 = sphi 0, %s90
      %s92 = sphi 0, %s90
      %s93 = sphi 0, %s92
      %s107 = sphi 0, %s93
      %s115 = sphi 0, %s117
      %s118 = sphi 0, %s115
      %s119 = sphi 0, %s118
      %s135 = sphi 0, %s119
      %s151 = sphi 0, %s153
      %s154 = sphi 0, %s151
      %s155 = sphi 0, %s154
      %s171 = sphi 0, %s155
      %s187 = sphi 0, %s189
      %s190 = sphi 0, %s187
      %s191 = sphi 0, %s190
      %s207 = sphi 0, %s191
      %s215 = sphi 0, %s217
      %s218 = sphi 0, %s215
      %s219 = sphi 0, %s218
      %s235 = sphi 0, %s219
      %s243 = sphi 0, %s245
      %s246 = sphi 0, %s243
      %s247 = sphi 0, %s246
      %s263 = sphi 0, %s247
    $region4: #{_lambda_.3} parent=1 // loop_header_branch
      %31 = sbr.rel (%p29) target = $region8
    $region5: #{_lambda_.3} parent=1 // loop_body
      %s33 = ssub.s32 %s28, 1
      %s34 = ssub.s32 %s28, 2
      %s41 = sadd.s32 1, %s36
      %p42 = scmp.ge.s32.totalorder %s41, 2
      %s43 = scalar_select %p42, 0, %s41
      %s44 = sadd.s32 1, %s35
      %s45 = scalar_select %p42, %s44, %s35
      %p46 = scmp.ge.s32.totalorder %s45, 2
      %s47 = scalar_select %p46, 0, %s45
      %s49 = sadd.s32 %s48, 1
      %p52 = scmp.eq.s32.totalorder %s28, 3
      %p53 = scmp.ne.s32.totalorder %s48, %s50
      %p54 = scmp.eq.s32.totalorder %s28, 0
      %p55 = por %p53, %p54
      %p56 = scmp.ne.s32.totalorder %s48, %s50
      %p57 = scmp.eq.s32.totalorder %s33, 3
      %p58 = por %p56, %p57
      %p59 = scmp.ne.s32.totalorder %s50, %s51
      %p60 = scmp.eq.s32.totalorder %s33, 0
      %p61 = por %p59, %p60
      %p62 = scmp.ne.s32.totalorder %s50, %s51
      %p63 = scmp.eq.s32.totalorder %s34, 3
      %p64 = por %p62, %p63
      %p66 = scmp.ne.s32.totalorder %s51, %s65
      %p67 = scmp.eq.s32.totalorder %s34, 0
      %p68 = por %p66, %p67
      %s70 = sadd.s32 %s69, 1
      %p73 = scmp.eq.s32.totalorder %s28, 3
      %p74 = scmp.ne.s32.totalorder %s69, %s71
      %p75 = scmp.eq.s32.totalorder %s28, 0
      %p76 = por %p74, %p75
      %p77 = scmp.ne.s32.totalorder %s69, %s71
      %p78 = scmp.eq.s32.totalorder %s33, 3
      %p79 = por %p77, %p78
      %p80 = scmp.ne.s32.totalorder %s71, %s72
      %p81 = scmp.eq.s32.totalorder %s33, 0
      %p82 = por %p80, %p81
      %p83 = scmp.ne.s32.totalorder %s71, %s72
      %p84 = scmp.eq.s32.totalorder %s34, 3
      %p85 = por %p83, %p84
      %p87 = scmp.ne.s32.totalorder %s72, %s86
      %p88 = scmp.eq.s32.totalorder %s34, 0
      %p89 = por %p87, %p88
      %s91 = sadd.s32 %s90, 1
      %p94 = scmp.eq.s32.totalorder %s28, 3
      %p95 = scmp.ne.s32.totalorder %s90, %s92
      %p96 = scmp.eq.s32.totalorder %s28, 0
      %p97 = por %p95, %p96
      %p98 = scmp.ne.s32.totalorder %s90, %s92
      %p99 = scmp.eq.s32.totalorder %s33, 3
      %p100 = por %p98, %p99
      %p101 = scmp.ne.s32.totalorder %s92, %s93
      %p102 = scmp.eq.s32.totalorder %s33, 0
      %p103 = por %p101, %p102
      %p104 = scmp.ne.s32.totalorder %s92, %s93
      %p105 = scmp.eq.s32.totalorder %s34, 3
      %p106 = por %p104, %p105
      %p108 = scmp.ne.s32.totalorder %s93, %s107
      %p109 = scmp.eq.s32.totalorder %s34, 0
      %p110 = por %p108, %p109
      %s111 = ssub.s32 %s35, %s47
      %s112 = ssub.s32 %s36, %s43
      %s113 = sor.u32 %s111, %s112
      %p114 = scmp.eq.s32.totalorder %s113, 0
      %s116 = sadd.s32 %s115, 1
      %s117 = scalar_select %p114, %s115, %s116
      %p120 = pneg %p114
      %p121 = scmp.eq.s32.totalorder %s28, 3
      %p122 = por %p120, %p121
      %p123 = scmp.ne.s32.totalorder %s115, %s118
      %p124 = scmp.eq.s32.totalorder %s28, 0
      %p125 = por %p123, %p124
      %p126 = scmp.ne.s32.totalorder %s115, %s118
      %p127 = scmp.eq.s32.totalorder %s33, 3
      %p128 = por %p126, %p127
      %p129 = scmp.ne.s32.totalorder %s118, %s119
      %p130 = scmp.eq.s32.totalorder %s33, 0
      %p131 = por %p129, %p130
      %p132 = scmp.ne.s32.totalorder %s118, %s119
      %p133 = scmp.eq.s32.totalorder %s34, 3
      %p134 = por %p132, %p133
      %p136 = scmp.ne.s32.totalorder %s119, %s135
      %p137 = scmp.eq.s32.totalorder %s34, 0
      %p138 = por %p136, %p137
      %s139 = smul.u32 %s36, 8
      %s140 = ssub.s32 %s139, 1
      %p141 = scmp.gt.s32.totalorder %s140, 0
      %s142 = scalar_select %p141, %s140, 0
      %s143 = smul.u32 %s43, 8
      %s144 = ssub.s32 %s143, 1
      %p145 = scmp.gt.s32.totalorder %s144, 0
      %s146 = scalar_select %p145, %s144, 0
      %s147 = ssub.s32 %s35, %s47
      %s148 = ssub.s32 %s142, %s146
      %s149 = sor.u32 %s147, %s148
      %p150 = scmp.eq.s32.totalorder %s149, 0
      %s152 = sadd.s32 %s151, 1
      %s153 = scalar_select %p150, %s151, %s152
      %p156 = pneg %p150
      %p157 = scmp.eq.s32.totalorder %s28, 3
      %p158 = por %p156, %p157
      %p159 = scmp.ne.s32.totalorder %s151, %s154
      %p160 = scmp.eq.s32.totalorder %s28, 0
      %p161 = por %p159, %p160
      %p162 = scmp.ne.s32.totalorder %s151, %s154
      %p163 = scmp.eq.s32.totalorder %s33, 3
      %p164 = por %p162, %p163
      %p165 = scmp.ne.s32.totalorder %s154, %s155
      %p166 = scmp.eq.s32.totalorder %s33, 0
      %p167 = por %p165, %p166
      %p168 = scmp.ne.s32.totalorder %s154, %s155
      %p169 = scmp.eq.s32.totalorder %s34, 3
      %p170 = por %p168, %p169
      %p172 = scmp.ne.s32.totalorder %s155, %s171
      %p173 = scmp.eq.s32.totalorder %s34, 0
      %p174 = por %p172, %p173
      %s175 = sadd.s32 %s36, 1
      %s176 = smul.u32 %s175, 8
      %p177 = scmp.lt.s32.totalorder %s176, 15
      %s178 = scalar_select %p177, %s176, 15
      %s179 = sadd.s32 %s43, 1
      %s180 = smul.u32 %s179, 8
      %p181 = scmp.lt.s32.totalorder %s180, 15
      %s182 = scalar_select %p181, %s180, 15
      %s183 = ssub.s32 %s35, %s47
      %s184 = ssub.s32 %s178, %s182
      %s185 = sor.u32 %s183, %s184
      %p186 = scmp.eq.s32.totalorder %s185, 0
      %s188 = sadd.s32 %s187, 1
      %s189 = scalar_select %p186, %s187, %s188
      %p192 = pneg %p186
      %p193 = scmp.eq.s32.totalorder %s28, 3
      %p194 = por %p192, %p193
      %p195 = scmp.ne.s32.totalorder %s187, %s190
      %p196 = scmp.eq.s32.totalorder %s28, 0
      %p197 = por %p195, %p196
      %p198 = scmp.ne.s32.totalorder %s187, %s190
      %p199 = scmp.eq.s32.totalorder %s33, 3
      %p200 = por %p198, %p199
      %p201 = scmp.ne.s32.totalorder %s190, %s191
      %p202 = scmp.eq.s32.totalorder %s33, 0
      %p203 = por %p201, %p202
      %p204 = scmp.ne.s32.totalorder %s190, %s191
      %p205 = scmp.eq.s32.totalorder %s34, 3
      %p206 = por %p204, %p205
      %p208 = scmp.ne.s32.totalorder %s191, %s207
      %p209 = scmp.eq.s32.totalorder %s34, 0
      %p210 = por %p208, %p209
      %s211 = ssub.s32 %s35, %s47
      %s212 = ssub.s32 %s36, %s43
      %s213 = sor.u32 %s211, %s212
      %p214 = scmp.eq.s32.totalorder %s213, 0
      %s216 = sadd.s32 %s215, 1
      %s217 = scalar_select %p214, %s215, %s216
      %p220 = pneg %p214
      %p221 = scmp.eq.s32.totalorder %s28, 3
      %p222 = por %p220, %p221
      %p223 = scmp.ne.s32.totalorder %s215, %s218
      %p224 = scmp.eq.s32.totalorder %s28, 0
      %p225 = por %p223, %p224
      %p226 = scmp.ne.s32.totalorder %s215, %s218
      %p227 = scmp.eq.s32.totalorder %s33, 3
      %p228 = por %p226, %p227
      %p229 = scmp.ne.s32.totalorder %s218, %s219
      %p230 = scmp.eq.s32.totalorder %s33, 0
      %p231 = por %p229, %p230
      %p232 = scmp.ne.s32.totalorder %s218, %s219
      %p233 = scmp.eq.s32.totalorder %s34, 3
      %p234 = por %p232, %p233
      %p236 = scmp.ne.s32.totalorder %s219, %s235
      %p237 = scmp.eq.s32.totalorder %s34, 0
      %p238 = por %p236, %p237
      %s239 = ssub.s32 %s35, %s47
      %s240 = ssub.s32 %s36, %s43
      %s241 = sor.u32 %s239, %s240
      %p242 = scmp.eq.s32.totalorder %s241, 0
      %s244 = sadd.s32 %s243, 1
      %s245 = scalar_select %p242, %s243, %s244
      %p248 = pneg %p242
      %p249 = scmp.eq.s32.totalorder %s28, 3
      %p250 = por %p248, %p249
      %p251 = scmp.ne.s32.totalorder %s243, %s246
      %p252 = scmp.eq.s32.totalorder %s28, 0
      %p253 = por %p251, %p252
      %p254 = scmp.ne.s32.totalorder %s243, %s246
      %p255 = scmp.eq.s32.totalorder %s33, 3
      %p256 = por %p254, %p255
      %p257 = scmp.ne.s32.totalorder %s246, %s247
      %p258 = scmp.eq.s32.totalorder %s33, 0
      %p259 = por %p257, %p258
      %p260 = scmp.ne.s32.totalorder %s246, %s247
      %p261 = scmp.eq.s32.totalorder %s34, 3
      %p262 = por %p260, %p261
      %p264 = scmp.ne.s32.totalorder %s247, %s263
      %p265 = scmp.eq.s32.totalorder %s34, 0
      %p266 = por %p264, %p265
      %p267 = scmp.le.s32.totalorder 1, %s28
      %p268 = scmp.lt.s32.totalorder %s28, 5
      %p269 = pnand %p267, %p268
      %p270 = pneg %p269
      // Predicated region
      $region9: #{_lambda_.3} parent=5 // pred_check
        _
      $region10: #{_lambda_.3} parent=5 // pred_check_branch
        %272 = sbr.rel (%p269) target = $region12
      $region11: #{_lambda_.3} parent=5 // pred_region
        %s273 = ssub.s32 %s28, 1
        // Predicated region
        $region13: #{_lambda_.3} parent=11 // pred_check
          %p274 = pneg %p61
        $region14: #{_lambda_.3} parent=11 // pred_check_branch
          %276 = sbr.rel (%p274) target = $region16
        $region15: #{_lambda_.3} parent=11 // pred_region
          %s278 = ssub.s32 16, 16
          %279 = vsyncadd [#allocation5], %s278
          %s281 = sshll.u32 [#allocation4], 4
          %s282 = int_to_ptr.vmem [resolvable:$true] %s281
          %284 = dma.hbm_to_vmem [thread:$0]  %s0, 16, %s282, [#allocation5]
        $region16: #{_lambda_.3} parent=11 // pred_fallthru
          _
        // Predicated region
        $region17: #{_lambda_.3} parent=11 // pred_check
          %p285 = pneg %p82
        $region18: #{_lambda_.3} parent=11 // pred_check_branch
          %287 = sbr.rel (%p285) target = $region20
        $region19: #{_lambda_.3} parent=11 // pred_region
          %s289 = ssub.s32 16, 16
          %290 = vsyncadd [#allocation8], %s289
          %s292 = sshll.u32 [#allocation7], 4
          %s293 = int_to_ptr.vmem [resolvable:$true] %s292
          %295 = dma.hbm_to_vmem [thread:$0]  %s1, 16, %s293, [#allocation8]
        $region20: #{_lambda_.3} parent=11 // pred_fallthru
          _
        // Predicated region
        $region21: #{_lambda_.3} parent=11 // pred_check
          %p296 = pneg %p103
        $region22: #{_lambda_.3} parent=11 // pred_check_branch
          %298 = sbr.rel (%p296) target = $region24
        $region23: #{_lambda_.3} parent=11 // pred_region
          %s300 = ssub.s32 9216, 9216
          %301 = vsyncadd [#allocation8], %s300
          %s302 = sshll.u32 [#allocation9], 4
          %s303 = int_to_ptr.vmem [resolvable:$true] %s302
          %308 = dma.hbm_to_vmem [thread:$0]  %s2, 9216, %s303, [#allocation8], 64, 64, 4
        $region24: #{_lambda_.3} parent=11 // pred_fallthru
          _
      $region12: #{_lambda_.3} parent=5 // pred_fallthru
        _
      %p309 = scmp.lt.s32.totalorder %s28, 4
      // Predicated region
      $region25: #{_lambda_.3} parent=5 // pred_check
        %p310 = pneg %p309
      $region26: #{_lambda_.3} parent=5 // pred_check_branch
        %312 = sbr.rel (%p310) target = $region28
      $region27: #{_lambda_.3} parent=5 // pred_region
        // Predicated region
        $region29: #{_lambda_.3} parent=27 // pred_check
          %p313 = pneg %p125
        $region30: #{_lambda_.3} parent=27 // pred_check_branch
          %315 = sbr.rel (%p313) target = $region32
        $region31: #{_lambda_.3} parent=27 // pred_region
          %s316 = sand.u32 %s28, 1
          %s317 = scalar_lea.sflag [#allocation11], %s316
          %s318 = sand.u32 %s115, 1
          %s319 = smul.addr %s318, 128
          %s320 = scalar_lea.vmem [#allocation10], %s319
          %s321 = smul.u32 32, %s36
          %s323 = ssub.s32 2048, 2048
          %324 = vsyncadd %s317, %s323
          %s325 = smul.addr %s35, 64
          %s326 = sadd.s32 %s321, %s325
          %s327 = smul.addr %s326, 64
          %s328 = scalar_lea.hbm %s3, %s327
          %s329 = sshll.u32 %s320, 4
          %s330 = int_to_ptr.vmem [resolvable:$true] %s329
          %335 = dma.hbm_to_vmem [thread:$0]  %s328, 2048, %s330, %s317, 64, 64, 4
        $region32: #{_lambda_.3} parent=27 // pred_fallthru
          _
        // Predicated region
        $region33: #{_lambda_.3} parent=27 // pred_check
          %p336 = pneg %p161
        $region34: #{_lambda_.3} parent=27 // pred_check_branch
          %338 = sbr.rel (%p336) target = $region36
        $region35: #{_lambda_.3} parent=27 // pred_region
          %s339 = sand.u32 %s28, 1
          %s340 = scalar_lea.sflag [#allocation11], %s339
          %s341 = sand.u32 %s151, 1
          %s342 = smul.addr %s341, 16
          %s343 = scalar_lea.vmem [#allocation12], %s342
          %s344 = smul.u32 %s36, 8
          %s345 = ssub.s32 %s344, 1
          %p346 = scmp.gt.s32.totalorder %s345, 0
          %s347 = scalar_select %p346, %s345, 0
          %s348 = smul.u32 4, %s347
          %s350 = ssub.s32 256, 256
          %351 = vsyncadd %s340, %s350
          %s352 = smul.addr %s35, 64
          %s353 = sadd.s32 %s348, %s352
          %s354 = smul.addr %s353, 64
          %s355 = scalar_lea.hbm %s4, %s354
          %s356 = sshll.u32 %s343, 4
          %s357 = int_to_ptr.vmem [resolvable:$true] %s356
          %362 = dma.hbm_to_vmem [thread:$0]  %s355, 256, %s357, %s340, 64, 64, 4
        $region36: #{_lambda_.3} parent=27 // pred_fallthru
          _
        // Predicated region
        $region37: #{_lambda_.3} parent=27 // pred_check
          %p363 = pneg %p197
        $region38: #{_lambda_.3} parent=27 // pred_check_branch
          %365 = sbr.rel (%p363) target = $region40
        $region39: #{_lambda_.3} parent=27 // pred_region
          %s366 = sand.u32 %s187, 1
          %s367 = scalar_lea.sflag [#allocation14], %s366
          %s368 = sand.u32 %s187, 1
          %s369 = smul.addr %s368, 16
          %s370 = scalar_lea.vmem [#allocation13], %s369
          %s371 = sadd.s32 %s36, 1
          %s372 = smul.u32 %s371, 8
          %p373 = scmp.lt.s32.totalorder %s372, 15
          %s374 = scalar_select %p373, %s372, 15
          %s375 = smul.u32 4, %s374
          %s377 = ssub.s32 256, 256
          %378 = vsyncadd %s367, %s377
          %s379 = smul.addr %s35, 64
          %s380 = sadd.s32 %s375, %s379
          %s381 = smul.addr %s380, 64
          %s382 = scalar_lea.hbm %s5, %s381
          %s383 = sshll.u32 %s370, 4
          %s384 = int_to_ptr.vmem [resolvable:$true] %s383
          %389 = dma.hbm_to_vmem [thread:$0]  %s382, 256, %s384, %s367, 64, 64, 4
        $region40: #{_lambda_.3} parent=27 // pred_fallthru
          _
      $region28: #{_lambda_.3} parent=5 // pred_fallthru
        _
      %p390 = scmp.le.s32.totalorder 1, %s28
      %p391 = scmp.lt.s32.totalorder %s28, 5
      %p392 = pnand %p390, %p391
      %p393 = pneg %p392
      // Predicated region
      $region41: #{_lambda_.3} parent=5 // pred_check
        _
      $region42: #{_lambda_.3} parent=5 // pred_check_branch
        %395 = sbr.rel (%p392) target = $region44
      $region43: #{_lambda_.3} parent=5 // pred_region
        %s396 = ssub.s32 %s28, 1
        // Predicated region
        $region45: #{_lambda_.3} parent=43 // pred_check
          %p397 = pneg %p61
        $region46: #{_lambda_.3} parent=43 // pred_check_branch
          %399 = sbr.rel (%p397) target = $region48
        $region47: #{_lambda_.3} parent=43 // pred_region
          %400 = dma.done [#allocation5], 16
        $region48: #{_lambda_.3} parent=43 // pred_fallthru
          _
        // Predicated region
        $region49: #{_lambda_.3} parent=43 // pred_check
          %p401 = pneg %p82
        $region50: #{_lambda_.3} parent=43 // pred_check_branch
          %403 = sbr.rel (%p401) target = $region52
        $region51: #{_lambda_.3} parent=43 // pred_region
          %404 = dma.done [#allocation8], 16
        $region52: #{_lambda_.3} parent=43 // pred_fallthru
          _
        // Predicated region
        $region53: #{_lambda_.3} parent=43 // pred_check
          %p405 = pneg %p103
        $region54: #{_lambda_.3} parent=43 // pred_check_branch
          %407 = sbr.rel (%p405) target = $region56
        $region55: #{_lambda_.3} parent=43 // pred_region
          %408 = dma.done [#allocation8], 9216
        $region56: #{_lambda_.3} parent=43 // pred_fallthru
          _
        %s409 = sand.u32 %s33, 1
        %s410 = scalar_lea.sflag [#allocation11], %s409
        %s411 = sand.u32 %s118, 1
        %s412 = smul.addr %s411, 128
        %s413 = scalar_lea.vmem [#allocation10], %s412
        // Predicated region
        $region57: #{_lambda_.3} parent=43 // pred_check
          %p414 = pneg %p131
        $region58: #{_lambda_.3} parent=43 // pred_check_branch
          %416 = sbr.rel (%p414) target = $region60
        $region59: #{_lambda_.3} parent=43 // pred_region
          %417 = dma.done %s410, 2048
        $region60: #{_lambda_.3} parent=43 // pred_fallthru
          _
        %s418 = sand.u32 %s33, 1
        %s419 = scalar_lea.sflag [#allocation11], %s418
        %s420 = sand.u32 %s154, 1
        %s421 = smul.addr %s420, 16
        %s422 = scalar_lea.vmem [#allocation12], %s421
        // Predicated region
        $region61: #{_lambda_.3} parent=43 // pred_check
          %p423 = pneg %p167
        $region62: #{_lambda_.3} parent=43 // pred_check_branch
          %425 = sbr.rel (%p423) target = $region64
        $region63: #{_lambda_.3} parent=43 // pred_region
          %426 = dma.done %s419, 256
        $region64: #{_lambda_.3} parent=43 // pred_fallthru
          _
        %s427 = sand.u32 %s190, 1
        %s428 = scalar_lea.sflag [#allocation14], %s427
        %s429 = sand.u32 %s190, 1
        %s430 = smul.addr %s429, 16
        %s431 = scalar_lea.vmem [#allocation13], %s430
        // Predicated region
        $region65: #{_lambda_.3} parent=43 // pred_check
          %p432 = pneg %p203
        $region66: #{_lambda_.3} parent=43 // pred_check_branch
          %434 = sbr.rel (%p432) target = $region68
        $region67: #{_lambda_.3} parent=43 // pred_region
          %435 = dma.done %s428, 256
        $region68: #{_lambda_.3} parent=43 // pred_fallthru
          _
        %p436 = pneg %p61
        %p437 = pneg %p58
        %p438 = pneg %p82
        %p439 = pneg %p79
        %p440 = pneg %p103
        %p441 = pneg %p100
        %s442 = sand.u32 %s33, 1
        %s443 = scalar_lea.sflag [#allocation11], %s442
        %s444 = sand.u32 %s118, 1
        %s445 = smul.addr %s444, 128
        %s446 = scalar_lea.vmem [#allocation10], %s445
        %p447 = pneg %p131
        %p448 = pneg %p128
        %s449 = sand.u32 %s33, 1
        %s450 = scalar_lea.sflag [#allocation11], %s449
        %s451 = sand.u32 %s154, 1
        %s452 = smul.addr %s451, 16
        %s453 = scalar_lea.vmem [#allocation12], %s452
        %p454 = pneg %p167
        %p455 = pneg %p164
        %s456 = sand.u32 %s190, 1
        %s457 = scalar_lea.sflag [#allocation14], %s456
        %s458 = sand.u32 %s190, 1
        %s459 = smul.addr %s458, 16
        %s460 = scalar_lea.vmem [#allocation13], %s459
        %p461 = pneg %p203
        %p462 = pneg %p200
        %p463 = pneg %p231
        %p464 = pneg %p228
        %s465 = sand.u32 %s218, 1
        %s466 = scalar_lea.sflag [#allocation6], %s465
        %s467 = sand.u32 %s218, 1
        %s468 = smul.addr %s467, 128
        %s469 = scalar_lea.vmem [#allocation15], %s468
        %p470 = pneg %p259
        %p471 = pneg %p256
        %s472 = sand.u32 %s246, 1
        %s473 = scalar_lea.sflag [#allocation17], %s472
        %s474 = sand.u32 %s246, 1
        %s475 = smul.addr %s474, 2
        %s476 = scalar_lea.vmem [#allocation16], %s475
        %s477 = smul.u32 32, %s38
        %s478 = smul.u32 %s38, 8
        %s479 = ssub.s32 %s478, 1
        %p480 = scmp.gt.s32.totalorder %s479, 0
        %s481 = scalar_select %p480, %s479, 0
        %s482 = smul.u32 4, %s481
        %s483 = sadd.s32 %s38, 1
        %s484 = smul.u32 %s483, 8
        %p485 = scmp.lt.s32.totalorder %s484, 15
        %s486 = scalar_select %p485, %s484, 15
        %s487 = smul.u32 4, %s486
        %s488 = smul.u32 32, %s38
        %v490 = vlaneseq
        %v491 = vshrl.u32 %v490, 7
        %v492 = vadd.s32 %v491, 8
        %v493 = vadd.s32 %v491, 16
        %v494 = vadd.s32 %v491, 24
        %v495 = vadd.s32 %v491, 32
        %v496 = vadd.s32 %v491, 40
        %v497 = vadd.s32 %v491, 48
        %v498 = vadd.s32 %v491, 56
        %v499 = vadd.s32 %v491, 64
        %v500 = vadd.s32 %v491, 72
        %v501 = vadd.s32 %v491, 80
        %v502 = vadd.s32 %v491, 88
        %v503 = vadd.s32 %v491, 96
        %v504 = vadd.s32 %v491, 104
        %v505 = vadd.s32 %v491, 112
        %v506 = vadd.s32 %v491, 120
        %v507 = vadd.s32 %v491, 128
        %v508 = vadd.s32 %v491, 136
        %v509 = vadd.s32 %v491, 144
        %v510 = vadd.s32 %v491, 152
        %v511 = vadd.s32 %v491, 160
        %v512 = vadd.s32 %v491, 168
        %v513 = vadd.s32 %v491, 176
        %v514 = vadd.s32 %v491, 184
        %v515 = vadd.s32 %v491, 192
        %v516 = vadd.s32 %v491, 200
        %v517 = vadd.s32 %v491, 208
        %v518 = vadd.s32 %v491, 216
        %v519 = vadd.s32 %v491, 224
        %v520 = vadd.s32 %v491, 232
        %v521 = vadd.s32 %v491, 240
        %v522 = vadd.s32 %v491, 248
        %vm523 = vcmp.lt.s32.totalorder %v491, 0
        %v524 = vsub.s32 0, %v491
        %v525 = vsel %vm523, %v524, %v491
        %v526 = vshrl.u32 %v525, 5
        %v527 = vand.u32 %v525, 31
        %v528 = vsub.s32 0, %v527
        %v529 = vsel %vm523, %v528, %v527
        %vm530 = vcmp.lt.s32.totalorder %v492, 0
        %v531 = vsub.s32 0, %v492
        %v532 = vsel %vm530, %v531, %v492
        %v533 = vshrl.u32 %v532, 5
        %v534 = vand.u32 %v532, 31
        %v535 = vsub.s32 0, %v534
        %v536 = vsel %vm530, %v535, %v534
        %vm537 = vcmp.lt.s32.totalorder %v493, 0
        %v538 = vsub.s32 0, %v493
        %v539 = vsel %vm537, %v538, %v493
        %v540 = vshrl.u32 %v539, 5
        %v541 = vand.u32 %v539, 31
        %v542 = vsub.s32 0, %v541
        %v543 = vsel %vm537, %v542, %v541
        %vm544 = vcmp.lt.s32.totalorder %v494, 0
        %v545 = vsub.s32 0, %v494
        %v546 = vsel %vm544, %v545, %v494
        %v547 = vshrl.u32 %v546, 5
        %v548 = vand.u32 %v546, 31
        %v549 = vsub.s32 0, %v548
        %v550 = vsel %vm544, %v549, %v548
        %vm551 = vcmp.lt.s32.totalorder %v495, 0
        %v552 = vsub.s32 0, %v495
        %v553 = vsel %vm551, %v552, %v495
        %v554 = vshrl.u32 %v553, 5
        %v555 = vand.u32 %v553, 31
        %v556 = vsub.s32 0, %v555
        %v557 = vsel %vm551, %v556, %v555
        %vm558 = vcmp.lt.s32.totalorder %v496, 0
        %v559 = vsub.s32 0, %v496
        %v560 = vsel %vm558, %v559, %v496
        %v561 = vshrl.u32 %v560, 5
        %v562 = vand.u32 %v560, 31
        %v563 = vsub.s32 0, %v562
        %v564 = vsel %vm558, %v563, %v562
        %vm565 = vcmp.lt.s32.totalorder %v497, 0
        %v566 = vsub.s32 0, %v497
        %v567 = vsel %vm565, %v566, %v497
        %v568 = vshrl.u32 %v567, 5
        %v569 = vand.u32 %v567, 31
        %v570 = vsub.s32 0, %v569
        %v571 = vsel %vm565, %v570, %v569
        %vm572 = vcmp.lt.s32.totalorder %v498, 0
        %v573 = vsub.s32 0, %v498
        %v574 = vsel %vm572, %v573, %v498
        %v575 = vshrl.u32 %v574, 5
        %v576 = vand.u32 %v574, 31
        %v577 = vsub.s32 0, %v576
        %v578 = vsel %vm572, %v577, %v576
        %vm579 = vcmp.lt.s32.totalorder %v499, 0
        %v580 = vsub.s32 0, %v499
        %v581 = vsel %vm579, %v580, %v499
        %v582 = vshrl.u32 %v581, 5
        %v583 = vand.u32 %v581, 31
        %v584 = vsub.s32 0, %v583
        %v585 = vsel %vm579, %v584, %v583
        %vm586 = vcmp.lt.s32.totalorder %v500, 0
        %v587 = vsub.s32 0, %v500
        %v588 = vsel %vm586, %v587, %v500
        %v589 = vshrl.u32 %v588, 5
        %v590 = vand.u32 %v588, 31
        %v591 = vsub.s32 0, %v590
        %v592 = vsel %vm586, %v591, %v590
        %vm593 = vcmp.lt.s32.totalorder %v501, 0
        %v594 = vsub.s32 0, %v501
        %v595 = vsel %vm593, %v594, %v501
        %v596 = vshrl.u32 %v595, 5
        %v597 = vand.u32 %v595, 31
        %v598 = vsub.s32 0, %v597
        %v599 = vsel %vm593, %v598, %v597
        %vm600 = vcmp.lt.s32.totalorder %v502, 0
        %v601 = vsub.s32 0, %v502
        %v602 = vsel %vm600, %v601, %v502
        %v603 = vshrl.u32 %v602, 5
        %v604 = vand.u32 %v602, 31
        %v605 = vsub.s32 0, %v604
        %v606 = vsel %vm600, %v605, %v604
        %vm607 = vcmp.lt.s32.totalorder %v503, 0
        %v608 = vsub.s32 0, %v503
        %v609 = vsel %vm607, %v608, %v503
        %v610 = vshrl.u32 %v609, 5
        %v611 = vand.u32 %v609, 31
        %v612 = vsub.s32 0, %v611
        %v613 = vsel %vm607, %v612, %v611
        %vm614 = vcmp.lt.s32.totalorder %v504, 0
        %v615 = vsub.s32 0, %v504
        %v616 = vsel %vm614, %v615, %v504
        %v617 = vshrl.u32 %v616, 5
        %v618 = vand.u32 %v616, 31
        %v619 = vsub.s32 0, %v618
        %v620 = vsel %vm614, %v619, %v618
        %vm621 = vcmp.lt.s32.totalorder %v505, 0
        %v622 = vsub.s32 0, %v505
        %v623 = vsel %vm621, %v622, %v505
        %v624 = vshrl.u32 %v623, 5
        %v625 = vand.u32 %v623, 31
        %v626 = vsub.s32 0, %v625
        %v627 = vsel %vm621, %v626, %v625
        %vm628 = vcmp.lt.s32.totalorder %v506, 0
        %v629 = vsub.s32 0, %v506
        %v630 = vsel %vm628, %v629, %v506
        %v631 = vshrl.u32 %v630, 5
        %v632 = vand.u32 %v630, 31
        %v633 = vsub.s32 0, %v632
        %v634 = vsel %vm628, %v633, %v632
        %vm635 = vcmp.lt.s32.totalorder %v507, 0
        %v636 = vsub.s32 0, %v507
        %v637 = vsel %vm635, %v636, %v507
        %v638 = vshrl.u32 %v637, 5
        %v639 = vand.u32 %v637, 31
        %v640 = vsub.s32 0, %v639
        %v641 = vsel %vm635, %v640, %v639
        %vm642 = vcmp.lt.s32.totalorder %v508, 0
        %v643 = vsub.s32 0, %v508
        %v644 = vsel %vm642, %v643, %v508
        %v645 = vshrl.u32 %v644, 5
        %v646 = vand.u32 %v644, 31
        %v647 = vsub.s32 0, %v646
        %v648 = vsel %vm642, %v647, %v646
        %vm649 = vcmp.lt.s32.totalorder %v509, 0
        %v650 = vsub.s32 0, %v509
        %v651 = vsel %vm649, %v650, %v509
        %v652 = vshrl.u32 %v651, 5
        %v653 = vand.u32 %v651, 31
        %v654 = vsub.s32 0, %v653
        %v655 = vsel %vm649, %v654, %v653
        %vm656 = vcmp.lt.s32.totalorder %v510, 0
        %v657 = vsub.s32 0, %v510
        %v658 = vsel %vm656, %v657, %v510
        %v659 = vshrl.u32 %v658, 5
        %v660 = vand.u32 %v658, 31
        %v661 = vsub.s32 0, %v660
        %v662 = vsel %vm656, %v661, %v660
        %vm663 = vcmp.lt.s32.totalorder %v511, 0
        %v664 = vsub.s32 0, %v511
        %v665 = vsel %vm663, %v664, %v511
        %v666 = vshrl.u32 %v665, 5
        %v667 = vand.u32 %v665, 31
        %v668 = vsub.s32 0, %v667
        %v669 = vsel %vm663, %v668, %v667
        %vm670 = vcmp.lt.s32.totalorder %v512, 0
        %v671 = vsub.s32 0, %v512
        %v672 = vsel %vm670, %v671, %v512
        %v673 = vshrl.u32 %v672, 5
        %v674 = vand.u32 %v672, 31
        %v675 = vsub.s32 0, %v674
        %v676 = vsel %vm670, %v675, %v674
        %vm677 = vcmp.lt.s32.totalorder %v513, 0
        %v678 = vsub.s32 0, %v513
        %v679 = vsel %vm677, %v678, %v513
        %v680 = vshrl.u32 %v679, 5
        %v681 = vand.u32 %v679, 31
        %v682 = vsub.s32 0, %v681
        %v683 = vsel %vm677, %v682, %v681
        %vm684 = vcmp.lt.s32.totalorder %v514, 0
        %v685 = vsub.s32 0, %v514
        %v686 = vsel %vm684, %v685, %v514
        %v687 = vshrl.u32 %v686, 5
        %v688 = vand.u32 %v686, 31
        %v689 = vsub.s32 0, %v688
        %v690 = vsel %vm684, %v689, %v688
        %vm691 = vcmp.lt.s32.totalorder %v515, 0
        %v692 = vsub.s32 0, %v515
        %v693 = vsel %vm691, %v692, %v515
        %v694 = vshrl.u32 %v693, 5
        %v695 = vand.u32 %v693, 31
        %v696 = vsub.s32 0, %v695
        %v697 = vsel %vm691, %v696, %v695
        %vm698 = vcmp.lt.s32.totalorder %v516, 0
        %v699 = vsub.s32 0, %v516
        %v700 = vsel %vm698, %v699, %v516
        %v701 = vshrl.u32 %v700, 5
        %v702 = vand.u32 %v700, 31
        %v703 = vsub.s32 0, %v702
        %v704 = vsel %vm698, %v703, %v702
        %vm705 = vcmp.lt.s32.totalorder %v517, 0
        %v706 = vsub.s32 0, %v517
        %v707 = vsel %vm705, %v706, %v517
        %v708 = vshrl.u32 %v707, 5
        %v709 = vand.u32 %v707, 31
        %v710 = vsub.s32 0, %v709
        %v711 = vsel %vm705, %v710, %v709
        %vm712 = vcmp.lt.s32.totalorder %v518, 0
        %v713 = vsub.s32 0, %v518
        %v714 = vsel %vm712, %v713, %v518
        %v715 = vshrl.u32 %v714, 5
        %v716 = vand.u32 %v714, 31
        %v717 = vsub.s32 0, %v716
        %v718 = vsel %vm712, %v717, %v716
        %vm719 = vcmp.lt.s32.totalorder %v519, 0
        %v720 = vsub.s32 0, %v519
        %v721 = vsel %vm719, %v720, %v519
        %v722 = vshrl.u32 %v721, 5
        %v723 = vand.u32 %v721, 31
        %v724 = vsub.s32 0, %v723
        %v725 = vsel %vm719, %v724, %v723
        %vm726 = vcmp.lt.s32.totalorder %v520, 0
        %v727 = vsub.s32 0, %v520
        %v728 = vsel %vm726, %v727, %v520
        %v729 = vshrl.u32 %v728, 5
        %v730 = vand.u32 %v728, 31
        %v731 = vsub.s32 0, %v730
        %v732 = vsel %vm726, %v731, %v730
        %vm733 = vcmp.lt.s32.totalorder %v521, 0
        %v734 = vsub.s32 0, %v521
        %v735 = vsel %vm733, %v734, %v521
        %v736 = vshrl.u32 %v735, 5
        %v737 = vand.u32 %v735, 31
        %v738 = vsub.s32 0, %v737
        %v739 = vsel %vm733, %v738, %v737
        %vm740 = vcmp.lt.s32.totalorder %v522, 0
        %v741 = vsub.s32 0, %v522
        %v742 = vsel %vm740, %v741, %v522
        %v743 = vshrl.u32 %v742, 5
        %v744 = vand.u32 %v742, 31
        %v745 = vsub.s32 0, %v744
        %v746 = vsel %vm740, %v745, %v744
        %vm747 = vcmp.ne.s32.totalorder %v529, 0
        %vm748 = vcmp.ne.s32.totalorder %v536, 0
        %vm749 = vcmp.ne.s32.totalorder %v543, 0
        %vm750 = vcmp.ne.s32.totalorder %v550, 0
        %vm751 = vcmp.ne.s32.totalorder %v557, 0
        %vm752 = vcmp.ne.s32.totalorder %v564, 0
        %vm753 = vcmp.ne.s32.totalorder %v571, 0
        %vm754 = vcmp.ne.s32.totalorder %v578, 0
        %vm755 = vcmp.ne.s32.totalorder %v585, 0
        %vm756 = vcmp.ne.s32.totalorder %v592, 0
        %vm757 = vcmp.ne.s32.totalorder %v599, 0
        %vm758 = vcmp.ne.s32.totalorder %v606, 0
        %vm759 = vcmp.ne.s32.totalorder %v613, 0
        %vm760 = vcmp.ne.s32.totalorder %v620, 0
        %vm761 = vcmp.ne.s32.totalorder %v627, 0
        %vm762 = vcmp.ne.s32.totalorder %v634, 0
        %vm763 = vcmp.ne.s32.totalorder %v641, 0
        %vm764 = vcmp.ne.s32.totalorder %v648, 0
        %vm765 = vcmp.ne.s32.totalorder %v655, 0
        %vm766 = vcmp.ne.s32.totalorder %v662, 0
        %vm767 = vcmp.ne.s32.totalorder %v669, 0
        %vm768 = vcmp.ne.s32.totalorder %v676, 0
        %vm769 = vcmp.ne.s32.totalorder %v683, 0
        %vm770 = vcmp.ne.s32.totalorder %v690, 0
        %vm771 = vcmp.ne.s32.totalorder %v697, 0
        %vm772 = vcmp.ne.s32.totalorder %v704, 0
        %vm773 = vcmp.ne.s32.totalorder %v711, 0
        %vm774 = vcmp.ne.s32.totalorder %v718, 0
        %vm775 = vcmp.ne.s32.totalorder %v725, 0
        %vm776 = vcmp.ne.s32.totalorder %v732, 0
        %vm777 = vcmp.ne.s32.totalorder %v739, 0
        %vm778 = vcmp.ne.s32.totalorder %v746, 0
        %vm779 = vcmp.lt.s32.totalorder %v529, 0
        %vm780 = vcmp.lt.s32.totalorder %v536, 0
        %vm781 = vcmp.lt.s32.totalorder %v543, 0
        %vm782 = vcmp.lt.s32.totalorder %v550, 0
        %vm783 = vcmp.lt.s32.totalorder %v557, 0
        %vm784 = vcmp.lt.s32.totalorder %v564, 0
        %vm785 = vcmp.lt.s32.totalorder %v571, 0
        %vm786 = vcmp.lt.s32.totalorder %v578, 0
        %vm787 = vcmp.lt.s32.totalorder %v585, 0
        %vm788 = vcmp.lt.s32.totalorder %v592, 0
        %vm789 = vcmp.lt.s32.totalorder %v599, 0
        %vm790 = vcmp.lt.s32.totalorder %v606, 0
        %vm791 = vcmp.lt.s32.totalorder %v613, 0
        %vm792 = vcmp.lt.s32.totalorder %v620, 0
        %vm793 = vcmp.lt.s32.totalorder %v627, 0
        %vm794 = vcmp.lt.s32.totalorder %v634, 0
        %vm795 = vcmp.lt.s32.totalorder %v641, 0
        %vm796 = vcmp.lt.s32.totalorder %v648, 0
        %vm797 = vcmp.lt.s32.totalorder %v655, 0
        %vm798 = vcmp.lt.s32.totalorder %v662, 0
        %vm799 = vcmp.lt.s32.totalorder %v669, 0
        %vm800 = vcmp.lt.s32.totalorder %v676, 0
        %vm801 = vcmp.lt.s32.totalorder %v683, 0
        %vm802 = vcmp.lt.s32.totalorder %v690, 0
        %vm803 = vcmp.lt.s32.totalorder %v697, 0
        %vm804 = vcmp.lt.s32.totalorder %v704, 0
        %vm805 = vcmp.lt.s32.totalorder %v711, 0
        %vm806 = vcmp.lt.s32.totalorder %v718, 0
        %vm807 = vcmp.lt.s32.totalorder %v725, 0
        %vm808 = vcmp.lt.s32.totalorder %v732, 0
        %vm809 = vcmp.lt.s32.totalorder %v739, 0
        %vm810 = vcmp.lt.s32.totalorder %v746, 0
        %vm811 = vmand %vm779, %vm747
        %vm812 = vmand %vm780, %vm748
        %vm813 = vmand %vm781, %vm749
        %vm814 = vmand %vm782, %vm750
        %vm815 = vmand %vm783, %vm751
        %vm816 = vmand %vm784, %vm752
        %vm817 = vmand %vm785, %vm753
        %vm818 = vmand %vm786, %vm754
        %vm819 = vmand %vm787, %vm755
        %vm820 = vmand %vm788, %vm756
        %vm821 = vmand %vm789, %vm757
        %vm822 = vmand %vm790, %vm758
        %vm823 = vmand %vm791, %vm759
        %vm824 = vmand %vm792, %vm760
        %vm825 = vmand %vm793, %vm761
        %vm826 = vmand %vm794, %vm762
        %vm827 = vmand %vm795, %vm763
        %vm828 = vmand %vm796, %vm764
        %vm829 = vmand %vm797, %vm765
        %vm830 = vmand %vm798, %vm766
        %vm831 = vmand %vm799, %vm767
        %vm832 = vmand %vm800, %vm768
        %vm833 = vmand %vm801, %vm769
        %vm834 = vmand %vm802, %vm770
        %vm835 = vmand %vm803, %vm771
        %vm836 = vmand %vm804, %vm772
        %vm837 = vmand %vm805, %vm773
        %vm838 = vmand %vm806, %vm774
        %vm839 = vmand %vm807, %vm775
        %vm840 = vmand %vm808, %vm776
        %vm841 = vmand %vm809, %vm777
        %vm842 = vmand %vm810, %vm778
        %v843 = vadd.s32 %v529, 32
        %v844 = vadd.s32 %v536, 32
        %v845 = vadd.s32 %v543, 32
        %v846 = vadd.s32 %v550, 32
        %v847 = vadd.s32 %v557, 32
        %v848 = vadd.s32 %v564, 32
        %v849 = vadd.s32 %v571, 32
        %v850 = vadd.s32 %v578, 32
        %v851 = vadd.s32 %v585, 32
        %v852 = vadd.s32 %v592, 32
        %v853 = vadd.s32 %v599, 32
        %v854 = vadd.s32 %v606, 32
        %v855 = vadd.s32 %v613, 32
        %v856 = vadd.s32 %v620, 32
        %v857 = vadd.s32 %v627, 32
        %v858 = vadd.s32 %v634, 32
        %v859 = vadd.s32 %v641, 32
        %v860 = vadd.s32 %v648, 32
        %v861 = vadd.s32 %v655, 32
        %v862 = vadd.s32 %v662, 32
        %v863 = vadd.s32 %v669, 32
        %v864 = vadd.s32 %v676, 32
        %v865 = vadd.s32 %v683, 32
        %v866 = vadd.s32 %v690, 32
        %v867 = vadd.s32 %v697, 32
        %v868 = vadd.s32 %v704, 32
        %v869 = vadd.s32 %v711, 32
        %v870 = vadd.s32 %v718, 32
        %v871 = vadd.s32 %v725, 32
        %v872 = vadd.s32 %v732, 32
        %v873 = vadd.s32 %v739, 32
        %v874 = vadd.s32 %v746, 32
        %v875 = vsel %vm811, %v843, %v529
        %v876 = vsel %vm812, %v844, %v536
        %v877 = vsel %vm813, %v845, %v543
        %v878 = vsel %vm814, %v846, %v550
        %v879 = vsel %vm815, %v847, %v557
        %v880 = vsel %vm816, %v848, %v564
        %v881 = vsel %vm817, %v849, %v571
        %v882 = vsel %vm818, %v850, %v578
        %v883 = vsel %vm819, %v851, %v585
        %v884 = vsel %vm820, %v852, %v592
        %v885 = vsel %vm821, %v853, %v599
        %v886 = vsel %vm822, %v854, %v606
        %v887 = vsel %vm823, %v855, %v613
        %v888 = vsel %vm824, %v856, %v620
        %v889 = vsel %vm825, %v857, %v627
        %v890 = vsel %vm826, %v858, %v634
        %v891 = vsel %vm827, %v859, %v641
        %v892 = vsel %vm828, %v860, %v648
        %v893 = vsel %vm829, %v861, %v655
        %v894 = vsel %vm830, %v862, %v662
        %v895 = vsel %vm831, %v863, %v669
        %v896 = vsel %vm832, %v864, %v676
        %v897 = vsel %vm833, %v865, %v683
        %v898 = vsel %vm834, %v866, %v690
        %v899 = vsel %vm835, %v867, %v697
        %v900 = vsel %vm836, %v868, %v704
        %v901 = vsel %vm837, %v869, %v711
        %v902 = vsel %vm838, %v870, %v718
        %v903 = vsel %vm839, %v871, %v725
        %v904 = vsel %vm840, %v872, %v732
        %v905 = vsel %vm841, %v873, %v739
        %v906 = vsel %vm842, %v874, %v746
        %vm907 = vcmp.ge.s32.totalorder %v875, 1
        %vm908 = vcmp.ge.s32.totalorder %v876, 1
        %vm909 = vcmp.ge.s32.totalorder %v877, 1
        %vm910 = vcmp.ge.s32.totalorder %v878, 1
        %vm911 = vcmp.ge.s32.totalorder %v879, 1
        %vm912 = vcmp.ge.s32.totalorder %v880, 1
        %vm913 = vcmp.ge.s32.totalorder %v881, 1
        %vm914 = vcmp.ge.s32.totalorder %v882, 1
        %vm915 = vcmp.ge.s32.totalorder %v883, 1
        %vm916 = vcmp.ge.s32.totalorder %v884, 1
        %vm917 = vcmp.ge.s32.totalorder %v885, 1
        %vm918 = vcmp.ge.s32.totalorder %v886, 1
        %vm919 = vcmp.ge.s32.totalorder %v887, 1
        %vm920 = vcmp.ge.s32.totalorder %v888, 1
        %vm921 = vcmp.ge.s32.totalorder %v889, 1
        %vm922 = vcmp.ge.s32.totalorder %v890, 1
        %vm923 = vcmp.ge.s32.totalorder %v891, 1
        %vm924 = vcmp.ge.s32.totalorder %v892, 1
        %vm925 = vcmp.ge.s32.totalorder %v893, 1
        %vm926 = vcmp.ge.s32.totalorder %v894, 1
        %vm927 = vcmp.ge.s32.totalorder %v895, 1
        %vm928 = vcmp.ge.s32.totalorder %v896, 1
        %vm929 = vcmp.ge.s32.totalorder %v897, 1
        %vm930 = vcmp.ge.s32.totalorder %v898, 1
        %vm931 = vcmp.ge.s32.totalorder %v899, 1
        %vm932 = vcmp.ge.s32.totalorder %v900, 1
        %vm933 = vcmp.ge.s32.totalorder %v901, 1
        %vm934 = vcmp.ge.s32.totalorder %v902, 1
        %vm935 = vcmp.ge.s32.totalorder %v903, 1
        %vm936 = vcmp.ge.s32.totalorder %v904, 1
        %vm937 = vcmp.ge.s32.totalorder %v905, 1
        %vm938 = vcmp.ge.s32.totalorder %v906, 1
        %vm939 = vcmp.le.s32.totalorder %v875, 16
        %vm940 = vcmp.le.s32.totalorder %v876, 16
        %vm941 = vcmp.le.s32.totalorder %v877, 16
        %vm942 = vcmp.le.s32.totalorder %v878, 16
        %vm943 = vcmp.le.s32.totalorder %v879, 16
        %vm944 = vcmp.le.s32.totalorder %v880, 16
        %vm945 = vcmp.le.s32.totalorder %v881, 16
        %vm946 = vcmp.le.s32.totalorder %v882, 16
        %vm947 = vcmp.le.s32.totalorder %v883, 16
        %vm948 = vcmp.le.s32.totalorder %v884, 16
        %vm949 = vcmp.le.s32.totalorder %v885, 16
        %vm950 = vcmp.le.s32.totalorder %v886, 16
        %vm951 = vcmp.le.s32.totalorder %v887, 16
        %vm952 = vcmp.le.s32.totalorder %v888, 16
        %vm953 = vcmp.le.s32.totalorder %v889, 16
        %vm954 = vcmp.le.s32.totalorder %v890, 16
        %vm955 = vcmp.le.s32.totalorder %v891, 16
        %vm956 = vcmp.le.s32.totalorder %v892, 16
        %vm957 = vcmp.le.s32.totalorder %v893, 16
        %vm958 = vcmp.le.s32.totalorder %v894, 16
        %vm959 = vcmp.le.s32.totalorder %v895, 16
        %vm960 = vcmp.le.s32.totalorder %v896, 16
        %vm961 = vcmp.le.s32.totalorder %v897, 16
        %vm962 = vcmp.le.s32.totalorder %v898, 16
        %vm963 = vcmp.le.s32.totalorder %v899, 16
        %vm964 = vcmp.le.s32.totalorder %v900, 16
        %vm965 = vcmp.le.s32.totalorder %v901, 16
        %vm966 = vcmp.le.s32.totalorder %v902, 16
        %vm967 = vcmp.le.s32.totalorder %v903, 16
        %vm968 = vcmp.le.s32.totalorder %v904, 16
        %vm969 = vcmp.le.s32.totalorder %v905, 16
        %vm970 = vcmp.le.s32.totalorder %v906, 16
        %vm971 = vmand %vm907, %vm939
        %vm972 = vmand %vm908, %vm940
        %vm973 = vmand %vm909, %vm941
        %vm974 = vmand %vm910, %vm942
        %vm975 = vmand %vm911, %vm943
        %vm976 = vmand %vm912, %vm944
        %vm977 = vmand %vm913, %vm945
        %vm978 = vmand %vm914, %vm946
        %vm979 = vmand %vm915, %vm947
        %vm980 = vmand %vm916, %vm948
        %vm981 = vmand %vm917, %vm949
        %vm982 = vmand %vm918, %vm950
        %vm983 = vmand %vm919, %vm951
        %vm984 = vmand %vm920, %vm952
        %vm985 = vmand %vm921, %vm953
        %vm986 = vmand %vm922, %vm954
        %vm987 = vmand %vm923, %vm955
        %vm988 = vmand %vm924, %vm956
        %vm989 = vmand %vm925, %vm957
        %vm990 = vmand %vm926, %vm958
        %vm991 = vmand %vm927, %vm959
        %vm992 = vmand %vm928, %vm960
        %vm993 = vmand %vm929, %vm961
        %vm994 = vmand %vm930, %vm962
        %vm995 = vmand %vm931, %vm963
        %vm996 = vmand %vm932, %vm964
        %vm997 = vmand %vm933, %vm965
        %vm998 = vmand %vm934, %vm966
        %vm999 = vmand %vm935, %vm967
        %vm1000 = vmand %vm936, %vm968
        %vm1001 = vmand %vm937, %vm969
        %vm1002 = vmand %vm938, %vm970
        %p1003 = scmp.gt.s32.totalorder %s38, 0
        %p1004 = scmp.lt.s32.totalorder %s38, 1
        %v1005 = vld [vmem:[%s413] sm:$0xf]
        %v1006 = vld [vmem:[%s413 + $0x4] sm:$0xf]
        %v1007 = vld [vmem:[%s413 + $0x8] sm:$0xf]
        %v1008 = vld [vmem:[%s413 + $0xc] sm:$0xf]
        %v1009 = vld [vmem:[%s413 + $0x10] sm:$0xf]
        %v1010 = vld [vmem:[%s413 + $0x14] sm:$0xf]
        %v1011 = vld [vmem:[%s413 + $0x18] sm:$0xf]
        %v1012 = vld [vmem:[%s413 + $0x1c] sm:$0xf]
        %v1013 = vld [vmem:[%s413 + $0x20] sm:$0xf]
        %v1014 = vld [vmem:[%s413 + $0x24] sm:$0xf]
        %v1015 = vld [vmem:[%s413 + $0x28] sm:$0xf]
        %v1016 = vld [vmem:[%s413 + $0x2c] sm:$0xf]
        %v1017 = vld [vmem:[%s413 + $0x30] sm:$0xf]
        %v1018 = vld [vmem:[%s413 + $0x34] sm:$0xf]
        %v1019 = vld [vmem:[%s413 + $0x38] sm:$0xf]
        %v1020 = vld [vmem:[%s413 + $0x3c] sm:$0xf]
        %v1021 = vld [vmem:[%s413 + $0x40] sm:$0xf]
        %v1022 = vld [vmem:[%s413 + $0x44] sm:$0xf]
        %v1023 = vld [vmem:[%s413 + $0x48] sm:$0xf]
        %v1024 = vld [vmem:[%s413 + $0x4c] sm:$0xf]
        %v1025 = vld [vmem:[%s413 + $0x50] sm:$0xf]
        %v1026 = vld [vmem:[%s413 + $0x54] sm:$0xf]
        %v1027 = vld [vmem:[%s413 + $0x58] sm:$0xf]
        %v1028 = vld [vmem:[%s413 + $0x5c] sm:$0xf]
        %v1029 = vld [vmem:[%s413 + $0x60] sm:$0xf]
        %v1030 = vld [vmem:[%s413 + $0x64] sm:$0xf]
        %v1031 = vld [vmem:[%s413 + $0x68] sm:$0xf]
        %v1032 = vld [vmem:[%s413 + $0x6c] sm:$0xf]
        %v1033 = vld [vmem:[%s413 + $0x70] sm:$0xf]
        %v1034 = vld [vmem:[%s413 + $0x74] sm:$0xf]
        %v1035 = vld [vmem:[%s413 + $0x78] sm:$0xf]
        %v1036 = vld [vmem:[%s413 + $0x7c] sm:$0xf]
        %v1069 = vunpack.c.l.b16 %v1005
        %v1070 = vunpack.c.l.b16 %v1006
        %v1071 = vunpack.c.l.b16 %v1007
        %v1072 = vunpack.c.l.b16 %v1008
        %v1073 = vunpack.c.l.b16 %v1009
        %v1074 = vunpack.c.l.b16 %v1010
        %v1075 = vunpack.c.l.b16 %v1011
        %v1076 = vunpack.c.l.b16 %v1012
        %v1077 = vunpack.c.l.b16 %v1013
        %v1078 = vunpack.c.l.b16 %v1014
        %v1079 = vunpack.c.l.b16 %v1015
        %v1080 = vunpack.c.l.b16 %v1016
        %v1081 = vunpack.c.l.b16 %v1017
        %v1082 = vunpack.c.l.b16 %v1018
        %v1083 = vunpack.c.l.b16 %v1019
        %v1084 = vunpack.c.l.b16 %v1020
        %v1085 = vunpack.c.l.b16 %v1021
        %v1086 = vunpack.c.l.b16 %v1022
        %v1087 = vunpack.c.l.b16 %v1023
        %v1088 = vunpack.c.l.b16 %v1024
        %v1089 = vunpack.c.l.b16 %v1025
        %v1090 = vunpack.c.l.b16 %v1026
        %v1091 = vunpack.c.l.b16 %v1027
        %v1092 = vunpack.c.l.b16 %v1028
        %v1093 = vunpack.c.l.b16 %v1029
        %v1094 = vunpack.c.l.b16 %v1030
        %v1095 = vunpack.c.l.b16 %v1031
        %v1096 = vunpack.c.l.b16 %v1032
        %v1097 = vunpack.c.l.b16 %v1033
        %v1098 = vunpack.c.l.b16 %v1034
        %v1099 = vunpack.c.l.b16 %v1035
        %v1100 = vunpack.c.l.b16 %v1036
        %v1101 = vpack.c.b16 %v1070, %v1069
        %v1102 = vpack.c.b16 %v1072, %v1071
        %v1103 = vpack.c.b16 %v1074, %v1073
        %v1104 = vpack.c.b16 %v1076, %v1075
        %v1105 = vpack.c.b16 %v1078, %v1077
        %v1106 = vpack.c.b16 %v1080, %v1079
        %v1107 = vpack.c.b16 %v1082, %v1081
        %v1108 = vpack.c.b16 %v1084, %v1083
        %v1109 = vpack.c.b16 %v1086, %v1085
        %v1110 = vpack.c.b16 %v1088, %v1087
        %v1111 = vpack.c.b16 %v1090, %v1089
        %v1112 = vpack.c.b16 %v1092, %v1091
        %v1113 = vpack.c.b16 %v1094, %v1093
        %v1114 = vpack.c.b16 %v1096, %v1095
        %v1115 = vpack.c.b16 %v1098, %v1097
        %v1116 = vpack.c.b16 %v1100, %v1099
        %1133 = vst [vmem:[#allocation2 + $0x18] sm:$0xff] %v1101
        %1134 = vst [vmem:[#allocation2 + $0x20] sm:$0xff] %v1102
        %1135 = vst [vmem:[#allocation2 + $0x28] sm:$0xff] %v1103
        %1136 = vst [vmem:[#allocation2 + $0x30] sm:$0xff] %v1104
        %1137 = vst [vmem:[#allocation2 + $0x38] sm:$0xff] %v1105
        %1138 = vst [vmem:[#allocation2 + $0x40] sm:$0xff] %v1106
        %1139 = vst [vmem:[#allocation2 + $0x48] sm:$0xff] %v1107
        %1140 = vst [vmem:[#allocation2 + $0x50] sm:$0xff] %v1108
        %1141 = vst [vmem:[#allocation2 + $0x58] sm:$0xff] %v1109
        %1142 = vst [vmem:[#allocation2 + $0x60] sm:$0xff] %v1110
        %1143 = vst [vmem:[#allocation2 + $0x68] sm:$0xff] %v1111
        %1144 = vst [vmem:[#allocation2 + $0x70] sm:$0xff] %v1112
        %1145 = vst [vmem:[#allocation2 + $0x78] sm:$0xff] %v1113
        %1146 = vst [vmem:[#allocation2 + $0x80] sm:$0xff] %v1114
        %1147 = vst [vmem:[#allocation2 + $0x88] sm:$0xff] %v1115
        %1148 = vst [vmem:[#allocation2 + $0x90] sm:$0xff] %v1116
        %v1149 = vld [vmem:[%s422] sm:$0xf]
        %v1150 = vld [vmem:[%s422 + $0x4] sm:$0xf]
        %v1151 = vld [vmem:[%s422 + $0x8] sm:$0xf]
        %v1152 = vld [vmem:[%s422 + $0xc] sm:$0xf]
        %s1153 = scalar_select %p1003, 1, 0
        %v1154 = vstv %s1153
        %vm1155 = vcmp.eq.s32.totalorder %v1154, 1
        %v1156 = vsel %vm1155, %v1149, 0
        %v1157 = vsel %vm1155, %v1150, 0
        %v1158 = vsel %vm1155, %v1151, 0
        %v1159 = vsel %vm1155, %v1152, 0
        %v1164 = vunpack.c.l.b16 %v1156
        %v1165 = vunpack.c.l.b16 %v1157
        %v1166 = vunpack.c.l.b16 %v1158
        %v1167 = vunpack.c.l.b16 %v1159
        %v1168 = vpack.c.b16 %v1165, %v1164
        %v1169 = vpack.c.b16 %v1167, %v1166
        %1172 = vst [vmem:[#allocation2 + $0x8] sm:$0xff] %v1168
        %1173 = vst [vmem:[#allocation2 + $0x10] sm:$0xff] %v1169
        %v1174 = vld [vmem:[%s431] sm:$0xf]
        %v1175 = vld [vmem:[%s431 + $0x4] sm:$0xf]
        %v1176 = vld [vmem:[%s431 + $0x8] sm:$0xf]
        %v1177 = vld [vmem:[%s431 + $0xc] sm:$0xf]
        %s1178 = scalar_select %p1004, 1, 0
        %v1179 = vstv %s1178
        %vm1180 = vcmp.eq.s32.totalorder %v1179, 1
        %v1181 = vsel %vm1180, %v1174, 0
        %v1182 = vsel %vm1180, %v1175, 0
        %v1183 = vsel %vm1180, %v1176, 0
        %v1184 = vsel %vm1180, %v1177, 0
        %v1189 = vunpack.c.l.b16 %v1181
        %v1190 = vunpack.c.l.b16 %v1182
        %v1191 = vunpack.c.l.b16 %v1183
        %v1192 = vunpack.c.l.b16 %v1184
        %v1193 = vpack.c.b16 %v1190, %v1189
        %v1194 = vpack.c.b16 %v1192, %v1191
        %1197 = vst [vmem:[#allocation2 + $0x98] sm:$0xff] %v1193
        %1198 = vst [vmem:[#allocation2 + $0xa0] sm:$0xff] %v1194
        %vm1199 = vcmask 1047559
        %vm1200 = vsmask.f32 7966
        %vm1201 = vmand %vm1199, %vm1200
        %v1202 = vld [vmem:[#allocation2] sm:$0x80]
        %v1203 = vsel %vm1201, 0, %v1202
        %1204 = vst [vmem:[#allocation2] sm:$0x80] %v1203
        %vm1205 = vcmask 1040384
        %vm1206 = vsmask.f32 256
        %vm1207 = vmand %vm1205, %vm1206
        %v1208 = vld [vmem:[#allocation2 + $0xa8] sm:$0x1]
        %v1209 = vsel %vm1207, 0, %v1208
        %1210 = vst [vmem:[#allocation2 + $0xa8] sm:$0x1] %v1209
        %v1211 = vld [vmem:[#allocation2] sm:$0x80]
        %v1212 = vld [vmem:[#allocation2 + $0x8] sm:$0xff]
        %v1213 = vld [vmem:[#allocation2 + $0x10] sm:$0xff]
        %v1214 = vld [vmem:[#allocation2 + $0x18] sm:$0xff]
        %v1215 = vld [vmem:[#allocation2 + $0x20] sm:$0xff]
        %v1216 = vld [vmem:[#allocation2 + $0x28] sm:$0xff]
        %v1217 = vld [vmem:[#allocation2 + $0x30] sm:$0xff]
        %v1218 = vld [vmem:[#allocation2 + $0x38] sm:$0xff]
        %v1219 = vld [vmem:[#allocation2 + $0x40] sm:$0xff]
        %v1220 = vld [vmem:[#allocation2 + $0x48] sm:$0xff]
        %v1221 = vld [vmem:[#allocation2 + $0x50] sm:$0xff]
        %v1222 = vld [vmem:[#allocation2 + $0x58] sm:$0xff]
        %v1223 = vld [vmem:[#allocation2 + $0x60] sm:$0xff]
        %v1224 = vld [vmem:[#allocation2 + $0x68] sm:$0xff]
        %v1225 = vld [vmem:[#allocation2 + $0x70] sm:$0xff]
        %v1226 = vld [vmem:[#allocation2 + $0x78] sm:$0xff]
        %v1227 = vld [vmem:[#allocation2 + $0x80] sm:$0xff]
        %v1228 = vld [vmem:[#allocation2 + $0x88] sm:$0xff]
        %v1229 = vld [vmem:[#allocation2 + $0x90] sm:$0xff]
        %v1230 = vld [vmem:[#allocation2 + $0x98] sm:$0xff]
        %v1231 = vld [vmem:[#allocation2 + $0xa0] sm:$0xff]
        %v1233 = vshrl.u32 %v1211, 16
        %v1235 = vrot.slane %v1233, 7
        %v1237 = vshrl.u32 %v1212, 16
        %v1239 = vrot.slane %v1237, 7
        %v1240 = vshll.u32 %v1212, 16
        %v1242 = vor.u32 %v1239, %v1240
        %v1243 = vsel %vm1206, %v1235, %v1242
        %v1245 = vshrl.u32 %v1213, 16
        %v1247 = vrot.slane %v1245, 7
        %v1248 = vshll.u32 %v1213, 16
        %v1250 = vor.u32 %v1247, %v1248
        %v1251 = vsel %vm1206, %v1239, %v1250
        %v1253 = vshrl.u32 %v1214, 16
        %v1255 = vrot.slane %v1253, 7
        %v1256 = vshll.u32 %v1214, 16
        %v1258 = vor.u32 %v1255, %v1256
        %v1259 = vsel %vm1206, %v1247, %v1258
        %v1261 = vshrl.u32 %v1215, 16
        %v1263 = vrot.slane %v1261, 7
        %v1264 = vshll.u32 %v1215, 16
        %v1266 = vor.u32 %v1263, %v1264
        %v1267 = vsel %vm1206, %v1255, %v1266
        %v1269 = vshrl.u32 %v1216, 16
        %v1271 = vrot.slane %v1269, 7
        %v1272 = vshll.u32 %v1216, 16
        %v1274 = vor.u32 %v1271, %v1272
        %v1275 = vsel %vm1206, %v1263, %v1274
        %v1277 = vshrl.u32 %v1217, 16
        %v1279 = vrot.slane %v1277, 7
        %v1280 = vshll.u32 %v1217, 16
        %v1282 = vor.u32 %v1279, %v1280
        %v1283 = vsel %vm1206, %v1271, %v1282
        %v1285 = vshrl.u32 %v1218, 16
        %v1287 = vrot.slane %v1285, 7
        %v1288 = vshll.u32 %v1218, 16
        %v1290 = vor.u32 %v1287, %v1288
        %v1291 = vsel %vm1206, %v1279, %v1290
        %v1293 = vshrl.u32 %v1219, 16
        %v1295 = vrot.slane %v1293, 7
        %v1296 = vshll.u32 %v1219, 16
        %v1298 = vor.u32 %v1295, %v1296
        %v1299 = vsel %vm1206, %v1287, %v1298
        %v1301 = vshrl.u32 %v1220, 16
        %v1303 = vrot.slane %v1301, 7
        %v1304 = vshll.u32 %v1220, 16
        %v1306 = vor.u32 %v1303, %v1304
        %v1307 = vsel %vm1206, %v1295, %v1306
        %v1309 = vshrl.u32 %v1221, 16
        %v1311 = vrot.slane %v1309, 7
        %v1312 = vshll.u32 %v1221, 16
        %v1314 = vor.u32 %v1311, %v1312
        %v1315 = vsel %vm1206, %v1303, %v1314
        %v1317 = vshrl.u32 %v1222, 16
        %v1319 = vrot.slane %v1317, 7
        %v1320 = vshll.u32 %v1222, 16
        %v1322 = vor.u32 %v1319, %v1320
        %v1323 = vsel %vm1206, %v1311, %v1322
        %v1325 = vshrl.u32 %v1223, 16
        %v1327 = vrot.slane %v1325, 7
        %v1328 = vshll.u32 %v1223, 16
        %v1330 = vor.u32 %v1327, %v1328
        %v1331 = vsel %vm1206, %v1319, %v1330
        %v1333 = vshrl.u32 %v1224, 16
        %v1335 = vrot.slane %v1333, 7
        %v1336 = vshll.u32 %v1224, 16
        %v1338 = vor.u32 %v1335, %v1336
        %v1339 = vsel %vm1206, %v1327, %v1338
        %v1341 = vshrl.u32 %v1225, 16
        %v1343 = vrot.slane %v1341, 7
        %v1344 = vshll.u32 %v1225, 16
        %v1346 = vor.u32 %v1343, %v1344
        %v1347 = vsel %vm1206, %v1335, %v1346
        %v1349 = vshrl.u32 %v1226, 16
        %v1351 = vrot.slane %v1349, 7
        %v1352 = vshll.u32 %v1226, 16
        %v1354 = vor.u32 %v1351, %v1352
        %v1355 = vsel %vm1206, %v1343, %v1354
        %v1357 = vshrl.u32 %v1227, 16
        %v1359 = vrot.slane %v1357, 7
        %v1360 = vshll.u32 %v1227, 16
        %v1362 = vor.u32 %v1359, %v1360
        %v1363 = vsel %vm1206, %v1351, %v1362
        %v1365 = vshrl.u32 %v1228, 16
        %v1367 = vrot.slane %v1365, 7
        %v1368 = vshll.u32 %v1228, 16
        %v1370 = vor.u32 %v1367, %v1368
        %v1371 = vsel %vm1206, %v1359, %v1370
        %v1373 = vshrl.u32 %v1229, 16
        %v1375 = vrot.slane %v1373, 7
        %v1376 = vshll.u32 %v1229, 16
        %v1378 = vor.u32 %v1375, %v1376
        %v1379 = vsel %vm1206, %v1367, %v1378
        %v1381 = vshrl.u32 %v1230, 16
        %v1383 = vrot.slane %v1381, 7
        %v1384 = vshll.u32 %v1230, 16
        %v1386 = vor.u32 %v1383, %v1384
        %v1387 = vsel %vm1206, %v1375, %v1386
        %v1389 = vshrl.u32 %v1231, 16
        %v1391 = vrot.slane %v1389, 7
        %v1392 = vshll.u32 %v1231, 16
        %v1394 = vor.u32 %v1391, %v1392
        %v1395 = vsel %vm1206, %v1383, %v1394
        %1416 = vst [vmem:[#allocation3] sm:$0xff] %v1243
        %1417 = vst [vmem:[#allocation3 + $0x18] sm:$0xff] %v1251
        %1418 = vst [vmem:[#allocation3 + $0x30] sm:$0xff] %v1259
        %1419 = vst [vmem:[#allocation3 + $0x48] sm:$0xff] %v1267
        %1420 = vst [vmem:[#allocation3 + $0x60] sm:$0xff] %v1275
        %1421 = vst [vmem:[#allocation3 + $0x78] sm:$0xff] %v1283
        %1422 = vst [vmem:[#allocation3 + $0x90] sm:$0xff] %v1291
        %1423 = vst [vmem:[#allocation3 + $0xa8] sm:$0xff] %v1299
        %1424 = vst [vmem:[#allocation3 + $0xc0] sm:$0xff] %v1307
        %1425 = vst [vmem:[#allocation3 + $0xd8] sm:$0xff] %v1315
        %1426 = vst [vmem:[#allocation3 + $0xf0] sm:$0xff] %v1323
        %1427 = vst [vmem:[#allocation3 + $0x108] sm:$0xff] %v1331
        %1428 = vst [vmem:[#allocation3 + $0x120] sm:$0xff] %v1339
        %1429 = vst [vmem:[#allocation3 + $0x138] sm:$0xff] %v1347
        %1430 = vst [vmem:[#allocation3 + $0x150] sm:$0xff] %v1355
        %1431 = vst [vmem:[#allocation3 + $0x168] sm:$0xff] %v1363
        %1432 = vst [vmem:[#allocation3 + $0x180] sm:$0xff] %v1371
        %1433 = vst [vmem:[#allocation3 + $0x198] sm:$0xff] %v1379
        %1434 = vst [vmem:[#allocation3 + $0x1b0] sm:$0xff] %v1387
        %1435 = vst [vmem:[#allocation3 + $0x1c8] sm:$0xff] %v1395
        %v1436 = vld [vmem:[#allocation2 + $0x8] sm:$0xff]
        %v1437 = vld [vmem:[#allocation2 + $0x10] sm:$0xff]
        %v1438 = vld [vmem:[#allocation2 + $0x18] sm:$0xff]
        %v1439 = vld [vmem:[#allocation2 + $0x20] sm:$0xff]
        %v1440 = vld [vmem:[#allocation2 + $0x28] sm:$0xff]
        %v1441 = vld [vmem:[#allocation2 + $0x30] sm:$0xff]
        %v1442 = vld [vmem:[#allocation2 + $0x38] sm:$0xff]
        %v1443 = vld [vmem:[#allocation2 + $0x40] sm:$0xff]
        %v1444 = vld [vmem:[#allocation2 + $0x48] sm:$0xff]
        %v1445 = vld [vmem:[#allocation2 + $0x50] sm:$0xff]
        %v1446 = vld [vmem:[#allocation2 + $0x58] sm:$0xff]
        %v1447 = vld [vmem:[#allocation2 + $0x60] sm:$0xff]
        %v1448 = vld [vmem:[#allocation2 + $0x68] sm:$0xff]
        %v1449 = vld [vmem:[#allocation2 + $0x70] sm:$0xff]
        %v1450 = vld [vmem:[#allocation2 + $0x78] sm:$0xff]
        %v1451 = vld [vmem:[#allocation2 + $0x80] sm:$0xff]
        %v1452 = vld [vmem:[#allocation2 + $0x88] sm:$0xff]
        %v1453 = vld [vmem:[#allocation2 + $0x90] sm:$0xff]
        %v1454 = vld [vmem:[#allocation2 + $0x98] sm:$0xff]
        %v1455 = vld [vmem:[#allocation2 + $0xa0] sm:$0xff]
        %1456 = vst [vmem:[#allocation3 + $0x8] sm:$0xff] %v1436
        %1457 = vst [vmem:[#allocation3 + $0x20] sm:$0xff] %v1437
        %1458 = vst [vmem:[#allocation3 + $0x38] sm:$0xff] %v1438
        %1459 = vst [vmem:[#allocation3 + $0x50] sm:$0xff] %v1439
        %1460 = vst [vmem:[#allocation3 + $0x68] sm:$0xff] %v1440
        %1461 = vst [vmem:[#allocation3 + $0x80] sm:$0xff] %v1441
        %1462 = vst [vmem:[#allocation3 + $0x98] sm:$0xff] %v1442
        %1463 = vst [vmem:[#allocation3 + $0xb0] sm:$0xff] %v1443
        %1464 = vst [vmem:[#allocation3 + $0xc8] sm:$0xff] %v1444
        %1465 = vst [vmem:[#allocation3 + $0xe0] sm:$0xff] %v1445
        %1466 = vst [vmem:[#allocation3 + $0xf8] sm:$0xff] %v1446
        %1467 = vst [vmem:[#allocation3 + $0x110] sm:$0xff] %v1447
        %1468 = vst [vmem:[#allocation3 + $0x128] sm:$0xff] %v1448
        %1469 = vst [vmem:[#allocation3 + $0x140] sm:$0xff] %v1449
        %1470 = vst [vmem:[#allocation3 + $0x158] sm:$0xff] %v1450
        %1471 = vst [vmem:[#allocation3 + $0x170] sm:$0xff] %v1451
        %1472 = vst [vmem:[#allocation3 + $0x188] sm:$0xff] %v1452
        %1473 = vst [vmem:[#allocation3 + $0x1a0] sm:$0xff] %v1453
        %1474 = vst [vmem:[#allocation3 + $0x1b8] sm:$0xff] %v1454
        %1475 = vst [vmem:[#allocation3 + $0x1d0] sm:$0xff] %v1455
        %v1476 = vld [vmem:[#allocation2 + $0x8] sm:$0xff]
        %v1477 = vld [vmem:[#allocation2 + $0x10] sm:$0xff]
        %v1478 = vld [vmem:[#allocation2 + $0x18] sm:$0xff]
        %v1479 = vld [vmem:[#allocation2 + $0x20] sm:$0xff]
        %v1480 = vld [vmem:[#allocation2 + $0x28] sm:$0xff]
        %v1481 = vld [vmem:[#allocation2 + $0x30] sm:$0xff]
        %v1482 = vld [vmem:[#allocation2 + $0x38] sm:$0xff]
        %v1483 = vld [vmem:[#allocation2 + $0x40] sm:$0xff]
        %v1484 = vld [vmem:[#allocation2 + $0x48] sm:$0xff]
        %v1485 = vld [vmem:[#allocation2 + $0x50] sm:$0xff]
        %v1486 = vld [vmem:[#allocation2 + $0x58] sm:$0xff]
        %v1487 = vld [vmem:[#allocation2 + $0x60] sm:$0xff]
        %v1488 = vld [vmem:[#allocation2 + $0x68] sm:$0xff]
        %v1489 = vld [vmem:[#allocation2 + $0x70] sm:$0xff]
        %v1490 = vld [vmem:[#allocation2 + $0x78] sm:$0xff]
        %v1491 = vld [vmem:[#allocation2 + $0x80] sm:$0xff]
        %v1492 = vld [vmem:[#allocation2 + $0x88] sm:$0xff]
        %v1493 = vld [vmem:[#allocation2 + $0x90] sm:$0xff]
        %v1494 = vld [vmem:[#allocation2 + $0x98] sm:$0xff]
        %v1495 = vld [vmem:[#allocation2 + $0xa0] sm:$0xff]
        %v1496 = vld [vmem:[#allocation2 + $0xa8] sm:$0x1]
        %vm1497 = vsmask.f32 7424
        %v1499 = vshrl.u32 %v1476, 16
        %v1501 = vshll.u32 %v1476, 16
        %v1503 = vrot.slane %v1501, 1
        %v1504 = vor.u32 %v1499, %v1503
        %v1506 = vshll.u32 %v1477, 16
        %v1508 = vrot.slane %v1506, 1
        %v1509 = vsel %vm1497, %v1504, %v1508
        %v1510 = vshrl.u32 %v1477, 16
        %v1512 = vor.u32 %v1510, %v1508
        %v1514 = vshll.u32 %v1478, 16
        %v1516 = vrot.slane %v1514, 1
        %v1517 = vsel %vm1497, %v1512, %v1516
        %v1518 = vshrl.u32 %v1478, 16
        %v1520 = vor.u32 %v1518, %v1516
        %v1522 = vshll.u32 %v1479, 16
        %v1524 = vrot.slane %v1522, 1
        %v1525 = vsel %vm1497, %v1520, %v1524
        %v1526 = vshrl.u32 %v1479, 16
        %v1528 = vor.u32 %v1526, %v1524
        %v1530 = vshll.u32 %v1480, 16
        %v1532 = vrot.slane %v1530, 1
        %v1533 = vsel %vm1497, %v1528, %v1532
        %v1534 = vshrl.u32 %v1480, 16
        %v1536 = vor.u32 %v1534, %v1532
        %v1538 = vshll.u32 %v1481, 16
        %v1540 = vrot.slane %v1538, 1
        %v1541 = vsel %vm1497, %v1536, %v1540
        %v1542 = vshrl.u32 %v1481, 16
        %v1544 = vor.u32 %v1542, %v1540
        %v1546 = vshll.u32 %v1482, 16
        %v1548 = vrot.slane %v1546, 1
        %v1549 = vsel %vm1497, %v1544, %v1548
        %v1550 = vshrl.u32 %v1482, 16
        %v1552 = vor.u32 %v1550, %v1548
        %v1554 = vshll.u32 %v1483, 16
        %v1556 = vrot.slane %v1554, 1
        %v1557 = vsel %vm1497, %v1552, %v1556
        %v1558 = vshrl.u32 %v1483, 16
        %v1560 = vor.u32 %v1558, %v1556
        %v1562 = vshll.u32 %v1484, 16
        %v1564 = vrot.slane %v1562, 1
        %v1565 = vsel %vm1497, %v1560, %v1564
        %v1566 = vshrl.u32 %v1484, 16
        %v1568 = vor.u32 %v1566, %v1564
        %v1570 = vshll.u32 %v1485, 16
        %v1572 = vrot.slane %v1570, 1
        %v1573 = vsel %vm1497, %v1568, %v1572
        %v1574 = vshrl.u32 %v1485, 16
        %v1576 = vor.u32 %v1574, %v1572
        %v1578 = vshll.u32 %v1486, 16
        %v1580 = vrot.slane %v1578, 1
        %v1581 = vsel %vm1497, %v1576, %v1580
        %v1582 = vshrl.u32 %v1486, 16
        %v1584 = vor.u32 %v1582, %v1580
        %v1586 = vshll.u32 %v1487, 16
        %v1588 = vrot.slane %v1586, 1
        %v1589 = vsel %vm1497, %v1584, %v1588
        %v1590 = vshrl.u32 %v1487, 16
        %v1592 = vor.u32 %v1590, %v1588
        %v1594 = vshll.u32 %v1488, 16
        %v1596 = vrot.slane %v1594, 1
        %v1597 = vsel %vm1497, %v1592, %v1596
        %v1598 = vshrl.u32 %v1488, 16
        %v1600 = vor.u32 %v1598, %v1596
        %v1602 = vshll.u32 %v1489, 16
        %v1604 = vrot.slane %v1602, 1
        %v1605 = vsel %vm1497, %v1600, %v1604
        %v1606 = vshrl.u32 %v1489, 16
        %v1608 = vor.u32 %v1606, %v1604
        %v1610 = vshll.u32 %v1490, 16
        %v1612 = vrot.slane %v1610, 1
        %v1613 = vsel %vm1497, %v1608, %v1612
        %v1614 = vshrl.u32 %v1490, 16
        %v1616 = vor.u32 %v1614, %v1612
        %v1618 = vshll.u32 %v1491, 16
        %v1620 = vrot.slane %v1618, 1
        %v1621 = vsel %vm1497, %v1616, %v1620
        %v1622 = vshrl.u32 %v1491, 16
        %v1624 = vor.u32 %v1622, %v1620
        %v1626 = vshll.u32 %v1492, 16
        %v1628 = vrot.slane %v1626, 1
        %v1629 = vsel %vm1497, %v1624, %v1628
        %v1630 = vshrl.u32 %v1492, 16
        %v1632 = vor.u32 %v1630, %v1628
        %v1634 = vshll.u32 %v1493, 16
        %v1636 = vrot.slane %v1634, 1
        %v1637 = vsel %vm1497, %v1632, %v1636
        %v1638 = vshrl.u32 %v1493, 16
        %v1640 = vor.u32 %v1638, %v1636
        %v1642 = vshll.u32 %v1494, 16
        %v1644 = vrot.slane %v1642, 1
        %v1645 = vsel %vm1497, %v1640, %v1644
        %v1646 = vshrl.u32 %v1494, 16
        %v1648 = vor.u32 %v1646, %v1644
        %v1650 = vshll.u32 %v1495, 16
        %v1652 = vrot.slane %v1650, 1
        %v1653 = vsel %vm1497, %v1648, %v1652
        %v1654 = vshrl.u32 %v1495, 16
        %v1656 = vor.u32 %v1654, %v1652
        %v1658 = vshll.u32 %v1496, 16
        %v1660 = vrot.slane %v1658, 1
        %v1661 = vsel %vm1497, %v1656, %v1660
        %1682 = vst [vmem:[#allocation3 + $0x10] sm:$0xff] %v1509
        %1683 = vst [vmem:[#allocation3 + $0x28] sm:$0xff] %v1517
        %1684 = vst [vmem:[#allocation3 + $0x40] sm:$0xff] %v1525
        %1685 = vst [vmem:[#allocation3 + $0x58] sm:$0xff] %v1533
        %1686 = vst [vmem:[#allocation3 + $0x70] sm:$0xff] %v1541
        %1687 = vst [vmem:[#allocation3 + $0x88] sm:$0xff] %v1549
        %1688 = vst [vmem:[#allocation3 + $0xa0] sm:$0xff] %v1557
        %1689 = vst [vmem:[#allocation3 + $0xb8] sm:$0xff] %v1565
        %1690 = vst [vmem:[#allocation3 + $0xd0] sm:$0xff] %v1573
        %1691 = vst [vmem:[#allocation3 + $0xe8] sm:$0xff] %v1581
        %1692 = vst [vmem:[#allocation3 + $0x100] sm:$0xff] %v1589
        %1693 = vst [vmem:[#allocation3 + $0x118] sm:$0xff] %v1597
        %1694 = vst [vmem:[#allocation3 + $0x130] sm:$0xff] %v1605
        %1695 = vst [vmem:[#allocation3 + $0x148] sm:$0xff] %v1613
        %1696 = vst [vmem:[#allocation3 + $0x160] sm:$0xff] %v1621
        %1697 = vst [vmem:[#allocation3 + $0x178] sm:$0xff] %v1629
        %1698 = vst [vmem:[#allocation3 + $0x190] sm:$0xff] %v1637
        %1699 = vst [vmem:[#allocation3 + $0x1a8] sm:$0xff] %v1645
        %1700 = vst [vmem:[#allocation3 + $0x1c0] sm:$0xff] %v1653
        %1701 = vst [vmem:[#allocation3 + $0x1d8] sm:$0xff] %v1661
        %v1702 = vld [vmem:[#allocation3] sm:$0xff]
        %v1703 = vld [vmem:[#allocation3 + $0x8] sm:$0xff]
        %v1704 = vld [vmem:[#allocation3 + $0x10] sm:$0xff]
        %v1705 = vld [vmem:[#allocation3 + $0x18] sm:$0xff]
        %v1706 = vld [vmem:[#allocation3 + $0x20] sm:$0xff]
        %v1707 = vld [vmem:[#allocation3 + $0x28] sm:$0xff]
        %v1708 = vld [vmem:[#allocation3 + $0x30] sm:$0xff]
        %v1709 = vld [vmem:[#allocation3 + $0x38] sm:$0xff]
        %v1710 = vld [vmem:[#allocation3 + $0x40] sm:$0xff]
        %v1711 = vld [vmem:[#allocation3 + $0x48] sm:$0xff]
        %v1712 = vld [vmem:[#allocation3 + $0x50] sm:$0xff]
        %v1713 = vld [vmem:[#allocation3 + $0x58] sm:$0xff]
        %v1714 = vld [vmem:[#allocation3 + $0x60] sm:$0xff]
        %v1715 = vld [vmem:[#allocation3 + $0x68] sm:$0xff]
        %v1716 = vld [vmem:[#allocation3 + $0x70] sm:$0xff]
        %v1717 = vld [vmem:[#allocation3 + $0x78] sm:$0xff]
        %v1718 = vld [vmem:[#allocation3 + $0x80] sm:$0xff]
        %v1719 = vld [vmem:[#allocation3 + $0x88] sm:$0xff]
        %v1720 = vld [vmem:[#allocation3 + $0x90] sm:$0xff]
        %v1721 = vld [vmem:[#allocation3 + $0x98] sm:$0xff]
        %v1722 = vld [vmem:[#allocation3 + $0xa0] sm:$0xff]
        %v1723 = vld [vmem:[#allocation3 + $0xa8] sm:$0xff]
        %v1724 = vld [vmem:[#allocation3 + $0xb0] sm:$0xff]
        %v1725 = vld [vmem:[#allocation3 + $0xb8] sm:$0xff]
        %v1726 = vld [vmem:[#allocation3 + $0xc0] sm:$0xff]
        %v1727 = vld [vmem:[#allocation3 + $0xc8] sm:$0xff]
        %v1728 = vld [vmem:[#allocation3 + $0xd0] sm:$0xff]
        %v1729 = vld [vmem:[#allocation3 + $0xd8] sm:$0xff]
        %v1730 = vld [vmem:[#allocation3 + $0xe0] sm:$0xff]
        %v1731 = vld [vmem:[#allocation3 + $0xe8] sm:$0xff]
        %v1732 = vld [vmem:[#allocation3 + $0xf0] sm:$0xff]
        %v1733 = vld [vmem:[#allocation3 + $0xf8] sm:$0xff]
        %v1734 = vld [vmem:[#allocation3 + $0x100] sm:$0xff]
        %v1735 = vld [vmem:[#allocation3 + $0x108] sm:$0xff]
        %v1736 = vld [vmem:[#allocation3 + $0x110] sm:$0xff]
        %v1737 = vld [vmem:[#allocation3 + $0x118] sm:$0xff]
        %v1738 = vld [vmem:[#allocation3 + $0x120] sm:$0xff]
        %v1739 = vld [vmem:[#allocation3 + $0x128] sm:$0xff]
        %v1740 = vld [vmem:[#allocation3 + $0x130] sm:$0xff]
        %v1741 = vld [vmem:[#allocation3 + $0x138] sm:$0xff]
        %v1742 = vld [vmem:[#allocation3 + $0x140] sm:$0xff]
        %v1743 = vld [vmem:[#allocation3 + $0x148] sm:$0xff]
        %v1744 = vld [vmem:[#allocation3 + $0x150] sm:$0xff]
        %v1745 = vld [vmem:[#allocation3 + $0x158] sm:$0xff]
        %v1746 = vld [vmem:[#allocation3 + $0x160] sm:$0xff]
        %v1747 = vld [vmem:[#allocation3 + $0x168] sm:$0xff]
        %v1748 = vld [vmem:[#allocation3 + $0x170] sm:$0xff]
        %v1749 = vld [vmem:[#allocation3 + $0x178] sm:$0xff]
        %v1750 = vld [vmem:[#allocation9] sm:$0xf]
        %v1751 = vld [vmem:[#allocation9 + $0x4] sm:$0xf]
        %v1752 = vld [vmem:[#allocation9 + $0x8] sm:$0xf]
        %v1753 = vld [vmem:[#allocation9 + $0xc] sm:$0xf]
        %v1754 = vld [vmem:[#allocation9 + $0x10] sm:$0xf]
        %v1755 = vld [vmem:[#allocation9 + $0x14] sm:$0xf]
        %v1756 = vld [vmem:[#allocation9 + $0x18] sm:$0xf]
        %v1757 = vld [vmem:[#allocation9 + $0x1c] sm:$0xf]
        %v1758 = vld [vmem:[#allocation9 + $0x20] sm:$0xf]
        %v1759 = vld [vmem:[#allocation9 + $0x24] sm:$0xf]
        %v1760 = vld [vmem:[#allocation9 + $0x28] sm:$0xf]
        %v1761 = vld [vmem:[#allocation9 + $0x2c] sm:$0xf]
        %v1762 = vld [vmem:[#allocation9 + $0x30] sm:$0xf]
        %v1763 = vld [vmem:[#allocation9 + $0x34] sm:$0xf]
        %v1764 = vld [vmem:[#allocation9 + $0x38] sm:$0xf]
        %v1765 = vld [vmem:[#allocation9 + $0x3c] sm:$0xf]
        %v1766 = vld [vmem:[#allocation9 + $0x40] sm:$0xf]
        %v1767 = vld [vmem:[#allocation9 + $0x44] sm:$0xf]
        %v1768 = vld [vmem:[#allocation9 + $0x48] sm:$0xf]
        %v1769 = vld [vmem:[#allocation9 + $0x4c] sm:$0xf]
        %v1770 = vld [vmem:[#allocation9 + $0x50] sm:$0xf]
        %v1771 = vld [vmem:[#allocation9 + $0x54] sm:$0xf]
        %v1772 = vld [vmem:[#allocation9 + $0x58] sm:$0xf]
        %v1773 = vld [vmem:[#allocation9 + $0x5c] sm:$0xf]
        %v1774 = vld [vmem:[#allocation9 + $0x60] sm:$0xf]
        %v1775 = vld [vmem:[#allocation9 + $0x64] sm:$0xf]
        %v1776 = vld [vmem:[#allocation9 + $0x68] sm:$0xf]
        %v1777 = vld [vmem:[#allocation9 + $0x6c] sm:$0xf]
        %v1778 = vld [vmem:[#allocation9 + $0x70] sm:$0xf]
        %v1779 = vld [vmem:[#allocation9 + $0x74] sm:$0xf]
        %v1780 = vld [vmem:[#allocation9 + $0x78] sm:$0xf]
        %v1781 = vld [vmem:[#allocation9 + $0x7c] sm:$0xf]
        %v1782 = vld [vmem:[#allocation9 + $0x80] sm:$0xf]
        %v1783 = vld [vmem:[#allocation9 + $0x84] sm:$0xf]
        %v1784 = vld [vmem:[#allocation9 + $0x88] sm:$0xf]
        %v1785 = vld [vmem:[#allocation9 + $0x8c] sm:$0xf]
        %v1786 = vld [vmem:[#allocation9 + $0x90] sm:$0xf]
        %v1787 = vld [vmem:[#allocation9 + $0x94] sm:$0xf]
        %v1788 = vld [vmem:[#allocation9 + $0x98] sm:$0xf]
        %v1789 = vld [vmem:[#allocation9 + $0x9c] sm:$0xf]
        %v1790 = vld [vmem:[#allocation9 + $0xa0] sm:$0xf]
        %v1791 = vld [vmem:[#allocation9 + $0xa4] sm:$0xf]
        %v1792 = vld [vmem:[#allocation9 + $0xa8] sm:$0xf]
        %v1793 = vld [vmem:[#allocation9 + $0xac] sm:$0xf]
        %v1794 = vld [vmem:[#allocation9 + $0xb0] sm:$0xf]
        %v1795 = vld [vmem:[#allocation9 + $0xb4] sm:$0xf]
        %v1796 = vld [vmem:[#allocation9 + $0xb8] sm:$0xf]
        %v1797 = vld [vmem:[#allocation9 + $0xbc] sm:$0xf]
        %v1798 = vld [vmem:[#allocation3 + $0x180] sm:$0xff]
        %v1799 = vld [vmem:[#allocation3 + $0x188] sm:$0xff]
        %v1800 = vld [vmem:[#allocation3 + $0x190] sm:$0xff]
        %v1801 = vld [vmem:[#allocation3 + $0x198] sm:$0xff]
        %v1802 = vld [vmem:[#allocation3 + $0x1a0] sm:$0xff]
        %v1803 = vld [vmem:[#allocation3 + $0x1a8] sm:$0xff]
        %s1804 = scalar_lea.vmem [#allocation9], 192
        %v1805 = vld [vmem:[%s1804] sm:$0xf]
        %v1806 = vld [vmem:[%s1804 + $0x4] sm:$0xf]
        %v1807 = vld [vmem:[%s1804 + $0x8] sm:$0xf]
        %v1808 = vld [vmem:[%s1804 + $0xc] sm:$0xf]
        %v1809 = vld [vmem:[%s1804 + $0x10] sm:$0xf]
        %v1810 = vld [vmem:[%s1804 + $0x14] sm:$0xf]
        %v1811 = vld [vmem:[%s1804 + $0x18] sm:$0xf]
        %v1812 = vld [vmem:[%s1804 + $0x1c] sm:$0xf]
        %v1813 = vld [vmem:[%s1804 + $0x20] sm:$0xf]
        %v1814 = vld [vmem:[%s1804 + $0x24] sm:$0xf]
        %v1815 = vld [vmem:[%s1804 + $0x28] sm:$0xf]
        %v1816 = vld [vmem:[%s1804 + $0x2c] sm:$0xf]
        %v1817 = vld [vmem:[%s1804 + $0x30] sm:$0xf]
        %v1818 = vld [vmem:[%s1804 + $0x34] sm:$0xf]
        %v1819 = vld [vmem:[%s1804 + $0x38] sm:$0xf]
        %v1820 = vld [vmem:[%s1804 + $0x3c] sm:$0xf]
        %v1821 = vld [vmem:[%s1804 + $0x40] sm:$0xf]
        %v1822 = vld [vmem:[%s1804 + $0x44] sm:$0xf]
        %v1823 = vld [vmem:[%s1804 + $0x48] sm:$0xf]
        %v1824 = vld [vmem:[%s1804 + $0x4c] sm:$0xf]
        %v1825 = vld [vmem:[%s1804 + $0x50] sm:$0xf]
        %v1826 = vld [vmem:[%s1804 + $0x54] sm:$0xf]
        %v1827 = vld [vmem:[%s1804 + $0x58] sm:$0xf]
        %v1828 = vld [vmem:[%s1804 + $0x5c] sm:$0xf]
        %v1829 = vld [vmem:[%s1804 + $0x60] sm:$0xf]
        %v1830 = vld [vmem:[%s1804 + $0x64] sm:$0xf]
        %v1831 = vld [vmem:[%s1804 + $0x68] sm:$0xf]
        %v1832 = vld [vmem:[%s1804 + $0x6c] sm:$0xf]
        %v1833 = vld [vmem:[%s1804 + $0x70] sm:$0xf]
        %v1834 = vld [vmem:[%s1804 + $0x74] sm:$0xf]
        %v1835 = vld [vmem:[%s1804 + $0x78] sm:$0xf]
        %v1836 = vld [vmem:[%s1804 + $0x7c] sm:$0xf]
        %v1837 = vld [vmem:[%s1804 + $0x80] sm:$0xf]
        %v1838 = vld [vmem:[%s1804 + $0x84] sm:$0xf]
        %v1839 = vld [vmem:[%s1804 + $0x88] sm:$0xf]
        %v1840 = vld [vmem:[%s1804 + $0x8c] sm:$0xf]
        %v1841 = vld [vmem:[%s1804 + $0x90] sm:$0xf]
        %v1842 = vld [vmem:[%s1804 + $0x94] sm:$0xf]
        %v1843 = vld [vmem:[%s1804 + $0x98] sm:$0xf]
        %v1844 = vld [vmem:[%s1804 + $0x9c] sm:$0xf]
        %v1845 = vld [vmem:[%s1804 + $0xa0] sm:$0xf]
        %v1846 = vld [vmem:[%s1804 + $0xa4] sm:$0xf]
        %v1847 = vld [vmem:[%s1804 + $0xa8] sm:$0xf]
        %v1848 = vld [vmem:[%s1804 + $0xac] sm:$0xf]
        %v1849 = vld [vmem:[%s1804 + $0xb0] sm:$0xf]
        %v1850 = vld [vmem:[%s1804 + $0xb4] sm:$0xf]
        %v1851 = vld [vmem:[%s1804 + $0xb8] sm:$0xf]
        %v1852 = vld [vmem:[%s1804 + $0xbc] sm:$0xf]
        %v1901 = vunpack.c.l.b16 %v1805
        %v1902 = vunpack.c.l.b16 %v1806
        %v1903 = vunpack.c.l.b16 %v1807
        %v1904 = vunpack.c.l.b16 %v1808
        %v1905 = vunpack.c.l.b16 %v1809
        %v1906 = vunpack.c.l.b16 %v1810
        %v1907 = vunpack.c.l.b16 %v1811
        %v1908 = vunpack.c.l.b16 %v1812
        %v1909 = vunpack.c.l.b16 %v1813
        %v1910 = vunpack.c.l.b16 %v1814
        %v1911 = vunpack.c.l.b16 %v1815
        %v1912 = vunpack.c.l.b16 %v1816
        %v1913 = vunpack.c.l.b16 %v1817
        %v1914 = vunpack.c.l.b16 %v1818
        %v1915 = vunpack.c.l.b16 %v1819
        %v1916 = vunpack.c.l.b16 %v1820
        %v1917 = vunpack.c.l.b16 %v1821
        %v1918 = vunpack.c.l.b16 %v1822
        %v1919 = vunpack.c.l.b16 %v1823
        %v1920 = vunpack.c.l.b16 %v1824
        %v1921 = vunpack.c.l.b16 %v1825
        %v1922 = vunpack.c.l.b16 %v1826
        %v1923 = vunpack.c.l.b16 %v1827
        %v1924 = vunpack.c.l.b16 %v1828
        %v1925 = vunpack.c.l.b16 %v1829
        %v1926 = vunpack.c.l.b16 %v1830
        %v1927 = vunpack.c.l.b16 %v1831
        %v1928 = vunpack.c.l.b16 %v1832
        %v1929 = vunpack.c.l.b16 %v1833
        %v1930 = vunpack.c.l.b16 %v1834
        %v1931 = vunpack.c.l.b16 %v1835
        %v1932 = vunpack.c.l.b16 %v1836
        %v1933 = vunpack.c.l.b16 %v1837
        %v1934 = vunpack.c.l.b16 %v1838
        %v1935 = vunpack.c.l.b16 %v1839
        %v1936 = vunpack.c.l.b16 %v1840
        %v1937 = vunpack.c.l.b16 %v1841
        %v1938 = vunpack.c.l.b16 %v1842
        %v1939 = vunpack.c.l.b16 %v1843
        %v1940 = vunpack.c.l.b16 %v1844
        %v1941 = vunpack.c.l.b16 %v1845
        %v1942 = vunpack.c.l.b16 %v1846
        %v1943 = vunpack.c.l.b16 %v1847
        %v1944 = vunpack.c.l.b16 %v1848
        %v1945 = vunpack.c.l.b16 %v1849
        %v1946 = vunpack.c.l.b16 %v1850
        %v1947 = vunpack.c.l.b16 %v1851
        %v1948 = vunpack.c.l.b16 %v1852
        %v1949 = vpack.c.b16 %v1902, %v1901
        %v1950 = vpack.c.b16 %v1904, %v1903
        %v1951 = vpack.c.b16 %v1906, %v1905
        %v1952 = vpack.c.b16 %v1908, %v1907
        %v1953 = vpack.c.b16 %v1910, %v1909
        %v1954 = vpack.c.b16 %v1912, %v1911
        %v1955 = vpack.c.b16 %v1914, %v1913
        %v1956 = vpack.c.b16 %v1916, %v1915
        %v1957 = vpack.c.b16 %v1918, %v1917
        %v1958 = vpack.c.b16 %v1920, %v1919
        %v1959 = vpack.c.b16 %v1922, %v1921
        %v1960 = vpack.c.b16 %v1924, %v1923
        %v1961 = vpack.c.b16 %v1926, %v1925
        %v1962 = vpack.c.b16 %v1928, %v1927
        %v1963 = vpack.c.b16 %v1930, %v1929
        %v1964 = vpack.c.b16 %v1932, %v1931
        %v1965 = vpack.c.b16 %v1934, %v1933
        %v1966 = vpack.c.b16 %v1936, %v1935
        %v1967 = vpack.c.b16 %v1938, %v1937
        %v1968 = vpack.c.b16 %v1940, %v1939
        %v1969 = vpack.c.b16 %v1942, %v1941
        %v1970 = vpack.c.b16 %v1944, %v1943
        %v1971 = vpack.c.b16 %v1946, %v1945
        %v1972 = vpack.c.b16 %v1948, %v1947
        %1997 = vmatprep.subr.bf16.mxu0 0
        %1998 = vmatpush1.bf16.msra.mxu0 %v1949
        %1999 = vmatprep.subr.bf16.mxu0 0
        %2000 = vmatpush1.bf16.msra.mxu0 %v1950
        %2001 = vmatprep.subr.bf16.mxu0 0
        %2002 = vmatpush1.bf16.msra.mxu0 %v1951
        %2003 = vmatprep.subr.bf16.mxu0 0
        %2004 = vmatpush1.bf16.msra.mxu0 %v1952
        %2005 = vmatprep.subr.bf16.mxu0 0
        %2006 = vmatpush1.bf16.msra.mxu0 %v1953
        %2007 = vmatprep.subr.bf16.mxu0 0
        %2008 = vmatpush1.bf16.msra.mxu0 %v1954
        %2009 = vmatprep.subr.bf16.mxu0 0
        %2010 = vmatpush1.bf16.msra.mxu0 %v1955
        %2011 = vmatprep.subr.bf16.mxu0 0
        %2012 = vmatpush1.bf16.msra.mxu0 %v1956
        %2013 = vmatprep.subr.bf16.mxu0 0
        %2014 = vmatpush1.bf16.msra.mxu0 %v1957
        %2015 = vmatprep.subr.bf16.mxu0 0
        %2016 = vmatpush1.bf16.msra.mxu0 %v1958
        %2017 = vmatprep.subr.bf16.mxu0 0
        %2018 = vmatpush1.bf16.msra.mxu0 %v1959
        %2019 = vmatprep.subr.bf16.mxu0 0
        %2020 = vmatpush1.bf16.msra.mxu0 %v1960
        %2021 = vmatprep.subr.bf16.mxu0 0
        %2022 = vmatpush1.bf16.msra.mxu0 %v1961
        %2023 = vmatprep.subr.bf16.mxu0 0
        %2024 = vmatpush1.bf16.msra.mxu0 %v1962
        %2025 = vmatprep.subr.bf16.mxu0 0
        %2026 = vmatpush1.bf16.msra.mxu0 %v1963
        %2027 = vmatprep.subr.bf16.mxu0 0
        %2028 = vmatpush1.bf16.msra.mxu0 %v1964
        %2029 = vmatprep.mubr.bf16.mxu0 %v1709
        %2030 = vmatmul.mubr.bf16.gmra.mrb[0].mxu0 %v1708
        %v2031 = vpop.f32.mrb[0].mxu0
        %v2032 = vadd.f32 0.0, %v2031
        %v2033 = vpop.f32.mrb[0].mxu0
        %v2034 = vpop.f32.mrb[0].mxu0
        %v2035 = vadd.f32 0.0, %v2034
        %v2036 = vpop.f32.mrb[0].mxu0
        %2037 = vmatprep.mubr.bf16.mxu0 %v1712
        %2038 = vmatmul.mubr.bf16.gmra.mrb[0].mxu0 %v1711
        %v2039 = vpop.f32.mrb[0].mxu0
        %v2040 = vadd.f32 0.0, %v2039
        %v2041 = vpop.f32.mrb[0].mxu0
        %v2042 = vpop.f32.mrb[0].mxu0
        %v2043 = vadd.f32 0.0, %v2042
        %v2044 = vpop.f32.mrb[0].mxu0
        %2045 = vmatprep.mubr.bf16.mxu0 %v1715
        %2046 = vmatmul.mubr.bf16.gmra.mrb[0].mxu0 %v1714
        %v2047 = vpop.f32.mrb[0].mxu0
        %v2048 = vadd.f32 0.0, %v2047
        %v2049 = vpop.f32.mrb[0].mxu0
        %v2050 = vpop.f32.mrb[0].mxu0
        %v2051 = vadd.f32 0.0, %v2050
        %v2052 = vpop.f32.mrb[0].mxu0
        %2053 = vmatprep.mubr.bf16.mxu0 %v1718
        %2054 = vmatmul.mubr.bf16.gmra.mrb[0].mxu0 %v1717
        %v2055 = vpop.f32.mrb[0].mxu0
        %v2056 = vadd.f32 0.0, %v2055
        %v2057 = vpop.f32.mrb[0].mxu0
        %v2058 = vpop.f32.mrb[0].mxu0
        %v2059 = vadd.f32 0.0, %v2058
        %v2060 = vpop.f32.mrb[0].mxu0
        %2061 = vmatprep.mubr.bf16.mxu0 %v1721
        %2062 = vmatmul.mubr.bf16.gmra.mrb[0].mxu0 %v1720
        %v2063 = vpop.f32.mrb[0].mxu0
        %v2064 = vadd.f32 0.0, %v2063
        %v2065 = vpop.f32.mrb[0].mxu0
        %v2066 = vpop.f32.mrb[0].mxu0
        %v2067 = vadd.f32 0.0, %v2066
        %v2068 = vpop.f32.mrb[0].mxu0
        %2069 = vmatprep.mubr.bf16.mxu0 %v1724
        %2070 = vmatmul.mubr.bf16.gmra.mrb[0].mxu0 %v1723
        %v2071 = vpop.f32.mrb[0].mxu0
        %v2072 = vadd.f32 0.0, %v2071
        %v2073 = vpop.f32.mrb[0].mxu0
        %v2074 = vpop.f32.mrb[0].mxu0
        %v2075 = vadd.f32 0.0, %v2074
        %v2076 = vpop.f32.mrb[0].mxu0
        %2077 = vmatprep.mubr.bf16.mxu0 %v1727
        %2078 = vmatmul.mubr.bf16.gmra.mrb[0].mxu0 %v1726
        %v2079 = vpop.f32.mrb[0].mxu0
        %v2080 = vadd.f32 0.0, %v2079
        %v2081 = vpop.f32.mrb[0].mxu0
        %v2082 = vpop.f32.mrb[0].mxu0
        %v2083 = vadd.f32 0.0, %v2082
        %v2084 = vpop.f32.mrb[0].mxu0
        %2085 = vmatprep.mubr.bf16.mxu0 %v1730
        %2086 = vmatmul.mubr.bf16.gmra.mrb[0].mxu0 %v1729
        %v2087 = vpop.f32.mrb[0].mxu0
        %v2088 = vadd.f32 0.0, %v2087
        %v2089 = vpop.f32.mrb[0].mxu0
        %v2090 = vpop.f32.mrb[0].mxu0
        %v2091 = vadd.f32 0.0, %v2090
        %v2092 = vpop.f32.mrb[0].mxu0
        %2093 = vmatprep.mubr.bf16.mxu0 %v1733
        %2094 = vmatmul.mubr.bf16.gmra.mrb[0].mxu0 %v1732
        %v2095 = vpop.f32.mrb[0].mxu0
        %v2096 = vadd.f32 0.0, %v2095
        %v2097 = vpop.f32.mrb[0].mxu0
        %v2098 = vpop.f32.mrb[0].mxu0
        %v2099 = vadd.f32 0.0, %v2098
        %v2100 = vpop.f32.mrb[0].mxu0
        %2101 = vmatprep.mubr.bf16.mxu0 %v1736
        %2102 = vmatmul.mubr.bf16.gmra.mrb[0].mxu0 %v1735
        %v2103 = vpop.f32.mrb[0].mxu0
        %v2104 = vadd.f32 0.0, %v2103
        %v2105 = vpop.f32.mrb[0].mxu0
        %v2106 = vpop.f32.mrb[0].mxu0
        %v2107 = vadd.f32 0.0, %v2106
        %v2108 = vpop.f32.mrb[0].mxu0
        %2109 = vmatprep.mubr.bf16.mxu0 %v1739
        %2110 = vmatmul.mubr.bf16.gmra.mrb[0].mxu0 %v1738
        %v2111 = vpop.f32.mrb[0].mxu0
        %v2112 = vadd.f32 0.0, %v2111
        %v2113 = vpop.f32.mrb[0].mxu0
        %v2114 = vpop.f32.mrb[0].mxu0
        %v2115 = vadd.f32 0.0, %v2114
        %v2116 = vpop.f32.mrb[0].mxu0
        %2117 = vmatprep.mubr.bf16.mxu0 %v1742
        %2118 = vmatmul.mubr.bf16.gmra.mrb[0].mxu0 %v1741
        %v2119 = vpop.f32.mrb[0].mxu0
        %v2120 = vadd.f32 0.0, %v2119
        %v2121 = vpop.f32.mrb[0].mxu0
        %v2122 = vpop.f32.mrb[0].mxu0
        %v2123 = vadd.f32 0.0, %v2122
        %v2124 = vpop.f32.mrb[0].mxu0
        %2125 = vmatprep.mubr.bf16.mxu0 %v1745
        %2126 = vmatmul.mubr.bf16.gmra.mrb[0].mxu0 %v1744
        %v2127 = vpop.f32.mrb[0].mxu0
        %v2128 = vadd.f32 0.0, %v2127
        %v2129 = vpop.f32.mrb[0].mxu0
        %v2130 = vpop.f32.mrb[0].mxu0
        %v2131 = vadd.f32 0.0, %v2130
        %v2132 = vpop.f32.mrb[0].mxu0
        %2133 = vmatprep.mubr.bf16.mxu0 %v1748
        %2134 = vmatmul.mubr.bf16.gmra.mrb[0].mxu0 %v1747
        %v2135 = vpop.f32.mrb[0].mxu0
        %v2136 = vadd.f32 0.0, %v2135
        %v2137 = vpop.f32.mrb[0].mxu0
        %v2138 = vpop.f32.mrb[0].mxu0
        %v2139 = vadd.f32 0.0, %v2138
        %v2140 = vpop.f32.mrb[0].mxu0
        %2141 = vmatprep.mubr.bf16.mxu0 %v1799
        %2142 = vmatmul.mubr.bf16.gmra.mrb[0].mxu0 %v1798
        %v2143 = vpop.f32.mrb[0].mxu0
        %v2144 = vadd.f32 0.0, %v2143
        %v2145 = vpop.f32.mrb[0].mxu0
        %v2146 = vpop.f32.mrb[0].mxu0
        %v2147 = vadd.f32 0.0, %v2146
        %v2148 = vpop.f32.mrb[0].mxu0
        %2149 = vmatprep.mubr.bf16.mxu0 %v1802
        %2150 = vmatmul.mubr.bf16.gmra.mrb[0].mxu0 %v1801
        %v2151 = vpop.f32.mrb[0].mxu0
        %v2152 = vadd.f32 0.0, %v2151
        %v2153 = vpop.f32.mrb[0].mxu0
        %v2154 = vpop.f32.mrb[0].mxu0
        %v2155 = vadd.f32 0.0, %v2154
        %v2156 = vpop.f32.mrb[0].mxu0
        %2157 = vdwg.mxu0
        %2158 = vmatprep.subr.bf16.mxu0 0
        %2159 = vmatpush1.bf16.msra.mxu0 %v1965
        %2160 = vmatprep.subr.bf16.mxu0 0
        %2161 = vmatpush1.bf16.msra.mxu0 %v1966
        %2162 = vmatprep.subr.bf16.mxu0 0
        %2163 = vmatpush1.bf16.msra.mxu0 %v1967
        %2164 = vmatprep.subr.bf16.mxu0 0
        %2165 = vmatpush1.bf16.msra.mxu0 %v1968
        %2166 = vmatprep.subr.bf16.mxu0 0
        %2167 = vmatpush1.bf16.msra.mxu0 %v1969
        %2168 = vmatprep.subr.bf16.mxu0 0
        %2169 = vmatpush1.bf16.msra.mxu0 %v1970
        %2170 = vmatprep.subr.bf16.mxu0 0
        %2171 = vmatpush1.bf16.msra.mxu0 %v1971
        %2172 = vmatprep.subr.bf16.mxu0 0
        %2173 = vmatpush1.bf16.msra.mxu0 %v1972
        %2174 = vmatprep.subr.bf16.mxu0 0
        %2175 = vmatpush1.bf16.msra.mxu0 0
        %2176 = vmatprep.subr.bf16.mxu0 0
        %2177 = vmatpush1.bf16.msra.mxu0 0
        %2178 = vmatprep.subr.bf16.mxu0 0
        %2179 = vmatpush1.bf16.msra.mxu0 0
        %2180 = vmatprep.subr.bf16.mxu0 0
        %2181 = vmatpush1.bf16.msra.mxu0 0
        %2182 = vmatprep.subr.bf16.mxu0 0
        %2183 = vmatpush1.bf16.msra.mxu0 0
        %2184 = vmatprep.subr.bf16.mxu0 0
        %2185 = vmatpush1.bf16.msra.mxu0 0
        %2186 = vmatprep.subr.bf16.mxu0 0
        %2187 = vmatpush1.bf16.msra.mxu0 0
        %2188 = vmatprep.subr.bf16.mxu0 0
        %2189 = vmatpush1.bf16.msra.mxu0 0
        %2190 = vmatprep.mubr.bf16.mxu0 0
        %2191 = vmatmul.mubr.bf16.gmra.mrb[0].mxu0 %v1710
        %v2192 = vpop.f32.mrb[0].mxu0
        %v2193 = vadd.f32 %v2032, %v2192
        %v2194 = vpop.f32.mrb[0].mxu0
        %v2195 = vpop.f32.mrb[0].mxu0
        %v2196 = vadd.f32 %v2035, %v2195
        %v2197 = vpop.f32.mrb[0].mxu0
        %2198 = vmatprep.mubr.bf16.mxu0 0
        %2199 = vmatmul.mubr.bf16.gmra.mrb[0].mxu0 %v1713
        %v2200 = vpop.f32.mrb[0].mxu0
        %v2201 = vadd.f32 %v2040, %v2200
        %v2202 = vpop.f32.mrb[0].mxu0
        %v2203 = vpop.f32.mrb[0].mxu0
        %v2204 = vadd.f32 %v2043, %v2203
        %v2205 = vpop.f32.mrb[0].mxu0
        %2206 = vmatprep.mubr.bf16.mxu0 0
        %2207 = vmatmul.mubr.bf16.gmra.mrb[0].mxu0 %v1716
        %v2208 = vpop.f32.mrb[0].mxu0
        %v2209 = vadd.f32 %v2048, %v2208
        %v2210 = vpop.f32.mrb[0].mxu0
        %v2211 = vpop.f32.mrb[0].mxu0
        %v2212 = vadd.f32 %v2051, %v2211
        %v2213 = vpop.f32.mrb[0].mxu0
        %2214 = vmatprep.mubr.bf16.mxu0 0
        %2215 = vmatmul.mubr.bf16.gmra.mrb[0].mxu0 %v1719
        %v2216 = vpop.f32.mrb[0].mxu0
        %v2217 = vadd.f32 %v2056, %v2216
        %v2218 = vpop.f32.mrb[0].mxu0
        %v2219 = vpop.f32.mrb[0].mxu0
        %v2220 = vadd.f32 %v2059, %v2219
        %v2221 = vpop.f32.mrb[0].mxu0
        %2222 = vmatprep.mubr.bf16.mxu0 0
        %2223 = vmatmul.mubr.bf16.gmra.mrb[0].mxu0 %v1722
        %v2224 = vpop.f32.mrb[0].mxu0
        %v2225 = vadd.f32 %v2064, %v2224
        %v2226 = vpop.f32.mrb[0].mxu0
        %v2227 = vpop.f32.mrb[0].mxu0
        %v2228 = vadd.f32 %v2067, %v2227
        %v2229 = vpop.f32.mrb[0].mxu0
        %2230 = vmatprep.mubr.bf16.mxu0 0
        %2231 = vmatmul.mubr.bf16.gmra.mrb[0].mxu0 %v1725
        %v2232 = vpop.f32.mrb[0].mxu0
        %v2233 = vadd.f32 %v2072, %v2232
        %v2234 = vpop.f32.mrb[0].mxu0
        %v2235 = vpop.f32.mrb[0].mxu0
        %v2236 = vadd.f32 %v2075, %v2235
        %v2237 = vpop.f32.mrb[0].mxu0
        %2238 = vmatprep.mubr.bf16.mxu0 0
        %2239 = vmatmul.mubr.bf16.gmra.mrb[0].mxu0 %v1728
        %v2240 = vpop.f32.mrb[0].mxu0
        %v2241 = vadd.f32 %v2080, %v2240
        %v2242 = vpop.f32.mrb[0].mxu0
        %v2243 = vpop.f32.mrb[0].mxu0
        %v2244 = vadd.f32 %v2083, %v2243
        %v2245 = vpop.f32.mrb[0].mxu0
        %2246 = vmatprep.mubr.bf16.mxu0 0
        %2247 = vmatmul.mubr.bf16.gmra.mrb[0].mxu0 %v1731
        %v2248 = vpop.f32.mrb[0].mxu0
        %v2249 = vadd.f32 %v2088, %v2248
        %v2250 = vpop.f32.mrb[0].mxu0
        %v2251 = vpop.f32.mrb[0].mxu0
        %v2252 = vadd.f32 %v2091, %v2251
        %v2253 = vpop.f32.mrb[0].mxu0
        %2254 = vmatprep.mubr.bf16.mxu0 0
        %2255 = vmatmul.mubr.bf16.gmra.mrb[0].mxu0 %v1734
        %v2256 = vpop.f32.mrb[0].mxu0
        %v2257 = vadd.f32 %v2096, %v2256
        %v2258 = vpop.f32.mrb[0].mxu0
        %v2259 = vpop.f32.mrb[0].mxu0
        %v2260 = vadd.f32 %v2099, %v2259
        %v2261 = vpop.f32.mrb[0].mxu0
        %2262 = vmatprep.mubr.bf16.mxu0 0
        %2263 = vmatmul.mubr.bf16.gmra.mrb[0].mxu0 %v1737
        %v2264 = vpop.f32.mrb[0].mxu0
        %v2265 = vadd.f32 %v2104, %v2264
        %v2266 = vpop.f32.mrb[0].mxu0
        %v2267 = vpop.f32.mrb[0].mxu0
        %v2268 = vadd.f32 %v2107, %v2267
        %v2269 = vpop.f32.mrb[0].mxu0
        %2270 = vmatprep.mubr.bf16.mxu0 0
        %2271 = vmatmul.mubr.bf16.gmra.mrb[0].mxu0 %v1740
        %v2272 = vpop.f32.mrb[0].mxu0
        %v2273 = vadd.f32 %v2112, %v2272
        %v2274 = vpop.f32.mrb[0].mxu0
        %v2275 = vpop.f32.mrb[0].mxu0
        %v2276 = vadd.f32 %v2115, %v2275
        %v2277 = vpop.f32.mrb[0].mxu0
        %2278 = vmatprep.mubr.bf16.mxu0 0
        %2279 = vmatmul.mubr.bf16.gmra.mrb[0].mxu0 %v1743
        %v2280 = vpop.f32.mrb[0].mxu0
        %v2281 = vadd.f32 %v2120, %v2280
        %v2282 = vpop.f32.mrb[0].mxu0
        %v2283 = vpop.f32.mrb[0].mxu0
        %v2284 = vadd.f32 %v2123, %v2283
        %v2285 = vpop.f32.mrb[0].mxu0
        %2286 = vmatprep.mubr.bf16.mxu0 0
        %2287 = vmatmul.mubr.bf16.gmra.mrb[0].mxu0 %v1746
        %v2288 = vpop.f32.mrb[0].mxu0
        %v2289 = vadd.f32 %v2128, %v2288
        %v2290 = vpop.f32.mrb[0].mxu0
        %v2291 = vpop.f32.mrb[0].mxu0
        %v2292 = vadd.f32 %v2131, %v2291
        %v2293 = vpop.f32.mrb[0].mxu0
        %2294 = vmatprep.mubr.bf16.mxu0 0
        %2295 = vmatmul.mubr.bf16.gmra.mrb[0].mxu0 %v1749
        %v2296 = vpop.f32.mrb[0].mxu0
        %v2297 = vadd.f32 %v2136, %v2296
        %v2298 = vpop.f32.mrb[0].mxu0
        %v2299 = vpop.f32.mrb[0].mxu0
        %v2300 = vadd.f32 %v2139, %v2299
        %v2301 = vpop.f32.mrb[0].mxu0
        %2302 = vmatprep.mubr.bf16.mxu0 0
        %2303 = vmatmul.mubr.bf16.gmra.mrb[0].mxu0 %v1800
        %v2304 = vpop.f32.mrb[0].mxu0
        %v2305 = vadd.f32 %v2144, %v2304
        %v2306 = vpop.f32.mrb[0].mxu0
        %v2307 = vpop.f32.mrb[0].mxu0
        %v2308 = vadd.f32 %v2147, %v2307
        %v2309 = vpop.f32.mrb[0].mxu0
        %2310 = vmatprep.mubr.bf16.mxu0 0
        %2311 = vmatmul.mubr.bf16.gmra.mrb[0].mxu0 %v1803
        %v2312 = vpop.f32.mrb[0].mxu0
        %v2313 = vadd.f32 %v2152, %v2312
        %v2314 = vpop.f32.mrb[0].mxu0
        %v2315 = vpop.f32.mrb[0].mxu0
        %v2316 = vadd.f32 %v2155, %v2315
        %v2317 = vpop.f32.mrb[0].mxu0
        %2318 = vdwg.mxu0
        %v2367 = vunpack.c.l.b16 %v1750
        %v2368 = vunpack.c.l.b16 %v1751
        %v2369 = vunpack.c.l.b16 %v1752
        %v2370 = vunpack.c.l.b16 %v1753
        %v2371 = vunpack.c.l.b16 %v1754
        %v2372 = vunpack.c.l.b16 %v1755
        %v2373 = vunpack.c.l.b16 %v1756
        %v2374 = vunpack.c.l.b16 %v1757
        %v2375 = vunpack.c.l.b16 %v1758
        %v2376 = vunpack.c.l.b16 %v1759
        %v2377 = vunpack.c.l.b16 %v1760
        %v2378 = vunpack.c.l.b16 %v1761
        %v2379 = vunpack.c.l.b16 %v1762
        %v2380 = vunpack.c.l.b16 %v1763
        %v2381 = vunpack.c.l.b16 %v1764
        %v2382 = vunpack.c.l.b16 %v1765
        %v2383 = vunpack.c.l.b16 %v1766
        %v2384 = vunpack.c.l.b16 %v1767
        %v2385 = vunpack.c.l.b16 %v1768
        %v2386 = vunpack.c.l.b16 %v1769
        %v2387 = vunpack.c.l.b16 %v1770
        %v2388 = vunpack.c.l.b16 %v1771
        %v2389 = vunpack.c.l.b16 %v1772
        %v2390 = vunpack.c.l.b16 %v1773
        %v2391 = vunpack.c.l.b16 %v1774
        %v2392 = vunpack.c.l.b16 %v1775
        %v2393 = vunpack.c.l.b16 %v1776
        %v2394 = vunpack.c.l.b16 %v1777
        %v2395 = vunpack.c.l.b16 %v1778
        %v2396 = vunpack.c.l.b16 %v1779
        %v2397 = vunpack.c.l.b16 %v1780
        %v2398 = vunpack.c.l.b16 %v1781
        %v2399 = vunpack.c.l.b16 %v1782
        %v2400 = vunpack.c.l.b16 %v1783
        %v2401 = vunpack.c.l.b16 %v1784
        %v2402 = vunpack.c.l.b16 %v1785
        %v2403 = vunpack.c.l.b16 %v1786
        %v2404 = vunpack.c.l.b16 %v1787
        %v2405 = vunpack.c.l.b16 %v1788
        %v2406 = vunpack.c.l.b16 %v1789
        %v2407 = vunpack.c.l.b16 %v1790
        %v2408 = vunpack.c.l.b16 %v1791
        %v2409 = vunpack.c.l.b16 %v1792
        %v2410 = vunpack.c.l.b16 %v1793
        %v2411 = vunpack.c.l.b16 %v1794
        %v2412 = vunpack.c.l.b16 %v1795
        %v2413 = vunpack.c.l.b16 %v1796
        %v2414 = vunpack.c.l.b16 %v1797
        %v2415 = vpack.c.b16 %v2368, %v2367
        %v2416 = vpack.c.b16 %v2370, %v2369
        %v2417 = vpack.c.b16 %v2372, %v2371
        %v2418 = vpack.c.b16 %v2374, %v2373
        %v2419 = vpack.c.b16 %v2376, %v2375
        %v2420 = vpack.c.b16 %v2378, %v2377
        %v2421 = vpack.c.b16 %v2380, %v2379
        %v2422 = vpack.c.b16 %v2382, %v2381
        %v2423 = vpack.c.b16 %v2384, %v2383
        %v2424 = vpack.c.b16 %v2386, %v2385
        %v2425 = vpack.c.b16 %v2388, %v2387
        %v2426 = vpack.c.b16 %v2390, %v2389
        %v2427 = vpack.c.b16 %v2392, %v2391
        %v2428 = vpack.c.b16 %v2394, %v2393
        %v2429 = vpack.c.b16 %v2396, %v2395
        %v2430 = vpack.c.b16 %v2398, %v2397
        %v2431 = vpack.c.b16 %v2400, %v2399
        %v2432 = vpack.c.b16 %v2402, %v2401
        %v2433 = vpack.c.b16 %v2404, %v2403
        %v2434 = vpack.c.b16 %v2406, %v2405
        %v2435 = vpack.c.b16 %v2408, %v2407
        %v2436 = vpack.c.b16 %v2410, %v2409
        %v2437 = vpack.c.b16 %v2412, %v2411
        %v2438 = vpack.c.b16 %v2414, %v2413
        %2463 = vmatprep.subr.bf16.mxu0 0
        %2464 = vmatpush1.bf16.msra.mxu0 %v2415
        %2465 = vmatprep.subr.bf16.mxu0 0
        %2466 = vmatpush1.bf16.msra.mxu0 %v2416
        %2467 = vmatprep.subr.bf16.mxu0 0
        %2468 = vmatpush1.bf16.msra.mxu0 %v2417
        %2469 = vmatprep.subr.bf16.mxu0 0
        %2470 = vmatpush1.bf16.msra.mxu0 %v2418
        %2471 = vmatprep.subr.bf16.mxu0 0
        %2472 = vmatpush1.bf16.msra.mxu0 %v2419
        %2473 = vmatprep.subr.bf16.mxu0 0
        %2474 = vmatpush1.bf16.msra.mxu0 %v2420
        %2475 = vmatprep.subr.bf16.mxu0 0
        %2476 = vmatpush1.bf16.msra.mxu0 %v2421
        %2477 = vmatprep.subr.bf16.mxu0 0
        %2478 = vmatpush1.bf16.msra.mxu0 %v2422
        %2479 = vmatprep.subr.bf16.mxu0 0
        %2480 = vmatpush1.bf16.msra.mxu0 %v2423
        %2481 = vmatprep.subr.bf16.mxu0 0
        %2482 = vmatpush1.bf16.msra.mxu0 %v2424
        %2483 = vmatprep.subr.bf16.mxu0 0
        %2484 = vmatpush1.bf16.msra.mxu0 %v2425
        %2485 = vmatprep.subr.bf16.mxu0 0
        %2486 = vmatpush1.bf16.msra.mxu0 %v2426
        %2487 = vmatprep.subr.bf16.mxu0 0
        %2488 = vmatpush1.bf16.msra.mxu0 %v2427
        %2489 = vmatprep.subr.bf16.mxu0 0
        %2490 = vmatpush1.bf16.msra.mxu0 %v2428
        %2491 = vmatprep.subr.bf16.mxu0 0
        %2492 = vmatpush1.bf16.msra.mxu0 %v2429
        %2493 = vmatprep.subr.bf16.mxu0 0
        %2494 = vmatpush1.bf16.msra.mxu0 %v2430
        %2495 = vmatprep.mubr.bf16.mxu0 %v1703
        %2496 = vmatmul.mubr.bf16.gmra.mrb[0].mxu0 %v1702
        %v2497 = vpop.f32.mrb[0].mxu0
        %v2498 = vadd.f32 %v2193, %v2497
        %v2499 = vpop.f32.mrb[0].mxu0
        %v2500 = vpop.f32.mrb[0].mxu0
        %v2501 = vadd.f32 %v2196, %v2500
        %v2502 = vpop.f32.mrb[0].mxu0
        %2503 = vmatprep.mubr.bf16.mxu0 %v1706
        %2504 = vmatmul.mubr.bf16.gmra.mrb[0].mxu0 %v1705
        %v2505 = vpop.f32.mrb[0].mxu0
        %v2506 = vadd.f32 %v2201, %v2505
        %v2507 = vpop.f32.mrb[0].mxu0
        %v2508 = vpop.f32.mrb[0].mxu0
        %v2509 = vadd.f32 %v2204, %v2508
        %v2510 = vpop.f32.mrb[0].mxu0
        %2511 = vmatprep.mubr.bf16.mxu0 %v1709
        %2512 = vmatmul.mubr.bf16.gmra.mrb[0].mxu0 %v1708
        %v2513 = vpop.f32.mrb[0].mxu0
        %v2514 = vadd.f32 %v2209, %v2513
        %v2515 = vpop.f32.mrb[0].mxu0
        %v2516 = vpop.f32.mrb[0].mxu0
        %v2517 = vadd.f32 %v2212, %v2516
        %v2518 = vpop.f32.mrb[0].mxu0
        %2519 = vmatprep.mubr.bf16.mxu0 %v1712
        %2520 = vmatmul.mubr.bf16.gmra.mrb[0].mxu0 %v1711
        %v2521 = vpop.f32.mrb[0].mxu0
        %v2522 = vadd.f32 %v2217, %v2521
        %v2523 = vpop.f32.mrb[0].mxu0
        %v2524 = vpop.f32.mrb[0].mxu0
        %v2525 = vadd.f32 %v2220, %v2524
        %v2526 = vpop.f32.mrb[0].mxu0
        %2527 = vmatprep.mubr.bf16.mxu0 %v1715
        %2528 = vmatmul.mubr.bf16.gmra.mrb[0].mxu0 %v1714
        %v2529 = vpop.f32.mrb[0].mxu0
        %v2530 = vadd.f32 %v2225, %v2529
        %v2531 = vpop.f32.mrb[0].mxu0
        %v2532 = vpop.f32.mrb[0].mxu0
        %v2533 = vadd.f32 %v2228, %v2532
        %v2534 = vpop.f32.mrb[0].mxu0
        %2535 = vmatprep.mubr.bf16.mxu0 %v1718
        %2536 = vmatmul.mubr.bf16.gmra.mrb[0].mxu0 %v1717
        %v2537 = vpop.f32.mrb[0].mxu0
        %v2538 = vadd.f32 %v2233, %v2537
        %v2539 = vpop.f32.mrb[0].mxu0
        %v2540 = vpop.f32.mrb[0].mxu0
        %v2541 = vadd.f32 %v2236, %v2540
        %v2542 = vpop.f32.mrb[0].mxu0
        %2543 = vmatprep.mubr.bf16.mxu0 %v1721
        %2544 = vmatmul.mubr.bf16.gmra.mrb[0].mxu0 %v1720
        %v2545 = vpop.f32.mrb[0].mxu0
        %v2546 = vadd.f32 %v2241, %v2545
        %v2547 = vpop.f32.mrb[0].mxu0
        %v2548 = vpop.f32.mrb[0].mxu0
        %v2549 = vadd.f32 %v2244, %v2548
        %v2550 = vpop.f32.mrb[0].mxu0
        %2551 = vmatprep.mubr.bf16.mxu0 %v1724
        %2552 = vmatmul.mubr.bf16.gmra.mrb[0].mxu0 %v1723
        %v2553 = vpop.f32.mrb[0].mxu0
        %v2554 = vadd.f32 %v2249, %v2553
        %v2555 = vpop.f32.mrb[0].mxu0
        %v2556 = vpop.f32.mrb[0].mxu0
        %v2557 = vadd.f32 %v2252, %v2556
        %v2558 = vpop.f32.mrb[0].mxu0
        %2559 = vmatprep.mubr.bf16.mxu0 %v1727
        %2560 = vmatmul.mubr.bf16.gmra.mrb[0].mxu0 %v1726
        %v2561 = vpop.f32.mrb[0].mxu0
        %v2562 = vadd.f32 %v2257, %v2561
        %v2563 = vpop.f32.mrb[0].mxu0
        %v2564 = vpop.f32.mrb[0].mxu0
        %v2565 = vadd.f32 %v2260, %v2564
        %v2566 = vpop.f32.mrb[0].mxu0
        %2567 = vmatprep.mubr.bf16.mxu0 %v1730
        %2568 = vmatmul.mubr.bf16.gmra.mrb[0].mxu0 %v1729
        %v2569 = vpop.f32.mrb[0].mxu0
        %v2570 = vadd.f32 %v2265, %v2569
        %v2571 = vpop.f32.mrb[0].mxu0
        %v2572 = vpop.f32.mrb[0].mxu0
        %v2573 = vadd.f32 %v2268, %v2572
        %v2574 = vpop.f32.mrb[0].mxu0
        %2575 = vmatprep.mubr.bf16.mxu0 %v1733
        %2576 = vmatmul.mubr.bf16.gmra.mrb[0].mxu0 %v1732
        %v2577 = vpop.f32.mrb[0].mxu0
        %v2578 = vadd.f32 %v2273, %v2577
        %v2579 = vpop.f32.mrb[0].mxu0
        %v2580 = vpop.f32.mrb[0].mxu0
        %v2581 = vadd.f32 %v2276, %v2580
        %v2582 = vpop.f32.mrb[0].mxu0
        %2583 = vmatprep.mubr.bf16.mxu0 %v1736
        %2584 = vmatmul.mubr.bf16.gmra.mrb[0].mxu0 %v1735
        %v2585 = vpop.f32.mrb[0].mxu0
        %v2586 = vadd.f32 %v2281, %v2585
        %v2587 = vpop.f32.mrb[0].mxu0
        %v2588 = vpop.f32.mrb[0].mxu0
        %v2589 = vadd.f32 %v2284, %v2588
        %v2590 = vpop.f32.mrb[0].mxu0
        %2591 = vmatprep.mubr.bf16.mxu0 %v1739
        %2592 = vmatmul.mubr.bf16.gmra.mrb[0].mxu0 %v1738
        %v2593 = vpop.f32.mrb[0].mxu0
        %v2594 = vadd.f32 %v2289, %v2593
        %v2595 = vpop.f32.mrb[0].mxu0
        %v2596 = vpop.f32.mrb[0].mxu0
        %v2597 = vadd.f32 %v2292, %v2596
        %v2598 = vpop.f32.mrb[0].mxu0
        %2599 = vmatprep.mubr.bf16.mxu0 %v1742
        %2600 = vmatmul.mubr.bf16.gmra.mrb[0].mxu0 %v1741
        %v2601 = vpop.f32.mrb[0].mxu0
        %v2602 = vadd.f32 %v2297, %v2601
        %v2603 = vpop.f32.mrb[0].mxu0
        %v2604 = vpop.f32.mrb[0].mxu0
        %v2605 = vadd.f32 %v2300, %v2604
        %v2606 = vpop.f32.mrb[0].mxu0
        %2607 = vmatprep.mubr.bf16.mxu0 %v1745
        %2608 = vmatmul.mubr.bf16.gmra.mrb[0].mxu0 %v1744
        %v2609 = vpop.f32.mrb[0].mxu0
        %v2610 = vadd.f32 %v2305, %v2609
        %v2611 = vpop.f32.mrb[0].mxu0
        %v2612 = vpop.f32.mrb[0].mxu0
        %v2613 = vadd.f32 %v2308, %v2612
        %v2614 = vpop.f32.mrb[0].mxu0
        %2615 = vmatprep.mubr.bf16.mxu0 %v1748
        %2616 = vmatmul.mubr.bf16.gmra.mrb[0].mxu0 %v1747
        %v2617 = vpop.f32.mrb[0].mxu0
        %v2618 = vadd.f32 %v2313, %v2617
        %v2619 = vpop.f32.mrb[0].mxu0
        %v2620 = vpop.f32.mrb[0].mxu0
        %v2621 = vadd.f32 %v2316, %v2620
        %v2622 = vpop.f32.mrb[0].mxu0
        %2623 = vdwg.mxu0
        %2624 = vmatprep.subr.bf16.mxu0 0
        %2625 = vmatpush1.bf16.msra.mxu0 %v2431
        %2626 = vmatprep.subr.bf16.mxu0 0
        %2627 = vmatpush1.bf16.msra.mxu0 %v2432
        %2628 = vmatprep.subr.bf16.mxu0 0
        %2629 = vmatpush1.bf16.msra.mxu0 %v2433
        %2630 = vmatprep.subr.bf16.mxu0 0
        %2631 = vmatpush1.bf16.msra.mxu0 %v2434
        %2632 = vmatprep.subr.bf16.mxu0 0
        %2633 = vmatpush1.bf16.msra.mxu0 %v2435
        %2634 = vmatprep.subr.bf16.mxu0 0
        %2635 = vmatpush1.bf16.msra.mxu0 %v2436
        %2636 = vmatprep.subr.bf16.mxu0 0
        %2637 = vmatpush1.bf16.msra.mxu0 %v2437
        %2638 = vmatprep.subr.bf16.mxu0 0
        %2639 = vmatpush1.bf16.msra.mxu0 %v2438
        %2640 = vmatprep.subr.bf16.mxu0 0
        %2641 = vmatpush1.bf16.msra.mxu0 0
        %2642 = vmatprep.subr.bf16.mxu0 0
        %2643 = vmatpush1.bf16.msra.mxu0 0
        %2644 = vmatprep.subr.bf16.mxu0 0
        %2645 = vmatpush1.bf16.msra.mxu0 0
        %2646 = vmatprep.subr.bf16.mxu0 0
        %2647 = vmatpush1.bf16.msra.mxu0 0
        %2648 = vmatprep.subr.bf16.mxu0 0
        %2649 = vmatpush1.bf16.msra.mxu0 0
        %2650 = vmatprep.subr.bf16.mxu0 0
        %2651 = vmatpush1.bf16.msra.mxu0 0
        %2652 = vmatprep.subr.bf16.mxu0 0
        %2653 = vmatpush1.bf16.msra.mxu0 0
        %2654 = vmatprep.subr.bf16.mxu0 0
        %2655 = vmatpush1.bf16.msra.mxu0 0
        %2656 = vmatprep.mubr.bf16.mxu0 0
        %2657 = vmatmul.mubr.bf16.gmra.mrb[0].mxu0 %v1704
        %v2658 = vpop.f32.mrb[0].mxu0
        %v2659 = vadd.f32 %v2498, %v2658
        %v2660 = vpop.f32.mrb[0].mxu0
        %v2661 = vpop.f32.mrb[0].mxu0
        %v2662 = vadd.f32 %v2501, %v2661
        %v2663 = vpop.f32.mrb[0].mxu0
        %2664 = vmatprep.mubr.bf16.mxu0 0
        %2665 = vmatmul.mubr.bf16.gmra.mrb[0].mxu0 %v1707
        %v2666 = vpop.f32.mrb[0].mxu0
        %v2667 = vadd.f32 %v2506, %v2666
        %v2668 = vpop.f32.mrb[0].mxu0
        %v2669 = vpop.f32.mrb[0].mxu0
        %v2670 = vadd.f32 %v2509, %v2669
        %v2671 = vpop.f32.mrb[0].mxu0
        %2672 = vmatprep.mubr.bf16.mxu0 0
        %2673 = vmatmul.mubr.bf16.gmra.mrb[0].mxu0 %v1710
        %v2674 = vpop.f32.mrb[0].mxu0
        %v2675 = vadd.f32 %v2514, %v2674
        %v2676 = vpop.f32.mrb[0].mxu0
        %v2677 = vpop.f32.mrb[0].mxu0
        %v2678 = vadd.f32 %v2517, %v2677
        %v2679 = vpop.f32.mrb[0].mxu0
        %2680 = vmatprep.mubr.bf16.mxu0 0
        %2681 = vmatmul.mubr.bf16.gmra.mrb[0].mxu0 %v1713
        %v2682 = vpop.f32.mrb[0].mxu0
        %v2683 = vadd.f32 %v2522, %v2682
        %v2684 = vpop.f32.mrb[0].mxu0
        %v2685 = vpop.f32.mrb[0].mxu0
        %v2686 = vadd.f32 %v2525, %v2685
        %v2687 = vpop.f32.mrb[0].mxu0
        %2688 = vmatprep.mubr.bf16.mxu0 0
        %2689 = vmatmul.mubr.bf16.gmra.mrb[0].mxu0 %v1716
        %v2690 = vpop.f32.mrb[0].mxu0
        %v2691 = vadd.f32 %v2530, %v2690
        %v2692 = vpop.f32.mrb[0].mxu0
        %v2693 = vpop.f32.mrb[0].mxu0
        %v2694 = vadd.f32 %v2533, %v2693
        %v2695 = vpop.f32.mrb[0].mxu0
        %2696 = vmatprep.mubr.bf16.mxu0 0
        %2697 = vmatmul.mubr.bf16.gmra.mrb[0].mxu0 %v1719
        %v2698 = vpop.f32.mrb[0].mxu0
        %v2699 = vadd.f32 %v2538, %v2698
        %v2700 = vpop.f32.mrb[0].mxu0
        %v2701 = vpop.f32.mrb[0].mxu0
        %v2702 = vadd.f32 %v2541, %v2701
        %v2703 = vpop.f32.mrb[0].mxu0
        %2704 = vmatprep.mubr.bf16.mxu0 0
        %2705 = vmatmul.mubr.bf16.gmra.mrb[0].mxu0 %v1722
        %v2706 = vpop.f32.mrb[0].mxu0
        %v2707 = vadd.f32 %v2546, %v2706
        %v2708 = vpop.f32.mrb[0].mxu0
        %v2709 = vpop.f32.mrb[0].mxu0
        %v2710 = vadd.f32 %v2549, %v2709
        %v2711 = vpop.f32.mrb[0].mxu0
        %2712 = vmatprep.mubr.bf16.mxu0 0
        %2713 = vmatmul.mubr.bf16.gmra.mrb[0].mxu0 %v1725
        %v2714 = vpop.f32.mrb[0].mxu0
        %v2715 = vadd.f32 %v2554, %v2714
        %v2716 = vpop.f32.mrb[0].mxu0
        %v2717 = vpop.f32.mrb[0].mxu0
        %v2718 = vadd.f32 %v2557, %v2717
        %v2719 = vpop.f32.mrb[0].mxu0
        %2720 = vmatprep.mubr.bf16.mxu0 0
        %2721 = vmatmul.mubr.bf16.gmra.mrb[0].mxu0 %v1728
        %v2722 = vpop.f32.mrb[0].mxu0
        %v2723 = vadd.f32 %v2562, %v2722
        %v2724 = vpop.f32.mrb[0].mxu0
        %v2725 = vpop.f32.mrb[0].mxu0
        %v2726 = vadd.f32 %v2565, %v2725
        %v2727 = vpop.f32.mrb[0].mxu0
        %2728 = vmatprep.mubr.bf16.mxu0 0
        %2729 = vmatmul.mubr.bf16.gmra.mrb[0].mxu0 %v1731
        %v2730 = vpop.f32.mrb[0].mxu0
        %v2731 = vadd.f32 %v2570, %v2730
        %v2732 = vpop.f32.mrb[0].mxu0
        %v2733 = vpop.f32.mrb[0].mxu0
        %v2734 = vadd.f32 %v2573, %v2733
        %v2735 = vpop.f32.mrb[0].mxu0
        %2736 = vmatprep.mubr.bf16.mxu0 0
        %2737 = vmatmul.mubr.bf16.gmra.mrb[0].mxu0 %v1734
        %v2738 = vpop.f32.mrb[0].mxu0
        %v2739 = vadd.f32 %v2578, %v2738
        %v2740 = vpop.f32.mrb[0].mxu0
        %v2741 = vpop.f32.mrb[0].mxu0
        %v2742 = vadd.f32 %v2581, %v2741
        %v2743 = vpop.f32.mrb[0].mxu0
        %2744 = vmatprep.mubr.bf16.mxu0 0
        %2745 = vmatmul.mubr.bf16.gmra.mrb[0].mxu0 %v1737
        %v2746 = vpop.f32.mrb[0].mxu0
        %v2747 = vadd.f32 %v2586, %v2746
        %v2748 = vpop.f32.mrb[0].mxu0
        %v2749 = vpop.f32.mrb[0].mxu0
        %v2750 = vadd.f32 %v2589, %v2749
        %v2751 = vpop.f32.mrb[0].mxu0
        %2752 = vmatprep.mubr.bf16.mxu0 0
        %2753 = vmatmul.mubr.bf16.gmra.mrb[0].mxu0 %v1740
        %v2754 = vpop.f32.mrb[0].mxu0
        %v2755 = vadd.f32 %v2594, %v2754
        %v2756 = vpop.f32.mrb[0].mxu0
        %v2757 = vpop.f32.mrb[0].mxu0
        %v2758 = vadd.f32 %v2597, %v2757
        %v2759 = vpop.f32.mrb[0].mxu0
        %2760 = vmatprep.mubr.bf16.mxu0 0
        %2761 = vmatmul.mubr.bf16.gmra.mrb[0].mxu0 %v1743
        %v2762 = vpop.f32.mrb[0].mxu0
        %v2763 = vadd.f32 %v2602, %v2762
        %v2764 = vpop.f32.mrb[0].mxu0
        %v2765 = vpop.f32.mrb[0].mxu0
        %v2766 = vadd.f32 %v2605, %v2765
        %v2767 = vpop.f32.mrb[0].mxu0
        %2768 = vmatprep.mubr.bf16.mxu0 0
        %2769 = vmatmul.mubr.bf16.gmra.mrb[0].mxu0 %v1746
        %v2770 = vpop.f32.mrb[0].mxu0
        %v2771 = vadd.f32 %v2610, %v2770
        %v2772 = vpop.f32.mrb[0].mxu0
        %v2773 = vpop.f32.mrb[0].mxu0
        %v2774 = vadd.f32 %v2613, %v2773
        %v2775 = vpop.f32.mrb[0].mxu0
        %2776 = vmatprep.mubr.bf16.mxu0 0
        %2777 = vmatmul.mubr.bf16.gmra.mrb[0].mxu0 %v1749
        %v2778 = vpop.f32.mrb[0].mxu0
        %v2779 = vadd.f32 %v2618, %v2778
        %v2780 = vpop.f32.mrb[0].mxu0
        %v2781 = vpop.f32.mrb[0].mxu0
        %v2782 = vadd.f32 %v2621, %v2781
        %v2783 = vpop.f32.mrb[0].mxu0
        %2784 = vdwg.mxu0
        %v2785 = vld [vmem:[#allocation3 + $0x60] sm:$0xff]
        %v2786 = vld [vmem:[#allocation3 + $0x68] sm:$0xff]
        %v2787 = vld [vmem:[#allocation3 + $0x70] sm:$0xff]
        %v2788 = vld [vmem:[#allocation3 + $0x78] sm:$0xff]
        %v2789 = vld [vmem:[#allocation3 + $0x80] sm:$0xff]
        %v2790 = vld [vmem:[#allocation3 + $0x88] sm:$0xff]
        %v2791 = vld [vmem:[#allocation3 + $0x90] sm:$0xff]
        %v2792 = vld [vmem:[#allocation3 + $0x98] sm:$0xff]
        %v2793 = vld [vmem:[#allocation3 + $0xa0] sm:$0xff]
        %v2794 = vld [vmem:[#allocation3 + $0xa8] sm:$0xff]
        %v2795 = vld [vmem:[#allocation3 + $0xb0] sm:$0xff]
        %v2796 = vld [vmem:[#allocation3 + $0xb8] sm:$0xff]
        %v2797 = vld [vmem:[#allocation3 + $0xc0] sm:$0xff]
        %v2798 = vld [vmem:[#allocation3 + $0xc8] sm:$0xff]
        %v2799 = vld [vmem:[#allocation3 + $0xd0] sm:$0xff]
        %v2800 = vld [vmem:[#allocation3 + $0xd8] sm:$0xff]
        %v2801 = vld [vmem:[#allocation3 + $0xe0] sm:$0xff]
        %v2802 = vld [vmem:[#allocation3 + $0xe8] sm:$0xff]
        %v2803 = vld [vmem:[#allocation3 + $0xf0] sm:$0xff]
        %v2804 = vld [vmem:[#allocation3 + $0xf8] sm:$0xff]
        %v2805 = vld [vmem:[#allocation3 + $0x100] sm:$0xff]
        %v2806 = vld [vmem:[#allocation3 + $0x108] sm:$0xff]
        %v2807 = vld [vmem:[#allocation3 + $0x110] sm:$0xff]
        %v2808 = vld [vmem:[#allocation3 + $0x118] sm:$0xff]
        %v2809 = vld [vmem:[#allocation3 + $0x120] sm:$0xff]
        %v2810 = vld [vmem:[#allocation3 + $0x128] sm:$0xff]
        %v2811 = vld [vmem:[#allocation3 + $0x130] sm:$0xff]
        %v2812 = vld [vmem:[#allocation3 + $0x138] sm:$0xff]
        %v2813 = vld [vmem:[#allocation3 + $0x140] sm:$0xff]
        %v2814 = vld [vmem:[#allocation3 + $0x148] sm:$0xff]
        %v2815 = vld [vmem:[#allocation3 + $0x150] sm:$0xff]
        %v2816 = vld [vmem:[#allocation3 + $0x158] sm:$0xff]
        %v2817 = vld [vmem:[#allocation3 + $0x160] sm:$0xff]
        %v2818 = vld [vmem:[#allocation3 + $0x168] sm:$0xff]
        %v2819 = vld [vmem:[#allocation3 + $0x170] sm:$0xff]
        %v2820 = vld [vmem:[#allocation3 + $0x178] sm:$0xff]
        %v2821 = vld [vmem:[#allocation3 + $0x180] sm:$0xff]
        %v2822 = vld [vmem:[#allocation3 + $0x188] sm:$0xff]
        %v2823 = vld [vmem:[#allocation3 + $0x190] sm:$0xff]
        %v2824 = vld [vmem:[#allocation3 + $0x198] sm:$0xff]
        %v2825 = vld [vmem:[#allocation3 + $0x1a0] sm:$0xff]
        %v2826 = vld [vmem:[#allocation3 + $0x1a8] sm:$0xff]
        %v2827 = vld [vmem:[#allocation3 + $0x1b0] sm:$0xff]
        %v2828 = vld [vmem:[#allocation3 + $0x1b8] sm:$0xff]
        %v2829 = vld [vmem:[#allocation3 + $0x1c0] sm:$0xff]
        %v2830 = vld [vmem:[#allocation3 + $0x1c8] sm:$0xff]
        %v2831 = vld [vmem:[#allocation3 + $0x1d0] sm:$0xff]
        %v2832 = vld [vmem:[#allocation3 + $0x1d8] sm:$0xff]
        %s2833 = scalar_lea.vmem [#allocation9], 384
        %v2834 = vld [vmem:[%s2833] sm:$0xf]
        %v2835 = vld [vmem:[%s2833 + $0x4] sm:$0xf]
        %v2836 = vld [vmem:[%s2833 + $0x8] sm:$0xf]
        %v2837 = vld [vmem:[%s2833 + $0xc] sm:$0xf]
        %v2838 = vld [vmem:[%s2833 + $0x10] sm:$0xf]
        %v2839 = vld [vmem:[%s2833 + $0x14] sm:$0xf]
        %v2840 = vld [vmem:[%s2833 + $0x18] sm:$0xf]
        %v2841 = vld [vmem:[%s2833 + $0x1c] sm:$0xf]
        %v2842 = vld [vmem:[%s2833 + $0x20] sm:$0xf]
        %v2843 = vld [vmem:[%s2833 + $0x24] sm:$0xf]
        %v2844 = vld [vmem:[%s2833 + $0x28] sm:$0xf]
        %v2845 = vld [vmem:[%s2833 + $0x2c] sm:$0xf]
        %v2846 = vld [vmem:[%s2833 + $0x30] sm:$0xf]
        %v2847 = vld [vmem:[%s2833 + $0x34] sm:$0xf]
        %v2848 = vld [vmem:[%s2833 + $0x38] sm:$0xf]
        %v2849 = vld [vmem:[%s2833 + $0x3c] sm:$0xf]
        %v2850 = vld [vmem:[%s2833 + $0x40] sm:$0xf]
        %v2851 = vld [vmem:[%s2833 + $0x44] sm:$0xf]
        %v2852 = vld [vmem:[%s2833 + $0x48] sm:$0xf]
        %v2853 = vld [vmem:[%s2833 + $0x4c] sm:$0xf]
        %v2854 = vld [vmem:[%s2833 + $0x50] sm:$0xf]
        %v2855 = vld [vmem:[%s2833 + $0x54] sm:$0xf]
        %v2856 = vld [vmem:[%s2833 + $0x58] sm:$0xf]
        %v2857 = vld [vmem:[%s2833 + $0x5c] sm:$0xf]
        %v2858 = vld [vmem:[%s2833 + $0x60] sm:$0xf]
        %v2859 = vld [vmem:[%s2833 + $0x64] sm:$0xf]
        %v2860 = vld [vmem:[%s2833 + $0x68] sm:$0xf]
        %v2861 = vld [vmem:[%s2833 + $0x6c] sm:$0xf]
        %v2862 = vld [vmem:[%s2833 + $0x70] sm:$0xf]
        %v2863 = vld [vmem:[%s2833 + $0x74] sm:$0xf]
        %v2864 = vld [vmem:[%s2833 + $0x78] sm:$0xf]
        %v2865 = vld [vmem:[%s2833 + $0x7c] sm:$0xf]
        %v2866 = vld [vmem:[%s2833 + $0x80] sm:$0xf]
        %v2867 = vld [vmem:[%s2833 + $0x84] sm:$0xf]
        %v2868 = vld [vmem:[%s2833 + $0x88] sm:$0xf]
        %v2869 = vld [vmem:[%s2833 + $0x8c] sm:$0xf]
        %v2870 = vld [vmem:[%s2833 + $0x90] sm:$0xf]
        %v2871 = vld [vmem:[%s2833 + $0x94] sm:$0xf]
        %v2872 = vld [vmem:[%s2833 + $0x98] sm:$0xf]
        %v2873 = vld [vmem:[%s2833 + $0x9c] sm:$0xf]
        %v2874 = vld [vmem:[%s2833 + $0xa0] sm:$0xf]
        %v2875 = vld [vmem:[%s2833 + $0xa4] sm:$0xf]
        %v2876 = vld [vmem:[%s2833 + $0xa8] sm:$0xf]
        %v2877 = vld [vmem:[%s2833 + $0xac] sm:$0xf]
        %v2878 = vld [vmem:[%s2833 + $0xb0] sm:$0xf]
        %v2879 = vld [vmem:[%s2833 + $0xb4] sm:$0xf]
        %v2880 = vld [vmem:[%s2833 + $0xb8] sm:$0xf]
        %v2881 = vld [vmem:[%s2833 + $0xbc] sm:$0xf]
        %v2930 = vunpack.c.l.b16 %v2834
        %v2931 = vunpack.c.l.b16 %v2835
        %v2932 = vunpack.c.l.b16 %v2836
        %v2933 = vunpack.c.l.b16 %v2837
        %v2934 = vunpack.c.l.b16 %v2838
        %v2935 = vunpack.c.l.b16 %v2839
        %v2936 = vunpack.c.l.b16 %v2840
        %v2937 = vunpack.c.l.b16 %v2841
        %v2938 = vunpack.c.l.b16 %v2842
        %v2939 = vunpack.c.l.b16 %v2843
        %v2940 = vunpack.c.l.b16 %v2844
        %v2941 = vunpack.c.l.b16 %v2845
        %v2942 = vunpack.c.l.b16 %v2846
        %v2943 = vunpack.c.l.b16 %v2847
        %v2944 = vunpack.c.l.b16 %v2848
        %v2945 = vunpack.c.l.b16 %v2849
        %v2946 = vunpack.c.l.b16 %v2850
        %v2947 = vunpack.c.l.b16 %v2851
        %v2948 = vunpack.c.l.b16 %v2852
        %v2949 = vunpack.c.l.b16 %v2853
        %v2950 = vunpack.c.l.b16 %v2854
        %v2951 = vunpack.c.l.b16 %v2855
        %v2952 = vunpack.c.l.b16 %v2856
        %v2953 = vunpack.c.l.b16 %v2857
        %v2954 = vunpack.c.l.b16 %v2858
        %v2955 = vunpack.c.l.b16 %v2859
        %v2956 = vunpack.c.l.b16 %v2860
        %v2957 = vunpack.c.l.b16 %v2861
        %v2958 = vunpack.c.l.b16 %v2862
        %v2959 = vunpack.c.l.b16 %v2863
        %v2960 = vunpack.c.l.b16 %v2864
        %v2961 = vunpack.c.l.b16 %v2865
        %v2962 = vunpack.c.l.b16 %v2866
        %v2963 = vunpack.c.l.b16 %v2867
        %v2964 = vunpack.c.l.b16 %v2868
        %v2965 = vunpack.c.l.b16 %v2869
        %v2966 = vunpack.c.l.b16 %v2870
        %v2967 = vunpack.c.l.b16 %v2871
        %v2968 = vunpack.c.l.b16 %v2872
        %v2969 = vunpack.c.l.b16 %v2873
        %v2970 = vunpack.c.l.b16 %v2874
        %v2971 = vunpack.c.l.b16 %v2875
        %v2972 = vunpack.c.l.b16 %v2876
        %v2973 = vunpack.c.l.b16 %v2877
        %v2974 = vunpack.c.l.b16 %v2878
        %v2975 = vunpack.c.l.b16 %v2879
        %v2976 = vunpack.c.l.b16 %v2880
        %v2977 = vunpack.c.l.b16 %v2881
        %v2978 = vpack.c.b16 %v2931, %v2930
        %v2979 = vpack.c.b16 %v2933, %v2932
        %v2980 = vpack.c.b16 %v2935, %v2934
        %v2981 = vpack.c.b16 %v2937, %v2936
        %v2982 = vpack.c.b16 %v2939, %v2938
        %v2983 = vpack.c.b16 %v2941, %v2940
        %v2984 = vpack.c.b16 %v2943, %v2942
        %v2985 = vpack.c.b16 %v2945, %v2944
        %v2986 = vpack.c.b16 %v2947, %v2946
        %v2987 = vpack.c.b16 %v2949, %v2948
        %v2988 = vpack.c.b16 %v2951, %v2950
        %v2989 = vpack.c.b16 %v2953, %v2952
        %v2990 = vpack.c.b16 %v2955, %v2954
        %v2991 = vpack.c.b16 %v2957, %v2956
        %v2992 = vpack.c.b16 %v2959, %v2958
        %v2993 = vpack.c.b16 %v2961, %v2960
        %v2994 = vpack.c.b16 %v2963, %v2962
        %v2995 = vpack.c.b16 %v2965, %v2964
        %v2996 = vpack.c.b16 %v2967, %v2966
        %v2997 = vpack.c.b16 %v2969, %v2968
        %v2998 = vpack.c.b16 %v2971, %v2970
        %v2999 = vpack.c.b16 %v2973, %v2972
        %v3000 = vpack.c.b16 %v2975, %v2974
        %v3001 = vpack.c.b16 %v2977, %v2976
        %3026 = vmatprep.subr.bf16.mxu0 0
        %3027 = vmatpush1.bf16.msra.mxu0 %v2978
        %3028 = vmatprep.subr.bf16.mxu0 0
        %3029 = vmatpush1.bf16.msra.mxu0 %v2979
        %3030 = vmatprep.subr.bf16.mxu0 0
        %3031 = vmatpush1.bf16.msra.mxu0 %v2980
        %3032 = vmatprep.subr.bf16.mxu0 0
        %3033 = vmatpush1.bf16.msra.mxu0 %v2981
        %3034 = vmatprep.subr.bf16.mxu0 0
        %3035 = vmatpush1.bf16.msra.mxu0 %v2982
        %3036 = vmatprep.subr.bf16.mxu0 0
        %3037 = vmatpush1.bf16.msra.mxu0 %v2983
        %3038 = vmatprep.subr.bf16.mxu0 0
        %3039 = vmatpush1.bf16.msra.mxu0 %v2984
        %3040 = vmatprep.subr.bf16.mxu0 0
        %3041 = vmatpush1.bf16.msra.mxu0 %v2985
        %3042 = vmatprep.subr.bf16.mxu0 0
        %3043 = vmatpush1.bf16.msra.mxu0 %v2986
        %3044 = vmatprep.subr.bf16.mxu0 0
        %3045 = vmatpush1.bf16.msra.mxu0 %v2987
        %3046 = vmatprep.subr.bf16.mxu0 0
        %3047 = vmatpush1.bf16.msra.mxu0 %v2988
        %3048 = vmatprep.subr.bf16.mxu0 0
        %3049 = vmatpush1.bf16.msra.mxu0 %v2989
        %3050 = vmatprep.subr.bf16.mxu0 0
        %3051 = vmatpush1.bf16.msra.mxu0 %v2990
        %3052 = vmatprep.subr.bf16.mxu0 0
        %3053 = vmatpush1.bf16.msra.mxu0 %v2991
        %3054 = vmatprep.subr.bf16.mxu0 0
        %3055 = vmatpush1.bf16.msra.mxu0 %v2992
        %3056 = vmatprep.subr.bf16.mxu0 0
        %3057 = vmatpush1.bf16.msra.mxu0 %v2993
        %3058 = vmatprep.mubr.bf16.mxu0 %v2786
        %3059 = vmatmul.mubr.bf16.gmra.mrb[0].mxu0 %v2785
        %v3060 = vpop.f32.mrb[0].mxu0
        %v3061 = vadd.f32 0.0, %v3060
        %v3062 = vpop.f32.mrb[0].mxu0
        %v3063 = vpop.f32.mrb[0].mxu0
        %v3064 = vadd.f32 0.0, %v3063
        %v3065 = vpop.f32.mrb[0].mxu0
        %3066 = vmatprep.mubr.bf16.mxu0 %v2789
        %3067 = vmatmul.mubr.bf16.gmra.mrb[0].mxu0 %v2788
        %v3068 = vpop.f32.mrb[0].mxu0
        %v3069 = vadd.f32 0.0, %v3068
        %v3070 = vpop.f32.mrb[0].mxu0
        %v3071 = vpop.f32.mrb[0].mxu0
        %v3072 = vadd.f32 0.0, %v3071
        %v3073 = vpop.f32.mrb[0].mxu0
        %3074 = vmatprep.mubr.bf16.mxu0 %v2792
        %3075 = vmatmul.mubr.bf16.gmra.mrb[0].mxu0 %v2791
        %v3076 = vpop.f32.mrb[0].mxu0
        %v3077 = vadd.f32 0.0, %v3076
        %v3078 = vpop.f32.mrb[0].mxu0
        %v3079 = vpop.f32.mrb[0].mxu0
        %v3080 = vadd.f32 0.0, %v3079
        %v3081 = vpop.f32.mrb[0].mxu0
        %3082 = vmatprep.mubr.bf16.mxu0 %v2795
        %3083 = vmatmul.mubr.bf16.gmra.mrb[0].mxu0 %v2794
        %v3084 = vpop.f32.mrb[0].mxu0
        %v3085 = vadd.f32 0.0, %v3084
        %v3086 = vpop.f32.mrb[0].mxu0
        %v3087 = vpop.f32.mrb[0].mxu0
        %v3088 = vadd.f32 0.0, %v3087
        %v3089 = vpop.f32.mrb[0].mxu0
        %3090 = vmatprep.mubr.bf16.mxu0 %v2798
        %3091 = vmatmul.mubr.bf16.gmra.mrb[0].mxu0 %v2797
        %v3092 = vpop.f32.mrb[0].mxu0
        %v3093 = vadd.f32 0.0, %v3092
        %v3094 = vpop.f32.mrb[0].mxu0
        %v3095 = vpop.f32.mrb[0].mxu0
        %v3096 = vadd.f32 0.0, %v3095
        %v3097 = vpop.f32.mrb[0].mxu0
        %3098 = vmatprep.mubr.bf16.mxu0 %v2801
        %3099 = vmatmul.mubr.bf16.gmra.mrb[0].mxu0 %v2800
        %v3100 = vpop.f32.mrb[0].mxu0
        %v3101 = vadd.f32 0.0, %v3100
        %v3102 = vpop.f32.mrb[0].mxu0
        %v3103 = vpop.f32.mrb[0].mxu0
        %v3104 = vadd.f32 0.0, %v3103
        %v3105 = vpop.f32.mrb[0].mxu0
        %3106 = vmatprep.mubr.bf16.mxu0 %v2804
        %3107 = vmatmul.mubr.bf16.gmra.mrb[0].mxu0 %v2803
        %v3108 = vpop.f32.mrb[0].mxu0
        %v3109 = vadd.f32 0.0, %v3108
        %v3110 = vpop.f32.mrb[0].mxu0
        %v3111 = vpop.f32.mrb[0].mxu0
        %v3112 = vadd.f32 0.0, %v3111
        %v3113 = vpop.f32.mrb[0].mxu0
        %3114 = vmatprep.mubr.bf16.mxu0 %v2807
        %3115 = vmatmul.mubr.bf16.gmra.mrb[0].mxu0 %v2806
        %v3116 = vpop.f32.mrb[0].mxu0
        %v3117 = vadd.f32 0.0, %v3116
        %v3118 = vpop.f32.mrb[0].mxu0
        %v3119 = vpop.f32.mrb[0].mxu0
        %v3120 = vadd.f32 0.0, %v3119
        %v3121 = vpop.f32.mrb[0].mxu0
        %3122 = vmatprep.mubr.bf16.mxu0 %v2810
        %3123 = vmatmul.mubr.bf16.gmra.mrb[0].mxu0 %v2809
        %v3124 = vpop.f32.mrb[0].mxu0
        %v3125 = vadd.f32 0.0, %v3124
        %v3126 = vpop.f32.mrb[0].mxu0
        %v3127 = vpop.f32.mrb[0].mxu0
        %v3128 = vadd.f32 0.0, %v3127
        %v3129 = vpop.f32.mrb[0].mxu0
        %3130 = vmatprep.mubr.bf16.mxu0 %v2813
        %3131 = vmatmul.mubr.bf16.gmra.mrb[0].mxu0 %v2812
        %v3132 = vpop.f32.mrb[0].mxu0
        %v3133 = vadd.f32 0.0, %v3132
        %v3134 = vpop.f32.mrb[0].mxu0
        %v3135 = vpop.f32.mrb[0].mxu0
        %v3136 = vadd.f32 0.0, %v3135
        %v3137 = vpop.f32.mrb[0].mxu0
        %3138 = vmatprep.mubr.bf16.mxu0 %v2816
        %3139 = vmatmul.mubr.bf16.gmra.mrb[0].mxu0 %v2815
        %v3140 = vpop.f32.mrb[0].mxu0
        %v3141 = vadd.f32 0.0, %v3140
        %v3142 = vpop.f32.mrb[0].mxu0
        %v3143 = vpop.f32.mrb[0].mxu0
        %v3144 = vadd.f32 0.0, %v3143
        %v3145 = vpop.f32.mrb[0].mxu0
        %3146 = vmatprep.mubr.bf16.mxu0 %v2819
        %3147 = vmatmul.mubr.bf16.gmra.mrb[0].mxu0 %v2818
        %v3148 = vpop.f32.mrb[0].mxu0
        %v3149 = vadd.f32 0.0, %v3148
        %v3150 = vpop.f32.mrb[0].mxu0
        %v3151 = vpop.f32.mrb[0].mxu0
        %v3152 = vadd.f32 0.0, %v3151
        %v3153 = vpop.f32.mrb[0].mxu0
        %3154 = vmatprep.mubr.bf16.mxu0 %v2822
        %3155 = vmatmul.mubr.bf16.gmra.mrb[0].mxu0 %v2821
        %v3156 = vpop.f32.mrb[0].mxu0
        %v3157 = vadd.f32 0.0, %v3156
        %v3158 = vpop.f32.mrb[0].mxu0
        %v3159 = vpop.f32.mrb[0].mxu0
        %v3160 = vadd.f32 0.0, %v3159
        %v3161 = vpop.f32.mrb[0].mxu0
        %3162 = vmatprep.mubr.bf16.mxu0 %v2825
        %3163 = vmatmul.mubr.bf16.gmra.mrb[0].mxu0 %v2824
        %v3164 = vpop.f32.mrb[0].mxu0
        %v3165 = vadd.f32 0.0, %v3164
        %v3166 = vpop.f32.mrb[0].mxu0
        %v3167 = vpop.f32.mrb[0].mxu0
        %v3168 = vadd.f32 0.0, %v3167
        %v3169 = vpop.f32.mrb[0].mxu0
        %3170 = vmatprep.mubr.bf16.mxu0 %v2828
        %3171 = vmatmul.mubr.bf16.gmra.mrb[0].mxu0 %v2827
        %v3172 = vpop.f32.mrb[0].mxu0
        %v3173 = vadd.f32 0.0, %v3172
        %v3174 = vpop.f32.mrb[0].mxu0
        %v3175 = vpop.f32.mrb[0].mxu0
        %v3176 = vadd.f32 0.0, %v3175
        %v3177 = vpop.f32.mrb[0].mxu0
        %3178 = vmatprep.mubr.bf16.mxu0 %v2831
        %3179 = vmatmul.mubr.bf16.gmra.mrb[0].mxu0 %v2830
        %v3180 = vpop.f32.mrb[0].mxu0
        %v3181 = vadd.f32 0.0, %v3180
        %v3182 = vpop.f32.mrb[0].mxu0
        %v3183 = vpop.f32.mrb[0].mxu0
        %v3184 = vadd.f32 0.0, %v3183
        %v3185 = vpop.f32.mrb[0].mxu0
        %3186 = vdwg.mxu0
        %3187 = vmatprep.subr.bf16.mxu0 0
        %3188 = vmatpush1.bf16.msra.mxu0 %v2994
        %3189 = vmatprep.subr.bf16.mxu0 0
        %3190 = vmatpush1.bf16.msra.mxu0 %v2995
        %3191 = vmatprep.subr.bf16.mxu0 0
        %3192 = vmatpush1.bf16.msra.mxu0 %v2996
        %3193 = vmatprep.subr.bf16.mxu0 0
        %3194 = vmatpush1.bf16.msra.mxu0 %v2997
        %3195 = vmatprep.subr.bf16.mxu0 0
        %3196 = vmatpush1.bf16.msra.mxu0 %v2998
        %3197 = vmatprep.subr.bf16.mxu0 0
        %3198 = vmatpush1.bf16.msra.mxu0 %v2999
        %3199 = vmatprep.subr.bf16.mxu0 0
        %3200 = vmatpush1.bf16.msra.mxu0 %v3000
        %3201 = vmatprep.subr.bf16.mxu0 0
        %3202 = vmatpush1.bf16.msra.mxu0 %v3001
        %3203 = vmatprep.subr.bf16.mxu0 0
        %3204 = vmatpush1.bf16.msra.mxu0 0
        %3205 = vmatprep.subr.bf16.mxu0 0
        %3206 = vmatpush1.bf16.msra.mxu0 0
        %3207 = vmatprep.subr.bf16.mxu0 0
        %3208 = vmatpush1.bf16.msra.mxu0 0
        %3209 = vmatprep.subr.bf16.mxu0 0
        %3210 = vmatpush1.bf16.msra.mxu0 0
        %3211 = vmatprep.subr.bf16.mxu0 0
        %3212 = vmatpush1.bf16.msra.mxu0 0
        %3213 = vmatprep.subr.bf16.mxu0 0
        %3214 = vmatpush1.bf16.msra.mxu0 0
        %3215 = vmatprep.subr.bf16.mxu0 0
        %3216 = vmatpush1.bf16.msra.mxu0 0
        %3217 = vmatprep.subr.bf16.mxu0 0
        %3218 = vmatpush1.bf16.msra.mxu0 0
        %3219 = vmatprep.mubr.bf16.mxu0 0
        %3220 = vmatmul.mubr.bf16.gmra.mrb[0].mxu0 %v2787
        %v3221 = vpop.f32.mrb[0].mxu0
        %v3222 = vadd.f32 %v3061, %v3221
        %v3223 = vpop.f32.mrb[0].mxu0
        %v3224 = vpop.f32.mrb[0].mxu0
        %v3225 = vadd.f32 %v3064, %v3224
        %v3226 = vpop.f32.mrb[0].mxu0
        %3227 = vmatprep.mubr.bf16.mxu0 0
        %3228 = vmatmul.mubr.bf16.gmra.mrb[0].mxu0 %v2790
        %v3229 = vpop.f32.mrb[0].mxu0
        %v3230 = vadd.f32 %v3069, %v3229
        %v3231 = vpop.f32.mrb[0].mxu0
        %v3232 = vpop.f32.mrb[0].mxu0
        %v3233 = vadd.f32 %v3072, %v3232
        %v3234 = vpop.f32.mrb[0].mxu0
        %3235 = vmatprep.mubr.bf16.mxu0 0
        %3236 = vmatmul.mubr.bf16.gmra.mrb[0].mxu0 %v2793
        %v3237 = vpop.f32.mrb[0].mxu0
        %v3238 = vadd.f32 %v3077, %v3237
        %v3239 = vpop.f32.mrb[0].mxu0
        %v3240 = vpop.f32.mrb[0].mxu0
        %v3241 = vadd.f32 %v3080, %v3240
        %v3242 = vpop.f32.mrb[0].mxu0
        %3243 = vmatprep.mubr.bf16.mxu0 0
        %3244 = vmatmul.mubr.bf16.gmra.mrb[0].mxu0 %v2796
        %v3245 = vpop.f32.mrb[0].mxu0
        %v3246 = vadd.f32 %v3085, %v3245
        %v3247 = vpop.f32.mrb[0].mxu0
        %v3248 = vpop.f32.mrb[0].mxu0
        %v3249 = vadd.f32 %v3088, %v3248
        %v3250 = vpop.f32.mrb[0].mxu0
        %3251 = vmatprep.mubr.bf16.mxu0 0
        %3252 = vmatmul.mubr.bf16.gmra.mrb[0].mxu0 %v2799
        %v3253 = vpop.f32.mrb[0].mxu0
        %v3254 = vadd.f32 %v3093, %v3253
        %v3255 = vpop.f32.mrb[0].mxu0
        %v3256 = vpop.f32.mrb[0].mxu0
        %v3257 = vadd.f32 %v3096, %v3256
        %v3258 = vpop.f32.mrb[0].mxu0
        %3259 = vmatprep.mubr.bf16.mxu0 0
        %3260 = vmatmul.mubr.bf16.gmra.mrb[0].mxu0 %v2802
        %v3261 = vpop.f32.mrb[0].mxu0
        %v3262 = vadd.f32 %v3101, %v3261
        %v3263 = vpop.f32.mrb[0].mxu0
        %v3264 = vpop.f32.mrb[0].mxu0
        %v3265 = vadd.f32 %v3104, %v3264
        %v3266 = vpop.f32.mrb[0].mxu0
        %3267 = vmatprep.mubr.bf16.mxu0 0
        %3268 = vmatmul.mubr.bf16.gmra.mrb[0].mxu0 %v2805
        %v3269 = vpop.f32.mrb[0].mxu0
        %v3270 = vadd.f32 %v3109, %v3269
        %v3271 = vpop.f32.mrb[0].mxu0
        %v3272 = vpop.f32.mrb[0].mxu0
        %v3273 = vadd.f32 %v3112, %v3272
        %v3274 = vpop.f32.mrb[0].mxu0
        %3275 = vmatprep.mubr.bf16.mxu0 0
        %3276 = vmatmul.mubr.bf16.gmra.mrb[0].mxu0 %v2808
        %v3277 = vpop.f32.mrb[0].mxu0
        %v3278 = vadd.f32 %v3117, %v3277
        %v3279 = vpop.f32.mrb[0].mxu0
        %v3280 = vpop.f32.mrb[0].mxu0
        %v3281 = vadd.f32 %v3120, %v3280
        %v3282 = vpop.f32.mrb[0].mxu0
        %3283 = vmatprep.mubr.bf16.mxu0 0
        %3284 = vmatmul.mubr.bf16.gmra.mrb[0].mxu0 %v2811
        %v3285 = vpop.f32.mrb[0].mxu0
        %v3286 = vadd.f32 %v3125, %v3285
        %v3287 = vpop.f32.mrb[0].mxu0
        %v3288 = vpop.f32.mrb[0].mxu0
        %v3289 = vadd.f32 %v3128, %v3288
        %v3290 = vpop.f32.mrb[0].mxu0
        %3291 = vmatprep.mubr.bf16.mxu0 0
        %3292 = vmatmul.mubr.bf16.gmra.mrb[0].mxu0 %v2814
        %v3293 = vpop.f32.mrb[0].mxu0
        %v3294 = vadd.f32 %v3133, %v3293
        %v3295 = vpop.f32.mrb[0].mxu0
        %v3296 = vpop.f32.mrb[0].mxu0
        %v3297 = vadd.f32 %v3136, %v3296
        %v3298 = vpop.f32.mrb[0].mxu0
        %3299 = vmatprep.mubr.bf16.mxu0 0
        %3300 = vmatmul.mubr.bf16.gmra.mrb[0].mxu0 %v2817
        %v3301 = vpop.f32.mrb[0].mxu0
        %v3302 = vadd.f32 %v3141, %v3301
        %v3303 = vpop.f32.mrb[0].mxu0
        %v3304 = vpop.f32.mrb[0].mxu0
        %v3305 = vadd.f32 %v3144, %v3304
        %v3306 = vpop.f32.mrb[0].mxu0
        %3307 = vmatprep.mubr.bf16.mxu0 0
        %3308 = vmatmul.mubr.bf16.gmra.mrb[0].mxu0 %v2820
        %v3309 = vpop.f32.mrb[0].mxu0
        %v3310 = vadd.f32 %v3149, %v3309
        %v3311 = vpop.f32.mrb[0].mxu0
        %v3312 = vpop.f32.mrb[0].mxu0
        %v3313 = vadd.f32 %v3152, %v3312
        %v3314 = vpop.f32.mrb[0].mxu0
        %3315 = vmatprep.mubr.bf16.mxu0 0
        %3316 = vmatmul.mubr.bf16.gmra.mrb[0].mxu0 %v2823
        %v3317 = vpop.f32.mrb[0].mxu0
        %v3318 = vadd.f32 %v3157, %v3317
        %v3319 = vpop.f32.mrb[0].mxu0
        %v3320 = vpop.f32.mrb[0].mxu0
        %v3321 = vadd.f32 %v3160, %v3320
        %v3322 = vpop.f32.mrb[0].mxu0
        %3323 = vmatprep.mubr.bf16.mxu0 0
        %3324 = vmatmul.mubr.bf16.gmra.mrb[0].mxu0 %v2826
        %v3325 = vpop.f32.mrb[0].mxu0
        %v3326 = vadd.f32 %v3165, %v3325
        %v3327 = vpop.f32.mrb[0].mxu0
        %v3328 = vpop.f32.mrb[0].mxu0
        %v3329 = vadd.f32 %v3168, %v3328
        %v3330 = vpop.f32.mrb[0].mxu0
        %3331 = vmatprep.mubr.bf16.mxu0 0
        %3332 = vmatmul.mubr.bf16.gmra.mrb[0].mxu0 %v2829
        %v3333 = vpop.f32.mrb[0].mxu0
        %v3334 = vadd.f32 %v3173, %v3333
        %v3335 = vpop.f32.mrb[0].mxu0
        %v3336 = vpop.f32.mrb[0].mxu0
        %v3337 = vadd.f32 %v3176, %v3336
        %v3338 = vpop.f32.mrb[0].mxu0
        %3339 = vmatprep.mubr.bf16.mxu0 0
        %3340 = vmatmul.mubr.bf16.gmra.mrb[0].mxu0 %v2832
        %v3341 = vpop.f32.mrb[0].mxu0
        %v3342 = vadd.f32 %v3181, %v3341
        %v3343 = vpop.f32.mrb[0].mxu0
        %v3344 = vpop.f32.mrb[0].mxu0
        %v3345 = vadd.f32 %v3184, %v3344
        %v3346 = vpop.f32.mrb[0].mxu0
        %3347 = vdwg.mxu0
        %v3348 = vadd.f32 %v2659, %v3222
        %v3349 = vadd.f32 %v2662, %v3225
        %v3350 = vadd.f32 %v2667, %v3230
        %v3351 = vadd.f32 %v2670, %v3233
        %v3352 = vadd.f32 %v2675, %v3238
        %v3353 = vadd.f32 %v2678, %v3241
        %v3354 = vadd.f32 %v2683, %v3246
        %v3355 = vadd.f32 %v2686, %v3249
        %v3356 = vadd.f32 %v2691, %v3254
        %v3357 = vadd.f32 %v2694, %v3257
        %v3358 = vadd.f32 %v2699, %v3262
        %v3359 = vadd.f32 %v2702, %v3265
        %v3360 = vadd.f32 %v2707, %v3270
        %v3361 = vadd.f32 %v2710, %v3273
        %v3362 = vadd.f32 %v2715, %v3278
        %v3363 = vadd.f32 %v2718, %v3281
        %v3364 = vadd.f32 %v2723, %v3286
        %v3365 = vadd.f32 %v2726, %v3289
        %v3366 = vadd.f32 %v2731, %v3294
        %v3367 = vadd.f32 %v2734, %v3297
        %v3368 = vadd.f32 %v2739, %v3302
        %v3369 = vadd.f32 %v2742, %v3305
        %v3370 = vadd.f32 %v2747, %v3310
        %v3371 = vadd.f32 %v2750, %v3313
        %v3372 = vadd.f32 %v2755, %v3318
        %v3373 = vadd.f32 %v2758, %v3321
        %v3374 = vadd.f32 %v2763, %v3326
        %v3375 = vadd.f32 %v2766, %v3329
        %v3376 = vadd.f32 %v2771, %v3334
        %v3377 = vadd.f32 %v2774, %v3337
        %v3378 = vadd.f32 %v2779, %v3342
        %v3379 = vadd.f32 %v2782, %v3345
        %v3380 = vpack.c.bf16 %v3349, %v3348
        %v3381 = vpack.c.bf16 %v3351, %v3350
        %v3382 = vpack.c.bf16 %v3353, %v3352
        %v3383 = vpack.c.bf16 %v3355, %v3354
        %v3384 = vpack.c.bf16 %v3357, %v3356
        %v3385 = vpack.c.bf16 %v3359, %v3358
        %v3386 = vpack.c.bf16 %v3361, %v3360
        %v3387 = vpack.c.bf16 %v3363, %v3362
        %v3388 = vpack.c.bf16 %v3365, %v3364
        %v3389 = vpack.c.bf16 %v3367, %v3366
        %v3390 = vpack.c.bf16 %v3369, %v3368
        %v3391 = vpack.c.bf16 %v3371, %v3370
        %v3392 = vpack.c.bf16 %v3373, %v3372
        %v3393 = vpack.c.bf16 %v3375, %v3374
        %v3394 = vpack.c.bf16 %v3377, %v3376
        %v3395 = vpack.c.bf16 %v3379, %v3378
        %v3412 = vunpack.c.l.b16 %v3380
        %v3413 = vunpack.c.h.b16 %v3380
        %v3414 = vunpack.c.l.b16 %v3381
        %v3415 = vunpack.c.h.b16 %v3381
        %v3416 = vunpack.c.l.b16 %v3382
        %v3417 = vunpack.c.h.b16 %v3382
        %v3418 = vunpack.c.l.b16 %v3383
        %v3419 = vunpack.c.h.b16 %v3383
        %v3420 = vunpack.c.l.b16 %v3384
        %v3421 = vunpack.c.h.b16 %v3384
        %v3422 = vunpack.c.l.b16 %v3385
        %v3423 = vunpack.c.h.b16 %v3385
        %v3424 = vunpack.c.l.b16 %v3386
        %v3425 = vunpack.c.h.b16 %v3386
        %v3426 = vunpack.c.l.b16 %v3387
        %v3427 = vunpack.c.h.b16 %v3387
        %v3428 = vunpack.c.l.b16 %v3388
        %v3429 = vunpack.c.h.b16 %v3388
        %v3430 = vunpack.c.l.b16 %v3389
        %v3431 = vunpack.c.h.b16 %v3389
        %v3432 = vunpack.c.l.b16 %v3390
        %v3433 = vunpack.c.h.b16 %v3390
        %v3434 = vunpack.c.l.b16 %v3391
        %v3435 = vunpack.c.h.b16 %v3391
        %v3436 = vunpack.c.l.b16 %v3392
        %v3437 = vunpack.c.h.b16 %v3392
        %v3438 = vunpack.c.l.b16 %v3393
        %v3439 = vunpack.c.h.b16 %v3393
        %v3440 = vunpack.c.l.b16 %v3394
        %v3441 = vunpack.c.h.b16 %v3394
        %v3442 = vunpack.c.l.b16 %v3395
        %v3443 = vunpack.c.h.b16 %v3395
        %v3444 = vpack.c.b16 %v3412, %v3412
        %v3445 = vpack.c.b16 %v3413, %v3413
        %v3446 = vpack.c.b16 %v3414, %v3414
        %v3447 = vpack.c.b16 %v3415, %v3415
        %v3448 = vpack.c.b16 %v3416, %v3416
        %v3449 = vpack.c.b16 %v3417, %v3417
        %v3450 = vpack.c.b16 %v3418, %v3418
        %v3451 = vpack.c.b16 %v3419, %v3419
        %v3452 = vpack.c.b16 %v3420, %v3420
        %v3453 = vpack.c.b16 %v3421, %v3421
        %v3454 = vpack.c.b16 %v3422, %v3422
        %v3455 = vpack.c.b16 %v3423, %v3423
        %v3456 = vpack.c.b16 %v3424, %v3424
        %v3457 = vpack.c.b16 %v3425, %v3425
        %v3458 = vpack.c.b16 %v3426, %v3426
        %v3459 = vpack.c.b16 %v3427, %v3427
        %v3460 = vpack.c.b16 %v3428, %v3428
        %v3461 = vpack.c.b16 %v3429, %v3429
        %v3462 = vpack.c.b16 %v3430, %v3430
        %v3463 = vpack.c.b16 %v3431, %v3431
        %v3464 = vpack.c.b16 %v3432, %v3432
        %v3465 = vpack.c.b16 %v3433, %v3433
        %v3466 = vpack.c.b16 %v3434, %v3434
        %v3467 = vpack.c.b16 %v3435, %v3435
        %v3468 = vpack.c.b16 %v3436, %v3436
        %v3469 = vpack.c.b16 %v3437, %v3437
        %v3470 = vpack.c.b16 %v3438, %v3438
        %v3471 = vpack.c.b16 %v3439, %v3439
        %v3472 = vpack.c.b16 %v3440, %v3440
        %v3473 = vpack.c.b16 %v3441, %v3441
        %v3474 = vpack.c.b16 %v3442, %v3442
        %v3475 = vpack.c.b16 %v3443, %v3443
        %3508 = vst [vmem:[%s469] sm:$0xf] %v3444
        %3509 = vst [vmem:[%s469 + $0x4] sm:$0xf] %v3445
        %3510 = vst [vmem:[%s469 + $0x8] sm:$0xf] %v3446
        %3511 = vst [vmem:[%s469 + $0xc] sm:$0xf] %v3447
        %3512 = vst [vmem:[%s469 + $0x10] sm:$0xf] %v3448
        %3513 = vst [vmem:[%s469 + $0x14] sm:$0xf] %v3449
        %3514 = vst [vmem:[%s469 + $0x18] sm:$0xf] %v3450
        %3515 = vst [vmem:[%s469 + $0x1c] sm:$0xf] %v3451
        %3516 = vst [vmem:[%s469 + $0x20] sm:$0xf] %v3452
        %3517 = vst [vmem:[%s469 + $0x24] sm:$0xf] %v3453
        %3518 = vst [vmem:[%s469 + $0x28] sm:$0xf] %v3454
        %3519 = vst [vmem:[%s469 + $0x2c] sm:$0xf] %v3455
        %3520 = vst [vmem:[%s469 + $0x30] sm:$0xf] %v3456
        %3521 = vst [vmem:[%s469 + $0x34] sm:$0xf] %v3457
        %3522 = vst [vmem:[%s469 + $0x38] sm:$0xf] %v3458
        %3523 = vst [vmem:[%s469 + $0x3c] sm:$0xf] %v3459
        %3524 = vst [vmem:[%s469 + $0x40] sm:$0xf] %v3460
        %3525 = vst [vmem:[%s469 + $0x44] sm:$0xf] %v3461
        %3526 = vst [vmem:[%s469 + $0x48] sm:$0xf] %v3462
        %3527 = vst [vmem:[%s469 + $0x4c] sm:$0xf] %v3463
        %3528 = vst [vmem:[%s469 + $0x50] sm:$0xf] %v3464
        %3529 = vst [vmem:[%s469 + $0x54] sm:$0xf] %v3465
        %3530 = vst [vmem:[%s469 + $0x58] sm:$0xf] %v3466
        %3531 = vst [vmem:[%s469 + $0x5c] sm:$0xf] %v3467
        %3532 = vst [vmem:[%s469 + $0x60] sm:$0xf] %v3468
        %3533 = vst [vmem:[%s469 + $0x64] sm:$0xf] %v3469
        %3534 = vst [vmem:[%s469 + $0x68] sm:$0xf] %v3470
        %3535 = vst [vmem:[%s469 + $0x6c] sm:$0xf] %v3471
        %3536 = vst [vmem:[%s469 + $0x70] sm:$0xf] %v3472
        %3537 = vst [vmem:[%s469 + $0x74] sm:$0xf] %v3473
        %3538 = vst [vmem:[%s469 + $0x78] sm:$0xf] %v3474
        %3539 = vst [vmem:[%s469 + $0x7c] sm:$0xf] %v3475
        %v3540 = vsel %vm971, 1, 0
        %v3541 = vsel %vm972, 1, 0
        %v3542 = vsel %vm973, 1, 0
        %v3543 = vsel %vm974, 1, 0
        %v3544 = vsel %vm975, 1, 0
        %v3545 = vsel %vm976, 1, 0
        %v3546 = vsel %vm977, 1, 0
        %v3547 = vsel %vm978, 1, 0
        %v3548 = vsel %vm979, 1, 0
        %v3549 = vsel %vm980, 1, 0
        %v3550 = vsel %vm981, 1, 0
        %v3551 = vsel %vm982, 1, 0
        %v3552 = vsel %vm983, 1, 0
        %v3553 = vsel %vm984, 1, 0
        %v3554 = vsel %vm985, 1, 0
        %v3555 = vsel %vm986, 1, 0
        %v3556 = vsel %vm987, 1, 0
        %v3557 = vsel %vm988, 1, 0
        %v3558 = vsel %vm989, 1, 0
        %v3559 = vsel %vm990, 1, 0
        %v3560 = vsel %vm991, 1, 0
        %v3561 = vsel %vm992, 1, 0
        %v3562 = vsel %vm993, 1, 0
        %v3563 = vsel %vm994, 1, 0
        %v3564 = vsel %vm995, 1, 0
        %v3565 = vsel %vm996, 1, 0
        %v3566 = vsel %vm997, 1, 0
        %v3567 = vsel %vm998, 1, 0
        %v3568 = vsel %vm999, 1, 0
        %v3569 = vsel %vm1000, 1, 0
        %v3570 = vsel %vm1001, 1, 0
        %v3571 = vsel %vm1002, 1, 0
        %vm3572 = vcmp.eq.s32.totalorder %v3540, 1
        %vm3573 = vcmp.eq.s32.totalorder %v3541, 1
        %vm3574 = vcmp.eq.s32.totalorder %v3542, 1
        %vm3575 = vcmp.eq.s32.totalorder %v3543, 1
        %vm3576 = vcmp.eq.s32.totalorder %v3544, 1
        %vm3577 = vcmp.eq.s32.totalorder %v3545, 1
        %vm3578 = vcmp.eq.s32.totalorder %v3546, 1
        %vm3579 = vcmp.eq.s32.totalorder %v3547, 1
        %vm3580 = vcmp.eq.s32.totalorder %v3548, 1
        %vm3581 = vcmp.eq.s32.totalorder %v3549, 1
        %vm3582 = vcmp.eq.s32.totalorder %v3550, 1
        %vm3583 = vcmp.eq.s32.totalorder %v3551, 1
        %vm3584 = vcmp.eq.s32.totalorder %v3552, 1
        %vm3585 = vcmp.eq.s32.totalorder %v3553, 1
        %vm3586 = vcmp.eq.s32.totalorder %v3554, 1
        %vm3587 = vcmp.eq.s32.totalorder %v3555, 1
        %vm3588 = vcmp.eq.s32.totalorder %v3556, 1
        %vm3589 = vcmp.eq.s32.totalorder %v3557, 1
        %vm3590 = vcmp.eq.s32.totalorder %v3558, 1
        %vm3591 = vcmp.eq.s32.totalorder %v3559, 1
        %vm3592 = vcmp.eq.s32.totalorder %v3560, 1
        %vm3593 = vcmp.eq.s32.totalorder %v3561, 1
        %vm3594 = vcmp.eq.s32.totalorder %v3562, 1
        %vm3595 = vcmp.eq.s32.totalorder %v3563, 1
        %vm3596 = vcmp.eq.s32.totalorder %v3564, 1
        %vm3597 = vcmp.eq.s32.totalorder %v3565, 1
        %vm3598 = vcmp.eq.s32.totalorder %v3566, 1
        %vm3599 = vcmp.eq.s32.totalorder %v3567, 1
        %vm3600 = vcmp.eq.s32.totalorder %v3568, 1
        %vm3601 = vcmp.eq.s32.totalorder %v3569, 1
        %vm3602 = vcmp.eq.s32.totalorder %v3570, 1
        %vm3603 = vcmp.eq.s32.totalorder %v3571, 1
        %v3604 = vsel %vm3572, %v3348, 0.0
        %v3605 = vsel %vm3573, %v3349, 0.0
        %v3606 = vsel %vm3574, %v3350, 0.0
        %v3607 = vsel %vm3575, %v3351, 0.0
        %v3608 = vsel %vm3576, %v3352, 0.0
        %v3609 = vsel %vm3577, %v3353, 0.0
        %v3610 = vsel %vm3578, %v3354, 0.0
        %v3611 = vsel %vm3579, %v3355, 0.0
        %v3612 = vsel %vm3580, %v3356, 0.0
        %v3613 = vsel %vm3581, %v3357, 0.0
        %v3614 = vsel %vm3582, %v3358, 0.0
        %v3615 = vsel %vm3583, %v3359, 0.0
        %v3616 = vsel %vm3584, %v3360, 0.0
        %v3617 = vsel %vm3585, %v3361, 0.0
        %v3618 = vsel %vm3586, %v3362, 0.0
        %v3619 = vsel %vm3587, %v3363, 0.0
        %v3620 = vsel %vm3588, %v3364, 0.0
        %v3621 = vsel %vm3589, %v3365, 0.0
        %v3622 = vsel %vm3590, %v3366, 0.0
        %v3623 = vsel %vm3591, %v3367, 0.0
        %v3624 = vsel %vm3592, %v3368, 0.0
        %v3625 = vsel %vm3593, %v3369, 0.0
        %v3626 = vsel %vm3594, %v3370, 0.0
        %v3627 = vsel %vm3595, %v3371, 0.0
        %v3628 = vsel %vm3596, %v3372, 0.0
        %v3629 = vsel %vm3597, %v3373, 0.0
        %v3630 = vsel %vm3598, %v3374, 0.0
        %v3631 = vsel %vm3599, %v3375, 0.0
        %v3632 = vsel %vm3600, %v3376, 0.0
        %v3633 = vsel %vm3601, %v3377, 0.0
        %v3634 = vsel %vm3602, %v3378, 0.0
        %v3635 = vsel %vm3603, %v3379, 0.0
        %v3636 = vadd.f32 %v3604, %v3605
        %v3637 = vadd.f32 %v3636, %v3606
        %v3638 = vadd.f32 %v3637, %v3607
        %v3639 = vadd.f32 %v3638, %v3608
        %v3640 = vadd.f32 %v3639, %v3609
        %v3641 = vadd.f32 %v3640, %v3610
        %v3642 = vadd.f32 %v3641, %v3611
        %v3643 = vadd.f32 %v3642, %v3612
        %v3644 = vadd.f32 %v3643, %v3613
        %v3645 = vadd.f32 %v3644, %v3614
        %v3646 = vadd.f32 %v3645, %v3615
        %v3647 = vadd.f32 %v3646, %v3616
        %v3648 = vadd.f32 %v3647, %v3617
        %v3649 = vadd.f32 %v3648, %v3618
        %v3650 = vadd.f32 %v3649, %v3619
        %v3651 = vadd.f32 %v3650, %v3620
        %v3652 = vadd.f32 %v3651, %v3621
        %v3653 = vadd.f32 %v3652, %v3622
        %v3654 = vadd.f32 %v3653, %v3623
        %v3655 = vadd.f32 %v3654, %v3624
        %v3656 = vadd.f32 %v3655, %v3625
        %v3657 = vadd.f32 %v3656, %v3626
        %v3658 = vadd.f32 %v3657, %v3627
        %v3659 = vadd.f32 %v3658, %v3628
        %v3660 = vadd.f32 %v3659, %v3629
        %v3661 = vadd.f32 %v3660, %v3630
        %v3662 = vadd.f32 %v3661, %v3631
        %v3663 = vadd.f32 %v3662, %v3632
        %v3664 = vadd.f32 %v3663, %v3633
        %v3665 = vadd.f32 %v3664, %v3634
        %v3666 = vadd.f32 %v3665, %v3635
        %v3667 = vrot.slane %v3666, 4
        %v3668 = vadd.f32 %v3666, %v3667
        %v3669 = vrot.slane %v3668, 2
        %v3670 = vadd.f32 %v3668, %v3669
        %v3671 = vrot.slane %v3670, 1
        %v3672 = vadd.f32 %v3670, %v3671
        %v3673 = vmul.f32 %v3604, %v3604
        %v3674 = vmul.f32 %v3605, %v3605
        %v3675 = vmul.f32 %v3606, %v3606
        %v3676 = vmul.f32 %v3607, %v3607
        %v3677 = vmul.f32 %v3608, %v3608
        %v3678 = vmul.f32 %v3609, %v3609
        %v3679 = vmul.f32 %v3610, %v3610
        %v3680 = vmul.f32 %v3611, %v3611
        %v3681 = vmul.f32 %v3612, %v3612
        %v3682 = vmul.f32 %v3613, %v3613
        %v3683 = vmul.f32 %v3614, %v3614
        %v3684 = vmul.f32 %v3615, %v3615
        %v3685 = vmul.f32 %v3616, %v3616
        %v3686 = vmul.f32 %v3617, %v3617
        %v3687 = vmul.f32 %v3618, %v3618
        %v3688 = vmul.f32 %v3619, %v3619
        %v3689 = vmul.f32 %v3620, %v3620
        %v3690 = vmul.f32 %v3621, %v3621
        %v3691 = vmul.f32 %v3622, %v3622
        %v3692 = vmul.f32 %v3623, %v3623
        %v3693 = vmul.f32 %v3624, %v3624
        %v3694 = vmul.f32 %v3625, %v3625
        %v3695 = vmul.f32 %v3626, %v3626
        %v3696 = vmul.f32 %v3627, %v3627
        %v3697 = vmul.f32 %v3628, %v3628
        %v3698 = vmul.f32 %v3629, %v3629
        %v3699 = vmul.f32 %v3630, %v3630
        %v3700 = vmul.f32 %v3631, %v3631
        %v3701 = vmul.f32 %v3632, %v3632
        %v3702 = vmul.f32 %v3633, %v3633
        %v3703 = vmul.f32 %v3634, %v3634
        %v3704 = vmul.f32 %v3635, %v3635
        %v3705 = vadd.f32 %v3673, %v3674
        %v3706 = vadd.f32 %v3705, %v3675
        %v3707 = vadd.f32 %v3706, %v3676
        %v3708 = vadd.f32 %v3707, %v3677
        %v3709 = vadd.f32 %v3708, %v3678
        %v3710 = vadd.f32 %v3709, %v3679
        %v3711 = vadd.f32 %v3710, %v3680
        %v3712 = vadd.f32 %v3711, %v3681
        %v3713 = vadd.f32 %v3712, %v3682
        %v3714 = vadd.f32 %v3713, %v3683
        %v3715 = vadd.f32 %v3714, %v3684
        %v3716 = vadd.f32 %v3715, %v3685
        %v3717 = vadd.f32 %v3716, %v3686
        %v3718 = vadd.f32 %v3717, %v3687
        %v3719 = vadd.f32 %v3718, %v3688
        %v3720 = vadd.f32 %v3719, %v3689
        %v3721 = vadd.f32 %v3720, %v3690
        %v3722 = vadd.f32 %v3721, %v3691
        %v3723 = vadd.f32 %v3722, %v3692
        %v3724 = vadd.f32 %v3723, %v3693
        %v3725 = vadd.f32 %v3724, %v3694
        %v3726 = vadd.f32 %v3725, %v3695
        %v3727 = vadd.f32 %v3726, %v3696
        %v3728 = vadd.f32 %v3727, %v3697
        %v3729 = vadd.f32 %v3728, %v3698
        %v3730 = vadd.f32 %v3729, %v3699
        %v3731 = vadd.f32 %v3730, %v3700
        %v3732 = vadd.f32 %v3731, %v3701
        %v3733 = vadd.f32 %v3732, %v3702
        %v3734 = vadd.f32 %v3733, %v3703
        %v3735 = vadd.f32 %v3734, %v3704
        %v3736 = vrot.slane %v3735, 4
        %v3737 = vadd.f32 %v3735, %v3736
        %v3738 = vrot.slane %v3737, 2
        %v3739 = vadd.f32 %v3737, %v3738
        %v3740 = vrot.slane %v3739, 1
        %v3741 = vadd.f32 %v3739, %v3740
        %vm3742 = vcmask 1040384
        %v3743 = vsel %vm3742, %v3672, %v3741
        %3744 = vst [vmem:[%s476] sm:$0x3] %v3743
        %s3745 = sand.u32 %s218, 1
        %s3746 = scalar_lea.sflag [#allocation6], %s3745
        %s3747 = sand.u32 %s218, 1
        %s3748 = smul.addr %s3747, 128
        %s3749 = scalar_lea.vmem [#allocation15], %s3748
        %s3750 = sand.u32 %s246, 1
        %s3751 = scalar_lea.sflag [#allocation17], %s3750
        %s3752 = sand.u32 %s246, 1
        %s3753 = smul.addr %s3752, 2
        %s3754 = scalar_lea.vmem [#allocation16], %s3753
        // Predicated region
        $region69: #{_lambda_.3} parent=43 // pred_check
          %p3755 = pneg %p228
        $region70: #{_lambda_.3} parent=43 // pred_check_branch
          %3757 = sbr.rel (%p3755) target = $region72
        $region71: #{_lambda_.3} parent=43 // pred_region
          %s3758 = smul.u32 32, %s38
          %s3760 = ssub.s32 2048, 2048
          %3761 = vsyncadd %s3746, %s3760
          %s3762 = smul.addr %s37, 64
          %s3763 = sadd.s32 %s3758, %s3762
          %s3764 = smul.addr %s3763, 64
          %s3765 = scalar_lea.hbm %s6, %s3764
          %s3766 = sshll.u32 %s3749, 4
          %s3767 = int_to_ptr.vmem [resolvable:$true] %s3766
          %3772 = dma.vmem_to_hbm [thread:$0]  %s3767, 2048, %s3765, %s3746, 64, 64, 4
        $region72: #{_lambda_.3} parent=43 // pred_fallthru
          _
        // Predicated region
        $region73: #{_lambda_.3} parent=43 // pred_check
          %p3773 = pneg %p256
        $region74: #{_lambda_.3} parent=43 // pred_check_branch
          %3775 = sbr.rel (%p3773) target = $region76
        $region75: #{_lambda_.3} parent=43 // pred_region
          %s3777 = ssub.s32 32, 32
          %3778 = vsyncadd %s3751, %s3777
          %s3779 = smul.addr %s37, 2
          %s3780 = sadd.s32 %s38, %s3779
          %s3781 = smul.addr %s3780, 32
          %s3782 = scalar_lea.hbm %s7, %s3781
          %s3784 = sshll.u32 %s3754, 4
          %s3785 = int_to_ptr.vmem [resolvable:$true] %s3784
          %3787 = dma.vmem_to_hbm [thread:$0]  %s3785, 32, %s3782, %s3751
        $region76: #{_lambda_.3} parent=43 // pred_fallthru
          _
      $region44: #{_lambda_.3} parent=5 // pred_fallthru
        _
      %p3788 = scmp.le.s32.totalorder 2, %s28
      // Predicated region
      $region77: #{_lambda_.3} parent=5 // pred_check
        %p3789 = pneg %p3788
      $region78: #{_lambda_.3} parent=5 // pred_check_branch
        %3791 = sbr.rel (%p3789) target = $region80
      $region79: #{_lambda_.3} parent=5 // pred_region
        %s3792 = ssub.s32 %s28, 2
        // Predicated region
        $region81: #{_lambda_.3} parent=79 // pred_check
          %p3793 = pneg %p234
        $region82: #{_lambda_.3} parent=79 // pred_check_branch
          %3795 = sbr.rel (%p3793) target = $region84
        $region83: #{_lambda_.3} parent=79 // pred_region
          %s3796 = sand.u32 %s219, 1
          %s3797 = scalar_lea.sflag [#allocation6], %s3796
          %s3798 = sand.u32 %s219, 1
          %s3799 = smul.addr %s3798, 128
          %s3800 = scalar_lea.vmem [#allocation15], %s3799
          %3801 = dma.done %s3797, 2048
        $region84: #{_lambda_.3} parent=79 // pred_fallthru
          _
        // Predicated region
        $region85: #{_lambda_.3} parent=79 // pred_check
          %p3802 = pneg %p262
        $region86: #{_lambda_.3} parent=79 // pred_check_branch
          %3804 = sbr.rel (%p3802) target = $region88
        $region87: #{_lambda_.3} parent=79 // pred_region
          %s3805 = sand.u32 %s247, 1
          %s3806 = scalar_lea.sflag [#allocation17], %s3805
          %s3807 = sand.u32 %s247, 1
          %s3808 = smul.addr %s3807, 2
          %s3809 = scalar_lea.vmem [#allocation16], %s3808
          %3810 = dma.done %s3806, 32
        $region88: #{_lambda_.3} parent=79 // pred_fallthru
          _
      $region80: #{_lambda_.3} parent=5 // pred_fallthru
        _
    $region6: #{_lambda_.3} parent=1 // loop_footer
      %s32 = sadd.s32 1, %s28
    $region7: #{_lambda_.3} parent=1 // loop_footer_branch
      %27 = sbr.rel target = $region3
    $region8: #{_lambda_.3} parent=1 // loop_exit
      _
    %3811 = vsyncpa [#allocation5], 1
    %s3812 = scalar_lea.sflag [#allocation5], 1
    %3813 = vsyncpa %s3812, 1
    %3814 = vsyncpa [#allocation8], 1
    %3815 = vsyncpa [#allocation11], 1
    %s3816 = scalar_lea.sflag [#allocation11], 1
    %3817 = vsyncpa %s3816, 1
    %3818 = vsyncpa [#allocation14], 1
    %s3819 = scalar_lea.sflag [#allocation14], 1
    %3820 = vsyncpa %s3819, 1
    %3821 = vsyncpa [#allocation6], 1
    %s3822 = scalar_lea.sflag [#allocation6], 1
    %3823 = vsyncpa %s3822, 1
    %3824 = vsyncpa [#allocation17], 1
    %s3825 = scalar_lea.sflag [#allocation17], 1
    %3826 = vsyncpa %s3825, 1

// kernel: _lambda_.4
$region0: #{_lambda_.4}
  #allocation0 [shape = 'u32[]', space=smem, size = 0x4, offset = 0x4, fixed_abs, tag = 'smem constant byte address 0x4 - core index']
  #allocation1 [shape = 'u32[144,128]{1,0:T(1,128)}', space=vmem, size = 0x12000, scoped, tag = 'internal scratch']
  #allocation2 [shape = 'bf16[352,128]{1,0:T(16,128)(2,1)}', space=vmem, size = 0x16000, scoped, tag = 'scratch operand']
  #allocation3 [shape = 'bf16[320,384]{1,0:T(16,128)(2,1)}', space=vmem, size = 0x3c000, scoped, tag = 'scratch operand']
  %s0 = inlined_call_operand.hbm [shape: f32[1,128], index: 0, kind: input, shape index: {}]
  %s1 = inlined_call_operand.hbm [shape: f32[1,128], index: 1, kind: input, shape index: {}]
  %s2 = inlined_call_operand.hbm [shape: bf16[3,384,128], index: 2, kind: input, shape index: {}]
  %s3 = inlined_call_operand.hbm [shape: bf16[2,512,128], index: 3, kind: input, shape index: {}, may-alias: {3,4,5}]
  %s4 = inlined_call_operand.hbm [shape: bf16[2,512,128], index: 4, kind: input, shape index: {}, may-alias: {3,4,5}]
  %s5 = inlined_call_operand.hbm [shape: bf16[2,512,128], index: 5, kind: input, shape index: {}, may-alias: {3,4,5}]
  %s6 = inlined_call_operand.hbm [shape: bf16[2,512,128], index: 6, kind: output, shape index: {0}]
  %s7 = inlined_call_operand.hbm [shape: f32[2,2,2,128], index: 7, kind: output, shape index: {1}]
  %8 = xla_tuple %s6, %s7
  %s9 = sld [smem:[#allocation0]]
  $region89: #{_lambda_.4} parent=0
    _
  %s11 = ssub.s32 1, %s9
  %s12 = scalar_select 0, %s11, %s9
  $region1: #{_lambda_.4} parent=0
    #allocation4 [shape = 'u8[512]{0}', space=vmem, size = 0x400, scoped, tag = 'input window, operand 0, single buffered']
    #allocation5 [shape = 's32[2]{0}', space=sflag, size = 0x8, scoped, tag = 'scoped memory for _lambda_.4']
    #allocation6 [shape = 's32[2]{0}', space=sflag, size = 0x8, scoped, tag = 'scoped memory for _lambda_.4']
    #allocation7 [shape = 'u8[512]{0}', space=vmem, size = 0x400, scoped, tag = 'input window, operand 1, single buffered']
    #allocation8 [shape = 's32[1]{0}', space=sflag, size = 0x4, scoped, tag = 'scoped memory for _lambda_.4']
    #allocation9 [shape = 'u8[294912]{0}', space=vmem, size = 0x48000, scoped, tag = 'input window, operand 2, single buffered']
    #allocation10 [shape = 'u8[131072]{0}', space=vmem, size = 0x20000, scoped, tag = 'input window, operand 3']
    #allocation11 [shape = 's32[2]{0}', space=sflag, size = 0x8, scoped, tag = 'scoped memory for _lambda_.4']
    #allocation12 [shape = 'u8[16384]{0}', space=vmem, size = 0x4000, scoped, tag = 'input window, operand 4']
    #allocation13 [shape = 'u8[16384]{0}', space=vmem, size = 0x4000, scoped, tag = 'input window, operand 5']
    #allocation14 [shape = 's32[2]{0}', space=sflag, size = 0x8, scoped, tag = 'scoped memory for _lambda_.4']
    #allocation15 [shape = 'u8[131072]{0}', space=vmem, size = 0x20000, scoped, tag = 'output window, operand 0']
    #allocation16 [shape = 'u8[2048]{0}', space=vmem, size = 0x800, scoped, tag = 'output window, operand 1']
    #allocation17 [shape = 's32[2]{0}', space=sflag, size = 0x8, scoped, tag = 'scoped memory for _lambda_.4']
    %13 = vsyncpa [#allocation5], 0
    %14 = vsyncpa [#allocation8], 0
    %15 = vsyncpa [#allocation11], 0
    %s16 = scalar_lea.sflag [#allocation11], 1
    %17 = vsyncpa %s16, 0
    %18 = vsyncpa [#allocation14], 0
    %s19 = scalar_lea.sflag [#allocation14], 1
    %20 = vsyncpa %s19, 0
    %21 = vsyncpa [#allocation6], 0
    %s22 = scalar_lea.sflag [#allocation6], 1
    %23 = vsyncpa %s22, 0
    %24 = vsyncpa [#allocation17], 0
    %s25 = scalar_lea.sflag [#allocation17], 1
    %26 = vsyncpa %s25, 0
    loop: start=0, step=1, limit=6
    $region2: #{_lambda_.4} parent=1 // loop_pre_header
      _
    $region3: #{_lambda_.4} parent=1 // loop_header
      %s28 = sphi 0, %s32
      %p29 = scmp.ge.s32.totalorder %s28, 6
      %s35 = sphi 0, %s47
      %s36 = sphi 0, %s43
      %s37 = sphi 0, %s35
      %s38 = sphi 0, %s36
      %s39 = sphi 0, %s37
      %s40 = sphi 0, %s38
      %s48 = sphi 0, %s48
      %s50 = sphi 0, %s48
      %s51 = sphi 0, %s50
      %s65 = sphi 0, %s51
      %s69 = sphi 0, %s69
      %s71 = sphi 0, %s69
      %s72 = sphi 0, %s71
      %s86 = sphi 0, %s72
      %s90 = sphi 0, %s90
      %s92 = sphi 0, %s90
      %s93 = sphi 0, %s92
      %s107 = sphi 0, %s93
      %s115 = sphi 0, %s117
      %s118 = sphi 0, %s115
      %s119 = sphi 0, %s118
      %s135 = sphi 0, %s119
      %s151 = sphi 0, %s153
      %s154 = sphi 0, %s151
      %s155 = sphi 0, %s154
      %s171 = sphi 0, %s155
      %s187 = sphi 0, %s189
      %s190 = sphi 0, %s187
      %s191 = sphi 0, %s190
      %s207 = sphi 0, %s191
      %s215 = sphi 0, %s217
      %s218 = sphi 0, %s215
      %s219 = sphi 0, %s218
      %s235 = sphi 0, %s219
      %s243 = sphi 0, %s245
      %s246 = sphi 0, %s243
      %s247 = sphi 0, %s246
      %s263 = sphi 0, %s247
    $region4: #{_lambda_.4} parent=1 // loop_header_branch
      %31 = sbr.rel (%p29) target = $region8
    $region5: #{_lambda_.4} parent=1 // loop_body
      %s33 = ssub.s32 %s28, 1
      %s34 = ssub.s32 %s28, 2
      %s41 = sadd.s32 1, %s36
      %p42 = scmp.ge.s32.totalorder %s41, 2
      %s43 = scalar_select %p42, 0, %s41
      %s44 = sadd.s32 1, %s35
      %s45 = scalar_select %p42, %s44, %s35
      %p46 = scmp.ge.s32.totalorder %s45, 2
      %s47 = scalar_select %p46, 0, %s45
      %s49 = sadd.s32 %s48, 1
      %p52 = scmp.eq.s32.totalorder %s28, 3
      %p53 = scmp.ne.s32.totalorder %s48, %s50
      %p54 = scmp.eq.s32.totalorder %s28, 0
      %p55 = por %p53, %p54
      %p56 = scmp.ne.s32.totalorder %s48, %s50
      %p57 = scmp.eq.s32.totalorder %s33, 3
      %p58 = por %p56, %p57
      %p59 = scmp.ne.s32.totalorder %s50, %s51
      %p60 = scmp.eq.s32.totalorder %s33, 0
      %p61 = por %p59, %p60
      %p62 = scmp.ne.s32.totalorder %s50, %s51
      %p63 = scmp.eq.s32.totalorder %s34, 3
      %p64 = por %p62, %p63
      %p66 = scmp.ne.s32.totalorder %s51, %s65
      %p67 = scmp.eq.s32.totalorder %s34, 0
      %p68 = por %p66, %p67
      %s70 = sadd.s32 %s69, 1
      %p73 = scmp.eq.s32.totalorder %s28, 3
      %p74 = scmp.ne.s32.totalorder %s69, %s71
      %p75 = scmp.eq.s32.totalorder %s28, 0
      %p76 = por %p74, %p75
      %p77 = scmp.ne.s32.totalorder %s69, %s71
      %p78 = scmp.eq.s32.totalorder %s33, 3
      %p79 = por %p77, %p78
      %p80 = scmp.ne.s32.totalorder %s71, %s72
      %p81 = scmp.eq.s32.totalorder %s33, 0
      %p82 = por %p80, %p81
      %p83 = scmp.ne.s32.totalorder %s71, %s72
      %p84 = scmp.eq.s32.totalorder %s34, 3
      %p85 = por %p83, %p84
      %p87 = scmp.ne.s32.totalorder %s72, %s86
      %p88 = scmp.eq.s32.totalorder %s34, 0
      %p89 = por %p87, %p88
      %s91 = sadd.s32 %s90, 1
      %p94 = scmp.eq.s32.totalorder %s28, 3
      %p95 = scmp.ne.s32.totalorder %s90, %s92
      %p96 = scmp.eq.s32.totalorder %s28, 0
      %p97 = por %p95, %p96
      %p98 = scmp.ne.s32.totalorder %s90, %s92
      %p99 = scmp.eq.s32.totalorder %s33, 3
      %p100 = por %p98, %p99
      %p101 = scmp.ne.s32.totalorder %s92, %s93
      %p102 = scmp.eq.s32.totalorder %s33, 0
      %p103 = por %p101, %p102
      %p104 = scmp.ne.s32.totalorder %s92, %s93
      %p105 = scmp.eq.s32.totalorder %s34, 3
      %p106 = por %p104, %p105
      %p108 = scmp.ne.s32.totalorder %s93, %s107
      %p109 = scmp.eq.s32.totalorder %s34, 0
      %p110 = por %p108, %p109
      %s111 = ssub.s32 %s35, %s47
      %s112 = ssub.s32 %s36, %s43
      %s113 = sor.u32 %s111, %s112
      %p114 = scmp.eq.s32.totalorder %s113, 0
      %s116 = sadd.s32 %s115, 1
      %s117 = scalar_select %p114, %s115, %s116
      %p120 = pneg %p114
      %p121 = scmp.eq.s32.totalorder %s28, 3
      %p122 = por %p120, %p121
      %p123 = scmp.ne.s32.totalorder %s115, %s118
      %p124 = scmp.eq.s32.totalorder %s28, 0
      %p125 = por %p123, %p124
      %p126 = scmp.ne.s32.totalorder %s115, %s118
      %p127 = scmp.eq.s32.totalorder %s33, 3
      %p128 = por %p126, %p127
      %p129 = scmp.ne.s32.totalorder %s118, %s119
      %p130 = scmp.eq.s32.totalorder %s33, 0
      %p131 = por %p129, %p130
      %p132 = scmp.ne.s32.totalorder %s118, %s119
      %p133 = scmp.eq.s32.totalorder %s34, 3
      %p134 = por %p132, %p133
      %p136 = scmp.ne.s32.totalorder %s119, %s135
      %p137 = scmp.eq.s32.totalorder %s34, 0
      %p138 = por %p136, %p137
      %s139 = smul.u32 %s36, 8
      %s140 = ssub.s32 %s139, 1
      %p141 = scmp.gt.s32.totalorder %s140, 0
      %s142 = scalar_select %p141, %s140, 0
      %s143 = smul.u32 %s43, 8
      %s144 = ssub.s32 %s143, 1
      %p145 = scmp.gt.s32.totalorder %s144, 0
      %s146 = scalar_select %p145, %s144, 0
      %s147 = ssub.s32 %s35, %s47
      %s148 = ssub.s32 %s142, %s146
      %s149 = sor.u32 %s147, %s148
      %p150 = scmp.eq.s32.totalorder %s149, 0
      %s152 = sadd.s32 %s151, 1
      %s153 = scalar_select %p150, %s151, %s152
      %p156 = pneg %p150
      %p157 = scmp.eq.s32.totalorder %s28, 3
      %p158 = por %p156, %p157
      %p159 = scmp.ne.s32.totalorder %s151, %s154
      %p160 = scmp.eq.s32.totalorder %s28, 0
      %p161 = por %p159, %p160
      %p162 = scmp.ne.s32.totalorder %s151, %s154
      %p163 = scmp.eq.s32.totalorder %s33, 3
      %p164 = por %p162, %p163
      %p165 = scmp.ne.s32.totalorder %s154, %s155
      %p166 = scmp.eq.s32.totalorder %s33, 0
      %p167 = por %p165, %p166
      %p168 = scmp.ne.s32.totalorder %s154, %s155
      %p169 = scmp.eq.s32.totalorder %s34, 3
      %p170 = por %p168, %p169
      %p172 = scmp.ne.s32.totalorder %s155, %s171
      %p173 = scmp.eq.s32.totalorder %s34, 0
      %p174 = por %p172, %p173
      %s175 = sadd.s32 %s36, 1
      %s176 = smul.u32 %s175, 8
      %p177 = scmp.lt.s32.totalorder %s176, 15
      %s178 = scalar_select %p177, %s176, 15
      %s179 = sadd.s32 %s43, 1
      %s180 = smul.u32 %s179, 8
      %p181 = scmp.lt.s32.totalorder %s180, 15
      %s182 = scalar_select %p181, %s180, 15
      %s183 = ssub.s32 %s35, %s47
      %s184 = ssub.s32 %s178, %s182
      %s185 = sor.u32 %s183, %s184
      %p186 = scmp.eq.s32.totalorder %s185, 0
      %s188 = sadd.s32 %s187, 1
      %s189 = scalar_select %p186, %s187, %s188
      %p192 = pneg %p186
      %p193 = scmp.eq.s32.totalorder %s28, 3
      %p194 = por %p192, %p193
      %p195 = scmp.ne.s32.totalorder %s187, %s190
      %p196 = scmp.eq.s32.totalorder %s28, 0
      %p197 = por %p195, %p196
      %p198 = scmp.ne.s32.totalorder %s187, %s190
      %p199 = scmp.eq.s32.totalorder %s33, 3
      %p200 = por %p198, %p199
      %p201 = scmp.ne.s32.totalorder %s190, %s191
      %p202 = scmp.eq.s32.totalorder %s33, 0
      %p203 = por %p201, %p202
      %p204 = scmp.ne.s32.totalorder %s190, %s191
      %p205 = scmp.eq.s32.totalorder %s34, 3
      %p206 = por %p204, %p205
      %p208 = scmp.ne.s32.totalorder %s191, %s207
      %p209 = scmp.eq.s32.totalorder %s34, 0
      %p210 = por %p208, %p209
      %s211 = ssub.s32 %s35, %s47
      %s212 = ssub.s32 %s36, %s43
      %s213 = sor.u32 %s211, %s212
      %p214 = scmp.eq.s32.totalorder %s213, 0
      %s216 = sadd.s32 %s215, 1
      %s217 = scalar_select %p214, %s215, %s216
      %p220 = pneg %p214
      %p221 = scmp.eq.s32.totalorder %s28, 3
      %p222 = por %p220, %p221
      %p223 = scmp.ne.s32.totalorder %s215, %s218
      %p224 = scmp.eq.s32.totalorder %s28, 0
      %p225 = por %p223, %p224
      %p226 = scmp.ne.s32.totalorder %s215, %s218
      %p227 = scmp.eq.s32.totalorder %s33, 3
      %p228 = por %p226, %p227
      %p229 = scmp.ne.s32.totalorder %s218, %s219
      %p230 = scmp.eq.s32.totalorder %s33, 0
      %p231 = por %p229, %p230
      %p232 = scmp.ne.s32.totalorder %s218, %s219
      %p233 = scmp.eq.s32.totalorder %s34, 3
      %p234 = por %p232, %p233
      %p236 = scmp.ne.s32.totalorder %s219, %s235
      %p237 = scmp.eq.s32.totalorder %s34, 0
      %p238 = por %p236, %p237
      %s239 = ssub.s32 %s35, %s47
      %s240 = ssub.s32 %s36, %s43
      %s241 = sor.u32 %s239, %s240
      %p242 = scmp.eq.s32.totalorder %s241, 0
      %s244 = sadd.s32 %s243, 1
      %s245 = scalar_select %p242, %s243, %s244
      %p248 = pneg %p242
      %p249 = scmp.eq.s32.totalorder %s28, 3
      %p250 = por %p248, %p249
      %p251 = scmp.ne.s32.totalorder %s243, %s246
      %p252 = scmp.eq.s32.totalorder %s28, 0
      %p253 = por %p251, %p252
      %p254 = scmp.ne.s32.totalorder %s243, %s246
      %p255 = scmp.eq.s32.totalorder %s33, 3
      %p256 = por %p254, %p255
      %p257 = scmp.ne.s32.totalorder %s246, %s247
      %p258 = scmp.eq.s32.totalorder %s33, 0
      %p259 = por %p257, %p258
      %p260 = scmp.ne.s32.totalorder %s246, %s247
      %p261 = scmp.eq.s32.totalorder %s34, 3
      %p262 = por %p260, %p261
      %p264 = scmp.ne.s32.totalorder %s247, %s263
      %p265 = scmp.eq.s32.totalorder %s34, 0
      %p266 = por %p264, %p265
      %p267 = scmp.le.s32.totalorder 1, %s28
      %p268 = scmp.lt.s32.totalorder %s28, 5
      %p269 = pnand %p267, %p268
      %p270 = pneg %p269
      // Predicated region
      $region9: #{_lambda_.4} parent=5 // pred_check
        _
      $region10: #{_lambda_.4} parent=5 // pred_check_branch
        %272 = sbr.rel (%p269) target = $region12
      $region11: #{_lambda_.4} parent=5 // pred_region
        %s273 = ssub.s32 %s28, 1
        // Predicated region
        $region13: #{_lambda_.4} parent=11 // pred_check
          %p274 = pneg %p61
        $region14: #{_lambda_.4} parent=11 // pred_check_branch
          %276 = sbr.rel (%p274) target = $region16
        $region15: #{_lambda_.4} parent=11 // pred_region
          %s278 = ssub.s32 16, 16
          %279 = vsyncadd [#allocation5], %s278
          %s281 = sshll.u32 [#allocation4], 4
          %s282 = int_to_ptr.vmem [resolvable:$true] %s281
          %284 = dma.hbm_to_vmem [thread:$0]  %s0, 16, %s282, [#allocation5]
        $region16: #{_lambda_.4} parent=11 // pred_fallthru
          _
        // Predicated region
        $region17: #{_lambda_.4} parent=11 // pred_check
          %p285 = pneg %p82
        $region18: #{_lambda_.4} parent=11 // pred_check_branch
          %287 = sbr.rel (%p285) target = $region20
        $region19: #{_lambda_.4} parent=11 // pred_region
          %s289 = ssub.s32 16, 16
          %290 = vsyncadd [#allocation8], %s289
          %s292 = sshll.u32 [#allocation7], 4
          %s293 = int_to_ptr.vmem [resolvable:$true] %s292
          %295 = dma.hbm_to_vmem [thread:$0]  %s1, 16, %s293, [#allocation8]
        $region20: #{_lambda_.4} parent=11 // pred_fallthru
          _
        // Predicated region
        $region21: #{_lambda_.4} parent=11 // pred_check
          %p296 = pneg %p103
        $region22: #{_lambda_.4} parent=11 // pred_check_branch
          %298 = sbr.rel (%p296) target = $region24
        $region23: #{_lambda_.4} parent=11 // pred_region
          %s300 = ssub.s32 9216, 9216
          %301 = vsyncadd [#allocation8], %s300
          %s302 = sshll.u32 [#allocation9], 4
          %s303 = int_to_ptr.vmem [resolvable:$true] %s302
          %308 = dma.hbm_to_vmem [thread:$0]  %s2, 9216, %s303, [#allocation8], 64, 64, 4
        $region24: #{_lambda_.4} parent=11 // pred_fallthru
          _
      $region12: #{_lambda_.4} parent=5 // pred_fallthru
        _
      %p309 = scmp.lt.s32.totalorder %s28, 4
      // Predicated region
      $region25: #{_lambda_.4} parent=5 // pred_check
        %p310 = pneg %p309
      $region26: #{_lambda_.4} parent=5 // pred_check_branch
        %312 = sbr.rel (%p310) target = $region28
      $region27: #{_lambda_.4} parent=5 // pred_region
        // Predicated region
        $region29: #{_lambda_.4} parent=27 // pred_check
          %p313 = pneg %p125
        $region30: #{_lambda_.4} parent=27 // pred_check_branch
          %315 = sbr.rel (%p313) target = $region32
        $region31: #{_lambda_.4} parent=27 // pred_region
          %s316 = sand.u32 %s28, 1
          %s317 = scalar_lea.sflag [#allocation11], %s316
          %s318 = sand.u32 %s115, 1
          %s319 = smul.addr %s318, 128
          %s320 = scalar_lea.vmem [#allocation10], %s319
          %s321 = smul.u32 32, %s36
          %s323 = ssub.s32 2048, 2048
          %324 = vsyncadd %s317, %s323
          %s325 = smul.addr %s35, 64
          %s326 = sadd.s32 %s321, %s325
          %s327 = smul.addr %s326, 64
          %s328 = scalar_lea.hbm %s3, %s327
          %s329 = sshll.u32 %s320, 4
          %s330 = int_to_ptr.vmem [resolvable:$true] %s329
          %335 = dma.hbm_to_vmem [thread:$0]  %s328, 2048, %s330, %s317, 64, 64, 4
        $region32: #{_lambda_.4} parent=27 // pred_fallthru
          _
        // Predicated region
        $region33: #{_lambda_.4} parent=27 // pred_check
          %p336 = pneg %p161
        $region34: #{_lambda_.4} parent=27 // pred_check_branch
          %338 = sbr.rel (%p336) target = $region36
        $region35: #{_lambda_.4} parent=27 // pred_region
          %s339 = sand.u32 %s28, 1
          %s340 = scalar_lea.sflag [#allocation11], %s339
          %s341 = sand.u32 %s151, 1
          %s342 = smul.addr %s341, 16
          %s343 = scalar_lea.vmem [#allocation12], %s342
          %s344 = smul.u32 %s36, 8
          %s345 = ssub.s32 %s344, 1
          %p346 = scmp.gt.s32.totalorder %s345, 0
          %s347 = scalar_select %p346, %s345, 0
          %s348 = smul.u32 4, %s347
          %s350 = ssub.s32 256, 256
          %351 = vsyncadd %s340, %s350
          %s352 = smul.addr %s35, 64
          %s353 = sadd.s32 %s348, %s352
          %s354 = smul.addr %s353, 64
          %s355 = scalar_lea.hbm %s4, %s354
          %s356 = sshll.u32 %s343, 4
          %s357 = int_to_ptr.vmem [resolvable:$true] %s356
          %362 = dma.hbm_to_vmem [thread:$0]  %s355, 256, %s357, %s340, 64, 64, 4
        $region36: #{_lambda_.4} parent=27 // pred_fallthru
          _
        // Predicated region
        $region37: #{_lambda_.4} parent=27 // pred_check
          %p363 = pneg %p197
        $region38: #{_lambda_.4} parent=27 // pred_check_branch
          %365 = sbr.rel (%p363) target = $region40
        $region39: #{_lambda_.4} parent=27 // pred_region
          %s366 = sand.u32 %s187, 1
          %s367 = scalar_lea.sflag [#allocation14], %s366
          %s368 = sand.u32 %s187, 1
          %s369 = smul.addr %s368, 16
          %s370 = scalar_lea.vmem [#allocation13], %s369
          %s371 = sadd.s32 %s36, 1
          %s372 = smul.u32 %s371, 8
          %p373 = scmp.lt.s32.totalorder %s372, 15
          %s374 = scalar_select %p373, %s372, 15
          %s375 = smul.u32 4, %s374
          %s377 = ssub.s32 256, 256
          %378 = vsyncadd %s367, %s377
          %s379 = smul.addr %s35, 64
          %s380 = sadd.s32 %s375, %s379
          %s381 = smul.addr %s380, 64
          %s382 = scalar_lea.hbm %s5, %s381
          %s383 = sshll.u32 %s370, 4
          %s384 = int_to_ptr.vmem [resolvable:$true] %s383
          %389 = dma.hbm_to_vmem [thread:$0]  %s382, 256, %s384, %s367, 64, 64, 4
        $region40: #{_lambda_.4} parent=27 // pred_fallthru
          _
      $region28: #{_lambda_.4} parent=5 // pred_fallthru
        _
      %p390 = scmp.le.s32.totalorder 1, %s28
      %p391 = scmp.lt.s32.totalorder %s28, 5
      %p392 = pnand %p390, %p391
      %p393 = pneg %p392
      // Predicated region
      $region41: #{_lambda_.4} parent=5 // pred_check
        _
      $region42: #{_lambda_.4} parent=5 // pred_check_branch
        %395 = sbr.rel (%p392) target = $region44
      $region43: #{_lambda_.4} parent=5 // pred_region
        %s396 = ssub.s32 %s28, 1
        // Predicated region
        $region45: #{_lambda_.4} parent=43 // pred_check
          %p397 = pneg %p61
        $region46: #{_lambda_.4} parent=43 // pred_check_branch
          %399 = sbr.rel (%p397) target = $region48
        $region47: #{_lambda_.4} parent=43 // pred_region
          %400 = dma.done [#allocation5], 16
        $region48: #{_lambda_.4} parent=43 // pred_fallthru
          _
        // Predicated region
        $region49: #{_lambda_.4} parent=43 // pred_check
          %p401 = pneg %p82
        $region50: #{_lambda_.4} parent=43 // pred_check_branch
          %403 = sbr.rel (%p401) target = $region52
        $region51: #{_lambda_.4} parent=43 // pred_region
          %404 = dma.done [#allocation8], 16
        $region52: #{_lambda_.4} parent=43 // pred_fallthru
          _
        // Predicated region
        $region53: #{_lambda_.4} parent=43 // pred_check
          %p405 = pneg %p103
        $region54: #{_lambda_.4} parent=43 // pred_check_branch
          %407 = sbr.rel (%p405) target = $region56
        $region55: #{_lambda_.4} parent=43 // pred_region
          %408 = dma.done [#allocation8], 9216
        $region56: #{_lambda_.4} parent=43 // pred_fallthru
          _
        %s409 = sand.u32 %s33, 1
        %s410 = scalar_lea.sflag [#allocation11], %s409
        %s411 = sand.u32 %s118, 1
        %s412 = smul.addr %s411, 128
        %s413 = scalar_lea.vmem [#allocation10], %s412
        // Predicated region
        $region57: #{_lambda_.4} parent=43 // pred_check
          %p414 = pneg %p131
        $region58: #{_lambda_.4} parent=43 // pred_check_branch
          %416 = sbr.rel (%p414) target = $region60
        $region59: #{_lambda_.4} parent=43 // pred_region
          %417 = dma.done %s410, 2048
        $region60: #{_lambda_.4} parent=43 // pred_fallthru
          _
        %s418 = sand.u32 %s33, 1
        %s419 = scalar_lea.sflag [#allocation11], %s418
        %s420 = sand.u32 %s154, 1
        %s421 = smul.addr %s420, 16
        %s422 = scalar_lea.vmem [#allocation12], %s421
        // Predicated region
        $region61: #{_lambda_.4} parent=43 // pred_check
          %p423 = pneg %p167
        $region62: #{_lambda_.4} parent=43 // pred_check_branch
          %425 = sbr.rel (%p423) target = $region64
        $region63: #{_lambda_.4} parent=43 // pred_region
          %426 = dma.done %s419, 256
        $region64: #{_lambda_.4} parent=43 // pred_fallthru
          _
        %s427 = sand.u32 %s190, 1
        %s428 = scalar_lea.sflag [#allocation14], %s427
        %s429 = sand.u32 %s190, 1
        %s430 = smul.addr %s429, 16
        %s431 = scalar_lea.vmem [#allocation13], %s430
        // Predicated region
        $region65: #{_lambda_.4} parent=43 // pred_check
          %p432 = pneg %p203
        $region66: #{_lambda_.4} parent=43 // pred_check_branch
          %434 = sbr.rel (%p432) target = $region68
        $region67: #{_lambda_.4} parent=43 // pred_region
          %435 = dma.done %s428, 256
        $region68: #{_lambda_.4} parent=43 // pred_fallthru
          _
        %p436 = pneg %p61
        %p437 = pneg %p58
        %p438 = pneg %p82
        %p439 = pneg %p79
        %p440 = pneg %p103
        %p441 = pneg %p100
        %s442 = sand.u32 %s33, 1
        %s443 = scalar_lea.sflag [#allocation11], %s442
        %s444 = sand.u32 %s118, 1
        %s445 = smul.addr %s444, 128
        %s446 = scalar_lea.vmem [#allocation10], %s445
        %p447 = pneg %p131
        %p448 = pneg %p128
        %s449 = sand.u32 %s33, 1
        %s450 = scalar_lea.sflag [#allocation11], %s449
        %s451 = sand.u32 %s154, 1
        %s452 = smul.addr %s451, 16
        %s453 = scalar_lea.vmem [#allocation12], %s452
        %p454 = pneg %p167
        %p455 = pneg %p164
        %s456 = sand.u32 %s190, 1
        %s457 = scalar_lea.sflag [#allocation14], %s456
        %s458 = sand.u32 %s190, 1
        %s459 = smul.addr %s458, 16
        %s460 = scalar_lea.vmem [#allocation13], %s459
        %p461 = pneg %p203
        %p462 = pneg %p200
        %p463 = pneg %p231
        %p464 = pneg %p228
        %s465 = sand.u32 %s218, 1
        %s466 = scalar_lea.sflag [#allocation6], %s465
        %s467 = sand.u32 %s218, 1
        %s468 = smul.addr %s467, 128
        %s469 = scalar_lea.vmem [#allocation15], %s468
        %p470 = pneg %p259
        %p471 = pneg %p256
        %s472 = sand.u32 %s246, 1
        %s473 = scalar_lea.sflag [#allocation17], %s472
        %s474 = sand.u32 %s246, 1
        %s475 = smul.addr %s474, 2
        %s476 = scalar_lea.vmem [#allocation16], %s475
        %s477 = smul.u32 32, %s38
        %s478 = smul.u32 %s38, 8
        %s479 = ssub.s32 %s478, 1
        %p480 = scmp.gt.s32.totalorder %s479, 0
        %s481 = scalar_select %p480, %s479, 0
        %s482 = smul.u32 4, %s481
        %s483 = sadd.s32 %s38, 1
        %s484 = smul.u32 %s483, 8
        %p485 = scmp.lt.s32.totalorder %s484, 15
        %s486 = scalar_select %p485, %s484, 15
        %s487 = smul.u32 4, %s486
        %s488 = smul.u32 32, %s38
        %v490 = vlaneseq
        %v491 = vshrl.u32 %v490, 7
        %v492 = vadd.s32 %v491, 8
        %v493 = vadd.s32 %v491, 16
        %v494 = vadd.s32 %v491, 24
        %v495 = vadd.s32 %v491, 32
        %v496 = vadd.s32 %v491, 40
        %v497 = vadd.s32 %v491, 48
        %v498 = vadd.s32 %v491, 56
        %v499 = vadd.s32 %v491, 64
        %v500 = vadd.s32 %v491, 72
        %v501 = vadd.s32 %v491, 80
        %v502 = vadd.s32 %v491, 88
        %v503 = vadd.s32 %v491, 96
        %v504 = vadd.s32 %v491, 104
        %v505 = vadd.s32 %v491, 112
        %v506 = vadd.s32 %v491, 120
        %v507 = vadd.s32 %v491, 128
        %v508 = vadd.s32 %v491, 136
        %v509 = vadd.s32 %v491, 144
        %v510 = vadd.s32 %v491, 152
        %v511 = vadd.s32 %v491, 160
        %v512 = vadd.s32 %v491, 168
        %v513 = vadd.s32 %v491, 176
        %v514 = vadd.s32 %v491, 184
        %v515 = vadd.s32 %v491, 192
        %v516 = vadd.s32 %v491, 200
        %v517 = vadd.s32 %v491, 208
        %v518 = vadd.s32 %v491, 216
        %v519 = vadd.s32 %v491, 224
        %v520 = vadd.s32 %v491, 232
        %v521 = vadd.s32 %v491, 240
        %v522 = vadd.s32 %v491, 248
        %vm523 = vcmp.lt.s32.totalorder %v491, 0
        %v524 = vsub.s32 0, %v491
        %v525 = vsel %vm523, %v524, %v491
        %v526 = vshrl.u32 %v525, 5
        %v527 = vand.u32 %v525, 31
        %v528 = vsub.s32 0, %v527
        %v529 = vsel %vm523, %v528, %v527
        %vm530 = vcmp.lt.s32.totalorder %v492, 0
        %v531 = vsub.s32 0, %v492
        %v532 = vsel %vm530, %v531, %v492
        %v533 = vshrl.u32 %v532, 5
        %v534 = vand.u32 %v532, 31
        %v535 = vsub.s32 0, %v534
        %v536 = vsel %vm530, %v535, %v534
        %vm537 = vcmp.lt.s32.totalorder %v493, 0
        %v538 = vsub.s32 0, %v493
        %v539 = vsel %vm537, %v538, %v493
        %v540 = vshrl.u32 %v539, 5
        %v541 = vand.u32 %v539, 31
        %v542 = vsub.s32 0, %v541
        %v543 = vsel %vm537, %v542, %v541
        %vm544 = vcmp.lt.s32.totalorder %v494, 0
        %v545 = vsub.s32 0, %v494
        %v546 = vsel %vm544, %v545, %v494
        %v547 = vshrl.u32 %v546, 5
        %v548 = vand.u32 %v546, 31
        %v549 = vsub.s32 0, %v548
        %v550 = vsel %vm544, %v549, %v548
        %vm551 = vcmp.lt.s32.totalorder %v495, 0
        %v552 = vsub.s32 0, %v495
        %v553 = vsel %vm551, %v552, %v495
        %v554 = vshrl.u32 %v553, 5
        %v555 = vand.u32 %v553, 31
        %v556 = vsub.s32 0, %v555
        %v557 = vsel %vm551, %v556, %v555
        %vm558 = vcmp.lt.s32.totalorder %v496, 0
        %v559 = vsub.s32 0, %v496
        %v560 = vsel %vm558, %v559, %v496
        %v561 = vshrl.u32 %v560, 5
        %v562 = vand.u32 %v560, 31
        %v563 = vsub.s32 0, %v562
        %v564 = vsel %vm558, %v563, %v562
        %vm565 = vcmp.lt.s32.totalorder %v497, 0
        %v566 = vsub.s32 0, %v497
        %v567 = vsel %vm565, %v566, %v497
        %v568 = vshrl.u32 %v567, 5
        %v569 = vand.u32 %v567, 31
        %v570 = vsub.s32 0, %v569
        %v571 = vsel %vm565, %v570, %v569
        %vm572 = vcmp.lt.s32.totalorder %v498, 0
        %v573 = vsub.s32 0, %v498
        %v574 = vsel %vm572, %v573, %v498
        %v575 = vshrl.u32 %v574, 5
        %v576 = vand.u32 %v574, 31
        %v577 = vsub.s32 0, %v576
        %v578 = vsel %vm572, %v577, %v576
        %vm579 = vcmp.lt.s32.totalorder %v499, 0
        %v580 = vsub.s32 0, %v499
        %v581 = vsel %vm579, %v580, %v499
        %v582 = vshrl.u32 %v581, 5
        %v583 = vand.u32 %v581, 31
        %v584 = vsub.s32 0, %v583
        %v585 = vsel %vm579, %v584, %v583
        %vm586 = vcmp.lt.s32.totalorder %v500, 0
        %v587 = vsub.s32 0, %v500
        %v588 = vsel %vm586, %v587, %v500
        %v589 = vshrl.u32 %v588, 5
        %v590 = vand.u32 %v588, 31
        %v591 = vsub.s32 0, %v590
        %v592 = vsel %vm586, %v591, %v590
        %vm593 = vcmp.lt.s32.totalorder %v501, 0
        %v594 = vsub.s32 0, %v501
        %v595 = vsel %vm593, %v594, %v501
        %v596 = vshrl.u32 %v595, 5
        %v597 = vand.u32 %v595, 31
        %v598 = vsub.s32 0, %v597
        %v599 = vsel %vm593, %v598, %v597
        %vm600 = vcmp.lt.s32.totalorder %v502, 0
        %v601 = vsub.s32 0, %v502
        %v602 = vsel %vm600, %v601, %v502
        %v603 = vshrl.u32 %v602, 5
        %v604 = vand.u32 %v602, 31
        %v605 = vsub.s32 0, %v604
        %v606 = vsel %vm600, %v605, %v604
        %vm607 = vcmp.lt.s32.totalorder %v503, 0
        %v608 = vsub.s32 0, %v503
        %v609 = vsel %vm607, %v608, %v503
        %v610 = vshrl.u32 %v609, 5
        %v611 = vand.u32 %v609, 31
        %v612 = vsub.s32 0, %v611
        %v613 = vsel %vm607, %v612, %v611
        %vm614 = vcmp.lt.s32.totalorder %v504, 0
        %v615 = vsub.s32 0, %v504
        %v616 = vsel %vm614, %v615, %v504
        %v617 = vshrl.u32 %v616, 5
        %v618 = vand.u32 %v616, 31
        %v619 = vsub.s32 0, %v618
        %v620 = vsel %vm614, %v619, %v618
        %vm621 = vcmp.lt.s32.totalorder %v505, 0
        %v622 = vsub.s32 0, %v505
        %v623 = vsel %vm621, %v622, %v505
        %v624 = vshrl.u32 %v623, 5
        %v625 = vand.u32 %v623, 31
        %v626 = vsub.s32 0, %v625
        %v627 = vsel %vm621, %v626, %v625
        %vm628 = vcmp.lt.s32.totalorder %v506, 0
        %v629 = vsub.s32 0, %v506
        %v630 = vsel %vm628, %v629, %v506
        %v631 = vshrl.u32 %v630, 5
        %v632 = vand.u32 %v630, 31
        %v633 = vsub.s32 0, %v632
        %v634 = vsel %vm628, %v633, %v632
        %vm635 = vcmp.lt.s32.totalorder %v507, 0
        %v636 = vsub.s32 0, %v507
        %v637 = vsel %vm635, %v636, %v507
        %v638 = vshrl.u32 %v637, 5
        %v639 = vand.u32 %v637, 31
        %v640 = vsub.s32 0, %v639
        %v641 = vsel %vm635, %v640, %v639
        %vm642 = vcmp.lt.s32.totalorder %v508, 0
        %v643 = vsub.s32 0, %v508
        %v644 = vsel %vm642, %v643, %v508
        %v645 = vshrl.u32 %v644, 5
        %v646 = vand.u32 %v644, 31
        %v647 = vsub.s32 0, %v646
        %v648 = vsel %vm642, %v647, %v646
        %vm649 = vcmp.lt.s32.totalorder %v509, 0
        %v650 = vsub.s32 0, %v509
        %v651 = vsel %vm649, %v650, %v509
        %v652 = vshrl.u32 %v651, 5
        %v653 = vand.u32 %v651, 31
        %v654 = vsub.s32 0, %v653
        %v655 = vsel %vm649, %v654, %v653
        %vm656 = vcmp.lt.s32.totalorder %v510, 0
        %v657 = vsub.s32 0, %v510
        %v658 = vsel %vm656, %v657, %v510
        %v659 = vshrl.u32 %v658, 5
        %v660 = vand.u32 %v658, 31
        %v661 = vsub.s32 0, %v660
        %v662 = vsel %vm656, %v661, %v660
        %vm663 = vcmp.lt.s32.totalorder %v511, 0
        %v664 = vsub.s32 0, %v511
        %v665 = vsel %vm663, %v664, %v511
        %v666 = vshrl.u32 %v665, 5
        %v667 = vand.u32 %v665, 31
        %v668 = vsub.s32 0, %v667
        %v669 = vsel %vm663, %v668, %v667
        %vm670 = vcmp.lt.s32.totalorder %v512, 0
        %v671 = vsub.s32 0, %v512
        %v672 = vsel %vm670, %v671, %v512
        %v673 = vshrl.u32 %v672, 5
        %v674 = vand.u32 %v672, 31
        %v675 = vsub.s32 0, %v674
        %v676 = vsel %vm670, %v675, %v674
        %vm677 = vcmp.lt.s32.totalorder %v513, 0
        %v678 = vsub.s32 0, %v513
        %v679 = vsel %vm677, %v678, %v513
        %v680 = vshrl.u32 %v679, 5
        %v681 = vand.u32 %v679, 31
        %v682 = vsub.s32 0, %v681
        %v683 = vsel %vm677, %v682, %v681
        %vm684 = vcmp.lt.s32.totalorder %v514, 0
        %v685 = vsub.s32 0, %v514
        %v686 = vsel %vm684, %v685, %v514
        %v687 = vshrl.u32 %v686, 5
        %v688 = vand.u32 %v686, 31
        %v689 = vsub.s32 0, %v688
        %v690 = vsel %vm684, %v689, %v688
        %vm691 = vcmp.lt.s32.totalorder %v515, 0
        %v692 = vsub.s32 0, %v515
        %v693 = vsel %vm691, %v692, %v515
        %v694 = vshrl.u32 %v693, 5
        %v695 = vand.u32 %v693, 31
        %v696 = vsub.s32 0, %v695
        %v697 = vsel %vm691, %v696, %v695
        %vm698 = vcmp.lt.s32.totalorder %v516, 0
        %v699 = vsub.s32 0, %v516
        %v700 = vsel %vm698, %v699, %v516
        %v701 = vshrl.u32 %v700, 5
        %v702 = vand.u32 %v700, 31
        %v703 = vsub.s32 0, %v702
        %v704 = vsel %vm698, %v703, %v702
        %vm705 = vcmp.lt.s32.totalorder %v517, 0
        %v706 = vsub.s32 0, %v517
        %v707 = vsel %vm705, %v706, %v517
        %v708 = vshrl.u32 %v707, 5
        %v709 = vand.u32 %v707, 31
        %v710 = vsub.s32 0, %v709
        %v711 = vsel %vm705, %v710, %v709
        %vm712 = vcmp.lt.s32.totalorder %v518, 0
        %v713 = vsub.s32 0, %v518
        %v714 = vsel %vm712, %v713, %v518
        %v715 = vshrl.u32 %v714, 5
        %v716 = vand.u32 %v714, 31
        %v717 = vsub.s32 0, %v716
        %v718 = vsel %vm712, %v717, %v716
        %vm719 = vcmp.lt.s32.totalorder %v519, 0
        %v720 = vsub.s32 0, %v519
        %v721 = vsel %vm719, %v720, %v519
        %v722 = vshrl.u32 %v721, 5
        %v723 = vand.u32 %v721, 31
        %v724 = vsub.s32 0, %v723
        %v725 = vsel %vm719, %v724, %v723
        %vm726 = vcmp.lt.s32.totalorder %v520, 0
        %v727 = vsub.s32 0, %v520
        %v728 = vsel %vm726, %v727, %v520
        %v729 = vshrl.u32 %v728, 5
        %v730 = vand.u32 %v728, 31
        %v731 = vsub.s32 0, %v730
        %v732 = vsel %vm726, %v731, %v730
        %vm733 = vcmp.lt.s32.totalorder %v521, 0
        %v734 = vsub.s32 0, %v521
        %v735 = vsel %vm733, %v734, %v521
        %v736 = vshrl.u32 %v735, 5
        %v737 = vand.u32 %v735, 31
        %v738 = vsub.s32 0, %v737
        %v739 = vsel %vm733, %v738, %v737
        %vm740 = vcmp.lt.s32.totalorder %v522, 0
        %v741 = vsub.s32 0, %v522
        %v742 = vsel %vm740, %v741, %v522
        %v743 = vshrl.u32 %v742, 5
        %v744 = vand.u32 %v742, 31
        %v745 = vsub.s32 0, %v744
        %v746 = vsel %vm740, %v745, %v744
        %vm747 = vcmp.ne.s32.totalorder %v529, 0
        %vm748 = vcmp.ne.s32.totalorder %v536, 0
        %vm749 = vcmp.ne.s32.totalorder %v543, 0
        %vm750 = vcmp.ne.s32.totalorder %v550, 0
        %vm751 = vcmp.ne.s32.totalorder %v557, 0
        %vm752 = vcmp.ne.s32.totalorder %v564, 0
        %vm753 = vcmp.ne.s32.totalorder %v571, 0
        %vm754 = vcmp.ne.s32.totalorder %v578, 0
        %vm755 = vcmp.ne.s32.totalorder %v585, 0
        %vm756 = vcmp.ne.s32.totalorder %v592, 0
        %vm757 = vcmp.ne.s32.totalorder %v599, 0
        %vm758 = vcmp.ne.s32.totalorder %v606, 0
        %vm759 = vcmp.ne.s32.totalorder %v613, 0
        %vm760 = vcmp.ne.s32.totalorder %v620, 0
        %vm761 = vcmp.ne.s32.totalorder %v627, 0
        %vm762 = vcmp.ne.s32.totalorder %v634, 0
        %vm763 = vcmp.ne.s32.totalorder %v641, 0
        %vm764 = vcmp.ne.s32.totalorder %v648, 0
        %vm765 = vcmp.ne.s32.totalorder %v655, 0
        %vm766 = vcmp.ne.s32.totalorder %v662, 0
        %vm767 = vcmp.ne.s32.totalorder %v669, 0
        %vm768 = vcmp.ne.s32.totalorder %v676, 0
        %vm769 = vcmp.ne.s32.totalorder %v683, 0
        %vm770 = vcmp.ne.s32.totalorder %v690, 0
        %vm771 = vcmp.ne.s32.totalorder %v697, 0
        %vm772 = vcmp.ne.s32.totalorder %v704, 0
        %vm773 = vcmp.ne.s32.totalorder %v711, 0
        %vm774 = vcmp.ne.s32.totalorder %v718, 0
        %vm775 = vcmp.ne.s32.totalorder %v725, 0
        %vm776 = vcmp.ne.s32.totalorder %v732, 0
        %vm777 = vcmp.ne.s32.totalorder %v739, 0
        %vm778 = vcmp.ne.s32.totalorder %v746, 0
        %vm779 = vcmp.lt.s32.totalorder %v529, 0
        %vm780 = vcmp.lt.s32.totalorder %v536, 0
        %vm781 = vcmp.lt.s32.totalorder %v543, 0
        %vm782 = vcmp.lt.s32.totalorder %v550, 0
        %vm783 = vcmp.lt.s32.totalorder %v557, 0
        %vm784 = vcmp.lt.s32.totalorder %v564, 0
        %vm785 = vcmp.lt.s32.totalorder %v571, 0
        %vm786 = vcmp.lt.s32.totalorder %v578, 0
        %vm787 = vcmp.lt.s32.totalorder %v585, 0
        %vm788 = vcmp.lt.s32.totalorder %v592, 0
        %vm789 = vcmp.lt.s32.totalorder %v599, 0
        %vm790 = vcmp.lt.s32.totalorder %v606, 0
        %vm791 = vcmp.lt.s32.totalorder %v613, 0
        %vm792 = vcmp.lt.s32.totalorder %v620, 0
        %vm793 = vcmp.lt.s32.totalorder %v627, 0
        %vm794 = vcmp.lt.s32.totalorder %v634, 0
        %vm795 = vcmp.lt.s32.totalorder %v641, 0
        %vm796 = vcmp.lt.s32.totalorder %v648, 0
        %vm797 = vcmp.lt.s32.totalorder %v655, 0
        %vm798 = vcmp.lt.s32.totalorder %v662, 0
        %vm799 = vcmp.lt.s32.totalorder %v669, 0
        %vm800 = vcmp.lt.s32.totalorder %v676, 0
        %vm801 = vcmp.lt.s32.totalorder %v683, 0
        %vm802 = vcmp.lt.s32.totalorder %v690, 0
        %vm803 = vcmp.lt.s32.totalorder %v697, 0
        %vm804 = vcmp.lt.s32.totalorder %v704, 0
        %vm805 = vcmp.lt.s32.totalorder %v711, 0
        %vm806 = vcmp.lt.s32.totalorder %v718, 0
        %vm807 = vcmp.lt.s32.totalorder %v725, 0
        %vm808 = vcmp.lt.s32.totalorder %v732, 0
        %vm809 = vcmp.lt.s32.totalorder %v739, 0
        %vm810 = vcmp.lt.s32.totalorder %v746, 0
        %vm811 = vmand %vm779, %vm747
        %vm812 = vmand %vm780, %vm748
        %vm813 = vmand %vm781, %vm749
        %vm814 = vmand %vm782, %vm750
        %vm815 = vmand %vm783, %vm751
        %vm816 = vmand %vm784, %vm752
        %vm817 = vmand %vm785, %vm753
        %vm818 = vmand %vm786, %vm754
        %vm819 = vmand %vm787, %vm755
        %vm820 = vmand %vm788, %vm756
        %vm821 = vmand %vm789, %vm757
        %vm822 = vmand %vm790, %vm758
        %vm823 = vmand %vm791, %vm759
        %vm824 = vmand %vm792, %vm760
        %vm825 = vmand %vm793, %vm761
        %vm826 = vmand %vm794, %vm762
        %vm827 = vmand %vm795, %vm763
        %vm828 = vmand %vm796, %vm764
        %vm829 = vmand %vm797, %vm765
        %vm830 = vmand %vm798, %vm766
        %vm831 = vmand %vm799, %vm767
        %vm832 = vmand %vm800, %vm768
        %vm833 = vmand %vm801, %vm769
        %vm834 = vmand %vm802, %vm770
        %vm835 = vmand %vm803, %vm771
        %vm836 = vmand %vm804, %vm772
        %vm837 = vmand %vm805, %vm773
        %vm838 = vmand %vm806, %vm774
        %vm839 = vmand %vm807, %vm775
        %vm840 = vmand %vm808, %vm776
        %vm841 = vmand %vm809, %vm777
        %vm842 = vmand %vm810, %vm778
        %v843 = vadd.s32 %v529, 32
        %v844 = vadd.s32 %v536, 32
        %v845 = vadd.s32 %v543, 32
        %v846 = vadd.s32 %v550, 32
        %v847 = vadd.s32 %v557, 32
        %v848 = vadd.s32 %v564, 32
        %v849 = vadd.s32 %v571, 32
        %v850 = vadd.s32 %v578, 32
        %v851 = vadd.s32 %v585, 32
        %v852 = vadd.s32 %v592, 32
        %v853 = vadd.s32 %v599, 32
        %v854 = vadd.s32 %v606, 32
        %v855 = vadd.s32 %v613, 32
        %v856 = vadd.s32 %v620, 32
        %v857 = vadd.s32 %v627, 32
        %v858 = vadd.s32 %v634, 32
        %v859 = vadd.s32 %v641, 32
        %v860 = vadd.s32 %v648, 32
        %v861 = vadd.s32 %v655, 32
        %v862 = vadd.s32 %v662, 32
        %v863 = vadd.s32 %v669, 32
        %v864 = vadd.s32 %v676, 32
        %v865 = vadd.s32 %v683, 32
        %v866 = vadd.s32 %v690, 32
        %v867 = vadd.s32 %v697, 32
        %v868 = vadd.s32 %v704, 32
        %v869 = vadd.s32 %v711, 32
        %v870 = vadd.s32 %v718, 32
        %v871 = vadd.s32 %v725, 32
        %v872 = vadd.s32 %v732, 32
        %v873 = vadd.s32 %v739, 32
        %v874 = vadd.s32 %v746, 32
        %v875 = vsel %vm811, %v843, %v529
        %v876 = vsel %vm812, %v844, %v536
        %v877 = vsel %vm813, %v845, %v543
        %v878 = vsel %vm814, %v846, %v550
        %v879 = vsel %vm815, %v847, %v557
        %v880 = vsel %vm816, %v848, %v564
        %v881 = vsel %vm817, %v849, %v571
        %v882 = vsel %vm818, %v850, %v578
        %v883 = vsel %vm819, %v851, %v585
        %v884 = vsel %vm820, %v852, %v592
        %v885 = vsel %vm821, %v853, %v599
        %v886 = vsel %vm822, %v854, %v606
        %v887 = vsel %vm823, %v855, %v613
        %v888 = vsel %vm824, %v856, %v620
        %v889 = vsel %vm825, %v857, %v627
        %v890 = vsel %vm826, %v858, %v634
        %v891 = vsel %vm827, %v859, %v641
        %v892 = vsel %vm828, %v860, %v648
        %v893 = vsel %vm829, %v861, %v655
        %v894 = vsel %vm830, %v862, %v662
        %v895 = vsel %vm831, %v863, %v669
        %v896 = vsel %vm832, %v864, %v676
        %v897 = vsel %vm833, %v865, %v683
        %v898 = vsel %vm834, %v866, %v690
        %v899 = vsel %vm835, %v867, %v697
        %v900 = vsel %vm836, %v868, %v704
        %v901 = vsel %vm837, %v869, %v711
        %v902 = vsel %vm838, %v870, %v718
        %v903 = vsel %vm839, %v871, %v725
        %v904 = vsel %vm840, %v872, %v732
        %v905 = vsel %vm841, %v873, %v739
        %v906 = vsel %vm842, %v874, %v746
        %vm907 = vcmp.ge.s32.totalorder %v875, 1
        %vm908 = vcmp.ge.s32.totalorder %v876, 1
        %vm909 = vcmp.ge.s32.totalorder %v877, 1
        %vm910 = vcmp.ge.s32.totalorder %v878, 1
        %vm911 = vcmp.ge.s32.totalorder %v879, 1
        %vm912 = vcmp.ge.s32.totalorder %v880, 1
        %vm913 = vcmp.ge.s32.totalorder %v881, 1
        %vm914 = vcmp.ge.s32.totalorder %v882, 1
        %vm915 = vcmp.ge.s32.totalorder %v883, 1
        %vm916 = vcmp.ge.s32.totalorder %v884, 1
        %vm917 = vcmp.ge.s32.totalorder %v885, 1
        %vm918 = vcmp.ge.s32.totalorder %v886, 1
        %vm919 = vcmp.ge.s32.totalorder %v887, 1
        %vm920 = vcmp.ge.s32.totalorder %v888, 1
        %vm921 = vcmp.ge.s32.totalorder %v889, 1
        %vm922 = vcmp.ge.s32.totalorder %v890, 1
        %vm923 = vcmp.ge.s32.totalorder %v891, 1
        %vm924 = vcmp.ge.s32.totalorder %v892, 1
        %vm925 = vcmp.ge.s32.totalorder %v893, 1
        %vm926 = vcmp.ge.s32.totalorder %v894, 1
        %vm927 = vcmp.ge.s32.totalorder %v895, 1
        %vm928 = vcmp.ge.s32.totalorder %v896, 1
        %vm929 = vcmp.ge.s32.totalorder %v897, 1
        %vm930 = vcmp.ge.s32.totalorder %v898, 1
        %vm931 = vcmp.ge.s32.totalorder %v899, 1
        %vm932 = vcmp.ge.s32.totalorder %v900, 1
        %vm933 = vcmp.ge.s32.totalorder %v901, 1
        %vm934 = vcmp.ge.s32.totalorder %v902, 1
        %vm935 = vcmp.ge.s32.totalorder %v903, 1
        %vm936 = vcmp.ge.s32.totalorder %v904, 1
        %vm937 = vcmp.ge.s32.totalorder %v905, 1
        %vm938 = vcmp.ge.s32.totalorder %v906, 1
        %vm939 = vcmp.le.s32.totalorder %v875, 16
        %vm940 = vcmp.le.s32.totalorder %v876, 16
        %vm941 = vcmp.le.s32.totalorder %v877, 16
        %vm942 = vcmp.le.s32.totalorder %v878, 16
        %vm943 = vcmp.le.s32.totalorder %v879, 16
        %vm944 = vcmp.le.s32.totalorder %v880, 16
        %vm945 = vcmp.le.s32.totalorder %v881, 16
        %vm946 = vcmp.le.s32.totalorder %v882, 16
        %vm947 = vcmp.le.s32.totalorder %v883, 16
        %vm948 = vcmp.le.s32.totalorder %v884, 16
        %vm949 = vcmp.le.s32.totalorder %v885, 16
        %vm950 = vcmp.le.s32.totalorder %v886, 16
        %vm951 = vcmp.le.s32.totalorder %v887, 16
        %vm952 = vcmp.le.s32.totalorder %v888, 16
        %vm953 = vcmp.le.s32.totalorder %v889, 16
        %vm954 = vcmp.le.s32.totalorder %v890, 16
        %vm955 = vcmp.le.s32.totalorder %v891, 16
        %vm956 = vcmp.le.s32.totalorder %v892, 16
        %vm957 = vcmp.le.s32.totalorder %v893, 16
        %vm958 = vcmp.le.s32.totalorder %v894, 16
        %vm959 = vcmp.le.s32.totalorder %v895, 16
        %vm960 = vcmp.le.s32.totalorder %v896, 16
        %vm961 = vcmp.le.s32.totalorder %v897, 16
        %vm962 = vcmp.le.s32.totalorder %v898, 16
        %vm963 = vcmp.le.s32.totalorder %v899, 16
        %vm964 = vcmp.le.s32.totalorder %v900, 16
        %vm965 = vcmp.le.s32.totalorder %v901, 16
        %vm966 = vcmp.le.s32.totalorder %v902, 16
        %vm967 = vcmp.le.s32.totalorder %v903, 16
        %vm968 = vcmp.le.s32.totalorder %v904, 16
        %vm969 = vcmp.le.s32.totalorder %v905, 16
        %vm970 = vcmp.le.s32.totalorder %v906, 16
        %vm971 = vmand %vm907, %vm939
        %vm972 = vmand %vm908, %vm940
        %vm973 = vmand %vm909, %vm941
        %vm974 = vmand %vm910, %vm942
        %vm975 = vmand %vm911, %vm943
        %vm976 = vmand %vm912, %vm944
        %vm977 = vmand %vm913, %vm945
        %vm978 = vmand %vm914, %vm946
        %vm979 = vmand %vm915, %vm947
        %vm980 = vmand %vm916, %vm948
        %vm981 = vmand %vm917, %vm949
        %vm982 = vmand %vm918, %vm950
        %vm983 = vmand %vm919, %vm951
        %vm984 = vmand %vm920, %vm952
        %vm985 = vmand %vm921, %vm953
        %vm986 = vmand %vm922, %vm954
        %vm987 = vmand %vm923, %vm955
        %vm988 = vmand %vm924, %vm956
        %vm989 = vmand %vm925, %vm957
        %vm990 = vmand %vm926, %vm958
        %vm991 = vmand %vm927, %vm959
        %vm992 = vmand %vm928, %vm960
        %vm993 = vmand %vm929, %vm961
        %vm994 = vmand %vm930, %vm962
        %vm995 = vmand %vm931, %vm963
        %vm996 = vmand %vm932, %vm964
        %vm997 = vmand %vm933, %vm965
        %vm998 = vmand %vm934, %vm966
        %vm999 = vmand %vm935, %vm967
        %vm1000 = vmand %vm936, %vm968
        %vm1001 = vmand %vm937, %vm969
        %vm1002 = vmand %vm938, %vm970
        %v1003 = vld [vmem:[#allocation4] sm:$0x1]
        %v1004 = vld [vmem:[#allocation7] sm:$0x1]
        %vm1005 = vcmp.ge.s32.totalorder %v491, 1
        %vm1006 = vcmp.ge.s32.totalorder %v492, 1
        %vm1007 = vcmp.ge.s32.totalorder %v493, 1
        %vm1008 = vcmp.ge.s32.totalorder %v494, 1
        %vm1009 = vcmp.le.s32.totalorder %v491, 16
        %vm1010 = vcmp.le.s32.totalorder %v492, 16
        %vm1011 = vcmp.le.s32.totalorder %v493, 16
        %vm1012 = vcmp.le.s32.totalorder %v494, 16
        %vm1013 = vmand %vm1005, %vm1009
        %vm1014 = vmand %vm1006, %vm1010
        %vm1015 = vmand %vm1007, %vm1011
        %vm1016 = vmand %vm1008, %vm1012
        %p1017 = scmp.gt.s32.totalorder %s38, 0
        %s1018 = scalar_select %p1017, 1, 0
        %v1019 = vstv %s1018
        %vm1020 = vcmp.eq.s32.totalorder %v1019, 1
        %vm1021 = vmand %vm1013, %vm1020
        %vm1022 = vmand %vm1014, %vm1020
        %vm1023 = vmand %vm1015, %vm1020
        %vm1024 = vmand %vm1016, %vm1020
        %p1025 = scmp.lt.s32.totalorder %s38, 1
        %s1026 = scalar_select %p1025, 1, 0
        %v1027 = vstv %s1026
        %vm1028 = vcmp.eq.s32.totalorder %v1027, 1
        %vm1029 = vmand %vm1013, %vm1028
        %vm1030 = vmand %vm1014, %vm1028
        %vm1031 = vmand %vm1015, %vm1028
        %vm1032 = vmand %vm1016, %vm1028
        %v1033 = vld [vmem:[%s413] sm:$0xf]
        %v1034 = vld [vmem:[%s413 + $0x4] sm:$0xf]
        %v1035 = vld [vmem:[%s413 + $0x8] sm:$0xf]
        %v1036 = vld [vmem:[%s413 + $0xc] sm:$0xf]
        %v1037 = vld [vmem:[%s413 + $0x10] sm:$0xf]
        %v1038 = vld [vmem:[%s413 + $0x14] sm:$0xf]
        %v1039 = vld [vmem:[%s413 + $0x18] sm:$0xf]
        %v1040 = vld [vmem:[%s413 + $0x1c] sm:$0xf]
        %v1041 = vld [vmem:[%s413 + $0x20] sm:$0xf]
        %v1042 = vld [vmem:[%s413 + $0x24] sm:$0xf]
        %v1043 = vld [vmem:[%s413 + $0x28] sm:$0xf]
        %v1044 = vld [vmem:[%s413 + $0x2c] sm:$0xf]
        %v1045 = vld [vmem:[%s413 + $0x30] sm:$0xf]
        %v1046 = vld [vmem:[%s413 + $0x34] sm:$0xf]
        %v1047 = vld [vmem:[%s413 + $0x38] sm:$0xf]
        %v1048 = vld [vmem:[%s413 + $0x3c] sm:$0xf]
        %v1049 = vld [vmem:[%s413 + $0x40] sm:$0xf]
        %v1050 = vld [vmem:[%s413 + $0x44] sm:$0xf]
        %v1051 = vld [vmem:[%s413 + $0x48] sm:$0xf]
        %v1052 = vld [vmem:[%s413 + $0x4c] sm:$0xf]
        %v1053 = vld [vmem:[%s413 + $0x50] sm:$0xf]
        %v1054 = vld [vmem:[%s413 + $0x54] sm:$0xf]
        %v1055 = vld [vmem:[%s413 + $0x58] sm:$0xf]
        %v1056 = vld [vmem:[%s413 + $0x5c] sm:$0xf]
        %v1057 = vld [vmem:[%s413 + $0x60] sm:$0xf]
        %v1058 = vld [vmem:[%s413 + $0x64] sm:$0xf]
        %v1059 = vld [vmem:[%s413 + $0x68] sm:$0xf]
        %v1060 = vld [vmem:[%s413 + $0x6c] sm:$0xf]
        %v1061 = vld [vmem:[%s413 + $0x70] sm:$0xf]
        %v1062 = vld [vmem:[%s413 + $0x74] sm:$0xf]
        %v1063 = vld [vmem:[%s413 + $0x78] sm:$0xf]
        %v1064 = vld [vmem:[%s413 + $0x7c] sm:$0xf]
        %v1065 = vunpack.c.l.bf16 %v1033
        %v1066 = vunpack.c.l.bf16 %v1034
        %v1067 = vunpack.c.l.bf16 %v1035
        %v1068 = vunpack.c.l.bf16 %v1036
        %v1069 = vunpack.c.l.bf16 %v1037
        %v1070 = vunpack.c.l.bf16 %v1038
        %v1071 = vunpack.c.l.bf16 %v1039
        %v1072 = vunpack.c.l.bf16 %v1040
        %v1073 = vunpack.c.l.bf16 %v1041
        %v1074 = vunpack.c.l.bf16 %v1042
        %v1075 = vunpack.c.l.bf16 %v1043
        %v1076 = vunpack.c.l.bf16 %v1044
        %v1077 = vunpack.c.l.bf16 %v1045
        %v1078 = vunpack.c.l.bf16 %v1046
        %v1079 = vunpack.c.l.bf16 %v1047
        %v1080 = vunpack.c.l.bf16 %v1048
        %v1081 = vunpack.c.l.bf16 %v1049
        %v1082 = vunpack.c.l.bf16 %v1050
        %v1083 = vunpack.c.l.bf16 %v1051
        %v1084 = vunpack.c.l.bf16 %v1052
        %v1085 = vunpack.c.l.bf16 %v1053
        %v1086 = vunpack.c.l.bf16 %v1054
        %v1087 = vunpack.c.l.bf16 %v1055
        %v1088 = vunpack.c.l.bf16 %v1056
        %v1089 = vunpack.c.l.bf16 %v1057
        %v1090 = vunpack.c.l.bf16 %v1058
        %v1091 = vunpack.c.l.bf16 %v1059
        %v1092 = vunpack.c.l.bf16 %v1060
        %v1093 = vunpack.c.l.bf16 %v1061
        %v1094 = vunpack.c.l.bf16 %v1062
        %v1095 = vunpack.c.l.bf16 %v1063
        %v1096 = vunpack.c.l.bf16 %v1064
        %v1098 = vlaneseq
        %v1099 = vshrl.u32 %v1098, 7
        %v1100 = vsub.s32 0, %v1099
        %v1101 = vrot.slane %v1003, %v1100
        %v1103 = vmul.f32 %v1065, %v1101
        %v1104 = vmul.f32 %v1066, %v1101
        %v1105 = vmul.f32 %v1067, %v1101
        %v1106 = vmul.f32 %v1068, %v1101
        %v1107 = vmul.f32 %v1069, %v1101
        %v1108 = vmul.f32 %v1070, %v1101
        %v1109 = vmul.f32 %v1071, %v1101
        %v1110 = vmul.f32 %v1072, %v1101
        %v1111 = vmul.f32 %v1073, %v1101
        %v1112 = vmul.f32 %v1074, %v1101
        %v1113 = vmul.f32 %v1075, %v1101
        %v1114 = vmul.f32 %v1076, %v1101
        %v1115 = vmul.f32 %v1077, %v1101
        %v1116 = vmul.f32 %v1078, %v1101
        %v1117 = vmul.f32 %v1079, %v1101
        %v1118 = vmul.f32 %v1080, %v1101
        %v1119 = vmul.f32 %v1081, %v1101
        %v1120 = vmul.f32 %v1082, %v1101
        %v1121 = vmul.f32 %v1083, %v1101
        %v1122 = vmul.f32 %v1084, %v1101
        %v1123 = vmul.f32 %v1085, %v1101
        %v1124 = vmul.f32 %v1086, %v1101
        %v1125 = vmul.f32 %v1087, %v1101
        %v1126 = vmul.f32 %v1088, %v1101
        %v1127 = vmul.f32 %v1089, %v1101
        %v1128 = vmul.f32 %v1090, %v1101
        %v1129 = vmul.f32 %v1091, %v1101
        %v1130 = vmul.f32 %v1092, %v1101
        %v1131 = vmul.f32 %v1093, %v1101
        %v1132 = vmul.f32 %v1094, %v1101
        %v1133 = vmul.f32 %v1095, %v1101
        %v1134 = vmul.f32 %v1096, %v1101
        %v1136 = vlaneseq
        %v1137 = vshrl.u32 %v1136, 7
        %v1138 = vsub.s32 0, %v1137
        %v1139 = vrot.slane %v1004, %v1138
        %v1141 = vadd.f32 %v1103, %v1139
        %v1142 = vadd.f32 %v1104, %v1139
        %v1143 = vadd.f32 %v1105, %v1139
        %v1144 = vadd.f32 %v1106, %v1139
        %v1145 = vadd.f32 %v1107, %v1139
        %v1146 = vadd.f32 %v1108, %v1139
        %v1147 = vadd.f32 %v1109, %v1139
        %v1148 = vadd.f32 %v1110, %v1139
        %v1149 = vadd.f32 %v1111, %v1139
        %v1150 = vadd.f32 %v1112, %v1139
        %v1151 = vadd.f32 %v1113, %v1139
        %v1152 = vadd.f32 %v1114, %v1139
        %v1153 = vadd.f32 %v1115, %v1139
        %v1154 = vadd.f32 %v1116, %v1139
        %v1155 = vadd.f32 %v1117, %v1139
        %v1156 = vadd.f32 %v1118, %v1139
        %v1157 = vadd.f32 %v1119, %v1139
        %v1158 = vadd.f32 %v1120, %v1139
        %v1159 = vadd.f32 %v1121, %v1139
        %v1160 = vadd.f32 %v1122, %v1139
        %v1161 = vadd.f32 %v1123, %v1139
        %v1162 = vadd.f32 %v1124, %v1139
        %v1163 = vadd.f32 %v1125, %v1139
        %v1164 = vadd.f32 %v1126, %v1139
        %v1165 = vadd.f32 %v1127, %v1139
        %v1166 = vadd.f32 %v1128, %v1139
        %v1167 = vadd.f32 %v1129, %v1139
        %v1168 = vadd.f32 %v1130, %v1139
        %v1169 = vadd.f32 %v1131, %v1139
        %v1170 = vadd.f32 %v1132, %v1139
        %v1171 = vadd.f32 %v1133, %v1139
        %v1172 = vadd.f32 %v1134, %v1139
        %v1173 = vmax.f32 %v1141, 0.0
        %v1174 = vmax.f32 %v1142, 0.0
        %v1175 = vmax.f32 %v1143, 0.0
        %v1176 = vmax.f32 %v1144, 0.0
        %v1177 = vmax.f32 %v1145, 0.0
        %v1178 = vmax.f32 %v1146, 0.0
        %v1179 = vmax.f32 %v1147, 0.0
        %v1180 = vmax.f32 %v1148, 0.0
        %v1181 = vmax.f32 %v1149, 0.0
        %v1182 = vmax.f32 %v1150, 0.0
        %v1183 = vmax.f32 %v1151, 0.0
        %v1184 = vmax.f32 %v1152, 0.0
        %v1185 = vmax.f32 %v1153, 0.0
        %v1186 = vmax.f32 %v1154, 0.0
        %v1187 = vmax.f32 %v1155, 0.0
        %v1188 = vmax.f32 %v1156, 0.0
        %v1189 = vmax.f32 %v1157, 0.0
        %v1190 = vmax.f32 %v1158, 0.0
        %v1191 = vmax.f32 %v1159, 0.0
        %v1192 = vmax.f32 %v1160, 0.0
        %v1193 = vmax.f32 %v1161, 0.0
        %v1194 = vmax.f32 %v1162, 0.0
        %v1195 = vmax.f32 %v1163, 0.0
        %v1196 = vmax.f32 %v1164, 0.0
        %v1197 = vmax.f32 %v1165, 0.0
        %v1198 = vmax.f32 %v1166, 0.0
        %v1199 = vmax.f32 %v1167, 0.0
        %v1200 = vmax.f32 %v1168, 0.0
        %v1201 = vmax.f32 %v1169, 0.0
        %v1202 = vmax.f32 %v1170, 0.0
        %v1203 = vmax.f32 %v1171, 0.0
        %v1204 = vmax.f32 %v1172, 0.0
        %v1205 = vsel %vm971, 1, 0
        %v1206 = vsel %vm972, 1, 0
        %v1207 = vsel %vm973, 1, 0
        %v1208 = vsel %vm974, 1, 0
        %v1209 = vsel %vm975, 1, 0
        %v1210 = vsel %vm976, 1, 0
        %v1211 = vsel %vm977, 1, 0
        %v1212 = vsel %vm978, 1, 0
        %v1213 = vsel %vm979, 1, 0
        %v1214 = vsel %vm980, 1, 0
        %v1215 = vsel %vm981, 1, 0
        %v1216 = vsel %vm982, 1, 0
        %v1217 = vsel %vm983, 1, 0
        %v1218 = vsel %vm984, 1, 0
        %v1219 = vsel %vm985, 1, 0
        %v1220 = vsel %vm986, 1, 0
        %v1221 = vsel %vm987, 1, 0
        %v1222 = vsel %vm988, 1, 0
        %v1223 = vsel %vm989, 1, 0
        %v1224 = vsel %vm990, 1, 0
        %v1225 = vsel %vm991, 1, 0
        %v1226 = vsel %vm992, 1, 0
        %v1227 = vsel %vm993, 1, 0
        %v1228 = vsel %vm994, 1, 0
        %v1229 = vsel %vm995, 1, 0
        %v1230 = vsel %vm996, 1, 0
        %v1231 = vsel %vm997, 1, 0
        %v1232 = vsel %vm998, 1, 0
        %v1233 = vsel %vm999, 1, 0
        %v1234 = vsel %vm1000, 1, 0
        %v1235 = vsel %vm1001, 1, 0
        %v1236 = vsel %vm1002, 1, 0
        %vm1237 = vcmp.eq.s32.totalorder %v1205, 1
        %vm1238 = vcmp.eq.s32.totalorder %v1206, 1
        %vm1239 = vcmp.eq.s32.totalorder %v1207, 1
        %vm1240 = vcmp.eq.s32.totalorder %v1208, 1
        %vm1241 = vcmp.eq.s32.totalorder %v1209, 1
        %vm1242 = vcmp.eq.s32.totalorder %v1210, 1
        %vm1243 = vcmp.eq.s32.totalorder %v1211, 1
        %vm1244 = vcmp.eq.s32.totalorder %v1212, 1
        %vm1245 = vcmp.eq.s32.totalorder %v1213, 1
        %vm1246 = vcmp.eq.s32.totalorder %v1214, 1
        %vm1247 = vcmp.eq.s32.totalorder %v1215, 1
        %vm1248 = vcmp.eq.s32.totalorder %v1216, 1
        %vm1249 = vcmp.eq.s32.totalorder %v1217, 1
        %vm1250 = vcmp.eq.s32.totalorder %v1218, 1
        %vm1251 = vcmp.eq.s32.totalorder %v1219, 1
        %vm1252 = vcmp.eq.s32.totalorder %v1220, 1
        %vm1253 = vcmp.eq.s32.totalorder %v1221, 1
        %vm1254 = vcmp.eq.s32.totalorder %v1222, 1
        %vm1255 = vcmp.eq.s32.totalorder %v1223, 1
        %vm1256 = vcmp.eq.s32.totalorder %v1224, 1
        %vm1257 = vcmp.eq.s32.totalorder %v1225, 1
        %vm1258 = vcmp.eq.s32.totalorder %v1226, 1
        %vm1259 = vcmp.eq.s32.totalorder %v1227, 1
        %vm1260 = vcmp.eq.s32.totalorder %v1228, 1
        %vm1261 = vcmp.eq.s32.totalorder %v1229, 1
        %vm1262 = vcmp.eq.s32.totalorder %v1230, 1
        %vm1263 = vcmp.eq.s32.totalorder %v1231, 1
        %vm1264 = vcmp.eq.s32.totalorder %v1232, 1
        %vm1265 = vcmp.eq.s32.totalorder %v1233, 1
        %vm1266 = vcmp.eq.s32.totalorder %v1234, 1
        %vm1267 = vcmp.eq.s32.totalorder %v1235, 1
        %vm1268 = vcmp.eq.s32.totalorder %v1236, 1
        %v1269 = vsel %vm1237, %v1173, 0.0
        %v1270 = vsel %vm1238, %v1174, 0.0
        %v1271 = vsel %vm1239, %v1175, 0.0
        %v1272 = vsel %vm1240, %v1176, 0.0
        %v1273 = vsel %vm1241, %v1177, 0.0
        %v1274 = vsel %vm1242, %v1178, 0.0
        %v1275 = vsel %vm1243, %v1179, 0.0
        %v1276 = vsel %vm1244, %v1180, 0.0
        %v1277 = vsel %vm1245, %v1181, 0.0
        %v1278 = vsel %vm1246, %v1182, 0.0
        %v1279 = vsel %vm1247, %v1183, 0.0
        %v1280 = vsel %vm1248, %v1184, 0.0
        %v1281 = vsel %vm1249, %v1185, 0.0
        %v1282 = vsel %vm1250, %v1186, 0.0
        %v1283 = vsel %vm1251, %v1187, 0.0
        %v1284 = vsel %vm1252, %v1188, 0.0
        %v1285 = vsel %vm1253, %v1189, 0.0
        %v1286 = vsel %vm1254, %v1190, 0.0
        %v1287 = vsel %vm1255, %v1191, 0.0
        %v1288 = vsel %vm1256, %v1192, 0.0
        %v1289 = vsel %vm1257, %v1193, 0.0
        %v1290 = vsel %vm1258, %v1194, 0.0
        %v1291 = vsel %vm1259, %v1195, 0.0
        %v1292 = vsel %vm1260, %v1196, 0.0
        %v1293 = vsel %vm1261, %v1197, 0.0
        %v1294 = vsel %vm1262, %v1198, 0.0
        %v1295 = vsel %vm1263, %v1199, 0.0
        %v1296 = vsel %vm1264, %v1200, 0.0
        %v1297 = vsel %vm1265, %v1201, 0.0
        %v1298 = vsel %vm1266, %v1202, 0.0
        %v1299 = vsel %vm1267, %v1203, 0.0
        %v1300 = vsel %vm1268, %v1204, 0.0
        %v1301 = vpack.c.bf16 %v1270, %v1269
        %v1302 = vpack.c.bf16 %v1272, %v1271
        %v1303 = vpack.c.bf16 %v1274, %v1273
        %v1304 = vpack.c.bf16 %v1276, %v1275
        %v1305 = vpack.c.bf16 %v1278, %v1277
        %v1306 = vpack.c.bf16 %v1280, %v1279
        %v1307 = vpack.c.bf16 %v1282, %v1281
        %v1308 = vpack.c.bf16 %v1284, %v1283
        %v1309 = vpack.c.bf16 %v1286, %v1285
        %v1310 = vpack.c.bf16 %v1288, %v1287
        %v1311 = vpack.c.bf16 %v1290, %v1289
        %v1312 = vpack.c.bf16 %v1292, %v1291
        %v1313 = vpack.c.bf16 %v1294, %v1293
        %v1314 = vpack.c.bf16 %v1296, %v1295
        %v1315 = vpack.c.bf16 %v1298, %v1297
        %v1316 = vpack.c.bf16 %v1300, %v1299
        %1317 = vst [vmem:[#allocation2 + $0x18] sm:$0xff] %v1301
        %1318 = vst [vmem:[#allocation2 + $0x20] sm:$0xff] %v1302
        %1319 = vst [vmem:[#allocation2 + $0x28] sm:$0xff] %v1303
        %1320 = vst [vmem:[#allocation2 + $0x30] sm:$0xff] %v1304
        %1321 = vst [vmem:[#allocation2 + $0x38] sm:$0xff] %v1305
        %1322 = vst [vmem:[#allocation2 + $0x40] sm:$0xff] %v1306
        %1323 = vst [vmem:[#allocation2 + $0x48] sm:$0xff] %v1307
        %1324 = vst [vmem:[#allocation2 + $0x50] sm:$0xff] %v1308
        %1325 = vst [vmem:[#allocation2 + $0x58] sm:$0xff] %v1309
        %1326 = vst [vmem:[#allocation2 + $0x60] sm:$0xff] %v1310
        %1327 = vst [vmem:[#allocation2 + $0x68] sm:$0xff] %v1311
        %1328 = vst [vmem:[#allocation2 + $0x70] sm:$0xff] %v1312
        %1329 = vst [vmem:[#allocation2 + $0x78] sm:$0xff] %v1313
        %1330 = vst [vmem:[#allocation2 + $0x80] sm:$0xff] %v1314
        %1331 = vst [vmem:[#allocation2 + $0x88] sm:$0xff] %v1315
        %1332 = vst [vmem:[#allocation2 + $0x90] sm:$0xff] %v1316
        %v1333 = vld [vmem:[%s422] sm:$0xf]
        %v1334 = vld [vmem:[%s422 + $0x4] sm:$0xf]
        %v1335 = vld [vmem:[%s422 + $0x8] sm:$0xf]
        %v1336 = vld [vmem:[%s422 + $0xc] sm:$0xf]
        %v1337 = vunpack.c.l.bf16 %v1333
        %v1338 = vunpack.c.l.bf16 %v1334
        %v1339 = vunpack.c.l.bf16 %v1335
        %v1340 = vunpack.c.l.bf16 %v1336
        %v1341 = vmul.f32 %v1337, %v1101
        %v1342 = vmul.f32 %v1338, %v1101
        %v1343 = vmul.f32 %v1339, %v1101
        %v1344 = vmul.f32 %v1340, %v1101
        %v1345 = vadd.f32 %v1341, %v1139
        %v1346 = vadd.f32 %v1342, %v1139
        %v1347 = vadd.f32 %v1343, %v1139
        %v1348 = vadd.f32 %v1344, %v1139
        %v1349 = vmax.f32 %v1345, 0.0
        %v1350 = vmax.f32 %v1346, 0.0
        %v1351 = vmax.f32 %v1347, 0.0
        %v1352 = vmax.f32 %v1348, 0.0
        %v1353 = vsel %vm1021, 1, 0
        %v1354 = vsel %vm1022, 1, 0
        %v1355 = vsel %vm1023, 1, 0
        %v1356 = vsel %vm1024, 1, 0
        %vm1357 = vcmp.eq.s32.totalorder %v1353, 1
        %vm1358 = vcmp.eq.s32.totalorder %v1354, 1
        %vm1359 = vcmp.eq.s32.totalorder %v1355, 1
        %vm1360 = vcmp.eq.s32.totalorder %v1356, 1
        %v1361 = vsel %vm1357, %v1349, 0.0
        %v1362 = vsel %vm1358, %v1350, 0.0
        %v1363 = vsel %vm1359, %v1351, 0.0
        %v1364 = vsel %vm1360, %v1352, 0.0
        %v1365 = vpack.c.bf16 %v1362, %v1361
        %v1366 = vpack.c.bf16 %v1364, %v1363
        %1367 = vst [vmem:[#allocation2 + $0x8] sm:$0xff] %v1365
        %1368 = vst [vmem:[#allocation2 + $0x10] sm:$0xff] %v1366
        %v1369 = vld [vmem:[%s431] sm:$0xf]
        %v1370 = vld [vmem:[%s431 + $0x4] sm:$0xf]
        %v1371 = vld [vmem:[%s431 + $0x8] sm:$0xf]
        %v1372 = vld [vmem:[%s431 + $0xc] sm:$0xf]
        %v1373 = vunpack.c.l.bf16 %v1369
        %v1374 = vunpack.c.l.bf16 %v1370
        %v1375 = vunpack.c.l.bf16 %v1371
        %v1376 = vunpack.c.l.bf16 %v1372
        %v1377 = vmul.f32 %v1373, %v1101
        %v1378 = vmul.f32 %v1374, %v1101
        %v1379 = vmul.f32 %v1375, %v1101
        %v1380 = vmul.f32 %v1376, %v1101
        %v1381 = vadd.f32 %v1377, %v1139
        %v1382 = vadd.f32 %v1378, %v1139
        %v1383 = vadd.f32 %v1379, %v1139
        %v1384 = vadd.f32 %v1380, %v1139
        %v1385 = vmax.f32 %v1381, 0.0
        %v1386 = vmax.f32 %v1382, 0.0
        %v1387 = vmax.f32 %v1383, 0.0
        %v1388 = vmax.f32 %v1384, 0.0
        %v1389 = vsel %vm1029, 1, 0
        %v1390 = vsel %vm1030, 1, 0
        %v1391 = vsel %vm1031, 1, 0
        %v1392 = vsel %vm1032, 1, 0
        %vm1393 = vcmp.eq.s32.totalorder %v1389, 1
        %vm1394 = vcmp.eq.s32.totalorder %v1390, 1
        %vm1395 = vcmp.eq.s32.totalorder %v1391, 1
        %vm1396 = vcmp.eq.s32.totalorder %v1392, 1
        %v1397 = vsel %vm1393, %v1385, 0.0
        %v1398 = vsel %vm1394, %v1386, 0.0
        %v1399 = vsel %vm1395, %v1387, 0.0
        %v1400 = vsel %vm1396, %v1388, 0.0
        %v1401 = vpack.c.bf16 %v1398, %v1397
        %v1402 = vpack.c.bf16 %v1400, %v1399
        %1403 = vst [vmem:[#allocation2 + $0x98] sm:$0xff] %v1401
        %1404 = vst [vmem:[#allocation2 + $0xa0] sm:$0xff] %v1402
        %vm1405 = vcmask 1047559
        %vm1406 = vsmask.f32 7966
        %vm1407 = vmand %vm1405, %vm1406
        %v1408 = vld [vmem:[#allocation2] sm:$0x80]
        %v1409 = vsel %vm1407, 0, %v1408
        %1410 = vst [vmem:[#allocation2] sm:$0x80] %v1409
        %vm1411 = vcmask 1040384
        %vm1412 = vsmask.f32 256
        %vm1413 = vmand %vm1411, %vm1412
        %v1414 = vld [vmem:[#allocation2 + $0xa8] sm:$0x1]
        %v1415 = vsel %vm1413, 0, %v1414
        %1416 = vst [vmem:[#allocation2 + $0xa8] sm:$0x1] %v1415
        %v1417 = vld [vmem:[#allocation2] sm:$0x80]
        %v1418 = vld [vmem:[#allocation2 + $0x8] sm:$0xff]
        %v1419 = vld [vmem:[#allocation2 + $0x10] sm:$0xff]
        %v1420 = vld [vmem:[#allocation2 + $0x18] sm:$0xff]
        %v1421 = vld [vmem:[#allocation2 + $0x20] sm:$0xff]
        %v1422 = vld [vmem:[#allocation2 + $0x28] sm:$0xff]
        %v1423 = vld [vmem:[#allocation2 + $0x30] sm:$0xff]
        %v1424 = vld [vmem:[#allocation2 + $0x38] sm:$0xff]
        %v1425 = vld [vmem:[#allocation2 + $0x40] sm:$0xff]
        %v1426 = vld [vmem:[#allocation2 + $0x48] sm:$0xff]
        %v1427 = vld [vmem:[#allocation2 + $0x50] sm:$0xff]
        %v1428 = vld [vmem:[#allocation2 + $0x58] sm:$0xff]
        %v1429 = vld [vmem:[#allocation2 + $0x60] sm:$0xff]
        %v1430 = vld [vmem:[#allocation2 + $0x68] sm:$0xff]
        %v1431 = vld [vmem:[#allocation2 + $0x70] sm:$0xff]
        %v1432 = vld [vmem:[#allocation2 + $0x78] sm:$0xff]
        %v1433 = vld [vmem:[#allocation2 + $0x80] sm:$0xff]
        %v1434 = vld [vmem:[#allocation2 + $0x88] sm:$0xff]
        %v1435 = vld [vmem:[#allocation2 + $0x90] sm:$0xff]
        %v1436 = vld [vmem:[#allocation2 + $0x98] sm:$0xff]
        %v1437 = vld [vmem:[#allocation2 + $0xa0] sm:$0xff]
        %v1439 = vshrl.u32 %v1417, 16
        %v1441 = vrot.slane %v1439, 7
        %v1443 = vshrl.u32 %v1418, 16
        %v1445 = vrot.slane %v1443, 7
        %v1446 = vshll.u32 %v1418, 16
        %v1448 = vor.u32 %v1445, %v1446
        %v1449 = vsel %vm1412, %v1441, %v1448
        %v1451 = vshrl.u32 %v1419, 16
        %v1453 = vrot.slane %v1451, 7
        %v1454 = vshll.u32 %v1419, 16
        %v1456 = vor.u32 %v1453, %v1454
        %v1457 = vsel %vm1412, %v1445, %v1456
        %v1459 = vshrl.u32 %v1420, 16
        %v1461 = vrot.slane %v1459, 7
        %v1462 = vshll.u32 %v1420, 16
        %v1464 = vor.u32 %v1461, %v1462
        %v1465 = vsel %vm1412, %v1453, %v1464
        %v1467 = vshrl.u32 %v1421, 16
        %v1469 = vrot.slane %v1467, 7
        %v1470 = vshll.u32 %v1421, 16
        %v1472 = vor.u32 %v1469, %v1470
        %v1473 = vsel %vm1412, %v1461, %v1472
        %v1475 = vshrl.u32 %v1422, 16
        %v1477 = vrot.slane %v1475, 7
        %v1478 = vshll.u32 %v1422, 16
        %v1480 = vor.u32 %v1477, %v1478
        %v1481 = vsel %vm1412, %v1469, %v1480
        %v1483 = vshrl.u32 %v1423, 16
        %v1485 = vrot.slane %v1483, 7
        %v1486 = vshll.u32 %v1423, 16
        %v1488 = vor.u32 %v1485, %v1486
        %v1489 = vsel %vm1412, %v1477, %v1488
        %v1491 = vshrl.u32 %v1424, 16
        %v1493 = vrot.slane %v1491, 7
        %v1494 = vshll.u32 %v1424, 16
        %v1496 = vor.u32 %v1493, %v1494
        %v1497 = vsel %vm1412, %v1485, %v1496
        %v1499 = vshrl.u32 %v1425, 16
        %v1501 = vrot.slane %v1499, 7
        %v1502 = vshll.u32 %v1425, 16
        %v1504 = vor.u32 %v1501, %v1502
        %v1505 = vsel %vm1412, %v1493, %v1504
        %v1507 = vshrl.u32 %v1426, 16
        %v1509 = vrot.slane %v1507, 7
        %v1510 = vshll.u32 %v1426, 16
        %v1512 = vor.u32 %v1509, %v1510
        %v1513 = vsel %vm1412, %v1501, %v1512
        %v1515 = vshrl.u32 %v1427, 16
        %v1517 = vrot.slane %v1515, 7
        %v1518 = vshll.u32 %v1427, 16
        %v1520 = vor.u32 %v1517, %v1518
        %v1521 = vsel %vm1412, %v1509, %v1520
        %v1523 = vshrl.u32 %v1428, 16
        %v1525 = vrot.slane %v1523, 7
        %v1526 = vshll.u32 %v1428, 16
        %v1528 = vor.u32 %v1525, %v1526
        %v1529 = vsel %vm1412, %v1517, %v1528
        %v1531 = vshrl.u32 %v1429, 16
        %v1533 = vrot.slane %v1531, 7
        %v1534 = vshll.u32 %v1429, 16
        %v1536 = vor.u32 %v1533, %v1534
        %v1537 = vsel %vm1412, %v1525, %v1536
        %v1539 = vshrl.u32 %v1430, 16
        %v1541 = vrot.slane %v1539, 7
        %v1542 = vshll.u32 %v1430, 16
        %v1544 = vor.u32 %v1541, %v1542
        %v1545 = vsel %vm1412, %v1533, %v1544
        %v1547 = vshrl.u32 %v1431, 16
        %v1549 = vrot.slane %v1547, 7
        %v1550 = vshll.u32 %v1431, 16
        %v1552 = vor.u32 %v1549, %v1550
        %v1553 = vsel %vm1412, %v1541, %v1552
        %v1555 = vshrl.u32 %v1432, 16
        %v1557 = vrot.slane %v1555, 7
        %v1558 = vshll.u32 %v1432, 16
        %v1560 = vor.u32 %v1557, %v1558
        %v1561 = vsel %vm1412, %v1549, %v1560
        %v1563 = vshrl.u32 %v1433, 16
        %v1565 = vrot.slane %v1563, 7
        %v1566 = vshll.u32 %v1433, 16
        %v1568 = vor.u32 %v1565, %v1566
        %v1569 = vsel %vm1412, %v1557, %v1568
        %v1571 = vshrl.u32 %v1434, 16
        %v1573 = vrot.slane %v1571, 7
        %v1574 = vshll.u32 %v1434, 16
        %v1576 = vor.u32 %v1573, %v1574
        %v1577 = vsel %vm1412, %v1565, %v1576
        %v1579 = vshrl.u32 %v1435, 16
        %v1581 = vrot.slane %v1579, 7
        %v1582 = vshll.u32 %v1435, 16
        %v1584 = vor.u32 %v1581, %v1582
        %v1585 = vsel %vm1412, %v1573, %v1584
        %v1587 = vshrl.u32 %v1436, 16
        %v1589 = vrot.slane %v1587, 7
        %v1590 = vshll.u32 %v1436, 16
        %v1592 = vor.u32 %v1589, %v1590
        %v1593 = vsel %vm1412, %v1581, %v1592
        %v1595 = vshrl.u32 %v1437, 16
        %v1597 = vrot.slane %v1595, 7
        %v1598 = vshll.u32 %v1437, 16
        %v1600 = vor.u32 %v1597, %v1598
        %v1601 = vsel %vm1412, %v1589, %v1600
        %1622 = vst [vmem:[#allocation3] sm:$0xff] %v1449
        %1623 = vst [vmem:[#allocation3 + $0x18] sm:$0xff] %v1457
        %1624 = vst [vmem:[#allocation3 + $0x30] sm:$0xff] %v1465
        %1625 = vst [vmem:[#allocation3 + $0x48] sm:$0xff] %v1473
        %1626 = vst [vmem:[#allocation3 + $0x60] sm:$0xff] %v1481
        %1627 = vst [vmem:[#allocation3 + $0x78] sm:$0xff] %v1489
        %1628 = vst [vmem:[#allocation3 + $0x90] sm:$0xff] %v1497
        %1629 = vst [vmem:[#allocation3 + $0xa8] sm:$0xff] %v1505
        %1630 = vst [vmem:[#allocation3 + $0xc0] sm:$0xff] %v1513
        %1631 = vst [vmem:[#allocation3 + $0xd8] sm:$0xff] %v1521
        %1632 = vst [vmem:[#allocation3 + $0xf0] sm:$0xff] %v1529
        %1633 = vst [vmem:[#allocation3 + $0x108] sm:$0xff] %v1537
        %1634 = vst [vmem:[#allocation3 + $0x120] sm:$0xff] %v1545
        %1635 = vst [vmem:[#allocation3 + $0x138] sm:$0xff] %v1553
        %1636 = vst [vmem:[#allocation3 + $0x150] sm:$0xff] %v1561
        %1637 = vst [vmem:[#allocation3 + $0x168] sm:$0xff] %v1569
        %1638 = vst [vmem:[#allocation3 + $0x180] sm:$0xff] %v1577
        %1639 = vst [vmem:[#allocation3 + $0x198] sm:$0xff] %v1585
        %1640 = vst [vmem:[#allocation3 + $0x1b0] sm:$0xff] %v1593
        %1641 = vst [vmem:[#allocation3 + $0x1c8] sm:$0xff] %v1601
        %v1642 = vld [vmem:[#allocation2 + $0x8] sm:$0xff]
        %v1643 = vld [vmem:[#allocation2 + $0x10] sm:$0xff]
        %v1644 = vld [vmem:[#allocation2 + $0x18] sm:$0xff]
        %v1645 = vld [vmem:[#allocation2 + $0x20] sm:$0xff]
        %v1646 = vld [vmem:[#allocation2 + $0x28] sm:$0xff]
        %v1647 = vld [vmem:[#allocation2 + $0x30] sm:$0xff]
        %v1648 = vld [vmem:[#allocation2 + $0x38] sm:$0xff]
        %v1649 = vld [vmem:[#allocation2 + $0x40] sm:$0xff]
        %v1650 = vld [vmem:[#allocation2 + $0x48] sm:$0xff]
        %v1651 = vld [vmem:[#allocation2 + $0x50] sm:$0xff]
        %v1652 = vld [vmem:[#allocation2 + $0x58] sm:$0xff]
        %v1653 = vld [vmem:[#allocation2 + $0x60] sm:$0xff]
        %v1654 = vld [vmem:[#allocation2 + $0x68] sm:$0xff]
        %v1655 = vld [vmem:[#allocation2 + $0x70] sm:$0xff]
        %v1656 = vld [vmem:[#allocation2 + $0x78] sm:$0xff]
        %v1657 = vld [vmem:[#allocation2 + $0x80] sm:$0xff]
        %v1658 = vld [vmem:[#allocation2 + $0x88] sm:$0xff]
        %v1659 = vld [vmem:[#allocation2 + $0x90] sm:$0xff]
        %v1660 = vld [vmem:[#allocation2 + $0x98] sm:$0xff]
        %v1661 = vld [vmem:[#allocation2 + $0xa0] sm:$0xff]
        %1662 = vst [vmem:[#allocation3 + $0x8] sm:$0xff] %v1642
        %1663 = vst [vmem:[#allocation3 + $0x20] sm:$0xff] %v1643
        %1664 = vst [vmem:[#allocation3 + $0x38] sm:$0xff] %v1644
        %1665 = vst [vmem:[#allocation3 + $0x50] sm:$0xff] %v1645
        %1666 = vst [vmem:[#allocation3 + $0x68] sm:$0xff] %v1646
        %1667 = vst [vmem:[#allocation3 + $0x80] sm:$0xff] %v1647
        %1668 = vst [vmem:[#allocation3 + $0x98] sm:$0xff] %v1648
        %1669 = vst [vmem:[#allocation3 + $0xb0] sm:$0xff] %v1649
        %1670 = vst [vmem:[#allocation3 + $0xc8] sm:$0xff] %v1650
        %1671 = vst [vmem:[#allocation3 + $0xe0] sm:$0xff] %v1651
        %1672 = vst [vmem:[#allocation3 + $0xf8] sm:$0xff] %v1652
        %1673 = vst [vmem:[#allocation3 + $0x110] sm:$0xff] %v1653
        %1674 = vst [vmem:[#allocation3 + $0x128] sm:$0xff] %v1654
        %1675 = vst [vmem:[#allocation3 + $0x140] sm:$0xff] %v1655
        %1676 = vst [vmem:[#allocation3 + $0x158] sm:$0xff] %v1656
        %1677 = vst [vmem:[#allocation3 + $0x170] sm:$0xff] %v1657
        %1678 = vst [vmem:[#allocation3 + $0x188] sm:$0xff] %v1658
        %1679 = vst [vmem:[#allocation3 + $0x1a0] sm:$0xff] %v1659
        %1680 = vst [vmem:[#allocation3 + $0x1b8] sm:$0xff] %v1660
        %1681 = vst [vmem:[#allocation3 + $0x1d0] sm:$0xff] %v1661
        %v1682 = vld [vmem:[#allocation2 + $0x8] sm:$0xff]
        %v1683 = vld [vmem:[#allocation2 + $0x10] sm:$0xff]
        %v1684 = vld [vmem:[#allocation2 + $0x18] sm:$0xff]
        %v1685 = vld [vmem:[#allocation2 + $0x20] sm:$0xff]
        %v1686 = vld [vmem:[#allocation2 + $0x28] sm:$0xff]
        %v1687 = vld [vmem:[#allocation2 + $0x30] sm:$0xff]
        %v1688 = vld [vmem:[#allocation2 + $0x38] sm:$0xff]
        %v1689 = vld [vmem:[#allocation2 + $0x40] sm:$0xff]
        %v1690 = vld [vmem:[#allocation2 + $0x48] sm:$0xff]
        %v1691 = vld [vmem:[#allocation2 + $0x50] sm:$0xff]
        %v1692 = vld [vmem:[#allocation2 + $0x58] sm:$0xff]
        %v1693 = vld [vmem:[#allocation2 + $0x60] sm:$0xff]
        %v1694 = vld [vmem:[#allocation2 + $0x68] sm:$0xff]
        %v1695 = vld [vmem:[#allocation2 + $0x70] sm:$0xff]
        %v1696 = vld [vmem:[#allocation2 + $0x78] sm:$0xff]
        %v1697 = vld [vmem:[#allocation2 + $0x80] sm:$0xff]
        %v1698 = vld [vmem:[#allocation2 + $0x88] sm:$0xff]
        %v1699 = vld [vmem:[#allocation2 + $0x90] sm:$0xff]
        %v1700 = vld [vmem:[#allocation2 + $0x98] sm:$0xff]
        %v1701 = vld [vmem:[#allocation2 + $0xa0] sm:$0xff]
        %v1702 = vld [vmem:[#allocation2 + $0xa8] sm:$0x1]
        %vm1703 = vsmask.f32 7424
        %v1705 = vshrl.u32 %v1682, 16
        %v1707 = vshll.u32 %v1682, 16
        %v1709 = vrot.slane %v1707, 1
        %v1710 = vor.u32 %v1705, %v1709
        %v1712 = vshll.u32 %v1683, 16
        %v1714 = vrot.slane %v1712, 1
        %v1715 = vsel %vm1703, %v1710, %v1714
        %v1716 = vshrl.u32 %v1683, 16
        %v1718 = vor.u32 %v1716, %v1714
        %v1720 = vshll.u32 %v1684, 16
        %v1722 = vrot.slane %v1720, 1
        %v1723 = vsel %vm1703, %v1718, %v1722
        %v1724 = vshrl.u32 %v1684, 16
        %v1726 = vor.u32 %v1724, %v1722
        %v1728 = vshll.u32 %v1685, 16
        %v1730 = vrot.slane %v1728, 1
        %v1731 = vsel %vm1703, %v1726, %v1730
        %v1732 = vshrl.u32 %v1685, 16
        %v1734 = vor.u32 %v1732, %v1730
        %v1736 = vshll.u32 %v1686, 16
        %v1738 = vrot.slane %v1736, 1
        %v1739 = vsel %vm1703, %v1734, %v1738
        %v1740 = vshrl.u32 %v1686, 16
        %v1742 = vor.u32 %v1740, %v1738
        %v1744 = vshll.u32 %v1687, 16
        %v1746 = vrot.slane %v1744, 1
        %v1747 = vsel %vm1703, %v1742, %v1746
        %v1748 = vshrl.u32 %v1687, 16
        %v1750 = vor.u32 %v1748, %v1746
        %v1752 = vshll.u32 %v1688, 16
        %v1754 = vrot.slane %v1752, 1
        %v1755 = vsel %vm1703, %v1750, %v1754
        %v1756 = vshrl.u32 %v1688, 16
        %v1758 = vor.u32 %v1756, %v1754
        %v1760 = vshll.u32 %v1689, 16
        %v1762 = vrot.slane %v1760, 1
        %v1763 = vsel %vm1703, %v1758, %v1762
        %v1764 = vshrl.u32 %v1689, 16
        %v1766 = vor.u32 %v1764, %v1762
        %v1768 = vshll.u32 %v1690, 16
        %v1770 = vrot.slane %v1768, 1
        %v1771 = vsel %vm1703, %v1766, %v1770
        %v1772 = vshrl.u32 %v1690, 16
        %v1774 = vor.u32 %v1772, %v1770
        %v1776 = vshll.u32 %v1691, 16
        %v1778 = vrot.slane %v1776, 1
        %v1779 = vsel %vm1703, %v1774, %v1778
        %v1780 = vshrl.u32 %v1691, 16
        %v1782 = vor.u32 %v1780, %v1778
        %v1784 = vshll.u32 %v1692, 16
        %v1786 = vrot.slane %v1784, 1
        %v1787 = vsel %vm1703, %v1782, %v1786
        %v1788 = vshrl.u32 %v1692, 16
        %v1790 = vor.u32 %v1788, %v1786
        %v1792 = vshll.u32 %v1693, 16
        %v1794 = vrot.slane %v1792, 1
        %v1795 = vsel %vm1703, %v1790, %v1794
        %v1796 = vshrl.u32 %v1693, 16
        %v1798 = vor.u32 %v1796, %v1794
        %v1800 = vshll.u32 %v1694, 16
        %v1802 = vrot.slane %v1800, 1
        %v1803 = vsel %vm1703, %v1798, %v1802
        %v1804 = vshrl.u32 %v1694, 16
        %v1806 = vor.u32 %v1804, %v1802
        %v1808 = vshll.u32 %v1695, 16
        %v1810 = vrot.slane %v1808, 1
        %v1811 = vsel %vm1703, %v1806, %v1810
        %v1812 = vshrl.u32 %v1695, 16
        %v1814 = vor.u32 %v1812, %v1810
        %v1816 = vshll.u32 %v1696, 16
        %v1818 = vrot.slane %v1816, 1
        %v1819 = vsel %vm1703, %v1814, %v1818
        %v1820 = vshrl.u32 %v1696, 16
        %v1822 = vor.u32 %v1820, %v1818
        %v1824 = vshll.u32 %v1697, 16
        %v1826 = vrot.slane %v1824, 1
        %v1827 = vsel %vm1703, %v1822, %v1826
        %v1828 = vshrl.u32 %v1697, 16
        %v1830 = vor.u32 %v1828, %v1826
        %v1832 = vshll.u32 %v1698, 16
        %v1834 = vrot.slane %v1832, 1
        %v1835 = vsel %vm1703, %v1830, %v1834
        %v1836 = vshrl.u32 %v1698, 16
        %v1838 = vor.u32 %v1836, %v1834
        %v1840 = vshll.u32 %v1699, 16
        %v1842 = vrot.slane %v1840, 1
        %v1843 = vsel %vm1703, %v1838, %v1842
        %v1844 = vshrl.u32 %v1699, 16
        %v1846 = vor.u32 %v1844, %v1842
        %v1848 = vshll.u32 %v1700, 16
        %v1850 = vrot.slane %v1848, 1
        %v1851 = vsel %vm1703, %v1846, %v1850
        %v1852 = vshrl.u32 %v1700, 16
        %v1854 = vor.u32 %v1852, %v1850
        %v1856 = vshll.u32 %v1701, 16
        %v1858 = vrot.slane %v1856, 1
        %v1859 = vsel %vm1703, %v1854, %v1858
        %v1860 = vshrl.u32 %v1701, 16
        %v1862 = vor.u32 %v1860, %v1858
        %v1864 = vshll.u32 %v1702, 16
        %v1866 = vrot.slane %v1864, 1
        %v1867 = vsel %vm1703, %v1862, %v1866
        %1888 = vst [vmem:[#allocation3 + $0x10] sm:$0xff] %v1715
        %1889 = vst [vmem:[#allocation3 + $0x28] sm:$0xff] %v1723
        %1890 = vst [vmem:[#allocation3 + $0x40] sm:$0xff] %v1731
        %1891 = vst [vmem:[#allocation3 + $0x58] sm:$0xff] %v1739
        %1892 = vst [vmem:[#allocation3 + $0x70] sm:$0xff] %v1747
        %1893 = vst [vmem:[#allocation3 + $0x88] sm:$0xff] %v1755
        %1894 = vst [vmem:[#allocation3 + $0xa0] sm:$0xff] %v1763
        %1895 = vst [vmem:[#allocation3 + $0xb8] sm:$0xff] %v1771
        %1896 = vst [vmem:[#allocation3 + $0xd0] sm:$0xff] %v1779
        %1897 = vst [vmem:[#allocation3 + $0xe8] sm:$0xff] %v1787
        %1898 = vst [vmem:[#allocation3 + $0x100] sm:$0xff] %v1795
        %1899 = vst [vmem:[#allocation3 + $0x118] sm:$0xff] %v1803
        %1900 = vst [vmem:[#allocation3 + $0x130] sm:$0xff] %v1811
        %1901 = vst [vmem:[#allocation3 + $0x148] sm:$0xff] %v1819
        %1902 = vst [vmem:[#allocation3 + $0x160] sm:$0xff] %v1827
        %1903 = vst [vmem:[#allocation3 + $0x178] sm:$0xff] %v1835
        %1904 = vst [vmem:[#allocation3 + $0x190] sm:$0xff] %v1843
        %1905 = vst [vmem:[#allocation3 + $0x1a8] sm:$0xff] %v1851
        %1906 = vst [vmem:[#allocation3 + $0x1c0] sm:$0xff] %v1859
        %1907 = vst [vmem:[#allocation3 + $0x1d8] sm:$0xff] %v1867
        %v1908 = vld [vmem:[#allocation3] sm:$0xff]
        %v1909 = vld [vmem:[#allocation3 + $0x8] sm:$0xff]
        %v1910 = vld [vmem:[#allocation3 + $0x10] sm:$0xff]
        %v1911 = vld [vmem:[#allocation3 + $0x18] sm:$0xff]
        %v1912 = vld [vmem:[#allocation3 + $0x20] sm:$0xff]
        %v1913 = vld [vmem:[#allocation3 + $0x28] sm:$0xff]
        %v1914 = vld [vmem:[#allocation3 + $0x30] sm:$0xff]
        %v1915 = vld [vmem:[#allocation3 + $0x38] sm:$0xff]
        %v1916 = vld [vmem:[#allocation3 + $0x40] sm:$0xff]
        %v1917 = vld [vmem:[#allocation3 + $0x48] sm:$0xff]
        %v1918 = vld [vmem:[#allocation3 + $0x50] sm:$0xff]
        %v1919 = vld [vmem:[#allocation3 + $0x58] sm:$0xff]
        %v1920 = vld [vmem:[#allocation3 + $0x60] sm:$0xff]
        %v1921 = vld [vmem:[#allocation3 + $0x68] sm:$0xff]
        %v1922 = vld [vmem:[#allocation3 + $0x70] sm:$0xff]
        %v1923 = vld [vmem:[#allocation3 + $0x78] sm:$0xff]
        %v1924 = vld [vmem:[#allocation3 + $0x80] sm:$0xff]
        %v1925 = vld [vmem:[#allocation3 + $0x88] sm:$0xff]
        %v1926 = vld [vmem:[#allocation3 + $0x90] sm:$0xff]
        %v1927 = vld [vmem:[#allocation3 + $0x98] sm:$0xff]
        %v1928 = vld [vmem:[#allocation3 + $0xa0] sm:$0xff]
        %v1929 = vld [vmem:[#allocation3 + $0xa8] sm:$0xff]
        %v1930 = vld [vmem:[#allocation3 + $0xb0] sm:$0xff]
        %v1931 = vld [vmem:[#allocation3 + $0xb8] sm:$0xff]
        %v1932 = vld [vmem:[#allocation3 + $0xc0] sm:$0xff]
        %v1933 = vld [vmem:[#allocation3 + $0xc8] sm:$0xff]
        %v1934 = vld [vmem:[#allocation3 + $0xd0] sm:$0xff]
        %v1935 = vld [vmem:[#allocation3 + $0xd8] sm:$0xff]
        %v1936 = vld [vmem:[#allocation3 + $0xe0] sm:$0xff]
        %v1937 = vld [vmem:[#allocation3 + $0xe8] sm:$0xff]
        %v1938 = vld [vmem:[#allocation3 + $0xf0] sm:$0xff]
        %v1939 = vld [vmem:[#allocation3 + $0xf8] sm:$0xff]
        %v1940 = vld [vmem:[#allocation3 + $0x100] sm:$0xff]
        %v1941 = vld [vmem:[#allocation3 + $0x108] sm:$0xff]
        %v1942 = vld [vmem:[#allocation3 + $0x110] sm:$0xff]
        %v1943 = vld [vmem:[#allocation3 + $0x118] sm:$0xff]
        %v1944 = vld [vmem:[#allocation3 + $0x120] sm:$0xff]
        %v1945 = vld [vmem:[#allocation3 + $0x128] sm:$0xff]
        %v1946 = vld [vmem:[#allocation3 + $0x130] sm:$0xff]
        %v1947 = vld [vmem:[#allocation3 + $0x138] sm:$0xff]
        %v1948 = vld [vmem:[#allocation3 + $0x140] sm:$0xff]
        %v1949 = vld [vmem:[#allocation3 + $0x148] sm:$0xff]
        %v1950 = vld [vmem:[#allocation3 + $0x150] sm:$0xff]
        %v1951 = vld [vmem:[#allocation3 + $0x158] sm:$0xff]
        %v1952 = vld [vmem:[#allocation3 + $0x160] sm:$0xff]
        %v1953 = vld [vmem:[#allocation3 + $0x168] sm:$0xff]
        %v1954 = vld [vmem:[#allocation3 + $0x170] sm:$0xff]
        %v1955 = vld [vmem:[#allocation3 + $0x178] sm:$0xff]
        %v1956 = vld [vmem:[#allocation9] sm:$0xf]
        %v1957 = vld [vmem:[#allocation9 + $0x4] sm:$0xf]
        %v1958 = vld [vmem:[#allocation9 + $0x8] sm:$0xf]
        %v1959 = vld [vmem:[#allocation9 + $0xc] sm:$0xf]
        %v1960 = vld [vmem:[#allocation9 + $0x10] sm:$0xf]
        %v1961 = vld [vmem:[#allocation9 + $0x14] sm:$0xf]
        %v1962 = vld [vmem:[#allocation9 + $0x18] sm:$0xf]
        %v1963 = vld [vmem:[#allocation9 + $0x1c] sm:$0xf]
        %v1964 = vld [vmem:[#allocation9 + $0x20] sm:$0xf]
        %v1965 = vld [vmem:[#allocation9 + $0x24] sm:$0xf]
        %v1966 = vld [vmem:[#allocation9 + $0x28] sm:$0xf]
        %v1967 = vld [vmem:[#allocation9 + $0x2c] sm:$0xf]
        %v1968 = vld [vmem:[#allocation9 + $0x30] sm:$0xf]
        %v1969 = vld [vmem:[#allocation9 + $0x34] sm:$0xf]
        %v1970 = vld [vmem:[#allocation9 + $0x38] sm:$0xf]
        %v1971 = vld [vmem:[#allocation9 + $0x3c] sm:$0xf]
        %v1972 = vld [vmem:[#allocation9 + $0x40] sm:$0xf]
        %v1973 = vld [vmem:[#allocation9 + $0x44] sm:$0xf]
        %v1974 = vld [vmem:[#allocation9 + $0x48] sm:$0xf]
        %v1975 = vld [vmem:[#allocation9 + $0x4c] sm:$0xf]
        %v1976 = vld [vmem:[#allocation9 + $0x50] sm:$0xf]
        %v1977 = vld [vmem:[#allocation9 + $0x54] sm:$0xf]
        %v1978 = vld [vmem:[#allocation9 + $0x58] sm:$0xf]
        %v1979 = vld [vmem:[#allocation9 + $0x5c] sm:$0xf]
        %v1980 = vld [vmem:[#allocation9 + $0x60] sm:$0xf]
        %v1981 = vld [vmem:[#allocation9 + $0x64] sm:$0xf]
        %v1982 = vld [vmem:[#allocation9 + $0x68] sm:$0xf]
        %v1983 = vld [vmem:[#allocation9 + $0x6c] sm:$0xf]
        %v1984 = vld [vmem:[#allocation9 + $0x70] sm:$0xf]
        %v1985 = vld [vmem:[#allocation9 + $0x74] sm:$0xf]
        %v1986 = vld [vmem:[#allocation9 + $0x78] sm:$0xf]
        %v1987 = vld [vmem:[#allocation9 + $0x7c] sm:$0xf]
        %v1988 = vld [vmem:[#allocation9 + $0x80] sm:$0xf]
        %v1989 = vld [vmem:[#allocation9 + $0x84] sm:$0xf]
        %v1990 = vld [vmem:[#allocation9 + $0x88] sm:$0xf]
        %v1991 = vld [vmem:[#allocation9 + $0x8c] sm:$0xf]
        %v1992 = vld [vmem:[#allocation9 + $0x90] sm:$0xf]
        %v1993 = vld [vmem:[#allocation9 + $0x94] sm:$0xf]
        %v1994 = vld [vmem:[#allocation9 + $0x98] sm:$0xf]
        %v1995 = vld [vmem:[#allocation9 + $0x9c] sm:$0xf]
        %v1996 = vld [vmem:[#allocation9 + $0xa0] sm:$0xf]
        %v1997 = vld [vmem:[#allocation9 + $0xa4] sm:$0xf]
        %v1998 = vld [vmem:[#allocation9 + $0xa8] sm:$0xf]
        %v1999 = vld [vmem:[#allocation9 + $0xac] sm:$0xf]
        %v2000 = vld [vmem:[#allocation9 + $0xb0] sm:$0xf]
        %v2001 = vld [vmem:[#allocation9 + $0xb4] sm:$0xf]
        %v2002 = vld [vmem:[#allocation9 + $0xb8] sm:$0xf]
        %v2003 = vld [vmem:[#allocation9 + $0xbc] sm:$0xf]
        %v2004 = vld [vmem:[#allocation3 + $0x180] sm:$0xff]
        %v2005 = vld [vmem:[#allocation3 + $0x188] sm:$0xff]
        %v2006 = vld [vmem:[#allocation3 + $0x190] sm:$0xff]
        %v2007 = vld [vmem:[#allocation3 + $0x198] sm:$0xff]
        %v2008 = vld [vmem:[#allocation3 + $0x1a0] sm:$0xff]
        %v2009 = vld [vmem:[#allocation3 + $0x1a8] sm:$0xff]
        %s2010 = scalar_lea.vmem [#allocation9], 192
        %v2011 = vld [vmem:[%s2010] sm:$0xf]
        %v2012 = vld [vmem:[%s2010 + $0x4] sm:$0xf]
        %v2013 = vld [vmem:[%s2010 + $0x8] sm:$0xf]
        %v2014 = vld [vmem:[%s2010 + $0xc] sm:$0xf]
        %v2015 = vld [vmem:[%s2010 + $0x10] sm:$0xf]
        %v2016 = vld [vmem:[%s2010 + $0x14] sm:$0xf]
        %v2017 = vld [vmem:[%s2010 + $0x18] sm:$0xf]
        %v2018 = vld [vmem:[%s2010 + $0x1c] sm:$0xf]
        %v2019 = vld [vmem:[%s2010 + $0x20] sm:$0xf]
        %v2020 = vld [vmem:[%s2010 + $0x24] sm:$0xf]
        %v2021 = vld [vmem:[%s2010 + $0x28] sm:$0xf]
        %v2022 = vld [vmem:[%s2010 + $0x2c] sm:$0xf]
        %v2023 = vld [vmem:[%s2010 + $0x30] sm:$0xf]
        %v2024 = vld [vmem:[%s2010 + $0x34] sm:$0xf]
        %v2025 = vld [vmem:[%s2010 + $0x38] sm:$0xf]
        %v2026 = vld [vmem:[%s2010 + $0x3c] sm:$0xf]
        %v2027 = vld [vmem:[%s2010 + $0x40] sm:$0xf]
        %v2028 = vld [vmem:[%s2010 + $0x44] sm:$0xf]
        %v2029 = vld [vmem:[%s2010 + $0x48] sm:$0xf]
        %v2030 = vld [vmem:[%s2010 + $0x4c] sm:$0xf]
        %v2031 = vld [vmem:[%s2010 + $0x50] sm:$0xf]
        %v2032 = vld [vmem:[%s2010 + $0x54] sm:$0xf]
        %v2033 = vld [vmem:[%s2010 + $0x58] sm:$0xf]
        %v2034 = vld [vmem:[%s2010 + $0x5c] sm:$0xf]
        %v2035 = vld [vmem:[%s2010 + $0x60] sm:$0xf]
        %v2036 = vld [vmem:[%s2010 + $0x64] sm:$0xf]
        %v2037 = vld [vmem:[%s2010 + $0x68] sm:$0xf]
        %v2038 = vld [vmem:[%s2010 + $0x6c] sm:$0xf]
        %v2039 = vld [vmem:[%s2010 + $0x70] sm:$0xf]
        %v2040 = vld [vmem:[%s2010 + $0x74] sm:$0xf]
        %v2041 = vld [vmem:[%s2010 + $0x78] sm:$0xf]
        %v2042 = vld [vmem:[%s2010 + $0x7c] sm:$0xf]
        %v2043 = vld [vmem:[%s2010 + $0x80] sm:$0xf]
        %v2044 = vld [vmem:[%s2010 + $0x84] sm:$0xf]
        %v2045 = vld [vmem:[%s2010 + $0x88] sm:$0xf]
        %v2046 = vld [vmem:[%s2010 + $0x8c] sm:$0xf]
        %v2047 = vld [vmem:[%s2010 + $0x90] sm:$0xf]
        %v2048 = vld [vmem:[%s2010 + $0x94] sm:$0xf]
        %v2049 = vld [vmem:[%s2010 + $0x98] sm:$0xf]
        %v2050 = vld [vmem:[%s2010 + $0x9c] sm:$0xf]
        %v2051 = vld [vmem:[%s2010 + $0xa0] sm:$0xf]
        %v2052 = vld [vmem:[%s2010 + $0xa4] sm:$0xf]
        %v2053 = vld [vmem:[%s2010 + $0xa8] sm:$0xf]
        %v2054 = vld [vmem:[%s2010 + $0xac] sm:$0xf]
        %v2055 = vld [vmem:[%s2010 + $0xb0] sm:$0xf]
        %v2056 = vld [vmem:[%s2010 + $0xb4] sm:$0xf]
        %v2057 = vld [vmem:[%s2010 + $0xb8] sm:$0xf]
        %v2058 = vld [vmem:[%s2010 + $0xbc] sm:$0xf]
        %v2107 = vunpack.c.l.b16 %v2011
        %v2108 = vunpack.c.l.b16 %v2012
        %v2109 = vunpack.c.l.b16 %v2013
        %v2110 = vunpack.c.l.b16 %v2014
        %v2111 = vunpack.c.l.b16 %v2015
        %v2112 = vunpack.c.l.b16 %v2016
        %v2113 = vunpack.c.l.b16 %v2017
        %v2114 = vunpack.c.l.b16 %v2018
        %v2115 = vunpack.c.l.b16 %v2019
        %v2116 = vunpack.c.l.b16 %v2020
        %v2117 = vunpack.c.l.b16 %v2021
        %v2118 = vunpack.c.l.b16 %v2022
        %v2119 = vunpack.c.l.b16 %v2023
        %v2120 = vunpack.c.l.b16 %v2024
        %v2121 = vunpack.c.l.b16 %v2025
        %v2122 = vunpack.c.l.b16 %v2026
        %v2123 = vunpack.c.l.b16 %v2027
        %v2124 = vunpack.c.l.b16 %v2028
        %v2125 = vunpack.c.l.b16 %v2029
        %v2126 = vunpack.c.l.b16 %v2030
        %v2127 = vunpack.c.l.b16 %v2031
        %v2128 = vunpack.c.l.b16 %v2032
        %v2129 = vunpack.c.l.b16 %v2033
        %v2130 = vunpack.c.l.b16 %v2034
        %v2131 = vunpack.c.l.b16 %v2035
        %v2132 = vunpack.c.l.b16 %v2036
        %v2133 = vunpack.c.l.b16 %v2037
        %v2134 = vunpack.c.l.b16 %v2038
        %v2135 = vunpack.c.l.b16 %v2039
        %v2136 = vunpack.c.l.b16 %v2040
        %v2137 = vunpack.c.l.b16 %v2041
        %v2138 = vunpack.c.l.b16 %v2042
        %v2139 = vunpack.c.l.b16 %v2043
        %v2140 = vunpack.c.l.b16 %v2044
        %v2141 = vunpack.c.l.b16 %v2045
        %v2142 = vunpack.c.l.b16 %v2046
        %v2143 = vunpack.c.l.b16 %v2047
        %v2144 = vunpack.c.l.b16 %v2048
        %v2145 = vunpack.c.l.b16 %v2049
        %v2146 = vunpack.c.l.b16 %v2050
        %v2147 = vunpack.c.l.b16 %v2051
        %v2148 = vunpack.c.l.b16 %v2052
        %v2149 = vunpack.c.l.b16 %v2053
        %v2150 = vunpack.c.l.b16 %v2054
        %v2151 = vunpack.c.l.b16 %v2055
        %v2152 = vunpack.c.l.b16 %v2056
        %v2153 = vunpack.c.l.b16 %v2057
        %v2154 = vunpack.c.l.b16 %v2058
        %v2155 = vpack.c.b16 %v2108, %v2107
        %v2156 = vpack.c.b16 %v2110, %v2109
        %v2157 = vpack.c.b16 %v2112, %v2111
        %v2158 = vpack.c.b16 %v2114, %v2113
        %v2159 = vpack.c.b16 %v2116, %v2115
        %v2160 = vpack.c.b16 %v2118, %v2117
        %v2161 = vpack.c.b16 %v2120, %v2119
        %v2162 = vpack.c.b16 %v2122, %v2121
        %v2163 = vpack.c.b16 %v2124, %v2123
        %v2164 = vpack.c.b16 %v2126, %v2125
        %v2165 = vpack.c.b16 %v2128, %v2127
        %v2166 = vpack.c.b16 %v2130, %v2129
        %v2167 = vpack.c.b16 %v2132, %v2131
        %v2168 = vpack.c.b16 %v2134, %v2133
        %v2169 = vpack.c.b16 %v2136, %v2135
        %v2170 = vpack.c.b16 %v2138, %v2137
        %v2171 = vpack.c.b16 %v2140, %v2139
        %v2172 = vpack.c.b16 %v2142, %v2141
        %v2173 = vpack.c.b16 %v2144, %v2143
        %v2174 = vpack.c.b16 %v2146, %v2145
        %v2175 = vpack.c.b16 %v2148, %v2147
        %v2176 = vpack.c.b16 %v2150, %v2149
        %v2177 = vpack.c.b16 %v2152, %v2151
        %v2178 = vpack.c.b16 %v2154, %v2153
        %2203 = vmatprep.subr.bf16.mxu0 0
        %2204 = vmatpush1.bf16.msra.mxu0 %v2155
        %2205 = vmatprep.subr.bf16.mxu0 0
        %2206 = vmatpush1.bf16.msra.mxu0 %v2156
        %2207 = vmatprep.subr.bf16.mxu0 0
        %2208 = vmatpush1.bf16.msra.mxu0 %v2157
        %2209 = vmatprep.subr.bf16.mxu0 0
        %2210 = vmatpush1.bf16.msra.mxu0 %v2158
        %2211 = vmatprep.subr.bf16.mxu0 0
        %2212 = vmatpush1.bf16.msra.mxu0 %v2159
        %2213 = vmatprep.subr.bf16.mxu0 0
        %2214 = vmatpush1.bf16.msra.mxu0 %v2160
        %2215 = vmatprep.subr.bf16.mxu0 0
        %2216 = vmatpush1.bf16.msra.mxu0 %v2161
        %2217 = vmatprep.subr.bf16.mxu0 0
        %2218 = vmatpush1.bf16.msra.mxu0 %v2162
        %2219 = vmatprep.subr.bf16.mxu0 0
        %2220 = vmatpush1.bf16.msra.mxu0 %v2163
        %2221 = vmatprep.subr.bf16.mxu0 0
        %2222 = vmatpush1.bf16.msra.mxu0 %v2164
        %2223 = vmatprep.subr.bf16.mxu0 0
        %2224 = vmatpush1.bf16.msra.mxu0 %v2165
        %2225 = vmatprep.subr.bf16.mxu0 0
        %2226 = vmatpush1.bf16.msra.mxu0 %v2166
        %2227 = vmatprep.subr.bf16.mxu0 0
        %2228 = vmatpush1.bf16.msra.mxu0 %v2167
        %2229 = vmatprep.subr.bf16.mxu0 0
        %2230 = vmatpush1.bf16.msra.mxu0 %v2168
        %2231 = vmatprep.subr.bf16.mxu0 0
        %2232 = vmatpush1.bf16.msra.mxu0 %v2169
        %2233 = vmatprep.subr.bf16.mxu0 0
        %2234 = vmatpush1.bf16.msra.mxu0 %v2170
        %2235 = vmatprep.mubr.bf16.mxu0 %v1915
        %2236 = vmatmul.mubr.bf16.gmra.mrb[0].mxu0 %v1914
        %v2237 = vpop.f32.mrb[0].mxu0
        %v2238 = vadd.f32 0.0, %v2237
        %v2239 = vpop.f32.mrb[0].mxu0
        %v2240 = vpop.f32.mrb[0].mxu0
        %v2241 = vadd.f32 0.0, %v2240
        %v2242 = vpop.f32.mrb[0].mxu0
        %2243 = vmatprep.mubr.bf16.mxu0 %v1918
        %2244 = vmatmul.mubr.bf16.gmra.mrb[0].mxu0 %v1917
        %v2245 = vpop.f32.mrb[0].mxu0
        %v2246 = vadd.f32 0.0, %v2245
        %v2247 = vpop.f32.mrb[0].mxu0
        %v2248 = vpop.f32.mrb[0].mxu0
        %v2249 = vadd.f32 0.0, %v2248
        %v2250 = vpop.f32.mrb[0].mxu0
        %2251 = vmatprep.mubr.bf16.mxu0 %v1921
        %2252 = vmatmul.mubr.bf16.gmra.mrb[0].mxu0 %v1920
        %v2253 = vpop.f32.mrb[0].mxu0
        %v2254 = vadd.f32 0.0, %v2253
        %v2255 = vpop.f32.mrb[0].mxu0
        %v2256 = vpop.f32.mrb[0].mxu0
        %v2257 = vadd.f32 0.0, %v2256
        %v2258 = vpop.f32.mrb[0].mxu0
        %2259 = vmatprep.mubr.bf16.mxu0 %v1924
        %2260 = vmatmul.mubr.bf16.gmra.mrb[0].mxu0 %v1923
        %v2261 = vpop.f32.mrb[0].mxu0
        %v2262 = vadd.f32 0.0, %v2261
        %v2263 = vpop.f32.mrb[0].mxu0
        %v2264 = vpop.f32.mrb[0].mxu0
        %v2265 = vadd.f32 0.0, %v2264
        %v2266 = vpop.f32.mrb[0].mxu0
        %2267 = vmatprep.mubr.bf16.mxu0 %v1927
        %2268 = vmatmul.mubr.bf16.gmra.mrb[0].mxu0 %v1926
        %v2269 = vpop.f32.mrb[0].mxu0
        %v2270 = vadd.f32 0.0, %v2269
        %v2271 = vpop.f32.mrb[0].mxu0
        %v2272 = vpop.f32.mrb[0].mxu0
        %v2273 = vadd.f32 0.0, %v2272
        %v2274 = vpop.f32.mrb[0].mxu0
        %2275 = vmatprep.mubr.bf16.mxu0 %v1930
        %2276 = vmatmul.mubr.bf16.gmra.mrb[0].mxu0 %v1929
        %v2277 = vpop.f32.mrb[0].mxu0
        %v2278 = vadd.f32 0.0, %v2277
        %v2279 = vpop.f32.mrb[0].mxu0
        %v2280 = vpop.f32.mrb[0].mxu0
        %v2281 = vadd.f32 0.0, %v2280
        %v2282 = vpop.f32.mrb[0].mxu0
        %2283 = vmatprep.mubr.bf16.mxu0 %v1933
        %2284 = vmatmul.mubr.bf16.gmra.mrb[0].mxu0 %v1932
        %v2285 = vpop.f32.mrb[0].mxu0
        %v2286 = vadd.f32 0.0, %v2285
        %v2287 = vpop.f32.mrb[0].mxu0
        %v2288 = vpop.f32.mrb[0].mxu0
        %v2289 = vadd.f32 0.0, %v2288
        %v2290 = vpop.f32.mrb[0].mxu0
        %2291 = vmatprep.mubr.bf16.mxu0 %v1936
        %2292 = vmatmul.mubr.bf16.gmra.mrb[0].mxu0 %v1935
        %v2293 = vpop.f32.mrb[0].mxu0
        %v2294 = vadd.f32 0.0, %v2293
        %v2295 = vpop.f32.mrb[0].mxu0
        %v2296 = vpop.f32.mrb[0].mxu0
        %v2297 = vadd.f32 0.0, %v2296
        %v2298 = vpop.f32.mrb[0].mxu0
        %2299 = vmatprep.mubr.bf16.mxu0 %v1939
        %2300 = vmatmul.mubr.bf16.gmra.mrb[0].mxu0 %v1938
        %v2301 = vpop.f32.mrb[0].mxu0
        %v2302 = vadd.f32 0.0, %v2301
        %v2303 = vpop.f32.mrb[0].mxu0
        %v2304 = vpop.f32.mrb[0].mxu0
        %v2305 = vadd.f32 0.0, %v2304
        %v2306 = vpop.f32.mrb[0].mxu0
        %2307 = vmatprep.mubr.bf16.mxu0 %v1942
        %2308 = vmatmul.mubr.bf16.gmra.mrb[0].mxu0 %v1941
        %v2309 = vpop.f32.mrb[0].mxu0
        %v2310 = vadd.f32 0.0, %v2309
        %v2311 = vpop.f32.mrb[0].mxu0
        %v2312 = vpop.f32.mrb[0].mxu0
        %v2313 = vadd.f32 0.0, %v2312
        %v2314 = vpop.f32.mrb[0].mxu0
        %2315 = vmatprep.mubr.bf16.mxu0 %v1945
        %2316 = vmatmul.mubr.bf16.gmra.mrb[0].mxu0 %v1944
        %v2317 = vpop.f32.mrb[0].mxu0
        %v2318 = vadd.f32 0.0, %v2317
        %v2319 = vpop.f32.mrb[0].mxu0
        %v2320 = vpop.f32.mrb[0].mxu0
        %v2321 = vadd.f32 0.0, %v2320
        %v2322 = vpop.f32.mrb[0].mxu0
        %2323 = vmatprep.mubr.bf16.mxu0 %v1948
        %2324 = vmatmul.mubr.bf16.gmra.mrb[0].mxu0 %v1947
        %v2325 = vpop.f32.mrb[0].mxu0
        %v2326 = vadd.f32 0.0, %v2325
        %v2327 = vpop.f32.mrb[0].mxu0
        %v2328 = vpop.f32.mrb[0].mxu0
        %v2329 = vadd.f32 0.0, %v2328
        %v2330 = vpop.f32.mrb[0].mxu0
        %2331 = vmatprep.mubr.bf16.mxu0 %v1951
        %2332 = vmatmul.mubr.bf16.gmra.mrb[0].mxu0 %v1950
        %v2333 = vpop.f32.mrb[0].mxu0
        %v2334 = vadd.f32 0.0, %v2333
        %v2335 = vpop.f32.mrb[0].mxu0
        %v2336 = vpop.f32.mrb[0].mxu0
        %v2337 = vadd.f32 0.0, %v2336
        %v2338 = vpop.f32.mrb[0].mxu0
        %2339 = vmatprep.mubr.bf16.mxu0 %v1954
        %2340 = vmatmul.mubr.bf16.gmra.mrb[0].mxu0 %v1953
        %v2341 = vpop.f32.mrb[0].mxu0
        %v2342 = vadd.f32 0.0, %v2341
        %v2343 = vpop.f32.mrb[0].mxu0
        %v2344 = vpop.f32.mrb[0].mxu0
        %v2345 = vadd.f32 0.0, %v2344
        %v2346 = vpop.f32.mrb[0].mxu0
        %2347 = vmatprep.mubr.bf16.mxu0 %v2005
        %2348 = vmatmul.mubr.bf16.gmra.mrb[0].mxu0 %v2004
        %v2349 = vpop.f32.mrb[0].mxu0
        %v2350 = vadd.f32 0.0, %v2349
        %v2351 = vpop.f32.mrb[0].mxu0
        %v2352 = vpop.f32.mrb[0].mxu0
        %v2353 = vadd.f32 0.0, %v2352
        %v2354 = vpop.f32.mrb[0].mxu0
        %2355 = vmatprep.mubr.bf16.mxu0 %v2008
        %2356 = vmatmul.mubr.bf16.gmra.mrb[0].mxu0 %v2007
        %v2357 = vpop.f32.mrb[0].mxu0
        %v2358 = vadd.f32 0.0, %v2357
        %v2359 = vpop.f32.mrb[0].mxu0
        %v2360 = vpop.f32.mrb[0].mxu0
        %v2361 = vadd.f32 0.0, %v2360
        %v2362 = vpop.f32.mrb[0].mxu0
        %2363 = vdwg.mxu0
        %2364 = vmatprep.subr.bf16.mxu0 0
        %2365 = vmatpush1.bf16.msra.mxu0 %v2171
        %2366 = vmatprep.subr.bf16.mxu0 0
        %2367 = vmatpush1.bf16.msra.mxu0 %v2172
        %2368 = vmatprep.subr.bf16.mxu0 0
        %2369 = vmatpush1.bf16.msra.mxu0 %v2173
        %2370 = vmatprep.subr.bf16.mxu0 0
        %2371 = vmatpush1.bf16.msra.mxu0 %v2174
        %2372 = vmatprep.subr.bf16.mxu0 0
        %2373 = vmatpush1.bf16.msra.mxu0 %v2175
        %2374 = vmatprep.subr.bf16.mxu0 0
        %2375 = vmatpush1.bf16.msra.mxu0 %v2176
        %2376 = vmatprep.subr.bf16.mxu0 0
        %2377 = vmatpush1.bf16.msra.mxu0 %v2177
        %2378 = vmatprep.subr.bf16.mxu0 0
        %2379 = vmatpush1.bf16.msra.mxu0 %v2178
        %2380 = vmatprep.subr.bf16.mxu0 0
        %2381 = vmatpush1.bf16.msra.mxu0 0
        %2382 = vmatprep.subr.bf16.mxu0 0
        %2383 = vmatpush1.bf16.msra.mxu0 0
        %2384 = vmatprep.subr.bf16.mxu0 0
        %2385 = vmatpush1.bf16.msra.mxu0 0
        %2386 = vmatprep.subr.bf16.mxu0 0
        %2387 = vmatpush1.bf16.msra.mxu0 0
        %2388 = vmatprep.subr.bf16.mxu0 0
        %2389 = vmatpush1.bf16.msra.mxu0 0
        %2390 = vmatprep.subr.bf16.mxu0 0
        %2391 = vmatpush1.bf16.msra.mxu0 0
        %2392 = vmatprep.subr.bf16.mxu0 0
        %2393 = vmatpush1.bf16.msra.mxu0 0
        %2394 = vmatprep.subr.bf16.mxu0 0
        %2395 = vmatpush1.bf16.msra.mxu0 0
        %2396 = vmatprep.mubr.bf16.mxu0 0
        %2397 = vmatmul.mubr.bf16.gmra.mrb[0].mxu0 %v1916
        %v2398 = vpop.f32.mrb[0].mxu0
        %v2399 = vadd.f32 %v2238, %v2398
        %v2400 = vpop.f32.mrb[0].mxu0
        %v2401 = vpop.f32.mrb[0].mxu0
        %v2402 = vadd.f32 %v2241, %v2401
        %v2403 = vpop.f32.mrb[0].mxu0
        %2404 = vmatprep.mubr.bf16.mxu0 0
        %2405 = vmatmul.mubr.bf16.gmra.mrb[0].mxu0 %v1919
        %v2406 = vpop.f32.mrb[0].mxu0
        %v2407 = vadd.f32 %v2246, %v2406
        %v2408 = vpop.f32.mrb[0].mxu0
        %v2409 = vpop.f32.mrb[0].mxu0
        %v2410 = vadd.f32 %v2249, %v2409
        %v2411 = vpop.f32.mrb[0].mxu0
        %2412 = vmatprep.mubr.bf16.mxu0 0
        %2413 = vmatmul.mubr.bf16.gmra.mrb[0].mxu0 %v1922
        %v2414 = vpop.f32.mrb[0].mxu0
        %v2415 = vadd.f32 %v2254, %v2414
        %v2416 = vpop.f32.mrb[0].mxu0
        %v2417 = vpop.f32.mrb[0].mxu0
        %v2418 = vadd.f32 %v2257, %v2417
        %v2419 = vpop.f32.mrb[0].mxu0
        %2420 = vmatprep.mubr.bf16.mxu0 0
        %2421 = vmatmul.mubr.bf16.gmra.mrb[0].mxu0 %v1925
        %v2422 = vpop.f32.mrb[0].mxu0
        %v2423 = vadd.f32 %v2262, %v2422
        %v2424 = vpop.f32.mrb[0].mxu0
        %v2425 = vpop.f32.mrb[0].mxu0
        %v2426 = vadd.f32 %v2265, %v2425
        %v2427 = vpop.f32.mrb[0].mxu0
        %2428 = vmatprep.mubr.bf16.mxu0 0
        %2429 = vmatmul.mubr.bf16.gmra.mrb[0].mxu0 %v1928
        %v2430 = vpop.f32.mrb[0].mxu0
        %v2431 = vadd.f32 %v2270, %v2430
        %v2432 = vpop.f32.mrb[0].mxu0
        %v2433 = vpop.f32.mrb[0].mxu0
        %v2434 = vadd.f32 %v2273, %v2433
        %v2435 = vpop.f32.mrb[0].mxu0
        %2436 = vmatprep.mubr.bf16.mxu0 0
        %2437 = vmatmul.mubr.bf16.gmra.mrb[0].mxu0 %v1931
        %v2438 = vpop.f32.mrb[0].mxu0
        %v2439 = vadd.f32 %v2278, %v2438
        %v2440 = vpop.f32.mrb[0].mxu0
        %v2441 = vpop.f32.mrb[0].mxu0
        %v2442 = vadd.f32 %v2281, %v2441
        %v2443 = vpop.f32.mrb[0].mxu0
        %2444 = vmatprep.mubr.bf16.mxu0 0
        %2445 = vmatmul.mubr.bf16.gmra.mrb[0].mxu0 %v1934
        %v2446 = vpop.f32.mrb[0].mxu0
        %v2447 = vadd.f32 %v2286, %v2446
        %v2448 = vpop.f32.mrb[0].mxu0
        %v2449 = vpop.f32.mrb[0].mxu0
        %v2450 = vadd.f32 %v2289, %v2449
        %v2451 = vpop.f32.mrb[0].mxu0
        %2452 = vmatprep.mubr.bf16.mxu0 0
        %2453 = vmatmul.mubr.bf16.gmra.mrb[0].mxu0 %v1937
        %v2454 = vpop.f32.mrb[0].mxu0
        %v2455 = vadd.f32 %v2294, %v2454
        %v2456 = vpop.f32.mrb[0].mxu0
        %v2457 = vpop.f32.mrb[0].mxu0
        %v2458 = vadd.f32 %v2297, %v2457
        %v2459 = vpop.f32.mrb[0].mxu0
        %2460 = vmatprep.mubr.bf16.mxu0 0
        %2461 = vmatmul.mubr.bf16.gmra.mrb[0].mxu0 %v1940
        %v2462 = vpop.f32.mrb[0].mxu0
        %v2463 = vadd.f32 %v2302, %v2462
        %v2464 = vpop.f32.mrb[0].mxu0
        %v2465 = vpop.f32.mrb[0].mxu0
        %v2466 = vadd.f32 %v2305, %v2465
        %v2467 = vpop.f32.mrb[0].mxu0
        %2468 = vmatprep.mubr.bf16.mxu0 0
        %2469 = vmatmul.mubr.bf16.gmra.mrb[0].mxu0 %v1943
        %v2470 = vpop.f32.mrb[0].mxu0
        %v2471 = vadd.f32 %v2310, %v2470
        %v2472 = vpop.f32.mrb[0].mxu0
        %v2473 = vpop.f32.mrb[0].mxu0
        %v2474 = vadd.f32 %v2313, %v2473
        %v2475 = vpop.f32.mrb[0].mxu0
        %2476 = vmatprep.mubr.bf16.mxu0 0
        %2477 = vmatmul.mubr.bf16.gmra.mrb[0].mxu0 %v1946
        %v2478 = vpop.f32.mrb[0].mxu0
        %v2479 = vadd.f32 %v2318, %v2478
        %v2480 = vpop.f32.mrb[0].mxu0
        %v2481 = vpop.f32.mrb[0].mxu0
        %v2482 = vadd.f32 %v2321, %v2481
        %v2483 = vpop.f32.mrb[0].mxu0
        %2484 = vmatprep.mubr.bf16.mxu0 0
        %2485 = vmatmul.mubr.bf16.gmra.mrb[0].mxu0 %v1949
        %v2486 = vpop.f32.mrb[0].mxu0
        %v2487 = vadd.f32 %v2326, %v2486
        %v2488 = vpop.f32.mrb[0].mxu0
        %v2489 = vpop.f32.mrb[0].mxu0
        %v2490 = vadd.f32 %v2329, %v2489
        %v2491 = vpop.f32.mrb[0].mxu0
        %2492 = vmatprep.mubr.bf16.mxu0 0
        %2493 = vmatmul.mubr.bf16.gmra.mrb[0].mxu0 %v1952
        %v2494 = vpop.f32.mrb[0].mxu0
        %v2495 = vadd.f32 %v2334, %v2494
        %v2496 = vpop.f32.mrb[0].mxu0
        %v2497 = vpop.f32.mrb[0].mxu0
        %v2498 = vadd.f32 %v2337, %v2497
        %v2499 = vpop.f32.mrb[0].mxu0
        %2500 = vmatprep.mubr.bf16.mxu0 0
        %2501 = vmatmul.mubr.bf16.gmra.mrb[0].mxu0 %v1955
        %v2502 = vpop.f32.mrb[0].mxu0
        %v2503 = vadd.f32 %v2342, %v2502
        %v2504 = vpop.f32.mrb[0].mxu0
        %v2505 = vpop.f32.mrb[0].mxu0
        %v2506 = vadd.f32 %v2345, %v2505
        %v2507 = vpop.f32.mrb[0].mxu0
        %2508 = vmatprep.mubr.bf16.mxu0 0
        %2509 = vmatmul.mubr.bf16.gmra.mrb[0].mxu0 %v2006
        %v2510 = vpop.f32.mrb[0].mxu0
        %v2511 = vadd.f32 %v2350, %v2510
        %v2512 = vpop.f32.mrb[0].mxu0
        %v2513 = vpop.f32.mrb[0].mxu0
        %v2514 = vadd.f32 %v2353, %v2513
        %v2515 = vpop.f32.mrb[0].mxu0
        %2516 = vmatprep.mubr.bf16.mxu0 0
        %2517 = vmatmul.mubr.bf16.gmra.mrb[0].mxu0 %v2009
        %v2518 = vpop.f32.mrb[0].mxu0
        %v2519 = vadd.f32 %v2358, %v2518
        %v2520 = vpop.f32.mrb[0].mxu0
        %v2521 = vpop.f32.mrb[0].mxu0
        %v2522 = vadd.f32 %v2361, %v2521
        %v2523 = vpop.f32.mrb[0].mxu0
        %2524 = vdwg.mxu0
        %v2573 = vunpack.c.l.b16 %v1956
        %v2574 = vunpack.c.l.b16 %v1957
        %v2575 = vunpack.c.l.b16 %v1958
        %v2576 = vunpack.c.l.b16 %v1959
        %v2577 = vunpack.c.l.b16 %v1960
        %v2578 = vunpack.c.l.b16 %v1961
        %v2579 = vunpack.c.l.b16 %v1962
        %v2580 = vunpack.c.l.b16 %v1963
        %v2581 = vunpack.c.l.b16 %v1964
        %v2582 = vunpack.c.l.b16 %v1965
        %v2583 = vunpack.c.l.b16 %v1966
        %v2584 = vunpack.c.l.b16 %v1967
        %v2585 = vunpack.c.l.b16 %v1968
        %v2586 = vunpack.c.l.b16 %v1969
        %v2587 = vunpack.c.l.b16 %v1970
        %v2588 = vunpack.c.l.b16 %v1971
        %v2589 = vunpack.c.l.b16 %v1972
        %v2590 = vunpack.c.l.b16 %v1973
        %v2591 = vunpack.c.l.b16 %v1974
        %v2592 = vunpack.c.l.b16 %v1975
        %v2593 = vunpack.c.l.b16 %v1976
        %v2594 = vunpack.c.l.b16 %v1977
        %v2595 = vunpack.c.l.b16 %v1978
        %v2596 = vunpack.c.l.b16 %v1979
        %v2597 = vunpack.c.l.b16 %v1980
        %v2598 = vunpack.c.l.b16 %v1981
        %v2599 = vunpack.c.l.b16 %v1982
        %v2600 = vunpack.c.l.b16 %v1983
        %v2601 = vunpack.c.l.b16 %v1984
        %v2602 = vunpack.c.l.b16 %v1985
        %v2603 = vunpack.c.l.b16 %v1986
        %v2604 = vunpack.c.l.b16 %v1987
        %v2605 = vunpack.c.l.b16 %v1988
        %v2606 = vunpack.c.l.b16 %v1989
        %v2607 = vunpack.c.l.b16 %v1990
        %v2608 = vunpack.c.l.b16 %v1991
        %v2609 = vunpack.c.l.b16 %v1992
        %v2610 = vunpack.c.l.b16 %v1993
        %v2611 = vunpack.c.l.b16 %v1994
        %v2612 = vunpack.c.l.b16 %v1995
        %v2613 = vunpack.c.l.b16 %v1996
        %v2614 = vunpack.c.l.b16 %v1997
        %v2615 = vunpack.c.l.b16 %v1998
        %v2616 = vunpack.c.l.b16 %v1999
        %v2617 = vunpack.c.l.b16 %v2000
        %v2618 = vunpack.c.l.b16 %v2001
        %v2619 = vunpack.c.l.b16 %v2002
        %v2620 = vunpack.c.l.b16 %v2003
        %v2621 = vpack.c.b16 %v2574, %v2573
        %v2622 = vpack.c.b16 %v2576, %v2575
        %v2623 = vpack.c.b16 %v2578, %v2577
        %v2624 = vpack.c.b16 %v2580, %v2579
        %v2625 = vpack.c.b16 %v2582, %v2581
        %v2626 = vpack.c.b16 %v2584, %v2583
        %v2627 = vpack.c.b16 %v2586, %v2585
        %v2628 = vpack.c.b16 %v2588, %v2587
        %v2629 = vpack.c.b16 %v2590, %v2589
        %v2630 = vpack.c.b16 %v2592, %v2591
        %v2631 = vpack.c.b16 %v2594, %v2593
        %v2632 = vpack.c.b16 %v2596, %v2595
        %v2633 = vpack.c.b16 %v2598, %v2597
        %v2634 = vpack.c.b16 %v2600, %v2599
        %v2635 = vpack.c.b16 %v2602, %v2601
        %v2636 = vpack.c.b16 %v2604, %v2603
        %v2637 = vpack.c.b16 %v2606, %v2605
        %v2638 = vpack.c.b16 %v2608, %v2607
        %v2639 = vpack.c.b16 %v2610, %v2609
        %v2640 = vpack.c.b16 %v2612, %v2611
        %v2641 = vpack.c.b16 %v2614, %v2613
        %v2642 = vpack.c.b16 %v2616, %v2615
        %v2643 = vpack.c.b16 %v2618, %v2617
        %v2644 = vpack.c.b16 %v2620, %v2619
        %2669 = vmatprep.subr.bf16.mxu0 0
        %2670 = vmatpush1.bf16.msra.mxu0 %v2621
        %2671 = vmatprep.subr.bf16.mxu0 0
        %2672 = vmatpush1.bf16.msra.mxu0 %v2622
        %2673 = vmatprep.subr.bf16.mxu0 0
        %2674 = vmatpush1.bf16.msra.mxu0 %v2623
        %2675 = vmatprep.subr.bf16.mxu0 0
        %2676 = vmatpush1.bf16.msra.mxu0 %v2624
        %2677 = vmatprep.subr.bf16.mxu0 0
        %2678 = vmatpush1.bf16.msra.mxu0 %v2625
        %2679 = vmatprep.subr.bf16.mxu0 0
        %2680 = vmatpush1.bf16.msra.mxu0 %v2626
        %2681 = vmatprep.subr.bf16.mxu0 0
        %2682 = vmatpush1.bf16.msra.mxu0 %v2627
        %2683 = vmatprep.subr.bf16.mxu0 0
        %2684 = vmatpush1.bf16.msra.mxu0 %v2628
        %2685 = vmatprep.subr.bf16.mxu0 0
        %2686 = vmatpush1.bf16.msra.mxu0 %v2629
        %2687 = vmatprep.subr.bf16.mxu0 0
        %2688 = vmatpush1.bf16.msra.mxu0 %v2630
        %2689 = vmatprep.subr.bf16.mxu0 0
        %2690 = vmatpush1.bf16.msra.mxu0 %v2631
        %2691 = vmatprep.subr.bf16.mxu0 0
        %2692 = vmatpush1.bf16.msra.mxu0 %v2632
        %2693 = vmatprep.subr.bf16.mxu0 0
        %2694 = vmatpush1.bf16.msra.mxu0 %v2633
        %2695 = vmatprep.subr.bf16.mxu0 0
        %2696 = vmatpush1.bf16.msra.mxu0 %v2634
        %2697 = vmatprep.subr.bf16.mxu0 0
        %2698 = vmatpush1.bf16.msra.mxu0 %v2635
        %2699 = vmatprep.subr.bf16.mxu0 0
        %2700 = vmatpush1.bf16.msra.mxu0 %v2636
        %2701 = vmatprep.mubr.bf16.mxu0 %v1909
        %2702 = vmatmul.mubr.bf16.gmra.mrb[0].mxu0 %v1908
        %v2703 = vpop.f32.mrb[0].mxu0
        %v2704 = vadd.f32 %v2399, %v2703
        %v2705 = vpop.f32.mrb[0].mxu0
        %v2706 = vpop.f32.mrb[0].mxu0
        %v2707 = vadd.f32 %v2402, %v2706
        %v2708 = vpop.f32.mrb[0].mxu0
        %2709 = vmatprep.mubr.bf16.mxu0 %v1912
        %2710 = vmatmul.mubr.bf16.gmra.mrb[0].mxu0 %v1911
        %v2711 = vpop.f32.mrb[0].mxu0
        %v2712 = vadd.f32 %v2407, %v2711
        %v2713 = vpop.f32.mrb[0].mxu0
        %v2714 = vpop.f32.mrb[0].mxu0
        %v2715 = vadd.f32 %v2410, %v2714
        %v2716 = vpop.f32.mrb[0].mxu0
        %2717 = vmatprep.mubr.bf16.mxu0 %v1915
        %2718 = vmatmul.mubr.bf16.gmra.mrb[0].mxu0 %v1914
        %v2719 = vpop.f32.mrb[0].mxu0
        %v2720 = vadd.f32 %v2415, %v2719
        %v2721 = vpop.f32.mrb[0].mxu0
        %v2722 = vpop.f32.mrb[0].mxu0
        %v2723 = vadd.f32 %v2418, %v2722
        %v2724 = vpop.f32.mrb[0].mxu0
        %2725 = vmatprep.mubr.bf16.mxu0 %v1918
        %2726 = vmatmul.mubr.bf16.gmra.mrb[0].mxu0 %v1917
        %v2727 = vpop.f32.mrb[0].mxu0
        %v2728 = vadd.f32 %v2423, %v2727
        %v2729 = vpop.f32.mrb[0].mxu0
        %v2730 = vpop.f32.mrb[0].mxu0
        %v2731 = vadd.f32 %v2426, %v2730
        %v2732 = vpop.f32.mrb[0].mxu0
        %2733 = vmatprep.mubr.bf16.mxu0 %v1921
        %2734 = vmatmul.mubr.bf16.gmra.mrb[0].mxu0 %v1920
        %v2735 = vpop.f32.mrb[0].mxu0
        %v2736 = vadd.f32 %v2431, %v2735
        %v2737 = vpop.f32.mrb[0].mxu0
        %v2738 = vpop.f32.mrb[0].mxu0
        %v2739 = vadd.f32 %v2434, %v2738
        %v2740 = vpop.f32.mrb[0].mxu0
        %2741 = vmatprep.mubr.bf16.mxu0 %v1924
        %2742 = vmatmul.mubr.bf16.gmra.mrb[0].mxu0 %v1923
        %v2743 = vpop.f32.mrb[0].mxu0
        %v2744 = vadd.f32 %v2439, %v2743
        %v2745 = vpop.f32.mrb[0].mxu0
        %v2746 = vpop.f32.mrb[0].mxu0
        %v2747 = vadd.f32 %v2442, %v2746
        %v2748 = vpop.f32.mrb[0].mxu0
        %2749 = vmatprep.mubr.bf16.mxu0 %v1927
        %2750 = vmatmul.mubr.bf16.gmra.mrb[0].mxu0 %v1926
        %v2751 = vpop.f32.mrb[0].mxu0
        %v2752 = vadd.f32 %v2447, %v2751
        %v2753 = vpop.f32.mrb[0].mxu0
        %v2754 = vpop.f32.mrb[0].mxu0
        %v2755 = vadd.f32 %v2450, %v2754
        %v2756 = vpop.f32.mrb[0].mxu0
        %2757 = vmatprep.mubr.bf16.mxu0 %v1930
        %2758 = vmatmul.mubr.bf16.gmra.mrb[0].mxu0 %v1929
        %v2759 = vpop.f32.mrb[0].mxu0
        %v2760 = vadd.f32 %v2455, %v2759
        %v2761 = vpop.f32.mrb[0].mxu0
        %v2762 = vpop.f32.mrb[0].mxu0
        %v2763 = vadd.f32 %v2458, %v2762
        %v2764 = vpop.f32.mrb[0].mxu0
        %2765 = vmatprep.mubr.bf16.mxu0 %v1933
        %2766 = vmatmul.mubr.bf16.gmra.mrb[0].mxu0 %v1932
        %v2767 = vpop.f32.mrb[0].mxu0
        %v2768 = vadd.f32 %v2463, %v2767
        %v2769 = vpop.f32.mrb[0].mxu0
        %v2770 = vpop.f32.mrb[0].mxu0
        %v2771 = vadd.f32 %v2466, %v2770
        %v2772 = vpop.f32.mrb[0].mxu0
        %2773 = vmatprep.mubr.bf16.mxu0 %v1936
        %2774 = vmatmul.mubr.bf16.gmra.mrb[0].mxu0 %v1935
        %v2775 = vpop.f32.mrb[0].mxu0
        %v2776 = vadd.f32 %v2471, %v2775
        %v2777 = vpop.f32.mrb[0].mxu0
        %v2778 = vpop.f32.mrb[0].mxu0
        %v2779 = vadd.f32 %v2474, %v2778
        %v2780 = vpop.f32.mrb[0].mxu0
        %2781 = vmatprep.mubr.bf16.mxu0 %v1939
        %2782 = vmatmul.mubr.bf16.gmra.mrb[0].mxu0 %v1938
        %v2783 = vpop.f32.mrb[0].mxu0
        %v2784 = vadd.f32 %v2479, %v2783
        %v2785 = vpop.f32.mrb[0].mxu0
        %v2786 = vpop.f32.mrb[0].mxu0
        %v2787 = vadd.f32 %v2482, %v2786
        %v2788 = vpop.f32.mrb[0].mxu0
        %2789 = vmatprep.mubr.bf16.mxu0 %v1942
        %2790 = vmatmul.mubr.bf16.gmra.mrb[0].mxu0 %v1941
        %v2791 = vpop.f32.mrb[0].mxu0
        %v2792 = vadd.f32 %v2487, %v2791
        %v2793 = vpop.f32.mrb[0].mxu0
        %v2794 = vpop.f32.mrb[0].mxu0
        %v2795 = vadd.f32 %v2490, %v2794
        %v2796 = vpop.f32.mrb[0].mxu0
        %2797 = vmatprep.mubr.bf16.mxu0 %v1945
        %2798 = vmatmul.mubr.bf16.gmra.mrb[0].mxu0 %v1944
        %v2799 = vpop.f32.mrb[0].mxu0
        %v2800 = vadd.f32 %v2495, %v2799
        %v2801 = vpop.f32.mrb[0].mxu0
        %v2802 = vpop.f32.mrb[0].mxu0
        %v2803 = vadd.f32 %v2498, %v2802
        %v2804 = vpop.f32.mrb[0].mxu0
        %2805 = vmatprep.mubr.bf16.mxu0 %v1948
        %2806 = vmatmul.mubr.bf16.gmra.mrb[0].mxu0 %v1947
        %v2807 = vpop.f32.mrb[0].mxu0
        %v2808 = vadd.f32 %v2503, %v2807
        %v2809 = vpop.f32.mrb[0].mxu0
        %v2810 = vpop.f32.mrb[0].mxu0
        %v2811 = vadd.f32 %v2506, %v2810
        %v2812 = vpop.f32.mrb[0].mxu0
        %2813 = vmatprep.mubr.bf16.mxu0 %v1951
        %2814 = vmatmul.mubr.bf16.gmra.mrb[0].mxu0 %v1950
        %v2815 = vpop.f32.mrb[0].mxu0
        %v2816 = vadd.f32 %v2511, %v2815
        %v2817 = vpop.f32.mrb[0].mxu0
        %v2818 = vpop.f32.mrb[0].mxu0
        %v2819 = vadd.f32 %v2514, %v2818
        %v2820 = vpop.f32.mrb[0].mxu0
        %2821 = vmatprep.mubr.bf16.mxu0 %v1954
        %2822 = vmatmul.mubr.bf16.gmra.mrb[0].mxu0 %v1953
        %v2823 = vpop.f32.mrb[0].mxu0
        %v2824 = vadd.f32 %v2519, %v2823
        %v2825 = vpop.f32.mrb[0].mxu0
        %v2826 = vpop.f32.mrb[0].mxu0
        %v2827 = vadd.f32 %v2522, %v2826
        %v2828 = vpop.f32.mrb[0].mxu0
        %2829 = vdwg.mxu0
        %2830 = vmatprep.subr.bf16.mxu0 0
        %2831 = vmatpush1.bf16.msra.mxu0 %v2637
        %2832 = vmatprep.subr.bf16.mxu0 0
        %2833 = vmatpush1.bf16.msra.mxu0 %v2638
        %2834 = vmatprep.subr.bf16.mxu0 0
        %2835 = vmatpush1.bf16.msra.mxu0 %v2639
        %2836 = vmatprep.subr.bf16.mxu0 0
        %2837 = vmatpush1.bf16.msra.mxu0 %v2640
        %2838 = vmatprep.subr.bf16.mxu0 0
        %2839 = vmatpush1.bf16.msra.mxu0 %v2641
        %2840 = vmatprep.subr.bf16.mxu0 0
        %2841 = vmatpush1.bf16.msra.mxu0 %v2642
        %2842 = vmatprep.subr.bf16.mxu0 0
        %2843 = vmatpush1.bf16.msra.mxu0 %v2643
        %2844 = vmatprep.subr.bf16.mxu0 0
        %2845 = vmatpush1.bf16.msra.mxu0 %v2644
        %2846 = vmatprep.subr.bf16.mxu0 0
        %2847 = vmatpush1.bf16.msra.mxu0 0
        %2848 = vmatprep.subr.bf16.mxu0 0
        %2849 = vmatpush1.bf16.msra.mxu0 0
        %2850 = vmatprep.subr.bf16.mxu0 0
        %2851 = vmatpush1.bf16.msra.mxu0 0
        %2852 = vmatprep.subr.bf16.mxu0 0
        %2853 = vmatpush1.bf16.msra.mxu0 0
        %2854 = vmatprep.subr.bf16.mxu0 0
        %2855 = vmatpush1.bf16.msra.mxu0 0
        %2856 = vmatprep.subr.bf16.mxu0 0
        %2857 = vmatpush1.bf16.msra.mxu0 0
        %2858 = vmatprep.subr.bf16.mxu0 0
        %2859 = vmatpush1.bf16.msra.mxu0 0
        %2860 = vmatprep.subr.bf16.mxu0 0
        %2861 = vmatpush1.bf16.msra.mxu0 0
        %2862 = vmatprep.mubr.bf16.mxu0 0
        %2863 = vmatmul.mubr.bf16.gmra.mrb[0].mxu0 %v1910
        %v2864 = vpop.f32.mrb[0].mxu0
        %v2865 = vadd.f32 %v2704, %v2864
        %v2866 = vpop.f32.mrb[0].mxu0
        %v2867 = vpop.f32.mrb[0].mxu0
        %v2868 = vadd.f32 %v2707, %v2867
        %v2869 = vpop.f32.mrb[0].mxu0
        %2870 = vmatprep.mubr.bf16.mxu0 0
        %2871 = vmatmul.mubr.bf16.gmra.mrb[0].mxu0 %v1913
        %v2872 = vpop.f32.mrb[0].mxu0
        %v2873 = vadd.f32 %v2712, %v2872
        %v2874 = vpop.f32.mrb[0].mxu0
        %v2875 = vpop.f32.mrb[0].mxu0
        %v2876 = vadd.f32 %v2715, %v2875
        %v2877 = vpop.f32.mrb[0].mxu0
        %2878 = vmatprep.mubr.bf16.mxu0 0
        %2879 = vmatmul.mubr.bf16.gmra.mrb[0].mxu0 %v1916
        %v2880 = vpop.f32.mrb[0].mxu0
        %v2881 = vadd.f32 %v2720, %v2880
        %v2882 = vpop.f32.mrb[0].mxu0
        %v2883 = vpop.f32.mrb[0].mxu0
        %v2884 = vadd.f32 %v2723, %v2883
        %v2885 = vpop.f32.mrb[0].mxu0
        %2886 = vmatprep.mubr.bf16.mxu0 0
        %2887 = vmatmul.mubr.bf16.gmra.mrb[0].mxu0 %v1919
        %v2888 = vpop.f32.mrb[0].mxu0
        %v2889 = vadd.f32 %v2728, %v2888
        %v2890 = vpop.f32.mrb[0].mxu0
        %v2891 = vpop.f32.mrb[0].mxu0
        %v2892 = vadd.f32 %v2731, %v2891
        %v2893 = vpop.f32.mrb[0].mxu0
        %2894 = vmatprep.mubr.bf16.mxu0 0
        %2895 = vmatmul.mubr.bf16.gmra.mrb[0].mxu0 %v1922
        %v2896 = vpop.f32.mrb[0].mxu0
        %v2897 = vadd.f32 %v2736, %v2896
        %v2898 = vpop.f32.mrb[0].mxu0
        %v2899 = vpop.f32.mrb[0].mxu0
        %v2900 = vadd.f32 %v2739, %v2899
        %v2901 = vpop.f32.mrb[0].mxu0
        %2902 = vmatprep.mubr.bf16.mxu0 0
        %2903 = vmatmul.mubr.bf16.gmra.mrb[0].mxu0 %v1925
        %v2904 = vpop.f32.mrb[0].mxu0
        %v2905 = vadd.f32 %v2744, %v2904
        %v2906 = vpop.f32.mrb[0].mxu0
        %v2907 = vpop.f32.mrb[0].mxu0
        %v2908 = vadd.f32 %v2747, %v2907
        %v2909 = vpop.f32.mrb[0].mxu0
        %2910 = vmatprep.mubr.bf16.mxu0 0
        %2911 = vmatmul.mubr.bf16.gmra.mrb[0].mxu0 %v1928
        %v2912 = vpop.f32.mrb[0].mxu0
        %v2913 = vadd.f32 %v2752, %v2912
        %v2914 = vpop.f32.mrb[0].mxu0
        %v2915 = vpop.f32.mrb[0].mxu0
        %v2916 = vadd.f32 %v2755, %v2915
        %v2917 = vpop.f32.mrb[0].mxu0
        %2918 = vmatprep.mubr.bf16.mxu0 0
        %2919 = vmatmul.mubr.bf16.gmra.mrb[0].mxu0 %v1931
        %v2920 = vpop.f32.mrb[0].mxu0
        %v2921 = vadd.f32 %v2760, %v2920
        %v2922 = vpop.f32.mrb[0].mxu0
        %v2923 = vpop.f32.mrb[0].mxu0
        %v2924 = vadd.f32 %v2763, %v2923
        %v2925 = vpop.f32.mrb[0].mxu0
        %2926 = vmatprep.mubr.bf16.mxu0 0
        %2927 = vmatmul.mubr.bf16.gmra.mrb[0].mxu0 %v1934
        %v2928 = vpop.f32.mrb[0].mxu0
        %v2929 = vadd.f32 %v2768, %v2928
        %v2930 = vpop.f32.mrb[0].mxu0
        %v2931 = vpop.f32.mrb[0].mxu0
        %v2932 = vadd.f32 %v2771, %v2931
        %v2933 = vpop.f32.mrb[0].mxu0
        %2934 = vmatprep.mubr.bf16.mxu0 0
        %2935 = vmatmul.mubr.bf16.gmra.mrb[0].mxu0 %v1937
        %v2936 = vpop.f32.mrb[0].mxu0
        %v2937 = vadd.f32 %v2776, %v2936
        %v2938 = vpop.f32.mrb[0].mxu0
        %v2939 = vpop.f32.mrb[0].mxu0
        %v2940 = vadd.f32 %v2779, %v2939
        %v2941 = vpop.f32.mrb[0].mxu0
        %2942 = vmatprep.mubr.bf16.mxu0 0
        %2943 = vmatmul.mubr.bf16.gmra.mrb[0].mxu0 %v1940
        %v2944 = vpop.f32.mrb[0].mxu0
        %v2945 = vadd.f32 %v2784, %v2944
        %v2946 = vpop.f32.mrb[0].mxu0
        %v2947 = vpop.f32.mrb[0].mxu0
        %v2948 = vadd.f32 %v2787, %v2947
        %v2949 = vpop.f32.mrb[0].mxu0
        %2950 = vmatprep.mubr.bf16.mxu0 0
        %2951 = vmatmul.mubr.bf16.gmra.mrb[0].mxu0 %v1943
        %v2952 = vpop.f32.mrb[0].mxu0
        %v2953 = vadd.f32 %v2792, %v2952
        %v2954 = vpop.f32.mrb[0].mxu0
        %v2955 = vpop.f32.mrb[0].mxu0
        %v2956 = vadd.f32 %v2795, %v2955
        %v2957 = vpop.f32.mrb[0].mxu0
        %2958 = vmatprep.mubr.bf16.mxu0 0
        %2959 = vmatmul.mubr.bf16.gmra.mrb[0].mxu0 %v1946
        %v2960 = vpop.f32.mrb[0].mxu0
        %v2961 = vadd.f32 %v2800, %v2960
        %v2962 = vpop.f32.mrb[0].mxu0
        %v2963 = vpop.f32.mrb[0].mxu0
        %v2964 = vadd.f32 %v2803, %v2963
        %v2965 = vpop.f32.mrb[0].mxu0
        %2966 = vmatprep.mubr.bf16.mxu0 0
        %2967 = vmatmul.mubr.bf16.gmra.mrb[0].mxu0 %v1949
        %v2968 = vpop.f32.mrb[0].mxu0
        %v2969 = vadd.f32 %v2808, %v2968
        %v2970 = vpop.f32.mrb[0].mxu0
        %v2971 = vpop.f32.mrb[0].mxu0
        %v2972 = vadd.f32 %v2811, %v2971
        %v2973 = vpop.f32.mrb[0].mxu0
        %2974 = vmatprep.mubr.bf16.mxu0 0
        %2975 = vmatmul.mubr.bf16.gmra.mrb[0].mxu0 %v1952
        %v2976 = vpop.f32.mrb[0].mxu0
        %v2977 = vadd.f32 %v2816, %v2976
        %v2978 = vpop.f32.mrb[0].mxu0
        %v2979 = vpop.f32.mrb[0].mxu0
        %v2980 = vadd.f32 %v2819, %v2979
        %v2981 = vpop.f32.mrb[0].mxu0
        %2982 = vmatprep.mubr.bf16.mxu0 0
        %2983 = vmatmul.mubr.bf16.gmra.mrb[0].mxu0 %v1955
        %v2984 = vpop.f32.mrb[0].mxu0
        %v2985 = vadd.f32 %v2824, %v2984
        %v2986 = vpop.f32.mrb[0].mxu0
        %v2987 = vpop.f32.mrb[0].mxu0
        %v2988 = vadd.f32 %v2827, %v2987
        %v2989 = vpop.f32.mrb[0].mxu0
        %2990 = vdwg.mxu0
        %v2991 = vld [vmem:[#allocation3 + $0x60] sm:$0xff]
        %v2992 = vld [vmem:[#allocation3 + $0x68] sm:$0xff]
        %v2993 = vld [vmem:[#allocation3 + $0x70] sm:$0xff]
        %v2994 = vld [vmem:[#allocation3 + $0x78] sm:$0xff]
        %v2995 = vld [vmem:[#allocation3 + $0x80] sm:$0xff]
        %v2996 = vld [vmem:[#allocation3 + $0x88] sm:$0xff]
        %v2997 = vld [vmem:[#allocation3 + $0x90] sm:$0xff]
        %v2998 = vld [vmem:[#allocation3 + $0x98] sm:$0xff]
        %v2999 = vld [vmem:[#allocation3 + $0xa0] sm:$0xff]
        %v3000 = vld [vmem:[#allocation3 + $0xa8] sm:$0xff]
        %v3001 = vld [vmem:[#allocation3 + $0xb0] sm:$0xff]
        %v3002 = vld [vmem:[#allocation3 + $0xb8] sm:$0xff]
        %v3003 = vld [vmem:[#allocation3 + $0xc0] sm:$0xff]
        %v3004 = vld [vmem:[#allocation3 + $0xc8] sm:$0xff]
        %v3005 = vld [vmem:[#allocation3 + $0xd0] sm:$0xff]
        %v3006 = vld [vmem:[#allocation3 + $0xd8] sm:$0xff]
        %v3007 = vld [vmem:[#allocation3 + $0xe0] sm:$0xff]
        %v3008 = vld [vmem:[#allocation3 + $0xe8] sm:$0xff]
        %v3009 = vld [vmem:[#allocation3 + $0xf0] sm:$0xff]
        %v3010 = vld [vmem:[#allocation3 + $0xf8] sm:$0xff]
        %v3011 = vld [vmem:[#allocation3 + $0x100] sm:$0xff]
        %v3012 = vld [vmem:[#allocation3 + $0x108] sm:$0xff]
        %v3013 = vld [vmem:[#allocation3 + $0x110] sm:$0xff]
        %v3014 = vld [vmem:[#allocation3 + $0x118] sm:$0xff]
        %v3015 = vld [vmem:[#allocation3 + $0x120] sm:$0xff]
        %v3016 = vld [vmem:[#allocation3 + $0x128] sm:$0xff]
        %v3017 = vld [vmem:[#allocation3 + $0x130] sm:$0xff]
        %v3018 = vld [vmem:[#allocation3 + $0x138] sm:$0xff]
        %v3019 = vld [vmem:[#allocation3 + $0x140] sm:$0xff]
        %v3020 = vld [vmem:[#allocation3 + $0x148] sm:$0xff]
        %v3021 = vld [vmem:[#allocation3 + $0x150] sm:$0xff]
        %v3022 = vld [vmem:[#allocation3 + $0x158] sm:$0xff]
        %v3023 = vld [vmem:[#allocation3 + $0x160] sm:$0xff]
        %v3024 = vld [vmem:[#allocation3 + $0x168] sm:$0xff]
        %v3025 = vld [vmem:[#allocation3 + $0x170] sm:$0xff]
        %v3026 = vld [vmem:[#allocation3 + $0x178] sm:$0xff]
        %v3027 = vld [vmem:[#allocation3 + $0x180] sm:$0xff]
        %v3028 = vld [vmem:[#allocation3 + $0x188] sm:$0xff]
        %v3029 = vld [vmem:[#allocation3 + $0x190] sm:$0xff]
        %v3030 = vld [vmem:[#allocation3 + $0x198] sm:$0xff]
        %v3031 = vld [vmem:[#allocation3 + $0x1a0] sm:$0xff]
        %v3032 = vld [vmem:[#allocation3 + $0x1a8] sm:$0xff]
        %v3033 = vld [vmem:[#allocation3 + $0x1b0] sm:$0xff]
        %v3034 = vld [vmem:[#allocation3 + $0x1b8] sm:$0xff]
        %v3035 = vld [vmem:[#allocation3 + $0x1c0] sm:$0xff]
        %v3036 = vld [vmem:[#allocation3 + $0x1c8] sm:$0xff]
        %v3037 = vld [vmem:[#allocation3 + $0x1d0] sm:$0xff]
        %v3038 = vld [vmem:[#allocation3 + $0x1d8] sm:$0xff]
        %s3039 = scalar_lea.vmem [#allocation9], 384
        %v3040 = vld [vmem:[%s3039] sm:$0xf]
        %v3041 = vld [vmem:[%s3039 + $0x4] sm:$0xf]
        %v3042 = vld [vmem:[%s3039 + $0x8] sm:$0xf]
        %v3043 = vld [vmem:[%s3039 + $0xc] sm:$0xf]
        %v3044 = vld [vmem:[%s3039 + $0x10] sm:$0xf]
        %v3045 = vld [vmem:[%s3039 + $0x14] sm:$0xf]
        %v3046 = vld [vmem:[%s3039 + $0x18] sm:$0xf]
        %v3047 = vld [vmem:[%s3039 + $0x1c] sm:$0xf]
        %v3048 = vld [vmem:[%s3039 + $0x20] sm:$0xf]
        %v3049 = vld [vmem:[%s3039 + $0x24] sm:$0xf]
        %v3050 = vld [vmem:[%s3039 + $0x28] sm:$0xf]
        %v3051 = vld [vmem:[%s3039 + $0x2c] sm:$0xf]
        %v3052 = vld [vmem:[%s3039 + $0x30] sm:$0xf]
        %v3053 = vld [vmem:[%s3039 + $0x34] sm:$0xf]
        %v3054 = vld [vmem:[%s3039 + $0x38] sm:$0xf]
        %v3055 = vld [vmem:[%s3039 + $0x3c] sm:$0xf]
        %v3056 = vld [vmem:[%s3039 + $0x40] sm:$0xf]
        %v3057 = vld [vmem:[%s3039 + $0x44] sm:$0xf]
        %v3058 = vld [vmem:[%s3039 + $0x48] sm:$0xf]
        %v3059 = vld [vmem:[%s3039 + $0x4c] sm:$0xf]
        %v3060 = vld [vmem:[%s3039 + $0x50] sm:$0xf]
        %v3061 = vld [vmem:[%s3039 + $0x54] sm:$0xf]
        %v3062 = vld [vmem:[%s3039 + $0x58] sm:$0xf]
        %v3063 = vld [vmem:[%s3039 + $0x5c] sm:$0xf]
        %v3064 = vld [vmem:[%s3039 + $0x60] sm:$0xf]
        %v3065 = vld [vmem:[%s3039 + $0x64] sm:$0xf]
        %v3066 = vld [vmem:[%s3039 + $0x68] sm:$0xf]
        %v3067 = vld [vmem:[%s3039 + $0x6c] sm:$0xf]
        %v3068 = vld [vmem:[%s3039 + $0x70] sm:$0xf]
        %v3069 = vld [vmem:[%s3039 + $0x74] sm:$0xf]
        %v3070 = vld [vmem:[%s3039 + $0x78] sm:$0xf]
        %v3071 = vld [vmem:[%s3039 + $0x7c] sm:$0xf]
        %v3072 = vld [vmem:[%s3039 + $0x80] sm:$0xf]
        %v3073 = vld [vmem:[%s3039 + $0x84] sm:$0xf]
        %v3074 = vld [vmem:[%s3039 + $0x88] sm:$0xf]
        %v3075 = vld [vmem:[%s3039 + $0x8c] sm:$0xf]
        %v3076 = vld [vmem:[%s3039 + $0x90] sm:$0xf]
        %v3077 = vld [vmem:[%s3039 + $0x94] sm:$0xf]
        %v3078 = vld [vmem:[%s3039 + $0x98] sm:$0xf]
        %v3079 = vld [vmem:[%s3039 + $0x9c] sm:$0xf]
        %v3080 = vld [vmem:[%s3039 + $0xa0] sm:$0xf]
        %v3081 = vld [vmem:[%s3039 + $0xa4] sm:$0xf]
        %v3082 = vld [vmem:[%s3039 + $0xa8] sm:$0xf]
        %v3083 = vld [vmem:[%s3039 + $0xac] sm:$0xf]
        %v3084 = vld [vmem:[%s3039 + $0xb0] sm:$0xf]
        %v3085 = vld [vmem:[%s3039 + $0xb4] sm:$0xf]
        %v3086 = vld [vmem:[%s3039 + $0xb8] sm:$0xf]
        %v3087 = vld [vmem:[%s3039 + $0xbc] sm:$0xf]
        %v3136 = vunpack.c.l.b16 %v3040
        %v3137 = vunpack.c.l.b16 %v3041
        %v3138 = vunpack.c.l.b16 %v3042
        %v3139 = vunpack.c.l.b16 %v3043
        %v3140 = vunpack.c.l.b16 %v3044
        %v3141 = vunpack.c.l.b16 %v3045
        %v3142 = vunpack.c.l.b16 %v3046
        %v3143 = vunpack.c.l.b16 %v3047
        %v3144 = vunpack.c.l.b16 %v3048
        %v3145 = vunpack.c.l.b16 %v3049
        %v3146 = vunpack.c.l.b16 %v3050
        %v3147 = vunpack.c.l.b16 %v3051
        %v3148 = vunpack.c.l.b16 %v3052
        %v3149 = vunpack.c.l.b16 %v3053
        %v3150 = vunpack.c.l.b16 %v3054
        %v3151 = vunpack.c.l.b16 %v3055
        %v3152 = vunpack.c.l.b16 %v3056
        %v3153 = vunpack.c.l.b16 %v3057
        %v3154 = vunpack.c.l.b16 %v3058
        %v3155 = vunpack.c.l.b16 %v3059
        %v3156 = vunpack.c.l.b16 %v3060
        %v3157 = vunpack.c.l.b16 %v3061
        %v3158 = vunpack.c.l.b16 %v3062
        %v3159 = vunpack.c.l.b16 %v3063
        %v3160 = vunpack.c.l.b16 %v3064
        %v3161 = vunpack.c.l.b16 %v3065
        %v3162 = vunpack.c.l.b16 %v3066
        %v3163 = vunpack.c.l.b16 %v3067
        %v3164 = vunpack.c.l.b16 %v3068
        %v3165 = vunpack.c.l.b16 %v3069
        %v3166 = vunpack.c.l.b16 %v3070
        %v3167 = vunpack.c.l.b16 %v3071
        %v3168 = vunpack.c.l.b16 %v3072
        %v3169 = vunpack.c.l.b16 %v3073
        %v3170 = vunpack.c.l.b16 %v3074
        %v3171 = vunpack.c.l.b16 %v3075
        %v3172 = vunpack.c.l.b16 %v3076
        %v3173 = vunpack.c.l.b16 %v3077
        %v3174 = vunpack.c.l.b16 %v3078
        %v3175 = vunpack.c.l.b16 %v3079
        %v3176 = vunpack.c.l.b16 %v3080
        %v3177 = vunpack.c.l.b16 %v3081
        %v3178 = vunpack.c.l.b16 %v3082
        %v3179 = vunpack.c.l.b16 %v3083
        %v3180 = vunpack.c.l.b16 %v3084
        %v3181 = vunpack.c.l.b16 %v3085
        %v3182 = vunpack.c.l.b16 %v3086
        %v3183 = vunpack.c.l.b16 %v3087
        %v3184 = vpack.c.b16 %v3137, %v3136
        %v3185 = vpack.c.b16 %v3139, %v3138
        %v3186 = vpack.c.b16 %v3141, %v3140
        %v3187 = vpack.c.b16 %v3143, %v3142
        %v3188 = vpack.c.b16 %v3145, %v3144
        %v3189 = vpack.c.b16 %v3147, %v3146
        %v3190 = vpack.c.b16 %v3149, %v3148
        %v3191 = vpack.c.b16 %v3151, %v3150
        %v3192 = vpack.c.b16 %v3153, %v3152
        %v3193 = vpack.c.b16 %v3155, %v3154
        %v3194 = vpack.c.b16 %v3157, %v3156
        %v3195 = vpack.c.b16 %v3159, %v3158
        %v3196 = vpack.c.b16 %v3161, %v3160
        %v3197 = vpack.c.b16 %v3163, %v3162
        %v3198 = vpack.c.b16 %v3165, %v3164
        %v3199 = vpack.c.b16 %v3167, %v3166
        %v3200 = vpack.c.b16 %v3169, %v3168
        %v3201 = vpack.c.b16 %v3171, %v3170
        %v3202 = vpack.c.b16 %v3173, %v3172
        %v3203 = vpack.c.b16 %v3175, %v3174
        %v3204 = vpack.c.b16 %v3177, %v3176
        %v3205 = vpack.c.b16 %v3179, %v3178
        %v3206 = vpack.c.b16 %v3181, %v3180
        %v3207 = vpack.c.b16 %v3183, %v3182
        %3232 = vmatprep.subr.bf16.mxu0 0
        %3233 = vmatpush1.bf16.msra.mxu0 %v3184
        %3234 = vmatprep.subr.bf16.mxu0 0
        %3235 = vmatpush1.bf16.msra.mxu0 %v3185
        %3236 = vmatprep.subr.bf16.mxu0 0
        %3237 = vmatpush1.bf16.msra.mxu0 %v3186
        %3238 = vmatprep.subr.bf16.mxu0 0
        %3239 = vmatpush1.bf16.msra.mxu0 %v3187
        %3240 = vmatprep.subr.bf16.mxu0 0
        %3241 = vmatpush1.bf16.msra.mxu0 %v3188
        %3242 = vmatprep.subr.bf16.mxu0 0
        %3243 = vmatpush1.bf16.msra.mxu0 %v3189
        %3244 = vmatprep.subr.bf16.mxu0 0
        %3245 = vmatpush1.bf16.msra.mxu0 %v3190
        %3246 = vmatprep.subr.bf16.mxu0 0
        %3247 = vmatpush1.bf16.msra.mxu0 %v3191
        %3248 = vmatprep.subr.bf16.mxu0 0
        %3249 = vmatpush1.bf16.msra.mxu0 %v3192
        %3250 = vmatprep.subr.bf16.mxu0 0
        %3251 = vmatpush1.bf16.msra.mxu0 %v3193
        %3252 = vmatprep.subr.bf16.mxu0 0
        %3253 = vmatpush1.bf16.msra.mxu0 %v3194
        %3254 = vmatprep.subr.bf16.mxu0 0
        %3255 = vmatpush1.bf16.msra.mxu0 %v3195
        %3256 = vmatprep.subr.bf16.mxu0 0
        %3257 = vmatpush1.bf16.msra.mxu0 %v3196
        %3258 = vmatprep.subr.bf16.mxu0 0
        %3259 = vmatpush1.bf16.msra.mxu0 %v3197
        %3260 = vmatprep.subr.bf16.mxu0 0
        %3261 = vmatpush1.bf16.msra.mxu0 %v3198
        %3262 = vmatprep.subr.bf16.mxu0 0
        %3263 = vmatpush1.bf16.msra.mxu0 %v3199
        %3264 = vmatprep.mubr.bf16.mxu0 %v2992
        %3265 = vmatmul.mubr.bf16.gmra.mrb[0].mxu0 %v2991
        %v3266 = vpop.f32.mrb[0].mxu0
        %v3267 = vadd.f32 0.0, %v3266
        %v3268 = vpop.f32.mrb[0].mxu0
        %v3269 = vpop.f32.mrb[0].mxu0
        %v3270 = vadd.f32 0.0, %v3269
        %v3271 = vpop.f32.mrb[0].mxu0
        %3272 = vmatprep.mubr.bf16.mxu0 %v2995
        %3273 = vmatmul.mubr.bf16.gmra.mrb[0].mxu0 %v2994
        %v3274 = vpop.f32.mrb[0].mxu0
        %v3275 = vadd.f32 0.0, %v3274
        %v3276 = vpop.f32.mrb[0].mxu0
        %v3277 = vpop.f32.mrb[0].mxu0
        %v3278 = vadd.f32 0.0, %v3277
        %v3279 = vpop.f32.mrb[0].mxu0
        %3280 = vmatprep.mubr.bf16.mxu0 %v2998
        %3281 = vmatmul.mubr.bf16.gmra.mrb[0].mxu0 %v2997
        %v3282 = vpop.f32.mrb[0].mxu0
        %v3283 = vadd.f32 0.0, %v3282
        %v3284 = vpop.f32.mrb[0].mxu0
        %v3285 = vpop.f32.mrb[0].mxu0
        %v3286 = vadd.f32 0.0, %v3285
        %v3287 = vpop.f32.mrb[0].mxu0
        %3288 = vmatprep.mubr.bf16.mxu0 %v3001
        %3289 = vmatmul.mubr.bf16.gmra.mrb[0].mxu0 %v3000
        %v3290 = vpop.f32.mrb[0].mxu0
        %v3291 = vadd.f32 0.0, %v3290
        %v3292 = vpop.f32.mrb[0].mxu0
        %v3293 = vpop.f32.mrb[0].mxu0
        %v3294 = vadd.f32 0.0, %v3293
        %v3295 = vpop.f32.mrb[0].mxu0
        %3296 = vmatprep.mubr.bf16.mxu0 %v3004
        %3297 = vmatmul.mubr.bf16.gmra.mrb[0].mxu0 %v3003
        %v3298 = vpop.f32.mrb[0].mxu0
        %v3299 = vadd.f32 0.0, %v3298
        %v3300 = vpop.f32.mrb[0].mxu0
        %v3301 = vpop.f32.mrb[0].mxu0
        %v3302 = vadd.f32 0.0, %v3301
        %v3303 = vpop.f32.mrb[0].mxu0
        %3304 = vmatprep.mubr.bf16.mxu0 %v3007
        %3305 = vmatmul.mubr.bf16.gmra.mrb[0].mxu0 %v3006
        %v3306 = vpop.f32.mrb[0].mxu0
        %v3307 = vadd.f32 0.0, %v3306
        %v3308 = vpop.f32.mrb[0].mxu0
        %v3309 = vpop.f32.mrb[0].mxu0
        %v3310 = vadd.f32 0.0, %v3309
        %v3311 = vpop.f32.mrb[0].mxu0
        %3312 = vmatprep.mubr.bf16.mxu0 %v3010
        %3313 = vmatmul.mubr.bf16.gmra.mrb[0].mxu0 %v3009
        %v3314 = vpop.f32.mrb[0].mxu0
        %v3315 = vadd.f32 0.0, %v3314
        %v3316 = vpop.f32.mrb[0].mxu0
        %v3317 = vpop.f32.mrb[0].mxu0
        %v3318 = vadd.f32 0.0, %v3317
        %v3319 = vpop.f32.mrb[0].mxu0
        %3320 = vmatprep.mubr.bf16.mxu0 %v3013
        %3321 = vmatmul.mubr.bf16.gmra.mrb[0].mxu0 %v3012
        %v3322 = vpop.f32.mrb[0].mxu0
        %v3323 = vadd.f32 0.0, %v3322
        %v3324 = vpop.f32.mrb[0].mxu0
        %v3325 = vpop.f32.mrb[0].mxu0
        %v3326 = vadd.f32 0.0, %v3325
        %v3327 = vpop.f32.mrb[0].mxu0
        %3328 = vmatprep.mubr.bf16.mxu0 %v3016
        %3329 = vmatmul.mubr.bf16.gmra.mrb[0].mxu0 %v3015
        %v3330 = vpop.f32.mrb[0].mxu0
        %v3331 = vadd.f32 0.0, %v3330
        %v3332 = vpop.f32.mrb[0].mxu0
        %v3333 = vpop.f32.mrb[0].mxu0
        %v3334 = vadd.f32 0.0, %v3333
        %v3335 = vpop.f32.mrb[0].mxu0
        %3336 = vmatprep.mubr.bf16.mxu0 %v3019
        %3337 = vmatmul.mubr.bf16.gmra.mrb[0].mxu0 %v3018
        %v3338 = vpop.f32.mrb[0].mxu0
        %v3339 = vadd.f32 0.0, %v3338
        %v3340 = vpop.f32.mrb[0].mxu0
        %v3341 = vpop.f32.mrb[0].mxu0
        %v3342 = vadd.f32 0.0, %v3341
        %v3343 = vpop.f32.mrb[0].mxu0
        %3344 = vmatprep.mubr.bf16.mxu0 %v3022
        %3345 = vmatmul.mubr.bf16.gmra.mrb[0].mxu0 %v3021
        %v3346 = vpop.f32.mrb[0].mxu0
        %v3347 = vadd.f32 0.0, %v3346
        %v3348 = vpop.f32.mrb[0].mxu0
        %v3349 = vpop.f32.mrb[0].mxu0
        %v3350 = vadd.f32 0.0, %v3349
        %v3351 = vpop.f32.mrb[0].mxu0
        %3352 = vmatprep.mubr.bf16.mxu0 %v3025
        %3353 = vmatmul.mubr.bf16.gmra.mrb[0].mxu0 %v3024
        %v3354 = vpop.f32.mrb[0].mxu0
        %v3355 = vadd.f32 0.0, %v3354
        %v3356 = vpop.f32.mrb[0].mxu0
        %v3357 = vpop.f32.mrb[0].mxu0
        %v3358 = vadd.f32 0.0, %v3357
        %v3359 = vpop.f32.mrb[0].mxu0
        %3360 = vmatprep.mubr.bf16.mxu0 %v3028
        %3361 = vmatmul.mubr.bf16.gmra.mrb[0].mxu0 %v3027
        %v3362 = vpop.f32.mrb[0].mxu0
        %v3363 = vadd.f32 0.0, %v3362
        %v3364 = vpop.f32.mrb[0].mxu0
        %v3365 = vpop.f32.mrb[0].mxu0
        %v3366 = vadd.f32 0.0, %v3365
        %v3367 = vpop.f32.mrb[0].mxu0
        %3368 = vmatprep.mubr.bf16.mxu0 %v3031
        %3369 = vmatmul.mubr.bf16.gmra.mrb[0].mxu0 %v3030
        %v3370 = vpop.f32.mrb[0].mxu0
        %v3371 = vadd.f32 0.0, %v3370
        %v3372 = vpop.f32.mrb[0].mxu0
        %v3373 = vpop.f32.mrb[0].mxu0
        %v3374 = vadd.f32 0.0, %v3373
        %v3375 = vpop.f32.mrb[0].mxu0
        %3376 = vmatprep.mubr.bf16.mxu0 %v3034
        %3377 = vmatmul.mubr.bf16.gmra.mrb[0].mxu0 %v3033
        %v3378 = vpop.f32.mrb[0].mxu0
        %v3379 = vadd.f32 0.0, %v3378
        %v3380 = vpop.f32.mrb[0].mxu0
        %v3381 = vpop.f32.mrb[0].mxu0
        %v3382 = vadd.f32 0.0, %v3381
        %v3383 = vpop.f32.mrb[0].mxu0
        %3384 = vmatprep.mubr.bf16.mxu0 %v3037
        %3385 = vmatmul.mubr.bf16.gmra.mrb[0].mxu0 %v3036
        %v3386 = vpop.f32.mrb[0].mxu0
        %v3387 = vadd.f32 0.0, %v3386
        %v3388 = vpop.f32.mrb[0].mxu0
        %v3389 = vpop.f32.mrb[0].mxu0
        %v3390 = vadd.f32 0.0, %v3389
        %v3391 = vpop.f32.mrb[0].mxu0
        %3392 = vdwg.mxu0
        %3393 = vmatprep.subr.bf16.mxu0 0
        %3394 = vmatpush1.bf16.msra.mxu0 %v3200
        %3395 = vmatprep.subr.bf16.mxu0 0
        %3396 = vmatpush1.bf16.msra.mxu0 %v3201
        %3397 = vmatprep.subr.bf16.mxu0 0
        %3398 = vmatpush1.bf16.msra.mxu0 %v3202
        %3399 = vmatprep.subr.bf16.mxu0 0
        %3400 = vmatpush1.bf16.msra.mxu0 %v3203
        %3401 = vmatprep.subr.bf16.mxu0 0
        %3402 = vmatpush1.bf16.msra.mxu0 %v3204
        %3403 = vmatprep.subr.bf16.mxu0 0
        %3404 = vmatpush1.bf16.msra.mxu0 %v3205
        %3405 = vmatprep.subr.bf16.mxu0 0
        %3406 = vmatpush1.bf16.msra.mxu0 %v3206
        %3407 = vmatprep.subr.bf16.mxu0 0
        %3408 = vmatpush1.bf16.msra.mxu0 %v3207
        %3409 = vmatprep.subr.bf16.mxu0 0
        %3410 = vmatpush1.bf16.msra.mxu0 0
        %3411 = vmatprep.subr.bf16.mxu0 0
        %3412 = vmatpush1.bf16.msra.mxu0 0
        %3413 = vmatprep.subr.bf16.mxu0 0
        %3414 = vmatpush1.bf16.msra.mxu0 0
        %3415 = vmatprep.subr.bf16.mxu0 0
        %3416 = vmatpush1.bf16.msra.mxu0 0
        %3417 = vmatprep.subr.bf16.mxu0 0
        %3418 = vmatpush1.bf16.msra.mxu0 0
        %3419 = vmatprep.subr.bf16.mxu0 0
        %3420 = vmatpush1.bf16.msra.mxu0 0
        %3421 = vmatprep.subr.bf16.mxu0 0
        %3422 = vmatpush1.bf16.msra.mxu0 0
        %3423 = vmatprep.subr.bf16.mxu0 0
        %3424 = vmatpush1.bf16.msra.mxu0 0
        %3425 = vmatprep.mubr.bf16.mxu0 0
        %3426 = vmatmul.mubr.bf16.gmra.mrb[0].mxu0 %v2993
        %v3427 = vpop.f32.mrb[0].mxu0
        %v3428 = vadd.f32 %v3267, %v3427
        %v3429 = vpop.f32.mrb[0].mxu0
        %v3430 = vpop.f32.mrb[0].mxu0
        %v3431 = vadd.f32 %v3270, %v3430
        %v3432 = vpop.f32.mrb[0].mxu0
        %3433 = vmatprep.mubr.bf16.mxu0 0
        %3434 = vmatmul.mubr.bf16.gmra.mrb[0].mxu0 %v2996
        %v3435 = vpop.f32.mrb[0].mxu0
        %v3436 = vadd.f32 %v3275, %v3435
        %v3437 = vpop.f32.mrb[0].mxu0
        %v3438 = vpop.f32.mrb[0].mxu0
        %v3439 = vadd.f32 %v3278, %v3438
        %v3440 = vpop.f32.mrb[0].mxu0
        %3441 = vmatprep.mubr.bf16.mxu0 0
        %3442 = vmatmul.mubr.bf16.gmra.mrb[0].mxu0 %v2999
        %v3443 = vpop.f32.mrb[0].mxu0
        %v3444 = vadd.f32 %v3283, %v3443
        %v3445 = vpop.f32.mrb[0].mxu0
        %v3446 = vpop.f32.mrb[0].mxu0
        %v3447 = vadd.f32 %v3286, %v3446
        %v3448 = vpop.f32.mrb[0].mxu0
        %3449 = vmatprep.mubr.bf16.mxu0 0
        %3450 = vmatmul.mubr.bf16.gmra.mrb[0].mxu0 %v3002
        %v3451 = vpop.f32.mrb[0].mxu0
        %v3452 = vadd.f32 %v3291, %v3451
        %v3453 = vpop.f32.mrb[0].mxu0
        %v3454 = vpop.f32.mrb[0].mxu0
        %v3455 = vadd.f32 %v3294, %v3454
        %v3456 = vpop.f32.mrb[0].mxu0
        %3457 = vmatprep.mubr.bf16.mxu0 0
        %3458 = vmatmul.mubr.bf16.gmra.mrb[0].mxu0 %v3005
        %v3459 = vpop.f32.mrb[0].mxu0
        %v3460 = vadd.f32 %v3299, %v3459
        %v3461 = vpop.f32.mrb[0].mxu0
        %v3462 = vpop.f32.mrb[0].mxu0
        %v3463 = vadd.f32 %v3302, %v3462
        %v3464 = vpop.f32.mrb[0].mxu0
        %3465 = vmatprep.mubr.bf16.mxu0 0
        %3466 = vmatmul.mubr.bf16.gmra.mrb[0].mxu0 %v3008
        %v3467 = vpop.f32.mrb[0].mxu0
        %v3468 = vadd.f32 %v3307, %v3467
        %v3469 = vpop.f32.mrb[0].mxu0
        %v3470 = vpop.f32.mrb[0].mxu0
        %v3471 = vadd.f32 %v3310, %v3470
        %v3472 = vpop.f32.mrb[0].mxu0
        %3473 = vmatprep.mubr.bf16.mxu0 0
        %3474 = vmatmul.mubr.bf16.gmra.mrb[0].mxu0 %v3011
        %v3475 = vpop.f32.mrb[0].mxu0
        %v3476 = vadd.f32 %v3315, %v3475
        %v3477 = vpop.f32.mrb[0].mxu0
        %v3478 = vpop.f32.mrb[0].mxu0
        %v3479 = vadd.f32 %v3318, %v3478
        %v3480 = vpop.f32.mrb[0].mxu0
        %3481 = vmatprep.mubr.bf16.mxu0 0
        %3482 = vmatmul.mubr.bf16.gmra.mrb[0].mxu0 %v3014
        %v3483 = vpop.f32.mrb[0].mxu0
        %v3484 = vadd.f32 %v3323, %v3483
        %v3485 = vpop.f32.mrb[0].mxu0
        %v3486 = vpop.f32.mrb[0].mxu0
        %v3487 = vadd.f32 %v3326, %v3486
        %v3488 = vpop.f32.mrb[0].mxu0
        %3489 = vmatprep.mubr.bf16.mxu0 0
        %3490 = vmatmul.mubr.bf16.gmra.mrb[0].mxu0 %v3017
        %v3491 = vpop.f32.mrb[0].mxu0
        %v3492 = vadd.f32 %v3331, %v3491
        %v3493 = vpop.f32.mrb[0].mxu0
        %v3494 = vpop.f32.mrb[0].mxu0
        %v3495 = vadd.f32 %v3334, %v3494
        %v3496 = vpop.f32.mrb[0].mxu0
        %3497 = vmatprep.mubr.bf16.mxu0 0
        %3498 = vmatmul.mubr.bf16.gmra.mrb[0].mxu0 %v3020
        %v3499 = vpop.f32.mrb[0].mxu0
        %v3500 = vadd.f32 %v3339, %v3499
        %v3501 = vpop.f32.mrb[0].mxu0
        %v3502 = vpop.f32.mrb[0].mxu0
        %v3503 = vadd.f32 %v3342, %v3502
        %v3504 = vpop.f32.mrb[0].mxu0
        %3505 = vmatprep.mubr.bf16.mxu0 0
        %3506 = vmatmul.mubr.bf16.gmra.mrb[0].mxu0 %v3023
        %v3507 = vpop.f32.mrb[0].mxu0
        %v3508 = vadd.f32 %v3347, %v3507
        %v3509 = vpop.f32.mrb[0].mxu0
        %v3510 = vpop.f32.mrb[0].mxu0
        %v3511 = vadd.f32 %v3350, %v3510
        %v3512 = vpop.f32.mrb[0].mxu0
        %3513 = vmatprep.mubr.bf16.mxu0 0
        %3514 = vmatmul.mubr.bf16.gmra.mrb[0].mxu0 %v3026
        %v3515 = vpop.f32.mrb[0].mxu0
        %v3516 = vadd.f32 %v3355, %v3515
        %v3517 = vpop.f32.mrb[0].mxu0
        %v3518 = vpop.f32.mrb[0].mxu0
        %v3519 = vadd.f32 %v3358, %v3518
        %v3520 = vpop.f32.mrb[0].mxu0
        %3521 = vmatprep.mubr.bf16.mxu0 0
        %3522 = vmatmul.mubr.bf16.gmra.mrb[0].mxu0 %v3029
        %v3523 = vpop.f32.mrb[0].mxu0
        %v3524 = vadd.f32 %v3363, %v3523
        %v3525 = vpop.f32.mrb[0].mxu0
        %v3526 = vpop.f32.mrb[0].mxu0
        %v3527 = vadd.f32 %v3366, %v3526
        %v3528 = vpop.f32.mrb[0].mxu0
        %3529 = vmatprep.mubr.bf16.mxu0 0
        %3530 = vmatmul.mubr.bf16.gmra.mrb[0].mxu0 %v3032
        %v3531 = vpop.f32.mrb[0].mxu0
        %v3532 = vadd.f32 %v3371, %v3531
        %v3533 = vpop.f32.mrb[0].mxu0
        %v3534 = vpop.f32.mrb[0].mxu0
        %v3535 = vadd.f32 %v3374, %v3534
        %v3536 = vpop.f32.mrb[0].mxu0
        %3537 = vmatprep.mubr.bf16.mxu0 0
        %3538 = vmatmul.mubr.bf16.gmra.mrb[0].mxu0 %v3035
        %v3539 = vpop.f32.mrb[0].mxu0
        %v3540 = vadd.f32 %v3379, %v3539
        %v3541 = vpop.f32.mrb[0].mxu0
        %v3542 = vpop.f32.mrb[0].mxu0
        %v3543 = vadd.f32 %v3382, %v3542
        %v3544 = vpop.f32.mrb[0].mxu0
        %3545 = vmatprep.mubr.bf16.mxu0 0
        %3546 = vmatmul.mubr.bf16.gmra.mrb[0].mxu0 %v3038
        %v3547 = vpop.f32.mrb[0].mxu0
        %v3548 = vadd.f32 %v3387, %v3547
        %v3549 = vpop.f32.mrb[0].mxu0
        %v3550 = vpop.f32.mrb[0].mxu0
        %v3551 = vadd.f32 %v3390, %v3550
        %v3552 = vpop.f32.mrb[0].mxu0
        %3553 = vdwg.mxu0
        %v3554 = vadd.f32 %v2865, %v3428
        %v3555 = vadd.f32 %v2868, %v3431
        %v3556 = vadd.f32 %v2873, %v3436
        %v3557 = vadd.f32 %v2876, %v3439
        %v3558 = vadd.f32 %v2881, %v3444
        %v3559 = vadd.f32 %v2884, %v3447
        %v3560 = vadd.f32 %v2889, %v3452
        %v3561 = vadd.f32 %v2892, %v3455
        %v3562 = vadd.f32 %v2897, %v3460
        %v3563 = vadd.f32 %v2900, %v3463
        %v3564 = vadd.f32 %v2905, %v3468
        %v3565 = vadd.f32 %v2908, %v3471
        %v3566 = vadd.f32 %v2913, %v3476
        %v3567 = vadd.f32 %v2916, %v3479
        %v3568 = vadd.f32 %v2921, %v3484
        %v3569 = vadd.f32 %v2924, %v3487
        %v3570 = vadd.f32 %v2929, %v3492
        %v3571 = vadd.f32 %v2932, %v3495
        %v3572 = vadd.f32 %v2937, %v3500
        %v3573 = vadd.f32 %v2940, %v3503
        %v3574 = vadd.f32 %v2945, %v3508
        %v3575 = vadd.f32 %v2948, %v3511
        %v3576 = vadd.f32 %v2953, %v3516
        %v3577 = vadd.f32 %v2956, %v3519
        %v3578 = vadd.f32 %v2961, %v3524
        %v3579 = vadd.f32 %v2964, %v3527
        %v3580 = vadd.f32 %v2969, %v3532
        %v3581 = vadd.f32 %v2972, %v3535
        %v3582 = vadd.f32 %v2977, %v3540
        %v3583 = vadd.f32 %v2980, %v3543
        %v3584 = vadd.f32 %v2985, %v3548
        %v3585 = vadd.f32 %v2988, %v3551
        %v3586 = vpack.c.bf16 %v3555, %v3554
        %v3587 = vpack.c.bf16 %v3557, %v3556
        %v3588 = vpack.c.bf16 %v3559, %v3558
        %v3589 = vpack.c.bf16 %v3561, %v3560
        %v3590 = vpack.c.bf16 %v3563, %v3562
        %v3591 = vpack.c.bf16 %v3565, %v3564
        %v3592 = vpack.c.bf16 %v3567, %v3566
        %v3593 = vpack.c.bf16 %v3569, %v3568
        %v3594 = vpack.c.bf16 %v3571, %v3570
        %v3595 = vpack.c.bf16 %v3573, %v3572
        %v3596 = vpack.c.bf16 %v3575, %v3574
        %v3597 = vpack.c.bf16 %v3577, %v3576
        %v3598 = vpack.c.bf16 %v3579, %v3578
        %v3599 = vpack.c.bf16 %v3581, %v3580
        %v3600 = vpack.c.bf16 %v3583, %v3582
        %v3601 = vpack.c.bf16 %v3585, %v3584
        %v3618 = vunpack.c.l.b16 %v3586
        %v3619 = vunpack.c.h.b16 %v3586
        %v3620 = vunpack.c.l.b16 %v3587
        %v3621 = vunpack.c.h.b16 %v3587
        %v3622 = vunpack.c.l.b16 %v3588
        %v3623 = vunpack.c.h.b16 %v3588
        %v3624 = vunpack.c.l.b16 %v3589
        %v3625 = vunpack.c.h.b16 %v3589
        %v3626 = vunpack.c.l.b16 %v3590
        %v3627 = vunpack.c.h.b16 %v3590
        %v3628 = vunpack.c.l.b16 %v3591
        %v3629 = vunpack.c.h.b16 %v3591
        %v3630 = vunpack.c.l.b16 %v3592
        %v3631 = vunpack.c.h.b16 %v3592
        %v3632 = vunpack.c.l.b16 %v3593
        %v3633 = vunpack.c.h.b16 %v3593
        %v3634 = vunpack.c.l.b16 %v3594
        %v3635 = vunpack.c.h.b16 %v3594
        %v3636 = vunpack.c.l.b16 %v3595
        %v3637 = vunpack.c.h.b16 %v3595
        %v3638 = vunpack.c.l.b16 %v3596
        %v3639 = vunpack.c.h.b16 %v3596
        %v3640 = vunpack.c.l.b16 %v3597
        %v3641 = vunpack.c.h.b16 %v3597
        %v3642 = vunpack.c.l.b16 %v3598
        %v3643 = vunpack.c.h.b16 %v3598
        %v3644 = vunpack.c.l.b16 %v3599
        %v3645 = vunpack.c.h.b16 %v3599
        %v3646 = vunpack.c.l.b16 %v3600
        %v3647 = vunpack.c.h.b16 %v3600
        %v3648 = vunpack.c.l.b16 %v3601
        %v3649 = vunpack.c.h.b16 %v3601
        %v3650 = vpack.c.b16 %v3618, %v3618
        %v3651 = vpack.c.b16 %v3619, %v3619
        %v3652 = vpack.c.b16 %v3620, %v3620
        %v3653 = vpack.c.b16 %v3621, %v3621
        %v3654 = vpack.c.b16 %v3622, %v3622
        %v3655 = vpack.c.b16 %v3623, %v3623
        %v3656 = vpack.c.b16 %v3624, %v3624
        %v3657 = vpack.c.b16 %v3625, %v3625
        %v3658 = vpack.c.b16 %v3626, %v3626
        %v3659 = vpack.c.b16 %v3627, %v3627
        %v3660 = vpack.c.b16 %v3628, %v3628
        %v3661 = vpack.c.b16 %v3629, %v3629
        %v3662 = vpack.c.b16 %v3630, %v3630
        %v3663 = vpack.c.b16 %v3631, %v3631
        %v3664 = vpack.c.b16 %v3632, %v3632
        %v3665 = vpack.c.b16 %v3633, %v3633
        %v3666 = vpack.c.b16 %v3634, %v3634
        %v3667 = vpack.c.b16 %v3635, %v3635
        %v3668 = vpack.c.b16 %v3636, %v3636
        %v3669 = vpack.c.b16 %v3637, %v3637
        %v3670 = vpack.c.b16 %v3638, %v3638
        %v3671 = vpack.c.b16 %v3639, %v3639
        %v3672 = vpack.c.b16 %v3640, %v3640
        %v3673 = vpack.c.b16 %v3641, %v3641
        %v3674 = vpack.c.b16 %v3642, %v3642
        %v3675 = vpack.c.b16 %v3643, %v3643
        %v3676 = vpack.c.b16 %v3644, %v3644
        %v3677 = vpack.c.b16 %v3645, %v3645
        %v3678 = vpack.c.b16 %v3646, %v3646
        %v3679 = vpack.c.b16 %v3647, %v3647
        %v3680 = vpack.c.b16 %v3648, %v3648
        %v3681 = vpack.c.b16 %v3649, %v3649
        %3714 = vst [vmem:[%s469] sm:$0xf] %v3650
        %3715 = vst [vmem:[%s469 + $0x4] sm:$0xf] %v3651
        %3716 = vst [vmem:[%s469 + $0x8] sm:$0xf] %v3652
        %3717 = vst [vmem:[%s469 + $0xc] sm:$0xf] %v3653
        %3718 = vst [vmem:[%s469 + $0x10] sm:$0xf] %v3654
        %3719 = vst [vmem:[%s469 + $0x14] sm:$0xf] %v3655
        %3720 = vst [vmem:[%s469 + $0x18] sm:$0xf] %v3656
        %3721 = vst [vmem:[%s469 + $0x1c] sm:$0xf] %v3657
        %3722 = vst [vmem:[%s469 + $0x20] sm:$0xf] %v3658
        %3723 = vst [vmem:[%s469 + $0x24] sm:$0xf] %v3659
        %3724 = vst [vmem:[%s469 + $0x28] sm:$0xf] %v3660
        %3725 = vst [vmem:[%s469 + $0x2c] sm:$0xf] %v3661
        %3726 = vst [vmem:[%s469 + $0x30] sm:$0xf] %v3662
        %3727 = vst [vmem:[%s469 + $0x34] sm:$0xf] %v3663
        %3728 = vst [vmem:[%s469 + $0x38] sm:$0xf] %v3664
        %3729 = vst [vmem:[%s469 + $0x3c] sm:$0xf] %v3665
        %3730 = vst [vmem:[%s469 + $0x40] sm:$0xf] %v3666
        %3731 = vst [vmem:[%s469 + $0x44] sm:$0xf] %v3667
        %3732 = vst [vmem:[%s469 + $0x48] sm:$0xf] %v3668
        %3733 = vst [vmem:[%s469 + $0x4c] sm:$0xf] %v3669
        %3734 = vst [vmem:[%s469 + $0x50] sm:$0xf] %v3670
        %3735 = vst [vmem:[%s469 + $0x54] sm:$0xf] %v3671
        %3736 = vst [vmem:[%s469 + $0x58] sm:$0xf] %v3672
        %3737 = vst [vmem:[%s469 + $0x5c] sm:$0xf] %v3673
        %3738 = vst [vmem:[%s469 + $0x60] sm:$0xf] %v3674
        %3739 = vst [vmem:[%s469 + $0x64] sm:$0xf] %v3675
        %3740 = vst [vmem:[%s469 + $0x68] sm:$0xf] %v3676
        %3741 = vst [vmem:[%s469 + $0x6c] sm:$0xf] %v3677
        %3742 = vst [vmem:[%s469 + $0x70] sm:$0xf] %v3678
        %3743 = vst [vmem:[%s469 + $0x74] sm:$0xf] %v3679
        %3744 = vst [vmem:[%s469 + $0x78] sm:$0xf] %v3680
        %3745 = vst [vmem:[%s469 + $0x7c] sm:$0xf] %v3681
        %v3746 = vsel %vm1237, %v3554, 0.0
        %v3747 = vsel %vm1238, %v3555, 0.0
        %v3748 = vsel %vm1239, %v3556, 0.0
        %v3749 = vsel %vm1240, %v3557, 0.0
        %v3750 = vsel %vm1241, %v3558, 0.0
        %v3751 = vsel %vm1242, %v3559, 0.0
        %v3752 = vsel %vm1243, %v3560, 0.0
        %v3753 = vsel %vm1244, %v3561, 0.0
        %v3754 = vsel %vm1245, %v3562, 0.0
        %v3755 = vsel %vm1246, %v3563, 0.0
        %v3756 = vsel %vm1247, %v3564, 0.0
        %v3757 = vsel %vm1248, %v3565, 0.0
        %v3758 = vsel %vm1249, %v3566, 0.0
        %v3759 = vsel %vm1250, %v3567, 0.0
        %v3760 = vsel %vm1251, %v3568, 0.0
        %v3761 = vsel %vm1252, %v3569, 0.0
        %v3762 = vsel %vm1253, %v3570, 0.0
        %v3763 = vsel %vm1254, %v3571, 0.0
        %v3764 = vsel %vm1255, %v3572, 0.0
        %v3765 = vsel %vm1256, %v3573, 0.0
        %v3766 = vsel %vm1257, %v3574, 0.0
        %v3767 = vsel %vm1258, %v3575, 0.0
        %v3768 = vsel %vm1259, %v3576, 0.0
        %v3769 = vsel %vm1260, %v3577, 0.0
        %v3770 = vsel %vm1261, %v3578, 0.0
        %v3771 = vsel %vm1262, %v3579, 0.0
        %v3772 = vsel %vm1263, %v3580, 0.0
        %v3773 = vsel %vm1264, %v3581, 0.0
        %v3774 = vsel %vm1265, %v3582, 0.0
        %v3775 = vsel %vm1266, %v3583, 0.0
        %v3776 = vsel %vm1267, %v3584, 0.0
        %v3777 = vsel %vm1268, %v3585, 0.0
        %v3778 = vadd.f32 %v3746, %v3747
        %v3779 = vadd.f32 %v3778, %v3748
        %v3780 = vadd.f32 %v3779, %v3749
        %v3781 = vadd.f32 %v3780, %v3750
        %v3782 = vadd.f32 %v3781, %v3751
        %v3783 = vadd.f32 %v3782, %v3752
        %v3784 = vadd.f32 %v3783, %v3753
        %v3785 = vadd.f32 %v3784, %v3754
        %v3786 = vadd.f32 %v3785, %v3755
        %v3787 = vadd.f32 %v3786, %v3756
        %v3788 = vadd.f32 %v3787, %v3757
        %v3789 = vadd.f32 %v3788, %v3758
        %v3790 = vadd.f32 %v3789, %v3759
        %v3791 = vadd.f32 %v3790, %v3760
        %v3792 = vadd.f32 %v3791, %v3761
        %v3793 = vadd.f32 %v3792, %v3762
        %v3794 = vadd.f32 %v3793, %v3763
        %v3795 = vadd.f32 %v3794, %v3764
        %v3796 = vadd.f32 %v3795, %v3765
        %v3797 = vadd.f32 %v3796, %v3766
        %v3798 = vadd.f32 %v3797, %v3767
        %v3799 = vadd.f32 %v3798, %v3768
        %v3800 = vadd.f32 %v3799, %v3769
        %v3801 = vadd.f32 %v3800, %v3770
        %v3802 = vadd.f32 %v3801, %v3771
        %v3803 = vadd.f32 %v3802, %v3772
        %v3804 = vadd.f32 %v3803, %v3773
        %v3805 = vadd.f32 %v3804, %v3774
        %v3806 = vadd.f32 %v3805, %v3775
        %v3807 = vadd.f32 %v3806, %v3776
        %v3808 = vadd.f32 %v3807, %v3777
        %v3809 = vrot.slane %v3808, 4
        %v3810 = vadd.f32 %v3808, %v3809
        %v3811 = vrot.slane %v3810, 2
        %v3812 = vadd.f32 %v3810, %v3811
        %v3813 = vrot.slane %v3812, 1
        %v3814 = vadd.f32 %v3812, %v3813
        %v3815 = vmul.f32 %v3746, %v3746
        %v3816 = vmul.f32 %v3747, %v3747
        %v3817 = vmul.f32 %v3748, %v3748
        %v3818 = vmul.f32 %v3749, %v3749
        %v3819 = vmul.f32 %v3750, %v3750
        %v3820 = vmul.f32 %v3751, %v3751
        %v3821 = vmul.f32 %v3752, %v3752
        %v3822 = vmul.f32 %v3753, %v3753
        %v3823 = vmul.f32 %v3754, %v3754
        %v3824 = vmul.f32 %v3755, %v3755
        %v3825 = vmul.f32 %v3756, %v3756
        %v3826 = vmul.f32 %v3757, %v3757
        %v3827 = vmul.f32 %v3758, %v3758
        %v3828 = vmul.f32 %v3759, %v3759
        %v3829 = vmul.f32 %v3760, %v3760
        %v3830 = vmul.f32 %v3761, %v3761
        %v3831 = vmul.f32 %v3762, %v3762
        %v3832 = vmul.f32 %v3763, %v3763
        %v3833 = vmul.f32 %v3764, %v3764
        %v3834 = vmul.f32 %v3765, %v3765
        %v3835 = vmul.f32 %v3766, %v3766
        %v3836 = vmul.f32 %v3767, %v3767
        %v3837 = vmul.f32 %v3768, %v3768
        %v3838 = vmul.f32 %v3769, %v3769
        %v3839 = vmul.f32 %v3770, %v3770
        %v3840 = vmul.f32 %v3771, %v3771
        %v3841 = vmul.f32 %v3772, %v3772
        %v3842 = vmul.f32 %v3773, %v3773
        %v3843 = vmul.f32 %v3774, %v3774
        %v3844 = vmul.f32 %v3775, %v3775
        %v3845 = vmul.f32 %v3776, %v3776
        %v3846 = vmul.f32 %v3777, %v3777
        %v3847 = vadd.f32 %v3815, %v3816
        %v3848 = vadd.f32 %v3847, %v3817
        %v3849 = vadd.f32 %v3848, %v3818
        %v3850 = vadd.f32 %v3849, %v3819
        %v3851 = vadd.f32 %v3850, %v3820
        %v3852 = vadd.f32 %v3851, %v3821
        %v3853 = vadd.f32 %v3852, %v3822
        %v3854 = vadd.f32 %v3853, %v3823
        %v3855 = vadd.f32 %v3854, %v3824
        %v3856 = vadd.f32 %v3855, %v3825
        %v3857 = vadd.f32 %v3856, %v3826
        %v3858 = vadd.f32 %v3857, %v3827
        %v3859 = vadd.f32 %v3858, %v3828
        %v3860 = vadd.f32 %v3859, %v3829
        %v3861 = vadd.f32 %v3860, %v3830
        %v3862 = vadd.f32 %v3861, %v3831
        %v3863 = vadd.f32 %v3862, %v3832
        %v3864 = vadd.f32 %v3863, %v3833
        %v3865 = vadd.f32 %v3864, %v3834
        %v3866 = vadd.f32 %v3865, %v3835
        %v3867 = vadd.f32 %v3866, %v3836
        %v3868 = vadd.f32 %v3867, %v3837
        %v3869 = vadd.f32 %v3868, %v3838
        %v3870 = vadd.f32 %v3869, %v3839
        %v3871 = vadd.f32 %v3870, %v3840
        %v3872 = vadd.f32 %v3871, %v3841
        %v3873 = vadd.f32 %v3872, %v3842
        %v3874 = vadd.f32 %v3873, %v3843
        %v3875 = vadd.f32 %v3874, %v3844
        %v3876 = vadd.f32 %v3875, %v3845
        %v3877 = vadd.f32 %v3876, %v3846
        %v3878 = vrot.slane %v3877, 4
        %v3879 = vadd.f32 %v3877, %v3878
        %v3880 = vrot.slane %v3879, 2
        %v3881 = vadd.f32 %v3879, %v3880
        %v3882 = vrot.slane %v3881, 1
        %v3883 = vadd.f32 %v3881, %v3882
        %vm3884 = vcmask 1040384
        %v3885 = vsel %vm3884, %v3814, %v3883
        %3886 = vst [vmem:[%s476] sm:$0x3] %v3885
        %s3887 = sand.u32 %s218, 1
        %s3888 = scalar_lea.sflag [#allocation6], %s3887
        %s3889 = sand.u32 %s218, 1
        %s3890 = smul.addr %s3889, 128
        %s3891 = scalar_lea.vmem [#allocation15], %s3890
        %s3892 = sand.u32 %s246, 1
        %s3893 = scalar_lea.sflag [#allocation17], %s3892
        %s3894 = sand.u32 %s246, 1
        %s3895 = smul.addr %s3894, 2
        %s3896 = scalar_lea.vmem [#allocation16], %s3895
        // Predicated region
        $region69: #{_lambda_.4} parent=43 // pred_check
          %p3897 = pneg %p228
        $region70: #{_lambda_.4} parent=43 // pred_check_branch
          %3899 = sbr.rel (%p3897) target = $region72
        $region71: #{_lambda_.4} parent=43 // pred_region
          %s3900 = smul.u32 32, %s38
          %s3902 = ssub.s32 2048, 2048
          %3903 = vsyncadd %s3888, %s3902
          %s3904 = smul.addr %s37, 64
          %s3905 = sadd.s32 %s3900, %s3904
          %s3906 = smul.addr %s3905, 64
          %s3907 = scalar_lea.hbm %s6, %s3906
          %s3908 = sshll.u32 %s3891, 4
          %s3909 = int_to_ptr.vmem [resolvable:$true] %s3908
          %3914 = dma.vmem_to_hbm [thread:$0]  %s3909, 2048, %s3907, %s3888, 64, 64, 4
        $region72: #{_lambda_.4} parent=43 // pred_fallthru
          _
        // Predicated region
        $region73: #{_lambda_.4} parent=43 // pred_check
          %p3915 = pneg %p256
        $region74: #{_lambda_.4} parent=43 // pred_check_branch
          %3917 = sbr.rel (%p3915) target = $region76
        $region75: #{_lambda_.4} parent=43 // pred_region
          %s3919 = ssub.s32 32, 32
          %3920 = vsyncadd %s3893, %s3919
          %s3921 = smul.addr %s37, 2
          %s3922 = sadd.s32 %s38, %s3921
          %s3923 = smul.addr %s3922, 32
          %s3924 = scalar_lea.hbm %s7, %s3923
          %s3926 = sshll.u32 %s3896, 4
          %s3927 = int_to_ptr.vmem [resolvable:$true] %s3926
          %3929 = dma.vmem_to_hbm [thread:$0]  %s3927, 32, %s3924, %s3893
        $region76: #{_lambda_.4} parent=43 // pred_fallthru
          _
      $region44: #{_lambda_.4} parent=5 // pred_fallthru
        _
      %p3930 = scmp.le.s32.totalorder 2, %s28
      // Predicated region
      $region77: #{_lambda_.4} parent=5 // pred_check
        %p3931 = pneg %p3930
      $region78: #{_lambda_.4} parent=5 // pred_check_branch
        %3933 = sbr.rel (%p3931) target = $region80
      $region79: #{_lambda_.4} parent=5 // pred_region
        %s3934 = ssub.s32 %s28, 2
        // Predicated region
        $region81: #{_lambda_.4} parent=79 // pred_check
          %p3935 = pneg %p234
        $region82: #{_lambda_.4} parent=79 // pred_check_branch
          %3937 = sbr.rel (%p3935) target = $region84
        $region83: #{_lambda_.4} parent=79 // pred_region
          %s3938 = sand.u32 %s219, 1
          %s3939 = scalar_lea.sflag [#allocation6], %s3938
          %s3940 = sand.u32 %s219, 1
          %s3941 = smul.addr %s3940, 128
          %s3942 = scalar_lea.vmem [#allocation15], %s3941
          %3943 = dma.done %s3939, 2048
        $region84: #{_lambda_.4} parent=79 // pred_fallthru
          _
        // Predicated region
        $region85: #{_lambda_.4} parent=79 // pred_check
          %p3944 = pneg %p262
        $region86: #{_lambda_.4} parent=79 // pred_check_branch
          %3946 = sbr.rel (%p3944) target = $region88
        $region87: #{_lambda_.4} parent=79 // pred_region
          %s3947 = sand.u32 %s247, 1
          %s3948 = scalar_lea.sflag [#allocation17], %s3947
          %s3949 = sand.u32 %s247, 1
          %s3950 = smul.addr %s3949, 2
          %s3951 = scalar_lea.vmem [#allocation16], %s3950
          %3952 = dma.done %s3948, 32
        $region88: #{_lambda_.4} parent=79 // pred_fallthru
          _
      $region80: #{_lambda_.4} parent=5 // pred_fallthru
        _
    $region6: #{_lambda_.4} parent=1 // loop_footer
      %s32 = sadd.s32 1, %s28
    $region7: #{_lambda_.4} parent=1 // loop_footer_branch
      %27 = sbr.rel target = $region3
    $region8: #{_lambda_.4} parent=1 // loop_exit
      _
    %3953 = vsyncpa [#allocation5], 1
    %s3954 = scalar_lea.sflag [#allocation5], 1
    %3955 = vsyncpa %s3954, 1
    %3956 = vsyncpa [#allocation8], 1
    %3957 = vsyncpa [#allocation11], 1
    %s3958 = scalar_lea.sflag [#allocation11], 1
    %3959 = vsyncpa %s3958, 1
    %3960 = vsyncpa [#allocation14], 1
    %s3961 = scalar_lea.sflag [#allocation14], 1
    %3962 = vsyncpa %s3961, 1
    %3963 = vsyncpa [#allocation6], 1
    %s3964 = scalar_lea.sflag [#allocation6], 1
    %3965 = vsyncpa %s3964, 1
    %3966 = vsyncpa [#allocation17], 1
    %s3967 = scalar_lea.sflag [#allocation17], 1
    %3968 = vsyncpa %s3967, 1

</llo_original>
